<compile_context>
chip_gen: v5e
topology: v5e:2x2
jax: 0.10.0
libtpu: 0.0.40
codegen_flags: <defaults>
</compile_context>

<pallas_src>
import jax
import jax.numpy as jnp
from jax import lax
from jax.experimental import pallas as pl
from jax.experimental.pallas import tpu as pltpu

_BN_EPS = 1e-5


def _conv3x3(xpad, w, N, H, W):
    """3x3 stride-1 conv on a spatially pre-padded NHWC block.

    xpad: (N, H+2, W+2, Cin) f32 value (zero halo already in place)
    w   : (3, 3, Cin, Cp)    bf16 value
    returns (N*H*W, Cp) f32 accumulator.
    """
    Cin = xpad.shape[-1]
    Cp = w.shape[-1]
    acc = jnp.zeros((N * H * W, Cp), jnp.float32)
    # 9 shifted (N*H*W, Cin) @ (Cin, Cp) MXU matmuls, bf16 operands, f32 accumulation.
    # (A single im2col matmul with K=9*Cin would need an unaligned minor-dim concat;
    #  kept as per-tap dots for robust lowering — at production Cin>=64 each tap
    #  already has a healthy K.)
    for dy in range(3):
        for dx in range(3):
            patch = xpad[:, dy:dy + H, dx:dx + W, :].reshape(N * H * W, Cin)
            acc = acc + jnp.dot(patch.astype(jnp.bfloat16), w[dy, dx],
                                preferred_element_type=jnp.float32)
    return acc


def _bn_relu(acc, gamma, beta, inv_n):
    """Training-mode BatchNorm2d (biased variance, eps=1e-5) + ReLU.

    Single-pass statistics (sum / sum-of-squares) and a folded affine so the
    normalize step is one FMA-style pass over acc. acc: (R, Cp) f32.
    """
    mean = jnp.sum(acc, axis=0, keepdims=True) * inv_n
    ex2 = jnp.sum(acc * acc, axis=0, keepdims=True) * inv_n
    var = jnp.maximum(ex2 - mean * mean, 0.0)          # guard tiny negative / zero-pad cols
    scale = gamma * lax.rsqrt(var + _BN_EPS)           # rsqrt goes to the EUP slot
    shift = beta - mean * scale
    return jnp.maximum(acc * scale + shift, 0.0)       # folded affine + ReLU


def _double_conv_kernel(x_ref, w1_ref, g1_ref, be1_ref, w2_ref, g2_ref, be2_ref,
                        out_ref, xpad_ref, mid_ref):
    """Fused (conv3x3 -> BN(train) -> ReLU) x 2.

    x_ref  : (N, H, W, Cin)        f32
    w1_ref : (3, 3, Cin, Cp)       bf16
    w2_ref : (3, 3, Cp, Cp)        bf16
    g*/be* : (1, Cp)               f32   (BN gamma / beta, zero-padded channels)
    out_ref: (N*H*W, Cp)           f32   (lane-dense: Cp is a multiple of 128)
    xpad_ref, mid_ref: VMEM scratch, spatially padded stage inputs.
    """
    N, Hp, Wp, _ = xpad_ref.shape
    H, W = Hp - 2, Wp - 2
    Cp = out_ref.shape[-1]
    inv_n = 1.0 / float(N * H * W)

    # ---- stage 1: in-kernel halo pad -> conv -> BN(train) -> ReLU ---------------
    xpad_ref[...] = jnp.zeros_like(xpad_ref)
    xpad_ref[:, 1:H + 1, 1:W + 1, :] = x_ref[...]
    acc1 = _conv3x3(xpad_ref[...], w1_ref[...], N, H, W)
    y1 = _bn_relu(acc1, g1_ref[...], be1_ref[...], inv_n)

    # ---- stage 2: intermediate stays in VMEM (no HBM round-trip) ----------------
    mid_ref[...] = jnp.zeros_like(mid_ref)
    mid_ref[:, 1:H + 1, 1:W + 1, :] = y1.reshape(N, H, W, Cp)
    acc2 = _conv3x3(mid_ref[...], w2_ref[...], N, H, W)
    y2 = _bn_relu(acc2, g2_ref[...], be2_ref[...], inv_n)

    # Full-width (Cp multiple of 128) unmasked store.
    out_ref[...] = y2


def _round_up(n, m):
    return ((n + m - 1) // m) * m


def double_conv(x_nchw, params):
    """Forward of Double_Conv. Input/output are NCHW like the torch module."""
    N, Cin, H, W = x_nchw.shape
    C = params["g1"].shape[0]
    Cp = _round_up(C, 128)  # lane-dense channel padding (no-op once C % 128 == 0)

    # NCHW -> NHWC: channels on the 128-lane axis.
    x = jnp.transpose(x_nchw, (0, 2, 3, 1)).astype(jnp.float32)

    def pad_c(a, axes):
        pads = [(0, 0)] * a.ndim
        for ax in axes:
            pads[ax] = (0, Cp - a.shape[ax])
        return jnp.pad(a, pads)

    # Conv weights as bf16 MXU operands (the kernel accumulates in f32).
    w1 = pad_c(params["w1"], (3,)).astype(jnp.bfloat16)       # (3, 3, Cin, Cp)
    w2 = pad_c(params["w2"], (2, 3)).astype(jnp.bfloat16)     # (3, 3, Cp,  Cp)
    g1 = pad_c(params["g1"], (0,)).astype(jnp.float32).reshape(1, Cp)
    be1 = pad_c(params["be1"], (0,)).astype(jnp.float32).reshape(1, Cp)
    g2 = pad_c(params["g2"], (0,)).astype(jnp.float32).reshape(1, Cp)
    be2 = pad_c(params["be2"], (0,)).astype(jnp.float32).reshape(1, Cp)
    # NOTE: conv biases b1/b2 are intentionally NOT passed to the kernel — a
    # per-channel constant added before training-mode BatchNorm is exactly
    # cancelled by the mean subtraction (saves a VPU pass and a DMA).

    vmem = pl.BlockSpec(memory_space=pltpu.MemorySpace.VMEM)
    out = pl.pallas_call(
        _double_conv_kernel,
        out_shape=jax.ShapeDtypeStruct((N * H * W, Cp), jnp.float32),
        in_specs=[vmem] * 7,
        out_specs=vmem,
        scratch_shapes=[
            pltpu.VMEM((N, H + 2, W + 2, Cin), jnp.float32),  # padded stage-1 input
            pltpu.VMEM((N, H + 2, W + 2, Cp), jnp.float32),   # padded intermediate
        ],
        compiler_params=pltpu.CompilerParams(
            # Explicit budget with headroom for v7x (64 MiB physical VMEM);
            # actual usage at this shape is ~2 MiB.
            vmem_limit_bytes=48 * 1024 * 1024,
        ),
    )(x, w1, g1, be1, w2, g2, be2)

    # (N*H*W, Cp) -> drop padded channels -> NHWC -> NCHW.
    y = out[:, :C].reshape(N, H, W, C)
    return jnp.transpose(y, (0, 3, 1, 2))


def init_params(key, in_channel, out_channel):
    k1, k2, k3, k4 = jax.random.split(key, 4)
    # Conv weights stored HWIO (torch OIHW weight transposed to (2, 3, 1, 0)).
    w1 = jax.random.normal(k1, (3, 3, in_channel, out_channel), jnp.float32) * 0.1
    b1 = jax.random.normal(k2, (out_channel,), jnp.float32) * 0.1
    w2 = jax.random.normal(k3, (3, 3, out_channel, out_channel), jnp.float32) * 0.1
    b2 = jax.random.normal(k4, (out_channel,), jnp.float32) * 0.1
    # BatchNorm2d affine defaults: gamma=1, beta=0.
    g1 = jnp.ones((out_channel,), jnp.float32)
    be1 = jnp.zeros((out_channel,), jnp.float32)
    g2 = jnp.ones((out_channel,), jnp.float32)
    be2 = jnp.zeros((out_channel,), jnp.float32)
    return dict(w1=w1, b1=b1, g1=g1, be1=be1, w2=w2, b2=b2, g2=g2, be2=be2)


def _reference(x_nchw, params):
    """Plain-JAX reference (lax conv with bf16 operands + batch-stat BN + ReLU)."""
    def block(x, w_hwio, b, g, be):
        y = lax.conv_general_dilated(
            x.astype(jnp.bfloat16), w_hwio.astype(jnp.bfloat16),
            window_strides=(1, 1), padding=((1, 1), (1, 1)),
            dimension_numbers=("NHWC", "HWIO", "NHWC"),
            preferred_element_type=jnp.float32)
        y = y + b[None, None, None, :]   # bias (cancelled by BN; kept for faithfulness)
        mean = jnp.mean(y, axis=(0, 1, 2), keepdims=True)
        var = jnp.mean((y - mean) ** 2, axis=(0, 1, 2), keepdims=True)
        y = (y - mean) * lax.rsqrt(var + _BN_EPS)
        y = y * g + be
        return jnp.maximum(y, 0.0)

    x = jnp.transpose(x_nchw, (0, 2, 3, 1))
    y = block(x, params["w1"], params["b1"], params["g1"], params["be1"])
    y = block(y, params["w2"], params["b2"], params["g2"], params["be2"])
    return jnp.transpose(y, (0, 3, 1, 2))


if __name__ == "__main__":
    key = jax.random.PRNGKey(0)
    kx, kp = jax.random.split(key)

    N, C_IN, C_OUT, H, W = 2, 4, 8, 16, 16
    x = jax.random.normal(kx, (N, C_IN, H, W), jnp.float32)
    params = init_params(kp, C_IN, C_OUT)

    out = jax.block_until_ready(double_conv(x, params))
    ref = jax.block_until_ready(_reference(x, params))

    assert out.shape == (N, C_OUT, H, W), out.shape
    err = float(jnp.max(jnp.abs(out - ref)))
    # bf16 MXU operands (f32 accumulation, f32 BN) -> bf16-level agreement.
    assert err < 1e-2, err
    print("KERNEL_OK")
</pallas_src>

<mosaic_0001>
module attributes {stable_mosaic.version = 11 : i64} {
  func.func @_double_conv_kernel(%arg0: memref<2x16x16x4xf32, #tpu.memory_space<vmem>>, %arg1: memref<3x3x4x128xbf16, #tpu.memory_space<vmem>>, %arg2: memref<1x128xf32, #tpu.memory_space<vmem>>, %arg3: memref<1x128xf32, #tpu.memory_space<vmem>>, %arg4: memref<3x3x128x128xbf16, #tpu.memory_space<vmem>>, %arg5: memref<1x128xf32, #tpu.memory_space<vmem>>, %arg6: memref<1x128xf32, #tpu.memory_space<vmem>>, %arg7: memref<512x128xf32, #tpu.memory_space<vmem>>, %arg8: memref<2x18x18x4xf32, #tpu.memory_space<vmem>>, %arg9: memref<2x18x18x128xf32, #tpu.memory_space<vmem>>) attributes {dimension_semantics = [], scalar_prefetch = 0 : i64, scratch_operands = 2 : i64, tpu.core_type = #tpu.core_type<tc>} {
    %cst = arith.constant 0.000000e+00 : f32
    %0 = vector.broadcast %cst : f32 to vector<2x18x18x4xf32>
    %c0 = arith.constant 0 : index
    %c0_0 = arith.constant 0 : index
    %c0_1 = arith.constant 0 : index
    %c0_2 = arith.constant 0 : index
    %1 = vector.load %arg8[%c0, %c0_0, %c0_1, %c0_2] : memref<2x18x18x4xf32, #tpu.memory_space<vmem>>, vector<2x18x18x4xf32>
    tpu.vector_store %arg8[%c0, %c0_0, %c0_1, %c0_2], %0 {strides = array<i32>} : memref<2x18x18x4xf32, #tpu.memory_space<vmem>>, vector<2x18x18x4xf32>,
    %c0_3 = arith.constant 0 : index
    %c0_4 = arith.constant 0 : index
    %c0_5 = arith.constant 0 : index
    %c0_6 = arith.constant 0 : index
    %2 = vector.load %arg0[%c0_3, %c0_4, %c0_5, %c0_6] : memref<2x16x16x4xf32, #tpu.memory_space<vmem>>, vector<2x16x16x4xf32>
    %c0_7 = arith.constant 0 : index
    %c1 = arith.constant 1 : index
    %c1_8 = arith.constant 1 : index
    %c0_9 = arith.constant 0 : index
    %3 = vector.load %arg8[%c0_7, %c1, %c1_8, %c0_9] : memref<2x18x18x4xf32, #tpu.memory_space<vmem>>, vector<2x16x16x4xf32>
    tpu.vector_store %arg8[%c0_7, %c1, %c1_8, %c0_9], %2 {strides = array<i32>} : memref<2x18x18x4xf32, #tpu.memory_space<vmem>>, vector<2x16x16x4xf32>,
    %c0_10 = arith.constant 0 : index
    %c0_11 = arith.constant 0 : index
    %c0_12 = arith.constant 0 : index
    %c0_13 = arith.constant 0 : index
    %4 = vector.load %arg8[%c0_10, %c0_11, %c0_12, %c0_13] : memref<2x18x18x4xf32, #tpu.memory_space<vmem>>, vector<2x18x18x4xf32>
    %c0_14 = arith.constant 0 : index
    %c0_15 = arith.constant 0 : index
    %c0_16 = arith.constant 0 : index
    %c0_17 = arith.constant 0 : index
    %5 = vector.load %arg1[%c0_14, %c0_15, %c0_16, %c0_17] : memref<3x3x4x128xbf16, #tpu.memory_space<vmem>>, vector<3x3x4x128xbf16>
    %cst_18 = arith.constant 0.000000e+00 : f32
    %6 = vector.broadcast %cst_18 : f32 to vector<512x128xf32>
    %7 = vector.extract_strided_slice %4 {offsets = [0, 0, 0, 0], sizes = [2, 16, 16, 4], strides = [1, 1, 1, 1]} : vector<2x18x18x4xf32> to vector<2x16x16x4xf32>
    %8 = vector.shape_cast %7 : vector<2x16x16x4xf32> to vector<512x4xf32>
    %9 = arith.truncf %8 : vector<512x4xf32> to vector<512x4xbf16>
    %10 = vector.extract_strided_slice %5 {offsets = [0, 0, 0, 0], sizes = [1, 1, 4, 128], strides = [1, 1, 1, 1]} : vector<3x3x4x128xbf16> to vector<1x1x4x128xbf16>
    %11 = vector.shape_cast %10 : vector<1x1x4x128xbf16> to vector<4x128xbf16>
    %cst_19 = arith.constant dense<0.000000e+00> : vector<512x128xf32>
    %12 = tpu.matmul %9, %11, %cst_19 {dimension_numbers = #tpu.dot_dimension_numbers<[1], [0], [0], [1], [0, 0, 1, 1], [], []>} : vector<512x4xbf16>, vector<4x128xbf16>, vector<512x128xf32> -> vector<512x128xf32>
    %13 = arith.addf %6, %12 : vector<512x128xf32>
    %14 = vector.extract_strided_slice %4 {offsets = [0, 0, 1, 0], sizes = [2, 16, 16, 4], strides = [1, 1, 1, 1]} : vector<2x18x18x4xf32> to vector<2x16x16x4xf32>
    %15 = vector.shape_cast %14 : vector<2x16x16x4xf32> to vector<512x4xf32>
    %16 = arith.truncf %15 : vector<512x4xf32> to vector<512x4xbf16>
    %17 = vector.extract_strided_slice %5 {offsets = [0, 1, 0, 0], sizes = [1, 1, 4, 128], strides = [1, 1, 1, 1]} : vector<3x3x4x128xbf16> to vector<1x1x4x128xbf16>
    %18 = vector.shape_cast %17 : vector<1x1x4x128xbf16> to vector<4x128xbf16>
    %cst_20 = arith.constant dense<0.000000e+00> : vector<512x128xf32>
    %19 = tpu.matmul %16, %18, %cst_20 {dimension_numbers = #tpu.dot_dimension_numbers<[1], [0], [0], [1], [0, 0, 1, 1], [], []>} : vector<512x4xbf16>, vector<4x128xbf16>, vector<512x128xf32> -> vector<512x128xf32>
    %20 = arith.addf %13, %19 : vector<512x128xf32>
    %21 = vector.extract_strided_slice %4 {offsets = [0, 0, 2, 0], sizes = [2, 16, 16, 4], strides = [1, 1, 1, 1]} : vector<2x18x18x4xf32> to vector<2x16x16x4xf32>
    %22 = vector.shape_cast %21 : vector<2x16x16x4xf32> to vector<512x4xf32>
    %23 = arith.truncf %22 : vector<512x4xf32> to vector<512x4xbf16>
    %24 = vector.extract_strided_slice %5 {offsets = [0, 2, 0, 0], sizes = [1, 1, 4, 128], strides = [1, 1, 1, 1]} : vector<3x3x4x128xbf16> to vector<1x1x4x128xbf16>
    %25 = vector.shape_cast %24 : vector<1x1x4x128xbf16> to vector<4x128xbf16>
    %cst_21 = arith.constant dense<0.000000e+00> : vector<512x128xf32>
    %26 = tpu.matmul %23, %25, %cst_21 {dimension_numbers = #tpu.dot_dimension_numbers<[1], [0], [0], [1], [0, 0, 1, 1], [], []>} : vector<512x4xbf16>, vector<4x128xbf16>, vector<512x128xf32> -> vector<512x128xf32>
    %27 = arith.addf %20, %26 : vector<512x128xf32>
    %28 = vector.extract_strided_slice %4 {offsets = [0, 1, 0, 0], sizes = [2, 16, 16, 4], strides = [1, 1, 1, 1]} : vector<2x18x18x4xf32> to vector<2x16x16x4xf32>
    %29 = vector.shape_cast %28 : vector<2x16x16x4xf32> to vector<512x4xf32>
    %30 = arith.truncf %29 : vector<512x4xf32> to vector<512x4xbf16>
    %31 = vector.extract_strided_slice %5 {offsets = [1, 0, 0, 0], sizes = [1, 1, 4, 128], strides = [1, 1, 1, 1]} : vector<3x3x4x128xbf16> to vector<1x1x4x128xbf16>
    %32 = vector.shape_cast %31 : vector<1x1x4x128xbf16> to vector<4x128xbf16>
    %cst_22 = arith.constant dense<0.000000e+00> : vector<512x128xf32>
    %33 = tpu.matmul %30, %32, %cst_22 {dimension_numbers = #tpu.dot_dimension_numbers<[1], [0], [0], [1], [0, 0, 1, 1], [], []>} : vector<512x4xbf16>, vector<4x128xbf16>, vector<512x128xf32> -> vector<512x128xf32>
    %34 = arith.addf %27, %33 : vector<512x128xf32>
    %35 = vector.extract_strided_slice %4 {offsets = [0, 1, 1, 0], sizes = [2, 16, 16, 4], strides = [1, 1, 1, 1]} : vector<2x18x18x4xf32> to vector<2x16x16x4xf32>
    %36 = vector.shape_cast %35 : vector<2x16x16x4xf32> to vector<512x4xf32>
    %37 = arith.truncf %36 : vector<512x4xf32> to vector<512x4xbf16>
    %38 = vector.extract_strided_slice %5 {offsets = [1, 1, 0, 0], sizes = [1, 1, 4, 128], strides = [1, 1, 1, 1]} : vector<3x3x4x128xbf16> to vector<1x1x4x128xbf16>
    %39 = vector.shape_cast %38 : vector<1x1x4x128xbf16> to vector<4x128xbf16>
    %cst_23 = arith.constant dense<0.000000e+00> : vector<512x128xf32>
    %40 = tpu.matmul %37, %39, %cst_23 {dimension_numbers = #tpu.dot_dimension_numbers<[1], [0], [0], [1], [0, 0, 1, 1], [], []>} : vector<512x4xbf16>, vector<4x128xbf16>, vector<512x128xf32> -> vector<512x128xf32>
    %41 = arith.addf %34, %40 : vector<512x128xf32>
    %42 = vector.extract_strided_slice %4 {offsets = [0, 1, 2, 0], sizes = [2, 16, 16, 4], strides = [1, 1, 1, 1]} : vector<2x18x18x4xf32> to vector<2x16x16x4xf32>
    %43 = vector.shape_cast %42 : vector<2x16x16x4xf32> to vector<512x4xf32>
    %44 = arith.truncf %43 : vector<512x4xf32> to vector<512x4xbf16>
    %45 = vector.extract_strided_slice %5 {offsets = [1, 2, 0, 0], sizes = [1, 1, 4, 128], strides = [1, 1, 1, 1]} : vector<3x3x4x128xbf16> to vector<1x1x4x128xbf16>
    %46 = vector.shape_cast %45 : vector<1x1x4x128xbf16> to vector<4x128xbf16>
    %cst_24 = arith.constant dense<0.000000e+00> : vector<512x128xf32>
    %47 = tpu.matmul %44, %46, %cst_24 {dimension_numbers = #tpu.dot_dimension_numbers<[1], [0], [0], [1], [0, 0, 1, 1], [], []>} : vector<512x4xbf16>, vector<4x128xbf16>, vector<512x128xf32> -> vector<512x128xf32>
    %48 = arith.addf %41, %47 : vector<512x128xf32>
    %49 = vector.extract_strided_slice %4 {offsets = [0, 2, 0, 0], sizes = [2, 16, 16, 4], strides = [1, 1, 1, 1]} : vector<2x18x18x4xf32> to vector<2x16x16x4xf32>
    %50 = vector.shape_cast %49 : vector<2x16x16x4xf32> to vector<512x4xf32>
    %51 = arith.truncf %50 : vector<512x4xf32> to vector<512x4xbf16>
    %52 = vector.extract_strided_slice %5 {offsets = [2, 0, 0, 0], sizes = [1, 1, 4, 128], strides = [1, 1, 1, 1]} : vector<3x3x4x128xbf16> to vector<1x1x4x128xbf16>
    %53 = vector.shape_cast %52 : vector<1x1x4x128xbf16> to vector<4x128xbf16>
    %cst_25 = arith.constant dense<0.000000e+00> : vector<512x128xf32>
    %54 = tpu.matmul %51, %53, %cst_25 {dimension_numbers = #tpu.dot_dimension_numbers<[1], [0], [0], [1], [0, 0, 1, 1], [], []>} : vector<512x4xbf16>, vector<4x128xbf16>, vector<512x128xf32> -> vector<512x128xf32>
    %55 = arith.addf %48, %54 : vector<512x128xf32>
    %56 = vector.extract_strided_slice %4 {offsets = [0, 2, 1, 0], sizes = [2, 16, 16, 4], strides = [1, 1, 1, 1]} : vector<2x18x18x4xf32> to vector<2x16x16x4xf32>
    %57 = vector.shape_cast %56 : vector<2x16x16x4xf32> to vector<512x4xf32>
    %58 = arith.truncf %57 : vector<512x4xf32> to vector<512x4xbf16>
    %59 = vector.extract_strided_slice %5 {offsets = [2, 1, 0, 0], sizes = [1, 1, 4, 128], strides = [1, 1, 1, 1]} : vector<3x3x4x128xbf16> to vector<1x1x4x128xbf16>
    %60 = vector.shape_cast %59 : vector<1x1x4x128xbf16> to vector<4x128xbf16>
    %cst_26 = arith.constant dense<0.000000e+00> : vector<512x128xf32>
    %61 = tpu.matmul %58, %60, %cst_26 {dimension_numbers = #tpu.dot_dimension_numbers<[1], [0], [0], [1], [0, 0, 1, 1], [], []>} : vector<512x4xbf16>, vector<4x128xbf16>, vector<512x128xf32> -> vector<512x128xf32>
    %62 = arith.addf %55, %61 : vector<512x128xf32>
    %63 = vector.extract_strided_slice %4 {offsets = [0, 2, 2, 0], sizes = [2, 16, 16, 4], strides = [1, 1, 1, 1]} : vector<2x18x18x4xf32> to vector<2x16x16x4xf32>
    %64 = vector.shape_cast %63 : vector<2x16x16x4xf32> to vector<512x4xf32>
    %65 = arith.truncf %64 : vector<512x4xf32> to vector<512x4xbf16>
    %66 = vector.extract_strided_slice %5 {offsets = [2, 2, 0, 0], sizes = [1, 1, 4, 128], strides = [1, 1, 1, 1]} : vector<3x3x4x128xbf16> to vector<1x1x4x128xbf16>
    %67 = vector.shape_cast %66 : vector<1x1x4x128xbf16> to vector<4x128xbf16>
    %cst_27 = arith.constant dense<0.000000e+00> : vector<512x128xf32>
    %68 = tpu.matmul %65, %67, %cst_27 {dimension_numbers = #tpu.dot_dimension_numbers<[1], [0], [0], [1], [0, 0, 1, 1], [], []>} : vector<512x4xbf16>, vector<4x128xbf16>, vector<512x128xf32> -> vector<512x128xf32>
    %69 = arith.addf %62, %68 : vector<512x128xf32>
    %c0_28 = arith.constant 0 : index
    %c0_29 = arith.constant 0 : index
    %70 = vector.load %arg2[%c0_28, %c0_29] : memref<1x128xf32, #tpu.memory_space<vmem>>, vector<1x128xf32>
    %c0_30 = arith.constant 0 : index
    %c0_31 = arith.constant 0 : index
    %71 = vector.load %arg3[%c0_30, %c0_31] : memref<1x128xf32, #tpu.memory_space<vmem>>, vector<1x128xf32>
    %cst_32 = arith.constant dense<0.000000e+00> : vector<128xf32>
    %72 = vector.multi_reduction <add>, %69, %cst_32 [0] : vector<512x128xf32> to vector<128xf32>
    %73 = vector.shape_cast %72 : vector<128xf32> to vector<1x128xf32>
    %cst_33 = arith.constant 0.001953125 : f32
    %74 = vector.broadcast %cst_33 : f32 to vector<1x128xf32>
    %75 = arith.mulf %73, %74 : vector<1x128xf32>
    %76 = arith.mulf %69, %69 : vector<512x128xf32>
    %cst_34 = arith.constant dense<0.000000e+00> : vector<128xf32>
    %77 = vector.multi_reduction <add>, %76, %cst_34 [0] : vector<512x128xf32> to vector<128xf32>
    %78 = vector.shape_cast %77 : vector<128xf32> to vector<1x128xf32>
    %cst_35 = arith.constant 0.001953125 : f32
    %79 = vector.broadcast %cst_35 : f32 to vector<1x128xf32>
    %80 = arith.mulf %78, %79 : vector<1x128xf32>
    %81 = arith.mulf %75, %75 : vector<1x128xf32>
    %82 = arith.subf %80, %81 : vector<1x128xf32>
    %cst_36 = arith.constant 0.000000e+00 : f32
    %83 = vector.broadcast %cst_36 : f32 to vector<1x128xf32>
    %84 = arith.maximumf %82, %83 : vector<1x128xf32>
    %cst_37 = arith.constant 9.99999974E-6 : f32
    %85 = vector.broadcast %cst_37 : f32 to vector<1x128xf32>
    %86 = arith.addf %84, %85 : vector<1x128xf32>
    %87 = math.rsqrt %86 : vector<1x128xf32>
    %88 = arith.mulf %70, %87 : vector<1x128xf32>
    %89 = arith.mulf %75, %88 : vector<1x128xf32>
    %90 = arith.subf %71, %89 : vector<1x128xf32>
    %91 = vector.broadcast %88 : vector<1x128xf32> to vector<512x128xf32>
    %92 = arith.mulf %69, %91 : vector<512x128xf32>
    %93 = vector.broadcast %90 : vector<1x128xf32> to vector<512x128xf32>
    %94 = arith.addf %92, %93 : vector<512x128xf32>
    %cst_38 = arith.constant 0.000000e+00 : f32
    %95 = vector.broadcast %cst_38 : f32 to vector<512x128xf32>
    %96 = arith.maximumf %94, %95 : vector<512x128xf32>
    %cst_39 = arith.constant 0.000000e+00 : f32
    %97 = vector.broadcast %cst_39 : f32 to vector<2x18x18x128xf32>
    %c0_40 = arith.constant 0 : index
    %c0_41 = arith.constant 0 : index
    %c0_42 = arith.constant 0 : index
    %c0_43 = arith.constant 0 : index
    %98 = vector.load %arg9[%c0_40, %c0_41, %c0_42, %c0_43] : memref<2x18x18x128xf32, #tpu.memory_space<vmem>>, vector<2x18x18x128xf32>
    tpu.vector_store %arg9[%c0_40, %c0_41, %c0_42, %c0_43], %97 {strides = array<i32>} : memref<2x18x18x128xf32, #tpu.memory_space<vmem>>, vector<2x18x18x128xf32>,
    %99 = vector.shape_cast %96 : vector<512x128xf32> to vector<2x16x16x128xf32>
    %c0_44 = arith.constant 0 : index
    %c1_45 = arith.constant 1 : index
    %c1_46 = arith.constant 1 : index
    %c0_47 = arith.constant 0 : index
    %100 = vector.load %arg9[%c0_44, %c1_45, %c1_46, %c0_47] : memref<2x18x18x128xf32, #tpu.memory_space<vmem>>, vector<2x16x16x128xf32>
    tpu.vector_store %arg9[%c0_44, %c1_45, %c1_46, %c0_47], %99 {strides = array<i32>} : memref<2x18x18x128xf32, #tpu.memory_space<vmem>>, vector<2x16x16x128xf32>,
    %c0_48 = arith.constant 0 : index
    %c0_49 = arith.constant 0 : index
    %c0_50 = arith.constant 0 : index
    %c0_51 = arith.constant 0 : index
    %101 = vector.load %arg9[%c0_48, %c0_49, %c0_50, %c0_51] : memref<2x18x18x128xf32, #tpu.memory_space<vmem>>, vector<2x18x18x128xf32>
    %c0_52 = arith.constant 0 : index
    %c0_53 = arith.constant 0 : index
    %c0_54 = arith.constant 0 : index
    %c0_55 = arith.constant 0 : index
    %102 = vector.load %arg4[%c0_52, %c0_53, %c0_54, %c0_55] : memref<3x3x128x128xbf16, #tpu.memory_space<vmem>>, vector<3x3x128x128xbf16>
    %cst_56 = arith.constant 0.000000e+00 : f32
    %103 = vector.broadcast %cst_56 : f32 to vector<512x128xf32>
    %104 = vector.extract_strided_slice %101 {offsets = [0, 0, 0, 0], sizes = [2, 16, 16, 128], strides = [1, 1, 1, 1]} : vector<2x18x18x128xf32> to vector<2x16x16x128xf32>
    %105 = vector.shape_cast %104 : vector<2x16x16x128xf32> to vector<512x128xf32>
    %106 = arith.truncf %105 : vector<512x128xf32> to vector<512x128xbf16>
    %107 = vector.extract_strided_slice %102 {offsets = [0, 0, 0, 0], sizes = [1, 1, 128, 128], strides = [1, 1, 1, 1]} : vector<3x3x128x128xbf16> to vector<1x1x128x128xbf16>
    %108 = vector.shape_cast %107 : vector<1x1x128x128xbf16> to vector<128x128xbf16>
    %cst_57 = arith.constant dense<0.000000e+00> : vector<512x128xf32>
    %109 = tpu.matmul %106, %108, %cst_57 {dimension_numbers = #tpu.dot_dimension_numbers<[1], [0], [0], [1], [0, 0, 1, 1], [], []>} : vector<512x128xbf16>, vector<128x128xbf16>, vector<512x128xf32> -> vector<512x128xf32>
    %110 = arith.addf %103, %109 : vector<512x128xf32>
    %111 = vector.extract_strided_slice %101 {offsets = [0, 0, 1, 0], sizes = [2, 16, 16, 128], strides = [1, 1, 1, 1]} : vector<2x18x18x128xf32> to vector<2x16x16x128xf32>
    %112 = vector.shape_cast %111 : vector<2x16x16x128xf32> to vector<512x128xf32>
    %113 = arith.truncf %112 : vector<512x128xf32> to vector<512x128xbf16>
    %114 = vector.extract_strided_slice %102 {offsets = [0, 1, 0, 0], sizes = [1, 1, 128, 128], strides = [1, 1, 1, 1]} : vector<3x3x128x128xbf16> to vector<1x1x128x128xbf16>
    %115 = vector.shape_cast %114 : vector<1x1x128x128xbf16> to vector<128x128xbf16>
    %cst_58 = arith.constant dense<0.000000e+00> : vector<512x128xf32>
    %116 = tpu.matmul %113, %115, %cst_58 {dimension_numbers = #tpu.dot_dimension_numbers<[1], [0], [0], [1], [0, 0, 1, 1], [], []>} : vector<512x128xbf16>, vector<128x128xbf16>, vector<512x128xf32> -> vector<512x128xf32>
    %117 = arith.addf %110, %116 : vector<512x128xf32>
    %118 = vector.extract_strided_slice %101 {offsets = [0, 0, 2, 0], sizes = [2, 16, 16, 128], strides = [1, 1, 1, 1]} : vector<2x18x18x128xf32> to vector<2x16x16x128xf32>
    %119 = vector.shape_cast %118 : vector<2x16x16x128xf32> to vector<512x128xf32>
    %120 = arith.truncf %119 : vector<512x128xf32> to vector<512x128xbf16>
    %121 = vector.extract_strided_slice %102 {offsets = [0, 2, 0, 0], sizes = [1, 1, 128, 128], strides = [1, 1, 1, 1]} : vector<3x3x128x128xbf16> to vector<1x1x128x128xbf16>
    %122 = vector.shape_cast %121 : vector<1x1x128x128xbf16> to vector<128x128xbf16>
    %cst_59 = arith.constant dense<0.000000e+00> : vector<512x128xf32>
    %123 = tpu.matmul %120, %122, %cst_59 {dimension_numbers = #tpu.dot_dimension_numbers<[1], [0], [0], [1], [0, 0, 1, 1], [], []>} : vector<512x128xbf16>, vector<128x128xbf16>, vector<512x128xf32> -> vector<512x128xf32>
    %124 = arith.addf %117, %123 : vector<512x128xf32>
    %125 = vector.extract_strided_slice %101 {offsets = [0, 1, 0, 0], sizes = [2, 16, 16, 128], strides = [1, 1, 1, 1]} : vector<2x18x18x128xf32> to vector<2x16x16x128xf32>
    %126 = vector.shape_cast %125 : vector<2x16x16x128xf32> to vector<512x128xf32>
    %127 = arith.truncf %126 : vector<512x128xf32> to vector<512x128xbf16>
    %128 = vector.extract_strided_slice %102 {offsets = [1, 0, 0, 0], sizes = [1, 1, 128, 128], strides = [1, 1, 1, 1]} : vector<3x3x128x128xbf16> to vector<1x1x128x128xbf16>
    %129 = vector.shape_cast %128 : vector<1x1x128x128xbf16> to vector<128x128xbf16>
    %cst_60 = arith.constant dense<0.000000e+00> : vector<512x128xf32>
    %130 = tpu.matmul %127, %129, %cst_60 {dimension_numbers = #tpu.dot_dimension_numbers<[1], [0], [0], [1], [0, 0, 1, 1], [], []>} : vector<512x128xbf16>, vector<128x128xbf16>, vector<512x128xf32> -> vector<512x128xf32>
    %131 = arith.addf %124, %130 : vector<512x128xf32>
    %132 = vector.extract_strided_slice %101 {offsets = [0, 1, 1, 0], sizes = [2, 16, 16, 128], strides = [1, 1, 1, 1]} : vector<2x18x18x128xf32> to vector<2x16x16x128xf32>
    %133 = vector.shape_cast %132 : vector<2x16x16x128xf32> to vector<512x128xf32>
    %134 = arith.truncf %133 : vector<512x128xf32> to vector<512x128xbf16>
    %135 = vector.extract_strided_slice %102 {offsets = [1, 1, 0, 0], sizes = [1, 1, 128, 128], strides = [1, 1, 1, 1]} : vector<3x3x128x128xbf16> to vector<1x1x128x128xbf16>
    %136 = vector.shape_cast %135 : vector<1x1x128x128xbf16> to vector<128x128xbf16>
    %cst_61 = arith.constant dense<0.000000e+00> : vector<512x128xf32>
    %137 = tpu.matmul %134, %136, %cst_61 {dimension_numbers = #tpu.dot_dimension_numbers<[1], [0], [0], [1], [0, 0, 1, 1], [], []>} : vector<512x128xbf16>, vector<128x128xbf16>, vector<512x128xf32> -> vector<512x128xf32>
    %138 = arith.addf %131, %137 : vector<512x128xf32>
    %139 = vector.extract_strided_slice %101 {offsets = [0, 1, 2, 0], sizes = [2, 16, 16, 128], strides = [1, 1, 1, 1]} : vector<2x18x18x128xf32> to vector<2x16x16x128xf32>
    %140 = vector.shape_cast %139 : vector<2x16x16x128xf32> to vector<512x128xf32>
    %141 = arith.truncf %140 : vector<512x128xf32> to vector<512x128xbf16>
    %142 = vector.extract_strided_slice %102 {offsets = [1, 2, 0, 0], sizes = [1, 1, 128, 128], strides = [1, 1, 1, 1]} : vector<3x3x128x128xbf16> to vector<1x1x128x128xbf16>
    %143 = vector.shape_cast %142 : vector<1x1x128x128xbf16> to vector<128x128xbf16>
    %cst_62 = arith.constant dense<0.000000e+00> : vector<512x128xf32>
    %144 = tpu.matmul %141, %143, %cst_62 {dimension_numbers = #tpu.dot_dimension_numbers<[1], [0], [0], [1], [0, 0, 1, 1], [], []>} : vector<512x128xbf16>, vector<128x128xbf16>, vector<512x128xf32> -> vector<512x128xf32>
    %145 = arith.addf %138, %144 : vector<512x128xf32>
    %146 = vector.extract_strided_slice %101 {offsets = [0, 2, 0, 0], sizes = [2, 16, 16, 128], strides = [1, 1, 1, 1]} : vector<2x18x18x128xf32> to vector<2x16x16x128xf32>
    %147 = vector.shape_cast %146 : vector<2x16x16x128xf32> to vector<512x128xf32>
    %148 = arith.truncf %147 : vector<512x128xf32> to vector<512x128xbf16>
    %149 = vector.extract_strided_slice %102 {offsets = [2, 0, 0, 0], sizes = [1, 1, 128, 128], strides = [1, 1, 1, 1]} : vector<3x3x128x128xbf16> to vector<1x1x128x128xbf16>
    %150 = vector.shape_cast %149 : vector<1x1x128x128xbf16> to vector<128x128xbf16>
    %cst_63 = arith.constant dense<0.000000e+00> : vector<512x128xf32>
    %151 = tpu.matmul %148, %150, %cst_63 {dimension_numbers = #tpu.dot_dimension_numbers<[1], [0], [0], [1], [0, 0, 1, 1], [], []>} : vector<512x128xbf16>, vector<128x128xbf16>, vector<512x128xf32> -> vector<512x128xf32>
    %152 = arith.addf %145, %151 : vector<512x128xf32>
    %153 = vector.extract_strided_slice %101 {offsets = [0, 2, 1, 0], sizes = [2, 16, 16, 128], strides = [1, 1, 1, 1]} : vector<2x18x18x128xf32> to vector<2x16x16x128xf32>
    %154 = vector.shape_cast %153 : vector<2x16x16x128xf32> to vector<512x128xf32>
    %155 = arith.truncf %154 : vector<512x128xf32> to vector<512x128xbf16>
    %156 = vector.extract_strided_slice %102 {offsets = [2, 1, 0, 0], sizes = [1, 1, 128, 128], strides = [1, 1, 1, 1]} : vector<3x3x128x128xbf16> to vector<1x1x128x128xbf16>
    %157 = vector.shape_cast %156 : vector<1x1x128x128xbf16> to vector<128x128xbf16>
    %cst_64 = arith.constant dense<0.000000e+00> : vector<512x128xf32>
    %158 = tpu.matmul %155, %157, %cst_64 {dimension_numbers = #tpu.dot_dimension_numbers<[1], [0], [0], [1], [0, 0, 1, 1], [], []>} : vector<512x128xbf16>, vector<128x128xbf16>, vector<512x128xf32> -> vector<512x128xf32>
    %159 = arith.addf %152, %158 : vector<512x128xf32>
    %160 = vector.extract_strided_slice %101 {offsets = [0, 2, 2, 0], sizes = [2, 16, 16, 128], strides = [1, 1, 1, 1]} : vector<2x18x18x128xf32> to vector<2x16x16x128xf32>
    %161 = vector.shape_cast %160 : vector<2x16x16x128xf32> to vector<512x128xf32>
    %162 = arith.truncf %161 : vector<512x128xf32> to vector<512x128xbf16>
    %163 = vector.extract_strided_slice %102 {offsets = [2, 2, 0, 0], sizes = [1, 1, 128, 128], strides = [1, 1, 1, 1]} : vector<3x3x128x128xbf16> to vector<1x1x128x128xbf16>
    %164 = vector.shape_cast %163 : vector<1x1x128x128xbf16> to vector<128x128xbf16>
    %cst_65 = arith.constant dense<0.000000e+00> : vector<512x128xf32>
    %165 = tpu.matmul %162, %164, %cst_65 {dimension_numbers = #tpu.dot_dimension_numbers<[1], [0], [0], [1], [0, 0, 1, 1], [], []>} : vector<512x128xbf16>, vector<128x128xbf16>, vector<512x128xf32> -> vector<512x128xf32>
    %166 = arith.addf %159, %165 : vector<512x128xf32>
    %c0_66 = arith.constant 0 : index
    %c0_67 = arith.constant 0 : index
    %167 = vector.load %arg5[%c0_66, %c0_67] : memref<1x128xf32, #tpu.memory_space<vmem>>, vector<1x128xf32>
    %c0_68 = arith.constant 0 : index
    %c0_69 = arith.constant 0 : index
    %168 = vector.load %arg6[%c0_68, %c0_69] : memref<1x128xf32, #tpu.memory_space<vmem>>, vector<1x128xf32>
    %cst_70 = arith.constant dense<0.000000e+00> : vector<128xf32>
    %169 = vector.multi_reduction <add>, %166, %cst_70 [0] : vector<512x128xf32> to vector<128xf32>
    %170 = vector.shape_cast %169 : vector<128xf32> to vector<1x128xf32>
    %cst_71 = arith.constant 0.001953125 : f32
    %171 = vector.broadcast %cst_71 : f32 to vector<1x128xf32>
    %172 = arith.mulf %170, %171 : vector<1x128xf32>
    %173 = arith.mulf %166, %166 : vector<512x128xf32>
    %cst_72 = arith.constant dense<0.000000e+00> : vector<128xf32>
    %174 = vector.multi_reduction <add>, %173, %cst_72 [0] : vector<512x128xf32> to vector<128xf32>
    %175 = vector.shape_cast %174 : vector<128xf32> to vector<1x128xf32>
    %cst_73 = arith.constant 0.001953125 : f32
    %176 = vector.broadcast %cst_73 : f32 to vector<1x128xf32>
    %177 = arith.mulf %175, %176 : vector<1x128xf32>
    %178 = arith.mulf %172, %172 : vector<1x128xf32>
    %179 = arith.subf %177, %178 : vector<1x128xf32>
    %cst_74 = arith.constant 0.000000e+00 : f32
    %180 = vector.broadcast %cst_74 : f32 to vector<1x128xf32>
    %181 = arith.maximumf %179, %180 : vector<1x128xf32>
    %cst_75 = arith.constant 9.99999974E-6 : f32
    %182 = vector.broadcast %cst_75 : f32 to vector<1x128xf32>
    %183 = arith.addf %181, %182 : vector<1x128xf32>
    %184 = math.rsqrt %183 : vector<1x128xf32>
    %185 = arith.mulf %167, %184 : vector<1x128xf32>
    %186 = arith.mulf %172, %185 : vector<1x128xf32>
    %187 = arith.subf %168, %186 : vector<1x128xf32>
    %188 = vector.broadcast %185 : vector<1x128xf32> to vector<512x128xf32>
    %189 = arith.mulf %166, %188 : vector<512x128xf32>
    %190 = vector.broadcast %187 : vector<1x128xf32> to vector<512x128xf32>
    %191 = arith.addf %189, %190 : vector<512x128xf32>
    %cst_76 = arith.constant 0.000000e+00 : f32
    %192 = vector.broadcast %cst_76 : f32 to vector<512x128xf32>
    %193 = arith.maximumf %191, %192 : vector<512x128xf32>
    %c0_77 = arith.constant 0 : index
    %c0_78 = arith.constant 0 : index
    %194 = vector.load %arg7[%c0_77, %c0_78] : memref<512x128xf32, #tpu.memory_space<vmem>>, vector<512x128xf32>
    tpu.vector_store %arg7[%c0_77, %c0_78], %193 {strides = array<i32>} : memref<512x128xf32, #tpu.memory_space<vmem>>, vector<512x128xf32>,
    return
  }
}

</mosaic_0001>

<llo_original>
// kernel: tpu_custom_call.1
$region0: #{tpu_custom_call.1}
  #allocation0 [shape = 'u32[]', space=smem, size = 0x4, offset = 0x4, fixed_abs, tag = 'smem constant byte address 0x4 - core index']
  #allocation1 [shape = 'u32[72,128]{1,0:T(1,128)}', space=vmem, size = 0x9000, scoped, tag = 'internal scratch']
  #allocation2 [shape = 'f32[2,18,18,4]{3,2,1,0:T(8,128)}', space=vmem, size = 0x6c000, scoped, tag = 'scratch operand']
  #allocation3 [shape = 'f32[2,18,18,128]{3,2,1,0:T(8,128)}', space=vmem, size = 0x6c000, scoped, tag = 'scratch operand']
  %s0 = inlined_call_operand.vmem [shape: f32[2,16,16,4], index: 0, kind: input, shape index: {}]
  %s1 = inlined_call_operand.vmem [shape: bf16[3,3,4,128], index: 1, kind: input, shape index: {}]
  %s2 = inlined_call_operand.vmem [shape: f32[1,128], index: 2, kind: input, shape index: {}]
  %s3 = inlined_call_operand.vmem [shape: f32[1,128], index: 3, kind: input, shape index: {}]
  %s4 = inlined_call_operand.vmem [shape: bf16[3,3,128,128], index: 4, kind: input, shape index: {}]
  %s5 = inlined_call_operand.vmem [shape: f32[1,128], index: 5, kind: input, shape index: {}]
  %s6 = inlined_call_operand.vmem [shape: f32[1,128], index: 6, kind: input, shape index: {}]
  %s7 = inlined_call_operand.hbm [shape: f32[512,128], index: 7, kind: output, shape index: {}]
  %s8 = sld [smem:[#allocation0]]
  $region38: #{tpu_custom_call.1} parent=0
    _
  %s10 = ssub.s32 1, %s8
  %s11 = scalar_select 0, %s10, %s8
  $region1: #{tpu_custom_call.1} parent=0
    #allocation4 [shape = 'u8[262144]{0}', space=vmem, size = 0x40000, scoped, tag = 'output window, operand 0, single buffered']
    #allocation5 [shape = 's32[1]{0}', space=sflag, size = 0x4, scoped, tag = 'scoped memory for tpu_custom_call.1']
    %12 = vsyncpa [#allocation5], 0
    // Predicated region
    $region2: #{tpu_custom_call.1} parent=1 // pred_check
      _
    $region3: #{tpu_custom_call.1} parent=1 // pred_check_branch
      %14 = sbr.rel (0) target = $region5
    $region4: #{tpu_custom_call.1} parent=1 // pred_region
      _
    $region5: #{tpu_custom_call.1} parent=1 // pred_fallthru
      _
    // Predicated region
    $region6: #{tpu_custom_call.1} parent=1 // pred_check
      _
    $region7: #{tpu_custom_call.1} parent=1 // pred_check_branch
      %16 = sbr.rel (0) target = $region9
    $region8: #{tpu_custom_call.1} parent=1 // pred_region
      _
    $region9: #{tpu_custom_call.1} parent=1 // pred_fallthru
      _
    // Predicated region
    $region10: #{tpu_custom_call.1} parent=1 // pred_check
      _
    $region11: #{tpu_custom_call.1} parent=1 // pred_check_branch
      %18 = sbr.rel (0) target = $region13
    $region12: #{tpu_custom_call.1} parent=1 // pred_region
      _
    $region13: #{tpu_custom_call.1} parent=1 // pred_fallthru
      _
    // Predicated region
    $region14: #{tpu_custom_call.1} parent=1 // pred_check
      _
    $region15: #{tpu_custom_call.1} parent=1 // pred_check_branch
      %20 = sbr.rel (0) target = $region17
    $region16: #{tpu_custom_call.1} parent=1 // pred_region
      _
    $region17: #{tpu_custom_call.1} parent=1 // pred_fallthru
      _
    // Predicated region
    $region18: #{tpu_custom_call.1} parent=1 // pred_check
      _
    $region19: #{tpu_custom_call.1} parent=1 // pred_check_branch
      %22 = sbr.rel (0) target = $region21
    $region20: #{tpu_custom_call.1} parent=1 // pred_region
      _
    $region21: #{tpu_custom_call.1} parent=1 // pred_fallthru
      _
    // Predicated region
    $region22: #{tpu_custom_call.1} parent=1 // pred_check
      _
    $region23: #{tpu_custom_call.1} parent=1 // pred_check_branch
      %24 = sbr.rel (0) target = $region25
    $region24: #{tpu_custom_call.1} parent=1 // pred_region
      _
    $region25: #{tpu_custom_call.1} parent=1 // pred_fallthru
      _
    // Predicated region
    $region26: #{tpu_custom_call.1} parent=1 // pred_check
      _
    $region27: #{tpu_custom_call.1} parent=1 // pred_check_branch
      %26 = sbr.rel (0) target = $region29
    $region28: #{tpu_custom_call.1} parent=1 // pred_region
      _
    $region29: #{tpu_custom_call.1} parent=1 // pred_fallthru
      _
    %vm28 = vcmask 31744
    %29 = vst.msk [vmem:[#allocation2] sm:$0xff] %vm28, 0.0
    %30 = vst.msk [vmem:[#allocation2 + $0x8] sm:$0xff] %vm28, 0.0
    %vm31 = vcmask 25600
    %32 = vst.msk [vmem:[#allocation2 + $0x10] sm:$0x3] %vm31, 0.0
    %33 = vst.msk [vmem:[#allocation2 + $0x18] sm:$0xff] %vm28, 0.0
    %34 = vst.msk [vmem:[#allocation2 + $0x20] sm:$0xff] %vm28, 0.0
    %35 = vst.msk [vmem:[#allocation2 + $0x28] sm:$0x3] %vm31, 0.0
    %36 = vst.msk [vmem:[#allocation2 + $0x30] sm:$0xff] %vm28, 0.0
    %37 = vst.msk [vmem:[#allocation2 + $0x38] sm:$0xff] %vm28, 0.0
    %38 = vst.msk [vmem:[#allocation2 + $0x40] sm:$0x3] %vm31, 0.0
    %39 = vst.msk [vmem:[#allocation2 + $0x48] sm:$0xff] %vm28, 0.0
    %40 = vst.msk [vmem:[#allocation2 + $0x50] sm:$0xff] %vm28, 0.0
    %41 = vst.msk [vmem:[#allocation2 + $0x58] sm:$0x3] %vm31, 0.0
    %42 = vst.msk [vmem:[#allocation2 + $0x60] sm:$0xff] %vm28, 0.0
    %43 = vst.msk [vmem:[#allocation2 + $0x68] sm:$0xff] %vm28, 0.0
    %44 = vst.msk [vmem:[#allocation2 + $0x70] sm:$0x3] %vm31, 0.0
    %45 = vst.msk [vmem:[#allocation2 + $0x78] sm:$0xff] %vm28, 0.0
    %46 = vst.msk [vmem:[#allocation2 + $0x80] sm:$0xff] %vm28, 0.0
    %47 = vst.msk [vmem:[#allocation2 + $0x88] sm:$0x3] %vm31, 0.0
    %48 = vst.msk [vmem:[#allocation2 + $0x90] sm:$0xff] %vm28, 0.0
    %49 = vst.msk [vmem:[#allocation2 + $0x98] sm:$0xff] %vm28, 0.0
    %50 = vst.msk [vmem:[#allocation2 + $0xa0] sm:$0x3] %vm31, 0.0
    %51 = vst.msk [vmem:[#allocation2 + $0xa8] sm:$0xff] %vm28, 0.0
    %52 = vst.msk [vmem:[#allocation2 + $0xb0] sm:$0xff] %vm28, 0.0
    %53 = vst.msk [vmem:[#allocation2 + $0xb8] sm:$0x3] %vm31, 0.0
    %54 = vst.msk [vmem:[#allocation2 + $0xc0] sm:$0xff] %vm28, 0.0
    %55 = vst.msk [vmem:[#allocation2 + $0xc8] sm:$0xff] %vm28, 0.0
    %56 = vst.msk [vmem:[#allocation2 + $0xd0] sm:$0x3] %vm31, 0.0
    %57 = vst.msk [vmem:[#allocation2 + $0xd8] sm:$0xff] %vm28, 0.0
    %58 = vst.msk [vmem:[#allocation2 + $0xe0] sm:$0xff] %vm28, 0.0
    %59 = vst.msk [vmem:[#allocation2 + $0xe8] sm:$0x3] %vm31, 0.0
    %60 = vst.msk [vmem:[#allocation2 + $0xf0] sm:$0xff] %vm28, 0.0
    %61 = vst.msk [vmem:[#allocation2 + $0xf8] sm:$0xff] %vm28, 0.0
    %62 = vst.msk [vmem:[#allocation2 + $0x100] sm:$0x3] %vm31, 0.0
    %63 = vst.msk [vmem:[#allocation2 + $0x108] sm:$0xff] %vm28, 0.0
    %64 = vst.msk [vmem:[#allocation2 + $0x110] sm:$0xff] %vm28, 0.0
    %65 = vst.msk [vmem:[#allocation2 + $0x118] sm:$0x3] %vm31, 0.0
    %66 = vst.msk [vmem:[#allocation2 + $0x120] sm:$0xff] %vm28, 0.0
    %67 = vst.msk [vmem:[#allocation2 + $0x128] sm:$0xff] %vm28, 0.0
    %68 = vst.msk [vmem:[#allocation2 + $0x130] sm:$0x3] %vm31, 0.0
    %69 = vst.msk [vmem:[#allocation2 + $0x138] sm:$0xff] %vm28, 0.0
    %70 = vst.msk [vmem:[#allocation2 + $0x140] sm:$0xff] %vm28, 0.0
    %71 = vst.msk [vmem:[#allocation2 + $0x148] sm:$0x3] %vm31, 0.0
    %72 = vst.msk [vmem:[#allocation2 + $0x150] sm:$0xff] %vm28, 0.0
    %73 = vst.msk [vmem:[#allocation2 + $0x158] sm:$0xff] %vm28, 0.0
    %74 = vst.msk [vmem:[#allocation2 + $0x160] sm:$0x3] %vm31, 0.0
    %75 = vst.msk [vmem:[#allocation2 + $0x168] sm:$0xff] %vm28, 0.0
    %76 = vst.msk [vmem:[#allocation2 + $0x170] sm:$0xff] %vm28, 0.0
    %77 = vst.msk [vmem:[#allocation2 + $0x178] sm:$0x3] %vm31, 0.0
    %78 = vst.msk [vmem:[#allocation2 + $0x180] sm:$0xff] %vm28, 0.0
    %79 = vst.msk [vmem:[#allocation2 + $0x188] sm:$0xff] %vm28, 0.0
    %80 = vst.msk [vmem:[#allocation2 + $0x190] sm:$0x3] %vm31, 0.0
    %81 = vst.msk [vmem:[#allocation2 + $0x198] sm:$0xff] %vm28, 0.0
    %82 = vst.msk [vmem:[#allocation2 + $0x1a0] sm:$0xff] %vm28, 0.0
    %83 = vst.msk [vmem:[#allocation2 + $0x1a8] sm:$0x3] %vm31, 0.0
    %84 = vst.msk [vmem:[#allocation2 + $0x1b0] sm:$0xff] %vm28, 0.0
    %85 = vst.msk [vmem:[#allocation2 + $0x1b8] sm:$0xff] %vm28, 0.0
    %86 = vst.msk [vmem:[#allocation2 + $0x1c0] sm:$0x3] %vm31, 0.0
    %87 = vst.msk [vmem:[#allocation2 + $0x1c8] sm:$0xff] %vm28, 0.0
    %88 = vst.msk [vmem:[#allocation2 + $0x1d0] sm:$0xff] %vm28, 0.0
    %89 = vst.msk [vmem:[#allocation2 + $0x1d8] sm:$0x3] %vm31, 0.0
    %90 = vst.msk [vmem:[#allocation2 + $0x1e0] sm:$0xff] %vm28, 0.0
    %91 = vst.msk [vmem:[#allocation2 + $0x1e8] sm:$0xff] %vm28, 0.0
    %92 = vst.msk [vmem:[#allocation2 + $0x1f0] sm:$0x3] %vm31, 0.0
    %93 = vst.msk [vmem:[#allocation2 + $0x1f8] sm:$0xff] %vm28, 0.0
    %94 = vst.msk [vmem:[#allocation2 + $0x200] sm:$0xff] %vm28, 0.0
    %95 = vst.msk [vmem:[#allocation2 + $0x208] sm:$0x3] %vm31, 0.0
    %96 = vst.msk [vmem:[#allocation2 + $0x210] sm:$0xff] %vm28, 0.0
    %97 = vst.msk [vmem:[#allocation2 + $0x218] sm:$0xff] %vm28, 0.0
    %98 = vst.msk [vmem:[#allocation2 + $0x220] sm:$0x3] %vm31, 0.0
    %99 = vst.msk [vmem:[#allocation2 + $0x228] sm:$0xff] %vm28, 0.0
    %100 = vst.msk [vmem:[#allocation2 + $0x230] sm:$0xff] %vm28, 0.0
    %101 = vst.msk [vmem:[#allocation2 + $0x238] sm:$0x3] %vm31, 0.0
    %102 = vst.msk [vmem:[#allocation2 + $0x240] sm:$0xff] %vm28, 0.0
    %103 = vst.msk [vmem:[#allocation2 + $0x248] sm:$0xff] %vm28, 0.0
    %104 = vst.msk [vmem:[#allocation2 + $0x250] sm:$0x3] %vm31, 0.0
    %105 = vst.msk [vmem:[#allocation2 + $0x258] sm:$0xff] %vm28, 0.0
    %106 = vst.msk [vmem:[#allocation2 + $0x260] sm:$0xff] %vm28, 0.0
    %107 = vst.msk [vmem:[#allocation2 + $0x268] sm:$0x3] %vm31, 0.0
    %108 = vst.msk [vmem:[#allocation2 + $0x270] sm:$0xff] %vm28, 0.0
    %109 = vst.msk [vmem:[#allocation2 + $0x278] sm:$0xff] %vm28, 0.0
    %110 = vst.msk [vmem:[#allocation2 + $0x280] sm:$0x3] %vm31, 0.0
    %111 = vst.msk [vmem:[#allocation2 + $0x288] sm:$0xff] %vm28, 0.0
    %112 = vst.msk [vmem:[#allocation2 + $0x290] sm:$0xff] %vm28, 0.0
    %113 = vst.msk [vmem:[#allocation2 + $0x298] sm:$0x3] %vm31, 0.0
    %114 = vst.msk [vmem:[#allocation2 + $0x2a0] sm:$0xff] %vm28, 0.0
    %115 = vst.msk [vmem:[#allocation2 + $0x2a8] sm:$0xff] %vm28, 0.0
    %116 = vst.msk [vmem:[#allocation2 + $0x2b0] sm:$0x3] %vm31, 0.0
    %117 = vst.msk [vmem:[#allocation2 + $0x2b8] sm:$0xff] %vm28, 0.0
    %118 = vst.msk [vmem:[#allocation2 + $0x2c0] sm:$0xff] %vm28, 0.0
    %119 = vst.msk [vmem:[#allocation2 + $0x2c8] sm:$0x3] %vm31, 0.0
    %120 = vst.msk [vmem:[#allocation2 + $0x2d0] sm:$0xff] %vm28, 0.0
    %121 = vst.msk [vmem:[#allocation2 + $0x2d8] sm:$0xff] %vm28, 0.0
    %122 = vst.msk [vmem:[#allocation2 + $0x2e0] sm:$0x3] %vm31, 0.0
    %123 = vst.msk [vmem:[#allocation2 + $0x2e8] sm:$0xff] %vm28, 0.0
    %124 = vst.msk [vmem:[#allocation2 + $0x2f0] sm:$0xff] %vm28, 0.0
    %125 = vst.msk [vmem:[#allocation2 + $0x2f8] sm:$0x3] %vm31, 0.0
    %126 = vst.msk [vmem:[#allocation2 + $0x300] sm:$0xff] %vm28, 0.0
    %127 = vst.msk [vmem:[#allocation2 + $0x308] sm:$0xff] %vm28, 0.0
    %128 = vst.msk [vmem:[#allocation2 + $0x310] sm:$0x3] %vm31, 0.0
    %129 = vst.msk [vmem:[#allocation2 + $0x318] sm:$0xff] %vm28, 0.0
    %130 = vst.msk [vmem:[#allocation2 + $0x320] sm:$0xff] %vm28, 0.0
    %131 = vst.msk [vmem:[#allocation2 + $0x328] sm:$0x3] %vm31, 0.0
    %132 = vst.msk [vmem:[#allocation2 + $0x330] sm:$0xff] %vm28, 0.0
    %133 = vst.msk [vmem:[#allocation2 + $0x338] sm:$0xff] %vm28, 0.0
    %134 = vst.msk [vmem:[#allocation2 + $0x340] sm:$0x3] %vm31, 0.0
    %135 = vst.msk [vmem:[#allocation2 + $0x348] sm:$0xff] %vm28, 0.0
    %136 = vst.msk [vmem:[#allocation2 + $0x350] sm:$0xff] %vm28, 0.0
    %137 = vst.msk [vmem:[#allocation2 + $0x358] sm:$0x3] %vm31, 0.0
    %v138 = vld [vmem:[%s0] sm:$0xff]
    %v139 = vld [vmem:[%s0 + $0x8] sm:$0xff]
    %v140 = vld [vmem:[%s0 + $0x10] sm:$0xff]
    %v141 = vld [vmem:[%s0 + $0x18] sm:$0xff]
    %v142 = vld [vmem:[%s0 + $0x20] sm:$0xff]
    %v143 = vld [vmem:[%s0 + $0x28] sm:$0xff]
    %v144 = vld [vmem:[%s0 + $0x30] sm:$0xff]
    %v145 = vld [vmem:[%s0 + $0x38] sm:$0xff]
    %v146 = vld [vmem:[%s0 + $0x40] sm:$0xff]
    %v147 = vld [vmem:[%s0 + $0x48] sm:$0xff]
    %v148 = vld [vmem:[%s0 + $0x50] sm:$0xff]
    %v149 = vld [vmem:[%s0 + $0x58] sm:$0xff]
    %v150 = vld [vmem:[%s0 + $0x60] sm:$0xff]
    %v151 = vld [vmem:[%s0 + $0x68] sm:$0xff]
    %v152 = vld [vmem:[%s0 + $0x70] sm:$0xff]
    %v153 = vld [vmem:[%s0 + $0x78] sm:$0xff]
    %v154 = vld [vmem:[%s0 + $0x80] sm:$0xff]
    %v155 = vld [vmem:[%s0 + $0x88] sm:$0xff]
    %v156 = vld [vmem:[%s0 + $0x90] sm:$0xff]
    %v157 = vld [vmem:[%s0 + $0x98] sm:$0xff]
    %v158 = vld [vmem:[%s0 + $0xa0] sm:$0xff]
    %v159 = vld [vmem:[%s0 + $0xa8] sm:$0xff]
    %v160 = vld [vmem:[%s0 + $0xb0] sm:$0xff]
    %v161 = vld [vmem:[%s0 + $0xb8] sm:$0xff]
    %v162 = vld [vmem:[%s0 + $0xc0] sm:$0xff]
    %v163 = vld [vmem:[%s0 + $0xc8] sm:$0xff]
    %v164 = vld [vmem:[%s0 + $0xd0] sm:$0xff]
    %v165 = vld [vmem:[%s0 + $0xd8] sm:$0xff]
    %v166 = vld [vmem:[%s0 + $0xe0] sm:$0xff]
    %v167 = vld [vmem:[%s0 + $0xe8] sm:$0xff]
    %v168 = vld [vmem:[%s0 + $0xf0] sm:$0xff]
    %v169 = vld [vmem:[%s0 + $0xf8] sm:$0xff]
    %v170 = vld [vmem:[%s0 + $0x100] sm:$0xff]
    %v171 = vld [vmem:[%s0 + $0x108] sm:$0xff]
    %v172 = vld [vmem:[%s0 + $0x110] sm:$0xff]
    %v173 = vld [vmem:[%s0 + $0x118] sm:$0xff]
    %v174 = vld [vmem:[%s0 + $0x120] sm:$0xff]
    %v175 = vld [vmem:[%s0 + $0x128] sm:$0xff]
    %v176 = vld [vmem:[%s0 + $0x130] sm:$0xff]
    %v177 = vld [vmem:[%s0 + $0x138] sm:$0xff]
    %v178 = vld [vmem:[%s0 + $0x140] sm:$0xff]
    %v179 = vld [vmem:[%s0 + $0x148] sm:$0xff]
    %v180 = vld [vmem:[%s0 + $0x150] sm:$0xff]
    %v181 = vld [vmem:[%s0 + $0x158] sm:$0xff]
    %v182 = vld [vmem:[%s0 + $0x160] sm:$0xff]
    %v183 = vld [vmem:[%s0 + $0x168] sm:$0xff]
    %v184 = vld [vmem:[%s0 + $0x170] sm:$0xff]
    %v185 = vld [vmem:[%s0 + $0x178] sm:$0xff]
    %v186 = vld [vmem:[%s0 + $0x180] sm:$0xff]
    %v187 = vld [vmem:[%s0 + $0x188] sm:$0xff]
    %v188 = vld [vmem:[%s0 + $0x190] sm:$0xff]
    %v189 = vld [vmem:[%s0 + $0x198] sm:$0xff]
    %v190 = vld [vmem:[%s0 + $0x1a0] sm:$0xff]
    %v191 = vld [vmem:[%s0 + $0x1a8] sm:$0xff]
    %v192 = vld [vmem:[%s0 + $0x1b0] sm:$0xff]
    %v193 = vld [vmem:[%s0 + $0x1b8] sm:$0xff]
    %v194 = vld [vmem:[%s0 + $0x1c0] sm:$0xff]
    %v195 = vld [vmem:[%s0 + $0x1c8] sm:$0xff]
    %v196 = vld [vmem:[%s0 + $0x1d0] sm:$0xff]
    %v197 = vld [vmem:[%s0 + $0x1d8] sm:$0xff]
    %v198 = vld [vmem:[%s0 + $0x1e0] sm:$0xff]
    %v199 = vld [vmem:[%s0 + $0x1e8] sm:$0xff]
    %v200 = vld [vmem:[%s0 + $0x1f0] sm:$0xff]
    %v201 = vld [vmem:[%s0 + $0x1f8] sm:$0xff]
    %s202 = scalar_lea.vmem [#allocation2], 24
    %203 = vst.msk [vmem:[%s202 + $0x1] sm:$0xff] %vm28, %v138
    %204 = vst.msk [vmem:[%s202 + $0x9] sm:$0xff] %vm28, %v139
    %205 = vst.msk [vmem:[%s202 + $0x19] sm:$0xff] %vm28, %v140
    %206 = vst.msk [vmem:[%s202 + $0x21] sm:$0xff] %vm28, %v141
    %207 = vst.msk [vmem:[%s202 + $0x31] sm:$0xff] %vm28, %v142
    %208 = vst.msk [vmem:[%s202 + $0x39] sm:$0xff] %vm28, %v143
    %209 = vst.msk [vmem:[%s202 + $0x49] sm:$0xff] %vm28, %v144
    %210 = vst.msk [vmem:[%s202 + $0x51] sm:$0xff] %vm28, %v145
    %211 = vst.msk [vmem:[%s202 + $0x61] sm:$0xff] %vm28, %v146
    %212 = vst.msk [vmem:[%s202 + $0x69] sm:$0xff] %vm28, %v147
    %213 = vst.msk [vmem:[%s202 + $0x79] sm:$0xff] %vm28, %v148
    %214 = vst.msk [vmem:[%s202 + $0x81] sm:$0xff] %vm28, %v149
    %215 = vst.msk [vmem:[%s202 + $0x91] sm:$0xff] %vm28, %v150
    %216 = vst.msk [vmem:[%s202 + $0x99] sm:$0xff] %vm28, %v151
    %217 = vst.msk [vmem:[%s202 + $0xa9] sm:$0xff] %vm28, %v152
    %218 = vst.msk [vmem:[%s202 + $0xb1] sm:$0xff] %vm28, %v153
    %219 = vst.msk [vmem:[%s202 + $0xc1] sm:$0xff] %vm28, %v154
    %220 = vst.msk [vmem:[%s202 + $0xc9] sm:$0xff] %vm28, %v155
    %221 = vst.msk [vmem:[%s202 + $0xd9] sm:$0xff] %vm28, %v156
    %222 = vst.msk [vmem:[%s202 + $0xe1] sm:$0xff] %vm28, %v157
    %223 = vst.msk [vmem:[%s202 + $0xf1] sm:$0xff] %vm28, %v158
    %224 = vst.msk [vmem:[%s202 + $0xf9] sm:$0xff] %vm28, %v159
    %225 = vst.msk [vmem:[%s202 + $0x109] sm:$0xff] %vm28, %v160
    %226 = vst.msk [vmem:[%s202 + $0x111] sm:$0xff] %vm28, %v161
    %227 = vst.msk [vmem:[%s202 + $0x121] sm:$0xff] %vm28, %v162
    %228 = vst.msk [vmem:[%s202 + $0x129] sm:$0xff] %vm28, %v163
    %229 = vst.msk [vmem:[%s202 + $0x139] sm:$0xff] %vm28, %v164
    %230 = vst.msk [vmem:[%s202 + $0x141] sm:$0xff] %vm28, %v165
    %231 = vst.msk [vmem:[%s202 + $0x151] sm:$0xff] %vm28, %v166
    %232 = vst.msk [vmem:[%s202 + $0x159] sm:$0xff] %vm28, %v167
    %233 = vst.msk [vmem:[%s202 + $0x169] sm:$0xff] %vm28, %v168
    %234 = vst.msk [vmem:[%s202 + $0x171] sm:$0xff] %vm28, %v169
    %235 = vst.msk [vmem:[%s202 + $0x1b1] sm:$0xff] %vm28, %v170
    %236 = vst.msk [vmem:[%s202 + $0x1b9] sm:$0xff] %vm28, %v171
    %237 = vst.msk [vmem:[%s202 + $0x1c9] sm:$0xff] %vm28, %v172
    %238 = vst.msk [vmem:[%s202 + $0x1d1] sm:$0xff] %vm28, %v173
    %239 = vst.msk [vmem:[%s202 + $0x1e1] sm:$0xff] %vm28, %v174
    %240 = vst.msk [vmem:[%s202 + $0x1e9] sm:$0xff] %vm28, %v175
    %241 = vst.msk [vmem:[%s202 + $0x1f9] sm:$0xff] %vm28, %v176
    %242 = vst.msk [vmem:[%s202 + $0x201] sm:$0xff] %vm28, %v177
    %243 = vst.msk [vmem:[%s202 + $0x211] sm:$0xff] %vm28, %v178
    %244 = vst.msk [vmem:[%s202 + $0x219] sm:$0xff] %vm28, %v179
    %245 = vst.msk [vmem:[%s202 + $0x229] sm:$0xff] %vm28, %v180
    %246 = vst.msk [vmem:[%s202 + $0x231] sm:$0xff] %vm28, %v181
    %247 = vst.msk [vmem:[%s202 + $0x241] sm:$0xff] %vm28, %v182
    %248 = vst.msk [vmem:[%s202 + $0x249] sm:$0xff] %vm28, %v183
    %249 = vst.msk [vmem:[%s202 + $0x259] sm:$0xff] %vm28, %v184
    %250 = vst.msk [vmem:[%s202 + $0x261] sm:$0xff] %vm28, %v185
    %251 = vst.msk [vmem:[%s202 + $0x271] sm:$0xff] %vm28, %v186
    %252 = vst.msk [vmem:[%s202 + $0x279] sm:$0xff] %vm28, %v187
    %253 = vst.msk [vmem:[%s202 + $0x289] sm:$0xff] %vm28, %v188
    %254 = vst.msk [vmem:[%s202 + $0x291] sm:$0xff] %vm28, %v189
    %255 = vst.msk [vmem:[%s202 + $0x2a1] sm:$0xff] %vm28, %v190
    %256 = vst.msk [vmem:[%s202 + $0x2a9] sm:$0xff] %vm28, %v191
    %257 = vst.msk [vmem:[%s202 + $0x2b9] sm:$0xff] %vm28, %v192
    %258 = vst.msk [vmem:[%s202 + $0x2c1] sm:$0xff] %vm28, %v193
    %259 = vst.msk [vmem:[%s202 + $0x2d1] sm:$0xff] %vm28, %v194
    %260 = vst.msk [vmem:[%s202 + $0x2d9] sm:$0xff] %vm28, %v195
    %261 = vst.msk [vmem:[%s202 + $0x2e9] sm:$0xff] %vm28, %v196
    %262 = vst.msk [vmem:[%s202 + $0x2f1] sm:$0xff] %vm28, %v197
    %263 = vst.msk [vmem:[%s202 + $0x301] sm:$0xff] %vm28, %v198
    %264 = vst.msk [vmem:[%s202 + $0x309] sm:$0xff] %vm28, %v199
    %265 = vst.msk [vmem:[%s202 + $0x319] sm:$0xff] %vm28, %v200
    %266 = vst.msk [vmem:[%s202 + $0x321] sm:$0xff] %vm28, %v201
    %v267 = vld [vmem:[#allocation2] sm:$0xff]
    %v268 = vld [vmem:[#allocation2 + $0x8] sm:$0xff]
    %v269 = vld [vmem:[#allocation2 + $0x10] sm:$0x3]
    %v270 = vld [vmem:[#allocation2 + $0x18] sm:$0xff]
    %v271 = vld [vmem:[#allocation2 + $0x20] sm:$0xff]
    %v272 = vld [vmem:[#allocation2 + $0x28] sm:$0x3]
    %v273 = vld [vmem:[#allocation2 + $0x30] sm:$0xff]
    %v274 = vld [vmem:[#allocation2 + $0x38] sm:$0xff]
    %v275 = vld [vmem:[#allocation2 + $0x40] sm:$0x3]
    %v276 = vld [vmem:[#allocation2 + $0x48] sm:$0xff]
    %v277 = vld [vmem:[#allocation2 + $0x50] sm:$0xff]
    %v278 = vld [vmem:[#allocation2 + $0x58] sm:$0x3]
    %v279 = vld [vmem:[#allocation2 + $0x60] sm:$0xff]
    %v280 = vld [vmem:[#allocation2 + $0x68] sm:$0xff]
    %v281 = vld [vmem:[#allocation2 + $0x70] sm:$0x3]
    %v282 = vld [vmem:[#allocation2 + $0x78] sm:$0xff]
    %v283 = vld [vmem:[#allocation2 + $0x80] sm:$0xff]
    %v284 = vld [vmem:[#allocation2 + $0x88] sm:$0x3]
    %v285 = vld [vmem:[#allocation2 + $0x90] sm:$0xff]
    %v286 = vld [vmem:[#allocation2 + $0x98] sm:$0xff]
    %v287 = vld [vmem:[#allocation2 + $0xa0] sm:$0x3]
    %v288 = vld [vmem:[#allocation2 + $0xa8] sm:$0xff]
    %v289 = vld [vmem:[#allocation2 + $0xb0] sm:$0xff]
    %v290 = vld [vmem:[#allocation2 + $0xb8] sm:$0x3]
    %v291 = vld [vmem:[#allocation2 + $0xc0] sm:$0xff]
    %v292 = vld [vmem:[#allocation2 + $0xc8] sm:$0xff]
    %v293 = vld [vmem:[#allocation2 + $0xd0] sm:$0x3]
    %v294 = vld [vmem:[#allocation2 + $0xd8] sm:$0xff]
    %v295 = vld [vmem:[#allocation2 + $0xe0] sm:$0xff]
    %v296 = vld [vmem:[#allocation2 + $0xe8] sm:$0x3]
    %v297 = vld [vmem:[#allocation2 + $0xf0] sm:$0xff]
    %v298 = vld [vmem:[#allocation2 + $0xf8] sm:$0xff]
    %v299 = vld [vmem:[#allocation2 + $0x100] sm:$0x3]
    %v300 = vld [vmem:[#allocation2 + $0x108] sm:$0xff]
    %v301 = vld [vmem:[#allocation2 + $0x110] sm:$0xff]
    %v302 = vld [vmem:[#allocation2 + $0x118] sm:$0x3]
    %v303 = vld [vmem:[#allocation2 + $0x120] sm:$0xff]
    %v304 = vld [vmem:[#allocation2 + $0x128] sm:$0xff]
    %v305 = vld [vmem:[#allocation2 + $0x130] sm:$0x3]
    %v306 = vld [vmem:[#allocation2 + $0x138] sm:$0xff]
    %v307 = vld [vmem:[#allocation2 + $0x140] sm:$0xff]
    %v308 = vld [vmem:[#allocation2 + $0x148] sm:$0x3]
    %v309 = vld [vmem:[#allocation2 + $0x150] sm:$0xff]
    %v310 = vld [vmem:[#allocation2 + $0x158] sm:$0xff]
    %v311 = vld [vmem:[#allocation2 + $0x160] sm:$0x3]
    %v312 = vld [vmem:[#allocation2 + $0x168] sm:$0xff]
    %v313 = vld [vmem:[#allocation2 + $0x170] sm:$0xff]
    %v314 = vld [vmem:[#allocation2 + $0x178] sm:$0x3]
    %v315 = vld [vmem:[#allocation2 + $0x180] sm:$0xff]
    %v316 = vld [vmem:[#allocation2 + $0x188] sm:$0xff]
    %v317 = vld [vmem:[#allocation2 + $0x190] sm:$0x3]
    %v318 = vld [vmem:[#allocation2 + $0x198] sm:$0xff]
    %v319 = vld [vmem:[#allocation2 + $0x1a0] sm:$0xff]
    %v320 = vld [vmem:[#allocation2 + $0x1a8] sm:$0x3]
    %v321 = vld [vmem:[#allocation2 + $0x1b0] sm:$0xff]
    %v322 = vld [vmem:[#allocation2 + $0x1b8] sm:$0xff]
    %v323 = vld [vmem:[#allocation2 + $0x1c0] sm:$0x3]
    %v324 = vld [vmem:[#allocation2 + $0x1c8] sm:$0xff]
    %v325 = vld [vmem:[#allocation2 + $0x1d0] sm:$0xff]
    %v326 = vld [vmem:[#allocation2 + $0x1d8] sm:$0x3]
    %v327 = vld [vmem:[#allocation2 + $0x1e0] sm:$0xff]
    %v328 = vld [vmem:[#allocation2 + $0x1e8] sm:$0xff]
    %v329 = vld [vmem:[#allocation2 + $0x1f0] sm:$0x3]
    %v330 = vld [vmem:[#allocation2 + $0x1f8] sm:$0xff]
    %v331 = vld [vmem:[#allocation2 + $0x200] sm:$0xff]
    %v332 = vld [vmem:[#allocation2 + $0x208] sm:$0x3]
    %v333 = vld [vmem:[#allocation2 + $0x210] sm:$0xff]
    %v334 = vld [vmem:[#allocation2 + $0x218] sm:$0xff]
    %v335 = vld [vmem:[#allocation2 + $0x220] sm:$0x3]
    %v336 = vld [vmem:[#allocation2 + $0x228] sm:$0xff]
    %v337 = vld [vmem:[#allocation2 + $0x230] sm:$0xff]
    %v338 = vld [vmem:[#allocation2 + $0x238] sm:$0x3]
    %v339 = vld [vmem:[#allocation2 + $0x240] sm:$0xff]
    %v340 = vld [vmem:[#allocation2 + $0x248] sm:$0xff]
    %v341 = vld [vmem:[#allocation2 + $0x250] sm:$0x3]
    %v342 = vld [vmem:[#allocation2 + $0x258] sm:$0xff]
    %v343 = vld [vmem:[#allocation2 + $0x260] sm:$0xff]
    %v344 = vld [vmem:[#allocation2 + $0x268] sm:$0x3]
    %v345 = vld [vmem:[#allocation2 + $0x270] sm:$0xff]
    %v346 = vld [vmem:[#allocation2 + $0x278] sm:$0xff]
    %v347 = vld [vmem:[#allocation2 + $0x280] sm:$0x3]
    %v348 = vld [vmem:[#allocation2 + $0x288] sm:$0xff]
    %v349 = vld [vmem:[#allocation2 + $0x290] sm:$0xff]
    %v350 = vld [vmem:[#allocation2 + $0x298] sm:$0x3]
    %v351 = vld [vmem:[#allocation2 + $0x2a0] sm:$0xff]
    %v352 = vld [vmem:[#allocation2 + $0x2a8] sm:$0xff]
    %v353 = vld [vmem:[#allocation2 + $0x2b0] sm:$0x3]
    %v354 = vld [vmem:[#allocation2 + $0x2b8] sm:$0xff]
    %v355 = vld [vmem:[#allocation2 + $0x2c0] sm:$0xff]
    %v356 = vld [vmem:[#allocation2 + $0x2c8] sm:$0x3]
    %v357 = vld [vmem:[#allocation2 + $0x2d0] sm:$0xff]
    %v358 = vld [vmem:[#allocation2 + $0x2d8] sm:$0xff]
    %v359 = vld [vmem:[#allocation2 + $0x2e0] sm:$0x3]
    %v360 = vld [vmem:[#allocation2 + $0x2e8] sm:$0xff]
    %v361 = vld [vmem:[#allocation2 + $0x2f0] sm:$0xff]
    %v362 = vld [vmem:[#allocation2 + $0x2f8] sm:$0x3]
    %v363 = vld [vmem:[#allocation2 + $0x300] sm:$0xff]
    %v364 = vld [vmem:[#allocation2 + $0x308] sm:$0xff]
    %v365 = vld [vmem:[#allocation2 + $0x310] sm:$0x3]
    %v366 = vld [vmem:[#allocation2 + $0x318] sm:$0xff]
    %v367 = vld [vmem:[#allocation2 + $0x320] sm:$0xff]
    %v368 = vld [vmem:[#allocation2 + $0x328] sm:$0x3]
    %v369 = vld [vmem:[#allocation2 + $0x330] sm:$0xff]
    %v370 = vld [vmem:[#allocation2 + $0x338] sm:$0xff]
    %v371 = vld [vmem:[#allocation2 + $0x340] sm:$0x3]
    %v372 = vld [vmem:[#allocation2 + $0x348] sm:$0xff]
    %v373 = vld [vmem:[#allocation2 + $0x350] sm:$0xff]
    %v374 = vld [vmem:[#allocation2 + $0x358] sm:$0x3]
    %v375 = vld [vmem:[%s1] sm:$0x3]
    %v376 = vld [vmem:[%s1 + $0x2] sm:$0x3]
    %v377 = vld [vmem:[%s1 + $0x4] sm:$0x3]
    %v378 = vld [vmem:[%s1 + $0x6] sm:$0x3]
    %v379 = vld [vmem:[%s1 + $0x8] sm:$0x3]
    %v380 = vld [vmem:[%s1 + $0xa] sm:$0x3]
    %v381 = vld [vmem:[%s1 + $0xc] sm:$0x3]
    %v382 = vld [vmem:[%s1 + $0xe] sm:$0x3]
    %v383 = vld [vmem:[%s1 + $0x10] sm:$0x3]
    %v384 = vpack.c.bf16 %v268, %v267
    %v385 = vpack.c.bf16 %v271, %v270
    %v386 = vpack.c.bf16 %v274, %v273
    %v387 = vpack.c.bf16 %v277, %v276
    %v388 = vpack.c.bf16 %v280, %v279
    %v389 = vpack.c.bf16 %v283, %v282
    %v390 = vpack.c.bf16 %v286, %v285
    %v391 = vpack.c.bf16 %v289, %v288
    %v392 = vpack.c.bf16 %v292, %v291
    %v393 = vpack.c.bf16 %v295, %v294
    %v394 = vpack.c.bf16 %v298, %v297
    %v395 = vpack.c.bf16 %v301, %v300
    %v396 = vpack.c.bf16 %v304, %v303
    %v397 = vpack.c.bf16 %v307, %v306
    %v398 = vpack.c.bf16 %v310, %v309
    %v399 = vpack.c.bf16 %v313, %v312
    %v400 = vpack.c.bf16 %v322, %v321
    %v401 = vpack.c.bf16 %v325, %v324
    %v402 = vpack.c.bf16 %v328, %v327
    %v403 = vpack.c.bf16 %v331, %v330
    %v404 = vpack.c.bf16 %v334, %v333
    %v405 = vpack.c.bf16 %v337, %v336
    %v406 = vpack.c.bf16 %v340, %v339
    %v407 = vpack.c.bf16 %v343, %v342
    %v408 = vpack.c.bf16 %v346, %v345
    %v409 = vpack.c.bf16 %v349, %v348
    %v410 = vpack.c.bf16 %v352, %v351
    %v411 = vpack.c.bf16 %v355, %v354
    %v412 = vpack.c.bf16 %v358, %v357
    %v413 = vpack.c.bf16 %v361, %v360
    %v414 = vpack.c.bf16 %v364, %v363
    %v415 = vpack.c.bf16 %v367, %v366
    %vm512 = vcmask 1046528
    %v513 = vrot.slane %v267, 1
    %v514 = vrot.slane %v268, 1
    %v515 = vsel %vm512, %v513, %v514
    %v516 = vrot.slane %v269, 1
    %v517 = vsel %vm512, %v514, %v516
    %v518 = vrot.slane %v270, 1
    %v519 = vrot.slane %v271, 1
    %v520 = vsel %vm512, %v518, %v519
    %v521 = vrot.slane %v272, 1
    %v522 = vsel %vm512, %v519, %v521
    %v523 = vrot.slane %v273, 1
    %v524 = vrot.slane %v274, 1
    %v525 = vsel %vm512, %v523, %v524
    %v526 = vrot.slane %v275, 1
    %v527 = vsel %vm512, %v524, %v526
    %v528 = vrot.slane %v276, 1
    %v529 = vrot.slane %v277, 1
    %v530 = vsel %vm512, %v528, %v529
    %v531 = vrot.slane %v278, 1
    %v532 = vsel %vm512, %v529, %v531
    %v533 = vrot.slane %v279, 1
    %v534 = vrot.slane %v280, 1
    %v535 = vsel %vm512, %v533, %v534
    %v536 = vrot.slane %v281, 1
    %v537 = vsel %vm512, %v534, %v536
    %v538 = vrot.slane %v282, 1
    %v539 = vrot.slane %v283, 1
    %v540 = vsel %vm512, %v538, %v539
    %v541 = vrot.slane %v284, 1
    %v542 = vsel %vm512, %v539, %v541
    %v543 = vrot.slane %v285, 1
    %v544 = vrot.slane %v286, 1
    %v545 = vsel %vm512, %v543, %v544
    %v546 = vrot.slane %v287, 1
    %v547 = vsel %vm512, %v544, %v546
    %v548 = vrot.slane %v288, 1
    %v549 = vrot.slane %v289, 1
    %v550 = vsel %vm512, %v548, %v549
    %v551 = vrot.slane %v290, 1
    %v552 = vsel %vm512, %v549, %v551
    %v553 = vrot.slane %v291, 1
    %v554 = vrot.slane %v292, 1
    %v555 = vsel %vm512, %v553, %v554
    %v556 = vrot.slane %v293, 1
    %v557 = vsel %vm512, %v554, %v556
    %v558 = vrot.slane %v294, 1
    %v559 = vrot.slane %v295, 1
    %v560 = vsel %vm512, %v558, %v559
    %v561 = vrot.slane %v296, 1
    %v562 = vsel %vm512, %v559, %v561
    %v563 = vrot.slane %v297, 1
    %v564 = vrot.slane %v298, 1
    %v565 = vsel %vm512, %v563, %v564
    %v566 = vrot.slane %v299, 1
    %v567 = vsel %vm512, %v564, %v566
    %v568 = vrot.slane %v300, 1
    %v569 = vrot.slane %v301, 1
    %v570 = vsel %vm512, %v568, %v569
    %v571 = vrot.slane %v302, 1
    %v572 = vsel %vm512, %v569, %v571
    %v573 = vrot.slane %v303, 1
    %v574 = vrot.slane %v304, 1
    %v575 = vsel %vm512, %v573, %v574
    %v576 = vrot.slane %v305, 1
    %v577 = vsel %vm512, %v574, %v576
    %v578 = vrot.slane %v306, 1
    %v579 = vrot.slane %v307, 1
    %v580 = vsel %vm512, %v578, %v579
    %v581 = vrot.slane %v308, 1
    %v582 = vsel %vm512, %v579, %v581
    %v583 = vrot.slane %v309, 1
    %v584 = vrot.slane %v310, 1
    %v585 = vsel %vm512, %v583, %v584
    %v586 = vrot.slane %v311, 1
    %v587 = vsel %vm512, %v584, %v586
    %v588 = vrot.slane %v312, 1
    %v589 = vrot.slane %v313, 1
    %v590 = vsel %vm512, %v588, %v589
    %v591 = vrot.slane %v314, 1
    %v592 = vsel %vm512, %v589, %v591
    %v593 = vrot.slane %v321, 1
    %v594 = vrot.slane %v322, 1
    %v595 = vsel %vm512, %v593, %v594
    %v596 = vrot.slane %v323, 1
    %v597 = vsel %vm512, %v594, %v596
    %v598 = vrot.slane %v324, 1
    %v599 = vrot.slane %v325, 1
    %v600 = vsel %vm512, %v598, %v599
    %v601 = vrot.slane %v326, 1
    %v602 = vsel %vm512, %v599, %v601
    %v603 = vrot.slane %v327, 1
    %v604 = vrot.slane %v328, 1
    %v605 = vsel %vm512, %v603, %v604
    %v606 = vrot.slane %v329, 1
    %v607 = vsel %vm512, %v604, %v606
    %v608 = vrot.slane %v330, 1
    %v609 = vrot.slane %v331, 1
    %v610 = vsel %vm512, %v608, %v609
    %v611 = vrot.slane %v332, 1
    %v612 = vsel %vm512, %v609, %v611
    %v613 = vrot.slane %v333, 1
    %v614 = vrot.slane %v334, 1
    %v615 = vsel %vm512, %v613, %v614
    %v616 = vrot.slane %v335, 1
    %v617 = vsel %vm512, %v614, %v616
    %v618 = vrot.slane %v336, 1
    %v619 = vrot.slane %v337, 1
    %v620 = vsel %vm512, %v618, %v619
    %v621 = vrot.slane %v338, 1
    %v622 = vsel %vm512, %v619, %v621
    %v623 = vrot.slane %v339, 1
    %v624 = vrot.slane %v340, 1
    %v625 = vsel %vm512, %v623, %v624
    %v626 = vrot.slane %v341, 1
    %v627 = vsel %vm512, %v624, %v626
    %v628 = vrot.slane %v342, 1
    %v629 = vrot.slane %v343, 1
    %v630 = vsel %vm512, %v628, %v629
    %v631 = vrot.slane %v344, 1
    %v632 = vsel %vm512, %v629, %v631
    %v633 = vrot.slane %v345, 1
    %v634 = vrot.slane %v346, 1
    %v635 = vsel %vm512, %v633, %v634
    %v636 = vrot.slane %v347, 1
    %v637 = vsel %vm512, %v634, %v636
    %v638 = vrot.slane %v348, 1
    %v639 = vrot.slane %v349, 1
    %v640 = vsel %vm512, %v638, %v639
    %v641 = vrot.slane %v350, 1
    %v642 = vsel %vm512, %v639, %v641
    %v643 = vrot.slane %v351, 1
    %v644 = vrot.slane %v352, 1
    %v645 = vsel %vm512, %v643, %v644
    %v646 = vrot.slane %v353, 1
    %v647 = vsel %vm512, %v644, %v646
    %v648 = vrot.slane %v354, 1
    %v649 = vrot.slane %v355, 1
    %v650 = vsel %vm512, %v648, %v649
    %v651 = vrot.slane %v356, 1
    %v652 = vsel %vm512, %v649, %v651
    %v653 = vrot.slane %v357, 1
    %v654 = vrot.slane %v358, 1
    %v655 = vsel %vm512, %v653, %v654
    %v656 = vrot.slane %v359, 1
    %v657 = vsel %vm512, %v654, %v656
    %v658 = vrot.slane %v360, 1
    %v659 = vrot.slane %v361, 1
    %v660 = vsel %vm512, %v658, %v659
    %v661 = vrot.slane %v362, 1
    %v662 = vsel %vm512, %v659, %v661
    %v663 = vrot.slane %v363, 1
    %v664 = vrot.slane %v364, 1
    %v665 = vsel %vm512, %v663, %v664
    %v666 = vrot.slane %v365, 1
    %v667 = vsel %vm512, %v664, %v666
    %v668 = vrot.slane %v366, 1
    %v669 = vrot.slane %v367, 1
    %v670 = vsel %vm512, %v668, %v669
    %v671 = vrot.slane %v368, 1
    %v672 = vsel %vm512, %v669, %v671
    %v737 = vpack.c.bf16 %v517, %v515
    %v738 = vpack.c.bf16 %v522, %v520
    %v739 = vpack.c.bf16 %v527, %v525
    %v740 = vpack.c.bf16 %v532, %v530
    %v741 = vpack.c.bf16 %v537, %v535
    %v742 = vpack.c.bf16 %v542, %v540
    %v743 = vpack.c.bf16 %v547, %v545
    %v744 = vpack.c.bf16 %v552, %v550
    %v745 = vpack.c.bf16 %v557, %v555
    %v746 = vpack.c.bf16 %v562, %v560
    %v747 = vpack.c.bf16 %v567, %v565
    %v748 = vpack.c.bf16 %v572, %v570
    %v749 = vpack.c.bf16 %v577, %v575
    %v750 = vpack.c.bf16 %v582, %v580
    %v751 = vpack.c.bf16 %v587, %v585
    %v752 = vpack.c.bf16 %v592, %v590
    %v753 = vpack.c.bf16 %v597, %v595
    %v754 = vpack.c.bf16 %v602, %v600
    %v755 = vpack.c.bf16 %v607, %v605
    %v756 = vpack.c.bf16 %v612, %v610
    %v757 = vpack.c.bf16 %v617, %v615
    %v758 = vpack.c.bf16 %v622, %v620
    %v759 = vpack.c.bf16 %v627, %v625
    %v760 = vpack.c.bf16 %v632, %v630
    %v761 = vpack.c.bf16 %v637, %v635
    %v762 = vpack.c.bf16 %v642, %v640
    %v763 = vpack.c.bf16 %v647, %v645
    %v764 = vpack.c.bf16 %v652, %v650
    %v765 = vpack.c.bf16 %v657, %v655
    %v766 = vpack.c.bf16 %v662, %v660
    %v767 = vpack.c.bf16 %v667, %v665
    %v768 = vpack.c.bf16 %v672, %v670
    %v770 = vsel %vm28, %v737, 0
    %v773 = vsel %vm28, %v738, 0
    %v776 = vsel %vm28, %v739, 0
    %v779 = vsel %vm28, %v740, 0
    %v782 = vsel %vm28, %v741, 0
    %v785 = vsel %vm28, %v742, 0
    %v788 = vsel %vm28, %v743, 0
    %v791 = vsel %vm28, %v744, 0
    %v794 = vsel %vm28, %v745, 0
    %v797 = vsel %vm28, %v746, 0
    %v800 = vsel %vm28, %v747, 0
    %v803 = vsel %vm28, %v748, 0
    %v806 = vsel %vm28, %v749, 0
    %v809 = vsel %vm28, %v750, 0
    %v812 = vsel %vm28, %v751, 0
    %v815 = vsel %vm28, %v752, 0
    %v818 = vsel %vm28, %v753, 0
    %v821 = vsel %vm28, %v754, 0
    %v824 = vsel %vm28, %v755, 0
    %v827 = vsel %vm28, %v756, 0
    %v830 = vsel %vm28, %v757, 0
    %v833 = vsel %vm28, %v758, 0
    %v836 = vsel %vm28, %v759, 0
    %v839 = vsel %vm28, %v760, 0
    %v842 = vsel %vm28, %v761, 0
    %v845 = vsel %vm28, %v762, 0
    %v848 = vsel %vm28, %v763, 0
    %v851 = vsel %vm28, %v764, 0
    %v854 = vsel %vm28, %v765, 0
    %v857 = vsel %vm28, %v766, 0
    %v860 = vsel %vm28, %v767, 0
    %v863 = vsel %vm28, %v768, 0
    %vm865 = vcmask 1041408
    %v867 = vsel %vm865, %v376, 0
    %869 = vmatpush.bf16.msra.mxu0 0
    %870 = vmatpush.bf16.msra.mxu0 0
    %871 = vmatpush.bf16.msra.mxu0 0
    %872 = vmatpush.bf16.msra.mxu0 0
    %873 = vmatpush.bf16.msra.mxu0 0
    %874 = vmatpush.bf16.msra.mxu0 0
    %875 = vmatpush.bf16.msra.mxu0 0
    %876 = vmatpush.bf16.msra.mxu0 %v867
    %877 = vmatmul.bf16.gmra.mxu0 %v770
    %v878 = vpop.f32.mrf.mxu0
    %v879 = vadd.f32 0.0, %v878
    %v880 = vpop.f32.mrf.mxu0
    %v881 = vadd.f32 0.0, %v880
    %882 = vmatmul.bf16.gmra.mxu0 %v773
    %v883 = vpop.f32.mrf.mxu0
    %v884 = vadd.f32 0.0, %v883
    %v885 = vpop.f32.mrf.mxu0
    %v886 = vadd.f32 0.0, %v885
    %887 = vmatmul.bf16.gmra.mxu0 %v776
    %v888 = vpop.f32.mrf.mxu0
    %v889 = vadd.f32 0.0, %v888
    %v890 = vpop.f32.mrf.mxu0
    %v891 = vadd.f32 0.0, %v890
    %892 = vmatmul.bf16.gmra.mxu0 %v779
    %v893 = vpop.f32.mrf.mxu0
    %v894 = vadd.f32 0.0, %v893
    %v895 = vpop.f32.mrf.mxu0
    %v896 = vadd.f32 0.0, %v895
    %897 = vmatmul.bf16.gmra.mxu0 %v782
    %v898 = vpop.f32.mrf.mxu0
    %v899 = vadd.f32 0.0, %v898
    %v900 = vpop.f32.mrf.mxu0
    %v901 = vadd.f32 0.0, %v900
    %902 = vmatmul.bf16.gmra.mxu0 %v785
    %v903 = vpop.f32.mrf.mxu0
    %v904 = vadd.f32 0.0, %v903
    %v905 = vpop.f32.mrf.mxu0
    %v906 = vadd.f32 0.0, %v905
    %907 = vmatmul.bf16.gmra.mxu0 %v788
    %v908 = vpop.f32.mrf.mxu0
    %v909 = vadd.f32 0.0, %v908
    %v910 = vpop.f32.mrf.mxu0
    %v911 = vadd.f32 0.0, %v910
    %912 = vmatmul.bf16.gmra.mxu0 %v791
    %v913 = vpop.f32.mrf.mxu0
    %v914 = vadd.f32 0.0, %v913
    %v915 = vpop.f32.mrf.mxu0
    %v916 = vadd.f32 0.0, %v915
    %917 = vmatmul.bf16.gmra.mxu0 %v794
    %v918 = vpop.f32.mrf.mxu0
    %v919 = vadd.f32 0.0, %v918
    %v920 = vpop.f32.mrf.mxu0
    %v921 = vadd.f32 0.0, %v920
    %922 = vmatmul.bf16.gmra.mxu0 %v797
    %v923 = vpop.f32.mrf.mxu0
    %v924 = vadd.f32 0.0, %v923
    %v925 = vpop.f32.mrf.mxu0
    %v926 = vadd.f32 0.0, %v925
    %927 = vmatmul.bf16.gmra.mxu0 %v800
    %v928 = vpop.f32.mrf.mxu0
    %v929 = vadd.f32 0.0, %v928
    %v930 = vpop.f32.mrf.mxu0
    %v931 = vadd.f32 0.0, %v930
    %932 = vmatmul.bf16.gmra.mxu0 %v803
    %v933 = vpop.f32.mrf.mxu0
    %v934 = vadd.f32 0.0, %v933
    %v935 = vpop.f32.mrf.mxu0
    %v936 = vadd.f32 0.0, %v935
    %937 = vmatmul.bf16.gmra.mxu0 %v806
    %v938 = vpop.f32.mrf.mxu0
    %v939 = vadd.f32 0.0, %v938
    %v940 = vpop.f32.mrf.mxu0
    %v941 = vadd.f32 0.0, %v940
    %942 = vmatmul.bf16.gmra.mxu0 %v809
    %v943 = vpop.f32.mrf.mxu0
    %v944 = vadd.f32 0.0, %v943
    %v945 = vpop.f32.mrf.mxu0
    %v946 = vadd.f32 0.0, %v945
    %947 = vmatmul.bf16.gmra.mxu0 %v812
    %v948 = vpop.f32.mrf.mxu0
    %v949 = vadd.f32 0.0, %v948
    %v950 = vpop.f32.mrf.mxu0
    %v951 = vadd.f32 0.0, %v950
    %952 = vmatmul.bf16.gmra.mxu0 %v815
    %v953 = vpop.f32.mrf.mxu0
    %v954 = vadd.f32 0.0, %v953
    %v955 = vpop.f32.mrf.mxu0
    %v956 = vadd.f32 0.0, %v955
    %957 = vmatmul.bf16.gmra.mxu0 %v818
    %v958 = vpop.f32.mrf.mxu0
    %v959 = vadd.f32 0.0, %v958
    %v960 = vpop.f32.mrf.mxu0
    %v961 = vadd.f32 0.0, %v960
    %962 = vmatmul.bf16.gmra.mxu0 %v821
    %v963 = vpop.f32.mrf.mxu0
    %v964 = vadd.f32 0.0, %v963
    %v965 = vpop.f32.mrf.mxu0
    %v966 = vadd.f32 0.0, %v965
    %967 = vmatmul.bf16.gmra.mxu0 %v824
    %v968 = vpop.f32.mrf.mxu0
    %v969 = vadd.f32 0.0, %v968
    %v970 = vpop.f32.mrf.mxu0
    %v971 = vadd.f32 0.0, %v970
    %972 = vmatmul.bf16.gmra.mxu0 %v827
    %v973 = vpop.f32.mrf.mxu0
    %v974 = vadd.f32 0.0, %v973
    %v975 = vpop.f32.mrf.mxu0
    %v976 = vadd.f32 0.0, %v975
    %977 = vmatmul.bf16.gmra.mxu0 %v830
    %v978 = vpop.f32.mrf.mxu0
    %v979 = vadd.f32 0.0, %v978
    %v980 = vpop.f32.mrf.mxu0
    %v981 = vadd.f32 0.0, %v980
    %982 = vmatmul.bf16.gmra.mxu0 %v833
    %v983 = vpop.f32.mrf.mxu0
    %v984 = vadd.f32 0.0, %v983
    %v985 = vpop.f32.mrf.mxu0
    %v986 = vadd.f32 0.0, %v985
    %987 = vmatmul.bf16.gmra.mxu0 %v836
    %v988 = vpop.f32.mrf.mxu0
    %v989 = vadd.f32 0.0, %v988
    %v990 = vpop.f32.mrf.mxu0
    %v991 = vadd.f32 0.0, %v990
    %992 = vmatmul.bf16.gmra.mxu0 %v839
    %v993 = vpop.f32.mrf.mxu0
    %v994 = vadd.f32 0.0, %v993
    %v995 = vpop.f32.mrf.mxu0
    %v996 = vadd.f32 0.0, %v995
    %997 = vmatmul.bf16.gmra.mxu0 %v842
    %v998 = vpop.f32.mrf.mxu0
    %v999 = vadd.f32 0.0, %v998
    %v1000 = vpop.f32.mrf.mxu0
    %v1001 = vadd.f32 0.0, %v1000
    %1002 = vmatmul.bf16.gmra.mxu0 %v845
    %v1003 = vpop.f32.mrf.mxu0
    %v1004 = vadd.f32 0.0, %v1003
    %v1005 = vpop.f32.mrf.mxu0
    %v1006 = vadd.f32 0.0, %v1005
    %1007 = vmatmul.bf16.gmra.mxu0 %v848
    %v1008 = vpop.f32.mrf.mxu0
    %v1009 = vadd.f32 0.0, %v1008
    %v1010 = vpop.f32.mrf.mxu0
    %v1011 = vadd.f32 0.0, %v1010
    %1012 = vmatmul.bf16.gmra.mxu0 %v851
    %v1013 = vpop.f32.mrf.mxu0
    %v1014 = vadd.f32 0.0, %v1013
    %v1015 = vpop.f32.mrf.mxu0
    %v1016 = vadd.f32 0.0, %v1015
    %1017 = vmatmul.bf16.gmra.mxu0 %v854
    %v1018 = vpop.f32.mrf.mxu0
    %v1019 = vadd.f32 0.0, %v1018
    %v1020 = vpop.f32.mrf.mxu0
    %v1021 = vadd.f32 0.0, %v1020
    %1022 = vmatmul.bf16.gmra.mxu0 %v857
    %v1023 = vpop.f32.mrf.mxu0
    %v1024 = vadd.f32 0.0, %v1023
    %v1025 = vpop.f32.mrf.mxu0
    %v1026 = vadd.f32 0.0, %v1025
    %1027 = vmatmul.bf16.gmra.mxu0 %v860
    %v1028 = vpop.f32.mrf.mxu0
    %v1029 = vadd.f32 0.0, %v1028
    %v1030 = vpop.f32.mrf.mxu0
    %v1031 = vadd.f32 0.0, %v1030
    %1032 = vmatmul.bf16.gmra.mxu0 %v863
    %v1033 = vpop.f32.mrf.mxu0
    %v1034 = vadd.f32 0.0, %v1033
    %v1035 = vpop.f32.mrf.mxu0
    %v1036 = vadd.f32 0.0, %v1035
    %1037 = vdwg.mxu0
    %v1039 = vsel %vm28, %v384, 0
    %v1042 = vsel %vm28, %v385, 0
    %v1045 = vsel %vm28, %v386, 0
    %v1048 = vsel %vm28, %v387, 0
    %v1051 = vsel %vm28, %v388, 0
    %v1054 = vsel %vm28, %v389, 0
    %v1057 = vsel %vm28, %v390, 0
    %v1060 = vsel %vm28, %v391, 0
    %v1063 = vsel %vm28, %v392, 0
    %v1066 = vsel %vm28, %v393, 0
    %v1069 = vsel %vm28, %v394, 0
    %v1072 = vsel %vm28, %v395, 0
    %v1075 = vsel %vm28, %v396, 0
    %v1078 = vsel %vm28, %v397, 0
    %v1081 = vsel %vm28, %v398, 0
    %v1084 = vsel %vm28, %v399, 0
    %v1087 = vsel %vm28, %v400, 0
    %v1090 = vsel %vm28, %v401, 0
    %v1093 = vsel %vm28, %v402, 0
    %v1096 = vsel %vm28, %v403, 0
    %v1099 = vsel %vm28, %v404, 0
    %v1102 = vsel %vm28, %v405, 0
    %v1105 = vsel %vm28, %v406, 0
    %v1108 = vsel %vm28, %v407, 0
    %v1111 = vsel %vm28, %v408, 0
    %v1114 = vsel %vm28, %v409, 0
    %v1117 = vsel %vm28, %v410, 0
    %v1120 = vsel %vm28, %v411, 0
    %v1123 = vsel %vm28, %v412, 0
    %v1126 = vsel %vm28, %v413, 0
    %v1129 = vsel %vm28, %v414, 0
    %v1132 = vsel %vm28, %v415, 0
    %v1135 = vsel %vm865, %v375, 0
    %1137 = vmatpush.bf16.msra.mxu0 0
    %1138 = vmatpush.bf16.msra.mxu0 0
    %1139 = vmatpush.bf16.msra.mxu0 0
    %1140 = vmatpush.bf16.msra.mxu0 0
    %1141 = vmatpush.bf16.msra.mxu0 0
    %1142 = vmatpush.bf16.msra.mxu0 0
    %1143 = vmatpush.bf16.msra.mxu0 0
    %1144 = vmatpush.bf16.msra.mxu0 %v1135
    %1145 = vmatmul.bf16.gmra.mxu0 %v1039
    %v1146 = vpop.f32.mrf.mxu0
    %v1147 = vadd.f32 %v879, %v1146
    %v1148 = vpop.f32.mrf.mxu0
    %v1149 = vadd.f32 %v881, %v1148
    %1150 = vmatmul.bf16.gmra.mxu0 %v1042
    %v1151 = vpop.f32.mrf.mxu0
    %v1152 = vadd.f32 %v884, %v1151
    %v1153 = vpop.f32.mrf.mxu0
    %v1154 = vadd.f32 %v886, %v1153
    %1155 = vmatmul.bf16.gmra.mxu0 %v1045
    %v1156 = vpop.f32.mrf.mxu0
    %v1157 = vadd.f32 %v889, %v1156
    %v1158 = vpop.f32.mrf.mxu0
    %v1159 = vadd.f32 %v891, %v1158
    %1160 = vmatmul.bf16.gmra.mxu0 %v1048
    %v1161 = vpop.f32.mrf.mxu0
    %v1162 = vadd.f32 %v894, %v1161
    %v1163 = vpop.f32.mrf.mxu0
    %v1164 = vadd.f32 %v896, %v1163
    %1165 = vmatmul.bf16.gmra.mxu0 %v1051
    %v1166 = vpop.f32.mrf.mxu0
    %v1167 = vadd.f32 %v899, %v1166
    %v1168 = vpop.f32.mrf.mxu0
    %v1169 = vadd.f32 %v901, %v1168
    %1170 = vmatmul.bf16.gmra.mxu0 %v1054
    %v1171 = vpop.f32.mrf.mxu0
    %v1172 = vadd.f32 %v904, %v1171
    %v1173 = vpop.f32.mrf.mxu0
    %v1174 = vadd.f32 %v906, %v1173
    %1175 = vmatmul.bf16.gmra.mxu0 %v1057
    %v1176 = vpop.f32.mrf.mxu0
    %v1177 = vadd.f32 %v909, %v1176
    %v1178 = vpop.f32.mrf.mxu0
    %v1179 = vadd.f32 %v911, %v1178
    %1180 = vmatmul.bf16.gmra.mxu0 %v1060
    %v1181 = vpop.f32.mrf.mxu0
    %v1182 = vadd.f32 %v914, %v1181
    %v1183 = vpop.f32.mrf.mxu0
    %v1184 = vadd.f32 %v916, %v1183
    %1185 = vmatmul.bf16.gmra.mxu0 %v1063
    %v1186 = vpop.f32.mrf.mxu0
    %v1187 = vadd.f32 %v919, %v1186
    %v1188 = vpop.f32.mrf.mxu0
    %v1189 = vadd.f32 %v921, %v1188
    %1190 = vmatmul.bf16.gmra.mxu0 %v1066
    %v1191 = vpop.f32.mrf.mxu0
    %v1192 = vadd.f32 %v924, %v1191
    %v1193 = vpop.f32.mrf.mxu0
    %v1194 = vadd.f32 %v926, %v1193
    %1195 = vmatmul.bf16.gmra.mxu0 %v1069
    %v1196 = vpop.f32.mrf.mxu0
    %v1197 = vadd.f32 %v929, %v1196
    %v1198 = vpop.f32.mrf.mxu0
    %v1199 = vadd.f32 %v931, %v1198
    %1200 = vmatmul.bf16.gmra.mxu0 %v1072
    %v1201 = vpop.f32.mrf.mxu0
    %v1202 = vadd.f32 %v934, %v1201
    %v1203 = vpop.f32.mrf.mxu0
    %v1204 = vadd.f32 %v936, %v1203
    %1205 = vmatmul.bf16.gmra.mxu0 %v1075
    %v1206 = vpop.f32.mrf.mxu0
    %v1207 = vadd.f32 %v939, %v1206
    %v1208 = vpop.f32.mrf.mxu0
    %v1209 = vadd.f32 %v941, %v1208
    %1210 = vmatmul.bf16.gmra.mxu0 %v1078
    %v1211 = vpop.f32.mrf.mxu0
    %v1212 = vadd.f32 %v944, %v1211
    %v1213 = vpop.f32.mrf.mxu0
    %v1214 = vadd.f32 %v946, %v1213
    %1215 = vmatmul.bf16.gmra.mxu0 %v1081
    %v1216 = vpop.f32.mrf.mxu0
    %v1217 = vadd.f32 %v949, %v1216
    %v1218 = vpop.f32.mrf.mxu0
    %v1219 = vadd.f32 %v951, %v1218
    %1220 = vmatmul.bf16.gmra.mxu0 %v1084
    %v1221 = vpop.f32.mrf.mxu0
    %v1222 = vadd.f32 %v954, %v1221
    %v1223 = vpop.f32.mrf.mxu0
    %v1224 = vadd.f32 %v956, %v1223
    %1225 = vmatmul.bf16.gmra.mxu0 %v1087
    %v1226 = vpop.f32.mrf.mxu0
    %v1227 = vadd.f32 %v959, %v1226
    %v1228 = vpop.f32.mrf.mxu0
    %v1229 = vadd.f32 %v961, %v1228
    %1230 = vmatmul.bf16.gmra.mxu0 %v1090
    %v1231 = vpop.f32.mrf.mxu0
    %v1232 = vadd.f32 %v964, %v1231
    %v1233 = vpop.f32.mrf.mxu0
    %v1234 = vadd.f32 %v966, %v1233
    %1235 = vmatmul.bf16.gmra.mxu0 %v1093
    %v1236 = vpop.f32.mrf.mxu0
    %v1237 = vadd.f32 %v969, %v1236
    %v1238 = vpop.f32.mrf.mxu0
    %v1239 = vadd.f32 %v971, %v1238
    %1240 = vmatmul.bf16.gmra.mxu0 %v1096
    %v1241 = vpop.f32.mrf.mxu0
    %v1242 = vadd.f32 %v974, %v1241
    %v1243 = vpop.f32.mrf.mxu0
    %v1244 = vadd.f32 %v976, %v1243
    %1245 = vmatmul.bf16.gmra.mxu0 %v1099
    %v1246 = vpop.f32.mrf.mxu0
    %v1247 = vadd.f32 %v979, %v1246
    %v1248 = vpop.f32.mrf.mxu0
    %v1249 = vadd.f32 %v981, %v1248
    %1250 = vmatmul.bf16.gmra.mxu0 %v1102
    %v1251 = vpop.f32.mrf.mxu0
    %v1252 = vadd.f32 %v984, %v1251
    %v1253 = vpop.f32.mrf.mxu0
    %v1254 = vadd.f32 %v986, %v1253
    %1255 = vmatmul.bf16.gmra.mxu0 %v1105
    %v1256 = vpop.f32.mrf.mxu0
    %v1257 = vadd.f32 %v989, %v1256
    %v1258 = vpop.f32.mrf.mxu0
    %v1259 = vadd.f32 %v991, %v1258
    %1260 = vmatmul.bf16.gmra.mxu0 %v1108
    %v1261 = vpop.f32.mrf.mxu0
    %v1262 = vadd.f32 %v994, %v1261
    %v1263 = vpop.f32.mrf.mxu0
    %v1264 = vadd.f32 %v996, %v1263
    %1265 = vmatmul.bf16.gmra.mxu0 %v1111
    %v1266 = vpop.f32.mrf.mxu0
    %v1267 = vadd.f32 %v999, %v1266
    %v1268 = vpop.f32.mrf.mxu0
    %v1269 = vadd.f32 %v1001, %v1268
    %1270 = vmatmul.bf16.gmra.mxu0 %v1114
    %v1271 = vpop.f32.mrf.mxu0
    %v1272 = vadd.f32 %v1004, %v1271
    %v1273 = vpop.f32.mrf.mxu0
    %v1274 = vadd.f32 %v1006, %v1273
    %1275 = vmatmul.bf16.gmra.mxu0 %v1117
    %v1276 = vpop.f32.mrf.mxu0
    %v1277 = vadd.f32 %v1009, %v1276
    %v1278 = vpop.f32.mrf.mxu0
    %v1279 = vadd.f32 %v1011, %v1278
    %1280 = vmatmul.bf16.gmra.mxu0 %v1120
    %v1281 = vpop.f32.mrf.mxu0
    %v1282 = vadd.f32 %v1014, %v1281
    %v1283 = vpop.f32.mrf.mxu0
    %v1284 = vadd.f32 %v1016, %v1283
    %1285 = vmatmul.bf16.gmra.mxu0 %v1123
    %v1286 = vpop.f32.mrf.mxu0
    %v1287 = vadd.f32 %v1019, %v1286
    %v1288 = vpop.f32.mrf.mxu0
    %v1289 = vadd.f32 %v1021, %v1288
    %1290 = vmatmul.bf16.gmra.mxu0 %v1126
    %v1291 = vpop.f32.mrf.mxu0
    %v1292 = vadd.f32 %v1024, %v1291
    %v1293 = vpop.f32.mrf.mxu0
    %v1294 = vadd.f32 %v1026, %v1293
    %1295 = vmatmul.bf16.gmra.mxu0 %v1129
    %v1296 = vpop.f32.mrf.mxu0
    %v1297 = vadd.f32 %v1029, %v1296
    %v1298 = vpop.f32.mrf.mxu0
    %v1299 = vadd.f32 %v1031, %v1298
    %1300 = vmatmul.bf16.gmra.mxu0 %v1132
    %v1301 = vpop.f32.mrf.mxu0
    %v1302 = vadd.f32 %v1034, %v1301
    %v1303 = vpop.f32.mrf.mxu0
    %v1304 = vadd.f32 %v1036, %v1303
    %1305 = vdwg.mxu0
    %vm1306 = vcmask 1045504
    %v1307 = vrot.slane %v267, 2
    %v1308 = vrot.slane %v268, 2
    %v1309 = vsel %vm1306, %v1307, %v1308
    %v1310 = vrot.slane %v269, 2
    %v1311 = vsel %vm1306, %v1308, %v1310
    %v1312 = vrot.slane %v270, 2
    %v1313 = vrot.slane %v271, 2
    %v1314 = vsel %vm1306, %v1312, %v1313
    %v1315 = vrot.slane %v272, 2
    %v1316 = vsel %vm1306, %v1313, %v1315
    %v1317 = vrot.slane %v273, 2
    %v1318 = vrot.slane %v274, 2
    %v1319 = vsel %vm1306, %v1317, %v1318
    %v1320 = vrot.slane %v275, 2
    %v1321 = vsel %vm1306, %v1318, %v1320
    %v1322 = vrot.slane %v276, 2
    %v1323 = vrot.slane %v277, 2
    %v1324 = vsel %vm1306, %v1322, %v1323
    %v1325 = vrot.slane %v278, 2
    %v1326 = vsel %vm1306, %v1323, %v1325
    %v1327 = vrot.slane %v279, 2
    %v1328 = vrot.slane %v280, 2
    %v1329 = vsel %vm1306, %v1327, %v1328
    %v1330 = vrot.slane %v281, 2
    %v1331 = vsel %vm1306, %v1328, %v1330
    %v1332 = vrot.slane %v282, 2
    %v1333 = vrot.slane %v283, 2
    %v1334 = vsel %vm1306, %v1332, %v1333
    %v1335 = vrot.slane %v284, 2
    %v1336 = vsel %vm1306, %v1333, %v1335
    %v1337 = vrot.slane %v285, 2
    %v1338 = vrot.slane %v286, 2
    %v1339 = vsel %vm1306, %v1337, %v1338
    %v1340 = vrot.slane %v287, 2
    %v1341 = vsel %vm1306, %v1338, %v1340
    %v1342 = vrot.slane %v288, 2
    %v1343 = vrot.slane %v289, 2
    %v1344 = vsel %vm1306, %v1342, %v1343
    %v1345 = vrot.slane %v290, 2
    %v1346 = vsel %vm1306, %v1343, %v1345
    %v1347 = vrot.slane %v291, 2
    %v1348 = vrot.slane %v292, 2
    %v1349 = vsel %vm1306, %v1347, %v1348
    %v1350 = vrot.slane %v293, 2
    %v1351 = vsel %vm1306, %v1348, %v1350
    %v1352 = vrot.slane %v294, 2
    %v1353 = vrot.slane %v295, 2
    %v1354 = vsel %vm1306, %v1352, %v1353
    %v1355 = vrot.slane %v296, 2
    %v1356 = vsel %vm1306, %v1353, %v1355
    %v1357 = vrot.slane %v297, 2
    %v1358 = vrot.slane %v298, 2
    %v1359 = vsel %vm1306, %v1357, %v1358
    %v1360 = vrot.slane %v299, 2
    %v1361 = vsel %vm1306, %v1358, %v1360
    %v1362 = vrot.slane %v300, 2
    %v1363 = vrot.slane %v301, 2
    %v1364 = vsel %vm1306, %v1362, %v1363
    %v1365 = vrot.slane %v302, 2
    %v1366 = vsel %vm1306, %v1363, %v1365
    %v1367 = vrot.slane %v303, 2
    %v1368 = vrot.slane %v304, 2
    %v1369 = vsel %vm1306, %v1367, %v1368
    %v1370 = vrot.slane %v305, 2
    %v1371 = vsel %vm1306, %v1368, %v1370
    %v1372 = vrot.slane %v306, 2
    %v1373 = vrot.slane %v307, 2
    %v1374 = vsel %vm1306, %v1372, %v1373
    %v1375 = vrot.slane %v308, 2
    %v1376 = vsel %vm1306, %v1373, %v1375
    %v1377 = vrot.slane %v309, 2
    %v1378 = vrot.slane %v310, 2
    %v1379 = vsel %vm1306, %v1377, %v1378
    %v1380 = vrot.slane %v311, 2
    %v1381 = vsel %vm1306, %v1378, %v1380
    %v1382 = vrot.slane %v312, 2
    %v1383 = vrot.slane %v313, 2
    %v1384 = vsel %vm1306, %v1382, %v1383
    %v1385 = vrot.slane %v314, 2
    %v1386 = vsel %vm1306, %v1383, %v1385
    %v1387 = vrot.slane %v321, 2
    %v1388 = vrot.slane %v322, 2
    %v1389 = vsel %vm1306, %v1387, %v1388
    %v1390 = vrot.slane %v323, 2
    %v1391 = vsel %vm1306, %v1388, %v1390
    %v1392 = vrot.slane %v324, 2
    %v1393 = vrot.slane %v325, 2
    %v1394 = vsel %vm1306, %v1392, %v1393
    %v1395 = vrot.slane %v326, 2
    %v1396 = vsel %vm1306, %v1393, %v1395
    %v1397 = vrot.slane %v327, 2
    %v1398 = vrot.slane %v328, 2
    %v1399 = vsel %vm1306, %v1397, %v1398
    %v1400 = vrot.slane %v329, 2
    %v1401 = vsel %vm1306, %v1398, %v1400
    %v1402 = vrot.slane %v330, 2
    %v1403 = vrot.slane %v331, 2
    %v1404 = vsel %vm1306, %v1402, %v1403
    %v1405 = vrot.slane %v332, 2
    %v1406 = vsel %vm1306, %v1403, %v1405
    %v1407 = vrot.slane %v333, 2
    %v1408 = vrot.slane %v334, 2
    %v1409 = vsel %vm1306, %v1407, %v1408
    %v1410 = vrot.slane %v335, 2
    %v1411 = vsel %vm1306, %v1408, %v1410
    %v1412 = vrot.slane %v336, 2
    %v1413 = vrot.slane %v337, 2
    %v1414 = vsel %vm1306, %v1412, %v1413
    %v1415 = vrot.slane %v338, 2
    %v1416 = vsel %vm1306, %v1413, %v1415
    %v1417 = vrot.slane %v339, 2
    %v1418 = vrot.slane %v340, 2
    %v1419 = vsel %vm1306, %v1417, %v1418
    %v1420 = vrot.slane %v341, 2
    %v1421 = vsel %vm1306, %v1418, %v1420
    %v1422 = vrot.slane %v342, 2
    %v1423 = vrot.slane %v343, 2
    %v1424 = vsel %vm1306, %v1422, %v1423
    %v1425 = vrot.slane %v344, 2
    %v1426 = vsel %vm1306, %v1423, %v1425
    %v1427 = vrot.slane %v345, 2
    %v1428 = vrot.slane %v346, 2
    %v1429 = vsel %vm1306, %v1427, %v1428
    %v1430 = vrot.slane %v347, 2
    %v1431 = vsel %vm1306, %v1428, %v1430
    %v1432 = vrot.slane %v348, 2
    %v1433 = vrot.slane %v349, 2
    %v1434 = vsel %vm1306, %v1432, %v1433
    %v1435 = vrot.slane %v350, 2
    %v1436 = vsel %vm1306, %v1433, %v1435
    %v1437 = vrot.slane %v351, 2
    %v1438 = vrot.slane %v352, 2
    %v1439 = vsel %vm1306, %v1437, %v1438
    %v1440 = vrot.slane %v353, 2
    %v1441 = vsel %vm1306, %v1438, %v1440
    %v1442 = vrot.slane %v354, 2
    %v1443 = vrot.slane %v355, 2
    %v1444 = vsel %vm1306, %v1442, %v1443
    %v1445 = vrot.slane %v356, 2
    %v1446 = vsel %vm1306, %v1443, %v1445
    %v1447 = vrot.slane %v357, 2
    %v1448 = vrot.slane %v358, 2
    %v1449 = vsel %vm1306, %v1447, %v1448
    %v1450 = vrot.slane %v359, 2
    %v1451 = vsel %vm1306, %v1448, %v1450
    %v1452 = vrot.slane %v360, 2
    %v1453 = vrot.slane %v361, 2
    %v1454 = vsel %vm1306, %v1452, %v1453
    %v1455 = vrot.slane %v362, 2
    %v1456 = vsel %vm1306, %v1453, %v1455
    %v1457 = vrot.slane %v363, 2
    %v1458 = vrot.slane %v364, 2
    %v1459 = vsel %vm1306, %v1457, %v1458
    %v1460 = vrot.slane %v365, 2
    %v1461 = vsel %vm1306, %v1458, %v1460
    %v1462 = vrot.slane %v366, 2
    %v1463 = vrot.slane %v367, 2
    %v1464 = vsel %vm1306, %v1462, %v1463
    %v1465 = vrot.slane %v368, 2
    %v1466 = vsel %vm1306, %v1463, %v1465
    %v1531 = vpack.c.bf16 %v1311, %v1309
    %v1532 = vpack.c.bf16 %v1316, %v1314
    %v1533 = vpack.c.bf16 %v1321, %v1319
    %v1534 = vpack.c.bf16 %v1326, %v1324
    %v1535 = vpack.c.bf16 %v1331, %v1329
    %v1536 = vpack.c.bf16 %v1336, %v1334
    %v1537 = vpack.c.bf16 %v1341, %v1339
    %v1538 = vpack.c.bf16 %v1346, %v1344
    %v1539 = vpack.c.bf16 %v1351, %v1349
    %v1540 = vpack.c.bf16 %v1356, %v1354
    %v1541 = vpack.c.bf16 %v1361, %v1359
    %v1542 = vpack.c.bf16 %v1366, %v1364
    %v1543 = vpack.c.bf16 %v1371, %v1369
    %v1544 = vpack.c.bf16 %v1376, %v1374
    %v1545 = vpack.c.bf16 %v1381, %v1379
    %v1546 = vpack.c.bf16 %v1386, %v1384
    %v1547 = vpack.c.bf16 %v1391, %v1389
    %v1548 = vpack.c.bf16 %v1396, %v1394
    %v1549 = vpack.c.bf16 %v1401, %v1399
    %v1550 = vpack.c.bf16 %v1406, %v1404
    %v1551 = vpack.c.bf16 %v1411, %v1409
    %v1552 = vpack.c.bf16 %v1416, %v1414
    %v1553 = vpack.c.bf16 %v1421, %v1419
    %v1554 = vpack.c.bf16 %v1426, %v1424
    %v1555 = vpack.c.bf16 %v1431, %v1429
    %v1556 = vpack.c.bf16 %v1436, %v1434
    %v1557 = vpack.c.bf16 %v1441, %v1439
    %v1558 = vpack.c.bf16 %v1446, %v1444
    %v1559 = vpack.c.bf16 %v1451, %v1449
    %v1560 = vpack.c.bf16 %v1456, %v1454
    %v1561 = vpack.c.bf16 %v1461, %v1459
    %v1562 = vpack.c.bf16 %v1466, %v1464
    %v1564 = vsel %vm28, %v1531, 0
    %v1567 = vsel %vm28, %v1532, 0
    %v1570 = vsel %vm28, %v1533, 0
    %v1573 = vsel %vm28, %v1534, 0
    %v1576 = vsel %vm28, %v1535, 0
    %v1579 = vsel %vm28, %v1536, 0
    %v1582 = vsel %vm28, %v1537, 0
    %v1585 = vsel %vm28, %v1538, 0
    %v1588 = vsel %vm28, %v1539, 0
    %v1591 = vsel %vm28, %v1540, 0
    %v1594 = vsel %vm28, %v1541, 0
    %v1597 = vsel %vm28, %v1542, 0
    %v1600 = vsel %vm28, %v1543, 0
    %v1603 = vsel %vm28, %v1544, 0
    %v1606 = vsel %vm28, %v1545, 0
    %v1609 = vsel %vm28, %v1546, 0
    %v1612 = vsel %vm28, %v1547, 0
    %v1615 = vsel %vm28, %v1548, 0
    %v1618 = vsel %vm28, %v1549, 0
    %v1621 = vsel %vm28, %v1550, 0
    %v1624 = vsel %vm28, %v1551, 0
    %v1627 = vsel %vm28, %v1552, 0
    %v1630 = vsel %vm28, %v1553, 0
    %v1633 = vsel %vm28, %v1554, 0
    %v1636 = vsel %vm28, %v1555, 0
    %v1639 = vsel %vm28, %v1556, 0
    %v1642 = vsel %vm28, %v1557, 0
    %v1645 = vsel %vm28, %v1558, 0
    %v1648 = vsel %vm28, %v1559, 0
    %v1651 = vsel %vm28, %v1560, 0
    %v1654 = vsel %vm28, %v1561, 0
    %v1657 = vsel %vm28, %v1562, 0
    %v1660 = vsel %vm865, %v377, 0
    %1662 = vmatpush.bf16.msra.mxu0 0
    %1663 = vmatpush.bf16.msra.mxu0 0
    %1664 = vmatpush.bf16.msra.mxu0 0
    %1665 = vmatpush.bf16.msra.mxu0 0
    %1666 = vmatpush.bf16.msra.mxu0 0
    %1667 = vmatpush.bf16.msra.mxu0 0
    %1668 = vmatpush.bf16.msra.mxu0 0
    %1669 = vmatpush.bf16.msra.mxu0 %v1660
    %1670 = vmatmul.bf16.gmra.mxu0 %v1564
    %v1671 = vpop.f32.mrf.mxu0
    %v1672 = vadd.f32 0.0, %v1671
    %v1673 = vpop.f32.mrf.mxu0
    %v1674 = vadd.f32 0.0, %v1673
    %1675 = vmatmul.bf16.gmra.mxu0 %v1567
    %v1676 = vpop.f32.mrf.mxu0
    %v1677 = vadd.f32 0.0, %v1676
    %v1678 = vpop.f32.mrf.mxu0
    %v1679 = vadd.f32 0.0, %v1678
    %1680 = vmatmul.bf16.gmra.mxu0 %v1570
    %v1681 = vpop.f32.mrf.mxu0
    %v1682 = vadd.f32 0.0, %v1681
    %v1683 = vpop.f32.mrf.mxu0
    %v1684 = vadd.f32 0.0, %v1683
    %1685 = vmatmul.bf16.gmra.mxu0 %v1573
    %v1686 = vpop.f32.mrf.mxu0
    %v1687 = vadd.f32 0.0, %v1686
    %v1688 = vpop.f32.mrf.mxu0
    %v1689 = vadd.f32 0.0, %v1688
    %1690 = vmatmul.bf16.gmra.mxu0 %v1576
    %v1691 = vpop.f32.mrf.mxu0
    %v1692 = vadd.f32 0.0, %v1691
    %v1693 = vpop.f32.mrf.mxu0
    %v1694 = vadd.f32 0.0, %v1693
    %1695 = vmatmul.bf16.gmra.mxu0 %v1579
    %v1696 = vpop.f32.mrf.mxu0
    %v1697 = vadd.f32 0.0, %v1696
    %v1698 = vpop.f32.mrf.mxu0
    %v1699 = vadd.f32 0.0, %v1698
    %1700 = vmatmul.bf16.gmra.mxu0 %v1582
    %v1701 = vpop.f32.mrf.mxu0
    %v1702 = vadd.f32 0.0, %v1701
    %v1703 = vpop.f32.mrf.mxu0
    %v1704 = vadd.f32 0.0, %v1703
    %1705 = vmatmul.bf16.gmra.mxu0 %v1585
    %v1706 = vpop.f32.mrf.mxu0
    %v1707 = vadd.f32 0.0, %v1706
    %v1708 = vpop.f32.mrf.mxu0
    %v1709 = vadd.f32 0.0, %v1708
    %1710 = vmatmul.bf16.gmra.mxu0 %v1588
    %v1711 = vpop.f32.mrf.mxu0
    %v1712 = vadd.f32 0.0, %v1711
    %v1713 = vpop.f32.mrf.mxu0
    %v1714 = vadd.f32 0.0, %v1713
    %1715 = vmatmul.bf16.gmra.mxu0 %v1591
    %v1716 = vpop.f32.mrf.mxu0
    %v1717 = vadd.f32 0.0, %v1716
    %v1718 = vpop.f32.mrf.mxu0
    %v1719 = vadd.f32 0.0, %v1718
    %1720 = vmatmul.bf16.gmra.mxu0 %v1594
    %v1721 = vpop.f32.mrf.mxu0
    %v1722 = vadd.f32 0.0, %v1721
    %v1723 = vpop.f32.mrf.mxu0
    %v1724 = vadd.f32 0.0, %v1723
    %1725 = vmatmul.bf16.gmra.mxu0 %v1597
    %v1726 = vpop.f32.mrf.mxu0
    %v1727 = vadd.f32 0.0, %v1726
    %v1728 = vpop.f32.mrf.mxu0
    %v1729 = vadd.f32 0.0, %v1728
    %1730 = vmatmul.bf16.gmra.mxu0 %v1600
    %v1731 = vpop.f32.mrf.mxu0
    %v1732 = vadd.f32 0.0, %v1731
    %v1733 = vpop.f32.mrf.mxu0
    %v1734 = vadd.f32 0.0, %v1733
    %1735 = vmatmul.bf16.gmra.mxu0 %v1603
    %v1736 = vpop.f32.mrf.mxu0
    %v1737 = vadd.f32 0.0, %v1736
    %v1738 = vpop.f32.mrf.mxu0
    %v1739 = vadd.f32 0.0, %v1738
    %1740 = vmatmul.bf16.gmra.mxu0 %v1606
    %v1741 = vpop.f32.mrf.mxu0
    %v1742 = vadd.f32 0.0, %v1741
    %v1743 = vpop.f32.mrf.mxu0
    %v1744 = vadd.f32 0.0, %v1743
    %1745 = vmatmul.bf16.gmra.mxu0 %v1609
    %v1746 = vpop.f32.mrf.mxu0
    %v1747 = vadd.f32 0.0, %v1746
    %v1748 = vpop.f32.mrf.mxu0
    %v1749 = vadd.f32 0.0, %v1748
    %1750 = vmatmul.bf16.gmra.mxu0 %v1612
    %v1751 = vpop.f32.mrf.mxu0
    %v1752 = vadd.f32 0.0, %v1751
    %v1753 = vpop.f32.mrf.mxu0
    %v1754 = vadd.f32 0.0, %v1753
    %1755 = vmatmul.bf16.gmra.mxu0 %v1615
    %v1756 = vpop.f32.mrf.mxu0
    %v1757 = vadd.f32 0.0, %v1756
    %v1758 = vpop.f32.mrf.mxu0
    %v1759 = vadd.f32 0.0, %v1758
    %1760 = vmatmul.bf16.gmra.mxu0 %v1618
    %v1761 = vpop.f32.mrf.mxu0
    %v1762 = vadd.f32 0.0, %v1761
    %v1763 = vpop.f32.mrf.mxu0
    %v1764 = vadd.f32 0.0, %v1763
    %1765 = vmatmul.bf16.gmra.mxu0 %v1621
    %v1766 = vpop.f32.mrf.mxu0
    %v1767 = vadd.f32 0.0, %v1766
    %v1768 = vpop.f32.mrf.mxu0
    %v1769 = vadd.f32 0.0, %v1768
    %1770 = vmatmul.bf16.gmra.mxu0 %v1624
    %v1771 = vpop.f32.mrf.mxu0
    %v1772 = vadd.f32 0.0, %v1771
    %v1773 = vpop.f32.mrf.mxu0
    %v1774 = vadd.f32 0.0, %v1773
    %1775 = vmatmul.bf16.gmra.mxu0 %v1627
    %v1776 = vpop.f32.mrf.mxu0
    %v1777 = vadd.f32 0.0, %v1776
    %v1778 = vpop.f32.mrf.mxu0
    %v1779 = vadd.f32 0.0, %v1778
    %1780 = vmatmul.bf16.gmra.mxu0 %v1630
    %v1781 = vpop.f32.mrf.mxu0
    %v1782 = vadd.f32 0.0, %v1781
    %v1783 = vpop.f32.mrf.mxu0
    %v1784 = vadd.f32 0.0, %v1783
    %1785 = vmatmul.bf16.gmra.mxu0 %v1633
    %v1786 = vpop.f32.mrf.mxu0
    %v1787 = vadd.f32 0.0, %v1786
    %v1788 = vpop.f32.mrf.mxu0
    %v1789 = vadd.f32 0.0, %v1788
    %1790 = vmatmul.bf16.gmra.mxu0 %v1636
    %v1791 = vpop.f32.mrf.mxu0
    %v1792 = vadd.f32 0.0, %v1791
    %v1793 = vpop.f32.mrf.mxu0
    %v1794 = vadd.f32 0.0, %v1793
    %1795 = vmatmul.bf16.gmra.mxu0 %v1639
    %v1796 = vpop.f32.mrf.mxu0
    %v1797 = vadd.f32 0.0, %v1796
    %v1798 = vpop.f32.mrf.mxu0
    %v1799 = vadd.f32 0.0, %v1798
    %1800 = vmatmul.bf16.gmra.mxu0 %v1642
    %v1801 = vpop.f32.mrf.mxu0
    %v1802 = vadd.f32 0.0, %v1801
    %v1803 = vpop.f32.mrf.mxu0
    %v1804 = vadd.f32 0.0, %v1803
    %1805 = vmatmul.bf16.gmra.mxu0 %v1645
    %v1806 = vpop.f32.mrf.mxu0
    %v1807 = vadd.f32 0.0, %v1806
    %v1808 = vpop.f32.mrf.mxu0
    %v1809 = vadd.f32 0.0, %v1808
    %1810 = vmatmul.bf16.gmra.mxu0 %v1648
    %v1811 = vpop.f32.mrf.mxu0
    %v1812 = vadd.f32 0.0, %v1811
    %v1813 = vpop.f32.mrf.mxu0
    %v1814 = vadd.f32 0.0, %v1813
    %1815 = vmatmul.bf16.gmra.mxu0 %v1651
    %v1816 = vpop.f32.mrf.mxu0
    %v1817 = vadd.f32 0.0, %v1816
    %v1818 = vpop.f32.mrf.mxu0
    %v1819 = vadd.f32 0.0, %v1818
    %1820 = vmatmul.bf16.gmra.mxu0 %v1654
    %v1821 = vpop.f32.mrf.mxu0
    %v1822 = vadd.f32 0.0, %v1821
    %v1823 = vpop.f32.mrf.mxu0
    %v1824 = vadd.f32 0.0, %v1823
    %1825 = vmatmul.bf16.gmra.mxu0 %v1657
    %v1826 = vpop.f32.mrf.mxu0
    %v1827 = vadd.f32 0.0, %v1826
    %v1828 = vpop.f32.mrf.mxu0
    %v1829 = vadd.f32 0.0, %v1828
    %1830 = vdwg.mxu0
    %v1831 = vadd.f32 %v1147, %v1672
    %v1832 = vadd.f32 %v1149, %v1674
    %v1833 = vadd.f32 %v1152, %v1677
    %v1834 = vadd.f32 %v1154, %v1679
    %v1835 = vadd.f32 %v1157, %v1682
    %v1836 = vadd.f32 %v1159, %v1684
    %v1837 = vadd.f32 %v1162, %v1687
    %v1838 = vadd.f32 %v1164, %v1689
    %v1839 = vadd.f32 %v1167, %v1692
    %v1840 = vadd.f32 %v1169, %v1694
    %v1841 = vadd.f32 %v1172, %v1697
    %v1842 = vadd.f32 %v1174, %v1699
    %v1843 = vadd.f32 %v1177, %v1702
    %v1844 = vadd.f32 %v1179, %v1704
    %v1845 = vadd.f32 %v1182, %v1707
    %v1846 = vadd.f32 %v1184, %v1709
    %v1847 = vadd.f32 %v1187, %v1712
    %v1848 = vadd.f32 %v1189, %v1714
    %v1849 = vadd.f32 %v1192, %v1717
    %v1850 = vadd.f32 %v1194, %v1719
    %v1851 = vadd.f32 %v1197, %v1722
    %v1852 = vadd.f32 %v1199, %v1724
    %v1853 = vadd.f32 %v1202, %v1727
    %v1854 = vadd.f32 %v1204, %v1729
    %v1855 = vadd.f32 %v1207, %v1732
    %v1856 = vadd.f32 %v1209, %v1734
    %v1857 = vadd.f32 %v1212, %v1737
    %v1858 = vadd.f32 %v1214, %v1739
    %v1859 = vadd.f32 %v1217, %v1742
    %v1860 = vadd.f32 %v1219, %v1744
    %v1861 = vadd.f32 %v1222, %v1747
    %v1862 = vadd.f32 %v1224, %v1749
    %v1863 = vadd.f32 %v1227, %v1752
    %v1864 = vadd.f32 %v1229, %v1754
    %v1865 = vadd.f32 %v1232, %v1757
    %v1866 = vadd.f32 %v1234, %v1759
    %v1867 = vadd.f32 %v1237, %v1762
    %v1868 = vadd.f32 %v1239, %v1764
    %v1869 = vadd.f32 %v1242, %v1767
    %v1870 = vadd.f32 %v1244, %v1769
    %v1871 = vadd.f32 %v1247, %v1772
    %v1872 = vadd.f32 %v1249, %v1774
    %v1873 = vadd.f32 %v1252, %v1777
    %v1874 = vadd.f32 %v1254, %v1779
    %v1875 = vadd.f32 %v1257, %v1782
    %v1876 = vadd.f32 %v1259, %v1784
    %v1877 = vadd.f32 %v1262, %v1787
    %v1878 = vadd.f32 %v1264, %v1789
    %v1879 = vadd.f32 %v1267, %v1792
    %v1880 = vadd.f32 %v1269, %v1794
    %v1881 = vadd.f32 %v1272, %v1797
    %v1882 = vadd.f32 %v1274, %v1799
    %v1883 = vadd.f32 %v1277, %v1802
    %v1884 = vadd.f32 %v1279, %v1804
    %v1885 = vadd.f32 %v1282, %v1807
    %v1886 = vadd.f32 %v1284, %v1809
    %v1887 = vadd.f32 %v1287, %v1812
    %v1888 = vadd.f32 %v1289, %v1814
    %v1889 = vadd.f32 %v1292, %v1817
    %v1890 = vadd.f32 %v1294, %v1819
    %v1891 = vadd.f32 %v1297, %v1822
    %v1892 = vadd.f32 %v1299, %v1824
    %v1893 = vadd.f32 %v1302, %v1827
    %v1894 = vadd.f32 %v1304, %v1829
    %v1895 = vpack.c.bf16 %v316, %v315
    %v1896 = vpack.c.bf16 %v370, %v369
    %v1898 = vsel %vm28, %v1895, 0
    %v1901 = vsel %vm28, %v1896, 0
    %v1904 = vsel %vm865, %v378, 0
    %1906 = vmatpush.bf16.msra.mxu0 0
    %1907 = vmatpush.bf16.msra.mxu0 0
    %1908 = vmatpush.bf16.msra.mxu0 0
    %1909 = vmatpush.bf16.msra.mxu0 0
    %1910 = vmatpush.bf16.msra.mxu0 0
    %1911 = vmatpush.bf16.msra.mxu0 0
    %1912 = vmatpush.bf16.msra.mxu0 0
    %1913 = vmatpush.bf16.msra.mxu0 %v1904
    %1914 = vmatmul.bf16.gmra.mxu0 %v1042
    %v1915 = vpop.f32.mrf.mxu0
    %v1916 = vadd.f32 0.0, %v1915
    %v1917 = vpop.f32.mrf.mxu0
    %v1918 = vadd.f32 0.0, %v1917
    %1919 = vmatmul.bf16.gmra.mxu0 %v1045
    %v1920 = vpop.f32.mrf.mxu0
    %v1921 = vadd.f32 0.0, %v1920
    %v1922 = vpop.f32.mrf.mxu0
    %v1923 = vadd.f32 0.0, %v1922
    %1924 = vmatmul.bf16.gmra.mxu0 %v1048
    %v1925 = vpop.f32.mrf.mxu0
    %v1926 = vadd.f32 0.0, %v1925
    %v1927 = vpop.f32.mrf.mxu0
    %v1928 = vadd.f32 0.0, %v1927
    %1929 = vmatmul.bf16.gmra.mxu0 %v1051
    %v1930 = vpop.f32.mrf.mxu0
    %v1931 = vadd.f32 0.0, %v1930
    %v1932 = vpop.f32.mrf.mxu0
    %v1933 = vadd.f32 0.0, %v1932
    %1934 = vmatmul.bf16.gmra.mxu0 %v1054
    %v1935 = vpop.f32.mrf.mxu0
    %v1936 = vadd.f32 0.0, %v1935
    %v1937 = vpop.f32.mrf.mxu0
    %v1938 = vadd.f32 0.0, %v1937
    %1939 = vmatmul.bf16.gmra.mxu0 %v1057
    %v1940 = vpop.f32.mrf.mxu0
    %v1941 = vadd.f32 0.0, %v1940
    %v1942 = vpop.f32.mrf.mxu0
    %v1943 = vadd.f32 0.0, %v1942
    %1944 = vmatmul.bf16.gmra.mxu0 %v1060
    %v1945 = vpop.f32.mrf.mxu0
    %v1946 = vadd.f32 0.0, %v1945
    %v1947 = vpop.f32.mrf.mxu0
    %v1948 = vadd.f32 0.0, %v1947
    %1949 = vmatmul.bf16.gmra.mxu0 %v1063
    %v1950 = vpop.f32.mrf.mxu0
    %v1951 = vadd.f32 0.0, %v1950
    %v1952 = vpop.f32.mrf.mxu0
    %v1953 = vadd.f32 0.0, %v1952
    %1954 = vmatmul.bf16.gmra.mxu0 %v1066
    %v1955 = vpop.f32.mrf.mxu0
    %v1956 = vadd.f32 0.0, %v1955
    %v1957 = vpop.f32.mrf.mxu0
    %v1958 = vadd.f32 0.0, %v1957
    %1959 = vmatmul.bf16.gmra.mxu0 %v1069
    %v1960 = vpop.f32.mrf.mxu0
    %v1961 = vadd.f32 0.0, %v1960
    %v1962 = vpop.f32.mrf.mxu0
    %v1963 = vadd.f32 0.0, %v1962
    %1964 = vmatmul.bf16.gmra.mxu0 %v1072
    %v1965 = vpop.f32.mrf.mxu0
    %v1966 = vadd.f32 0.0, %v1965
    %v1967 = vpop.f32.mrf.mxu0
    %v1968 = vadd.f32 0.0, %v1967
    %1969 = vmatmul.bf16.gmra.mxu0 %v1075
    %v1970 = vpop.f32.mrf.mxu0
    %v1971 = vadd.f32 0.0, %v1970
    %v1972 = vpop.f32.mrf.mxu0
    %v1973 = vadd.f32 0.0, %v1972
    %1974 = vmatmul.bf16.gmra.mxu0 %v1078
    %v1975 = vpop.f32.mrf.mxu0
    %v1976 = vadd.f32 0.0, %v1975
    %v1977 = vpop.f32.mrf.mxu0
    %v1978 = vadd.f32 0.0, %v1977
    %1979 = vmatmul.bf16.gmra.mxu0 %v1081
    %v1980 = vpop.f32.mrf.mxu0
    %v1981 = vadd.f32 0.0, %v1980
    %v1982 = vpop.f32.mrf.mxu0
    %v1983 = vadd.f32 0.0, %v1982
    %1984 = vmatmul.bf16.gmra.mxu0 %v1084
    %v1985 = vpop.f32.mrf.mxu0
    %v1986 = vadd.f32 0.0, %v1985
    %v1987 = vpop.f32.mrf.mxu0
    %v1988 = vadd.f32 0.0, %v1987
    %1989 = vmatmul.bf16.gmra.mxu0 %v1898
    %v1990 = vpop.f32.mrf.mxu0
    %v1991 = vadd.f32 0.0, %v1990
    %v1992 = vpop.f32.mrf.mxu0
    %v1993 = vadd.f32 0.0, %v1992
    %1994 = vmatmul.bf16.gmra.mxu0 %v1090
    %v1995 = vpop.f32.mrf.mxu0
    %v1996 = vadd.f32 0.0, %v1995
    %v1997 = vpop.f32.mrf.mxu0
    %v1998 = vadd.f32 0.0, %v1997
    %1999 = vmatmul.bf16.gmra.mxu0 %v1093
    %v2000 = vpop.f32.mrf.mxu0
    %v2001 = vadd.f32 0.0, %v2000
    %v2002 = vpop.f32.mrf.mxu0
    %v2003 = vadd.f32 0.0, %v2002
    %2004 = vmatmul.bf16.gmra.mxu0 %v1096
    %v2005 = vpop.f32.mrf.mxu0
    %v2006 = vadd.f32 0.0, %v2005
    %v2007 = vpop.f32.mrf.mxu0
    %v2008 = vadd.f32 0.0, %v2007
    %2009 = vmatmul.bf16.gmra.mxu0 %v1099
    %v2010 = vpop.f32.mrf.mxu0
    %v2011 = vadd.f32 0.0, %v2010
    %v2012 = vpop.f32.mrf.mxu0
    %v2013 = vadd.f32 0.0, %v2012
    %2014 = vmatmul.bf16.gmra.mxu0 %v1102
    %v2015 = vpop.f32.mrf.mxu0
    %v2016 = vadd.f32 0.0, %v2015
    %v2017 = vpop.f32.mrf.mxu0
    %v2018 = vadd.f32 0.0, %v2017
    %2019 = vmatmul.bf16.gmra.mxu0 %v1105
    %v2020 = vpop.f32.mrf.mxu0
    %v2021 = vadd.f32 0.0, %v2020
    %v2022 = vpop.f32.mrf.mxu0
    %v2023 = vadd.f32 0.0, %v2022
    %2024 = vmatmul.bf16.gmra.mxu0 %v1108
    %v2025 = vpop.f32.mrf.mxu0
    %v2026 = vadd.f32 0.0, %v2025
    %v2027 = vpop.f32.mrf.mxu0
    %v2028 = vadd.f32 0.0, %v2027
    %2029 = vmatmul.bf16.gmra.mxu0 %v1111
    %v2030 = vpop.f32.mrf.mxu0
    %v2031 = vadd.f32 0.0, %v2030
    %v2032 = vpop.f32.mrf.mxu0
    %v2033 = vadd.f32 0.0, %v2032
    %2034 = vmatmul.bf16.gmra.mxu0 %v1114
    %v2035 = vpop.f32.mrf.mxu0
    %v2036 = vadd.f32 0.0, %v2035
    %v2037 = vpop.f32.mrf.mxu0
    %v2038 = vadd.f32 0.0, %v2037
    %2039 = vmatmul.bf16.gmra.mxu0 %v1117
    %v2040 = vpop.f32.mrf.mxu0
    %v2041 = vadd.f32 0.0, %v2040
    %v2042 = vpop.f32.mrf.mxu0
    %v2043 = vadd.f32 0.0, %v2042
    %2044 = vmatmul.bf16.gmra.mxu0 %v1120
    %v2045 = vpop.f32.mrf.mxu0
    %v2046 = vadd.f32 0.0, %v2045
    %v2047 = vpop.f32.mrf.mxu0
    %v2048 = vadd.f32 0.0, %v2047
    %2049 = vmatmul.bf16.gmra.mxu0 %v1123
    %v2050 = vpop.f32.mrf.mxu0
    %v2051 = vadd.f32 0.0, %v2050
    %v2052 = vpop.f32.mrf.mxu0
    %v2053 = vadd.f32 0.0, %v2052
    %2054 = vmatmul.bf16.gmra.mxu0 %v1126
    %v2055 = vpop.f32.mrf.mxu0
    %v2056 = vadd.f32 0.0, %v2055
    %v2057 = vpop.f32.mrf.mxu0
    %v2058 = vadd.f32 0.0, %v2057
    %2059 = vmatmul.bf16.gmra.mxu0 %v1129
    %v2060 = vpop.f32.mrf.mxu0
    %v2061 = vadd.f32 0.0, %v2060
    %v2062 = vpop.f32.mrf.mxu0
    %v2063 = vadd.f32 0.0, %v2062
    %2064 = vmatmul.bf16.gmra.mxu0 %v1132
    %v2065 = vpop.f32.mrf.mxu0
    %v2066 = vadd.f32 0.0, %v2065
    %v2067 = vpop.f32.mrf.mxu0
    %v2068 = vadd.f32 0.0, %v2067
    %2069 = vmatmul.bf16.gmra.mxu0 %v1901
    %v2070 = vpop.f32.mrf.mxu0
    %v2071 = vadd.f32 0.0, %v2070
    %v2072 = vpop.f32.mrf.mxu0
    %v2073 = vadd.f32 0.0, %v2072
    %2074 = vdwg.mxu0
    %v2075 = vadd.f32 %v1831, %v1916
    %v2076 = vadd.f32 %v1832, %v1918
    %v2077 = vadd.f32 %v1833, %v1921
    %v2078 = vadd.f32 %v1834, %v1923
    %v2079 = vadd.f32 %v1835, %v1926
    %v2080 = vadd.f32 %v1836, %v1928
    %v2081 = vadd.f32 %v1837, %v1931
    %v2082 = vadd.f32 %v1838, %v1933
    %v2083 = vadd.f32 %v1839, %v1936
    %v2084 = vadd.f32 %v1840, %v1938
    %v2085 = vadd.f32 %v1841, %v1941
    %v2086 = vadd.f32 %v1842, %v1943
    %v2087 = vadd.f32 %v1843, %v1946
    %v2088 = vadd.f32 %v1844, %v1948
    %v2089 = vadd.f32 %v1845, %v1951
    %v2090 = vadd.f32 %v1846, %v1953
    %v2091 = vadd.f32 %v1847, %v1956
    %v2092 = vadd.f32 %v1848, %v1958
    %v2093 = vadd.f32 %v1849, %v1961
    %v2094 = vadd.f32 %v1850, %v1963
    %v2095 = vadd.f32 %v1851, %v1966
    %v2096 = vadd.f32 %v1852, %v1968
    %v2097 = vadd.f32 %v1853, %v1971
    %v2098 = vadd.f32 %v1854, %v1973
    %v2099 = vadd.f32 %v1855, %v1976
    %v2100 = vadd.f32 %v1856, %v1978
    %v2101 = vadd.f32 %v1857, %v1981
    %v2102 = vadd.f32 %v1858, %v1983
    %v2103 = vadd.f32 %v1859, %v1986
    %v2104 = vadd.f32 %v1860, %v1988
    %v2105 = vadd.f32 %v1861, %v1991
    %v2106 = vadd.f32 %v1862, %v1993
    %v2107 = vadd.f32 %v1863, %v1996
    %v2108 = vadd.f32 %v1864, %v1998
    %v2109 = vadd.f32 %v1865, %v2001
    %v2110 = vadd.f32 %v1866, %v2003
    %v2111 = vadd.f32 %v1867, %v2006
    %v2112 = vadd.f32 %v1868, %v2008
    %v2113 = vadd.f32 %v1869, %v2011
    %v2114 = vadd.f32 %v1870, %v2013
    %v2115 = vadd.f32 %v1871, %v2016
    %v2116 = vadd.f32 %v1872, %v2018
    %v2117 = vadd.f32 %v1873, %v2021
    %v2118 = vadd.f32 %v1874, %v2023
    %v2119 = vadd.f32 %v1875, %v2026
    %v2120 = vadd.f32 %v1876, %v2028
    %v2121 = vadd.f32 %v1877, %v2031
    %v2122 = vadd.f32 %v1878, %v2033
    %v2123 = vadd.f32 %v1879, %v2036
    %v2124 = vadd.f32 %v1880, %v2038
    %v2125 = vadd.f32 %v1881, %v2041
    %v2126 = vadd.f32 %v1882, %v2043
    %v2127 = vadd.f32 %v1883, %v2046
    %v2128 = vadd.f32 %v1884, %v2048
    %v2129 = vadd.f32 %v1885, %v2051
    %v2130 = vadd.f32 %v1886, %v2053
    %v2131 = vadd.f32 %v1887, %v2056
    %v2132 = vadd.f32 %v1888, %v2058
    %v2133 = vadd.f32 %v1889, %v2061
    %v2134 = vadd.f32 %v1890, %v2063
    %v2135 = vadd.f32 %v1891, %v2066
    %v2136 = vadd.f32 %v1892, %v2068
    %v2137 = vadd.f32 %v1893, %v2071
    %v2138 = vadd.f32 %v1894, %v2073
    %v2145 = vrot.slane %v315, 1
    %v2146 = vrot.slane %v316, 1
    %v2147 = vsel %vm512, %v2145, %v2146
    %v2148 = vrot.slane %v317, 1
    %v2149 = vsel %vm512, %v2146, %v2148
    %v2150 = vrot.slane %v369, 1
    %v2151 = vrot.slane %v370, 1
    %v2152 = vsel %vm512, %v2150, %v2151
    %v2153 = vrot.slane %v371, 1
    %v2154 = vsel %vm512, %v2151, %v2153
    %v2159 = vpack.c.bf16 %v2149, %v2147
    %v2160 = vpack.c.bf16 %v2154, %v2152
    %v2162 = vsel %vm28, %v2159, 0
    %v2165 = vsel %vm28, %v2160, 0
    %v2168 = vsel %vm865, %v379, 0
    %2170 = vmatpush.bf16.msra.mxu0 0
    %2171 = vmatpush.bf16.msra.mxu0 0
    %2172 = vmatpush.bf16.msra.mxu0 0
    %2173 = vmatpush.bf16.msra.mxu0 0
    %2174 = vmatpush.bf16.msra.mxu0 0
    %2175 = vmatpush.bf16.msra.mxu0 0
    %2176 = vmatpush.bf16.msra.mxu0 0
    %2177 = vmatpush.bf16.msra.mxu0 %v2168
    %2178 = vmatmul.bf16.gmra.mxu0 %v773
    %v2179 = vpop.f32.mrf.mxu0
    %v2180 = vadd.f32 0.0, %v2179
    %v2181 = vpop.f32.mrf.mxu0
    %v2182 = vadd.f32 0.0, %v2181
    %2183 = vmatmul.bf16.gmra.mxu0 %v776
    %v2184 = vpop.f32.mrf.mxu0
    %v2185 = vadd.f32 0.0, %v2184
    %v2186 = vpop.f32.mrf.mxu0
    %v2187 = vadd.f32 0.0, %v2186
    %2188 = vmatmul.bf16.gmra.mxu0 %v779
    %v2189 = vpop.f32.mrf.mxu0
    %v2190 = vadd.f32 0.0, %v2189
    %v2191 = vpop.f32.mrf.mxu0
    %v2192 = vadd.f32 0.0, %v2191
    %2193 = vmatmul.bf16.gmra.mxu0 %v782
    %v2194 = vpop.f32.mrf.mxu0
    %v2195 = vadd.f32 0.0, %v2194
    %v2196 = vpop.f32.mrf.mxu0
    %v2197 = vadd.f32 0.0, %v2196
    %2198 = vmatmul.bf16.gmra.mxu0 %v785
    %v2199 = vpop.f32.mrf.mxu0
    %v2200 = vadd.f32 0.0, %v2199
    %v2201 = vpop.f32.mrf.mxu0
    %v2202 = vadd.f32 0.0, %v2201
    %2203 = vmatmul.bf16.gmra.mxu0 %v788
    %v2204 = vpop.f32.mrf.mxu0
    %v2205 = vadd.f32 0.0, %v2204
    %v2206 = vpop.f32.mrf.mxu0
    %v2207 = vadd.f32 0.0, %v2206
    %2208 = vmatmul.bf16.gmra.mxu0 %v791
    %v2209 = vpop.f32.mrf.mxu0
    %v2210 = vadd.f32 0.0, %v2209
    %v2211 = vpop.f32.mrf.mxu0
    %v2212 = vadd.f32 0.0, %v2211
    %2213 = vmatmul.bf16.gmra.mxu0 %v794
    %v2214 = vpop.f32.mrf.mxu0
    %v2215 = vadd.f32 0.0, %v2214
    %v2216 = vpop.f32.mrf.mxu0
    %v2217 = vadd.f32 0.0, %v2216
    %2218 = vmatmul.bf16.gmra.mxu0 %v797
    %v2219 = vpop.f32.mrf.mxu0
    %v2220 = vadd.f32 0.0, %v2219
    %v2221 = vpop.f32.mrf.mxu0
    %v2222 = vadd.f32 0.0, %v2221
    %2223 = vmatmul.bf16.gmra.mxu0 %v800
    %v2224 = vpop.f32.mrf.mxu0
    %v2225 = vadd.f32 0.0, %v2224
    %v2226 = vpop.f32.mrf.mxu0
    %v2227 = vadd.f32 0.0, %v2226
    %2228 = vmatmul.bf16.gmra.mxu0 %v803
    %v2229 = vpop.f32.mrf.mxu0
    %v2230 = vadd.f32 0.0, %v2229
    %v2231 = vpop.f32.mrf.mxu0
    %v2232 = vadd.f32 0.0, %v2231
    %2233 = vmatmul.bf16.gmra.mxu0 %v806
    %v2234 = vpop.f32.mrf.mxu0
    %v2235 = vadd.f32 0.0, %v2234
    %v2236 = vpop.f32.mrf.mxu0
    %v2237 = vadd.f32 0.0, %v2236
    %2238 = vmatmul.bf16.gmra.mxu0 %v809
    %v2239 = vpop.f32.mrf.mxu0
    %v2240 = vadd.f32 0.0, %v2239
    %v2241 = vpop.f32.mrf.mxu0
    %v2242 = vadd.f32 0.0, %v2241
    %2243 = vmatmul.bf16.gmra.mxu0 %v812
    %v2244 = vpop.f32.mrf.mxu0
    %v2245 = vadd.f32 0.0, %v2244
    %v2246 = vpop.f32.mrf.mxu0
    %v2247 = vadd.f32 0.0, %v2246
    %2248 = vmatmul.bf16.gmra.mxu0 %v815
    %v2249 = vpop.f32.mrf.mxu0
    %v2250 = vadd.f32 0.0, %v2249
    %v2251 = vpop.f32.mrf.mxu0
    %v2252 = vadd.f32 0.0, %v2251
    %2253 = vmatmul.bf16.gmra.mxu0 %v2162
    %v2254 = vpop.f32.mrf.mxu0
    %v2255 = vadd.f32 0.0, %v2254
    %v2256 = vpop.f32.mrf.mxu0
    %v2257 = vadd.f32 0.0, %v2256
    %2258 = vmatmul.bf16.gmra.mxu0 %v821
    %v2259 = vpop.f32.mrf.mxu0
    %v2260 = vadd.f32 0.0, %v2259
    %v2261 = vpop.f32.mrf.mxu0
    %v2262 = vadd.f32 0.0, %v2261
    %2263 = vmatmul.bf16.gmra.mxu0 %v824
    %v2264 = vpop.f32.mrf.mxu0
    %v2265 = vadd.f32 0.0, %v2264
    %v2266 = vpop.f32.mrf.mxu0
    %v2267 = vadd.f32 0.0, %v2266
    %2268 = vmatmul.bf16.gmra.mxu0 %v827
    %v2269 = vpop.f32.mrf.mxu0
    %v2270 = vadd.f32 0.0, %v2269
    %v2271 = vpop.f32.mrf.mxu0
    %v2272 = vadd.f32 0.0, %v2271
    %2273 = vmatmul.bf16.gmra.mxu0 %v830
    %v2274 = vpop.f32.mrf.mxu0
    %v2275 = vadd.f32 0.0, %v2274
    %v2276 = vpop.f32.mrf.mxu0
    %v2277 = vadd.f32 0.0, %v2276
    %2278 = vmatmul.bf16.gmra.mxu0 %v833
    %v2279 = vpop.f32.mrf.mxu0
    %v2280 = vadd.f32 0.0, %v2279
    %v2281 = vpop.f32.mrf.mxu0
    %v2282 = vadd.f32 0.0, %v2281
    %2283 = vmatmul.bf16.gmra.mxu0 %v836
    %v2284 = vpop.f32.mrf.mxu0
    %v2285 = vadd.f32 0.0, %v2284
    %v2286 = vpop.f32.mrf.mxu0
    %v2287 = vadd.f32 0.0, %v2286
    %2288 = vmatmul.bf16.gmra.mxu0 %v839
    %v2289 = vpop.f32.mrf.mxu0
    %v2290 = vadd.f32 0.0, %v2289
    %v2291 = vpop.f32.mrf.mxu0
    %v2292 = vadd.f32 0.0, %v2291
    %2293 = vmatmul.bf16.gmra.mxu0 %v842
    %v2294 = vpop.f32.mrf.mxu0
    %v2295 = vadd.f32 0.0, %v2294
    %v2296 = vpop.f32.mrf.mxu0
    %v2297 = vadd.f32 0.0, %v2296
    %2298 = vmatmul.bf16.gmra.mxu0 %v845
    %v2299 = vpop.f32.mrf.mxu0
    %v2300 = vadd.f32 0.0, %v2299
    %v2301 = vpop.f32.mrf.mxu0
    %v2302 = vadd.f32 0.0, %v2301
    %2303 = vmatmul.bf16.gmra.mxu0 %v848
    %v2304 = vpop.f32.mrf.mxu0
    %v2305 = vadd.f32 0.0, %v2304
    %v2306 = vpop.f32.mrf.mxu0
    %v2307 = vadd.f32 0.0, %v2306
    %2308 = vmatmul.bf16.gmra.mxu0 %v851
    %v2309 = vpop.f32.mrf.mxu0
    %v2310 = vadd.f32 0.0, %v2309
    %v2311 = vpop.f32.mrf.mxu0
    %v2312 = vadd.f32 0.0, %v2311
    %2313 = vmatmul.bf16.gmra.mxu0 %v854
    %v2314 = vpop.f32.mrf.mxu0
    %v2315 = vadd.f32 0.0, %v2314
    %v2316 = vpop.f32.mrf.mxu0
    %v2317 = vadd.f32 0.0, %v2316
    %2318 = vmatmul.bf16.gmra.mxu0 %v857
    %v2319 = vpop.f32.mrf.mxu0
    %v2320 = vadd.f32 0.0, %v2319
    %v2321 = vpop.f32.mrf.mxu0
    %v2322 = vadd.f32 0.0, %v2321
    %2323 = vmatmul.bf16.gmra.mxu0 %v860
    %v2324 = vpop.f32.mrf.mxu0
    %v2325 = vadd.f32 0.0, %v2324
    %v2326 = vpop.f32.mrf.mxu0
    %v2327 = vadd.f32 0.0, %v2326
    %2328 = vmatmul.bf16.gmra.mxu0 %v863
    %v2329 = vpop.f32.mrf.mxu0
    %v2330 = vadd.f32 0.0, %v2329
    %v2331 = vpop.f32.mrf.mxu0
    %v2332 = vadd.f32 0.0, %v2331
    %2333 = vmatmul.bf16.gmra.mxu0 %v2165
    %v2334 = vpop.f32.mrf.mxu0
    %v2335 = vadd.f32 0.0, %v2334
    %v2336 = vpop.f32.mrf.mxu0
    %v2337 = vadd.f32 0.0, %v2336
    %2338 = vdwg.mxu0
    %v2339 = vadd.f32 %v2075, %v2180
    %v2340 = vadd.f32 %v2076, %v2182
    %v2341 = vadd.f32 %v2077, %v2185
    %v2342 = vadd.f32 %v2078, %v2187
    %v2343 = vadd.f32 %v2079, %v2190
    %v2344 = vadd.f32 %v2080, %v2192
    %v2345 = vadd.f32 %v2081, %v2195
    %v2346 = vadd.f32 %v2082, %v2197
    %v2347 = vadd.f32 %v2083, %v2200
    %v2348 = vadd.f32 %v2084, %v2202
    %v2349 = vadd.f32 %v2085, %v2205
    %v2350 = vadd.f32 %v2086, %v2207
    %v2351 = vadd.f32 %v2087, %v2210
    %v2352 = vadd.f32 %v2088, %v2212
    %v2353 = vadd.f32 %v2089, %v2215
    %v2354 = vadd.f32 %v2090, %v2217
    %v2355 = vadd.f32 %v2091, %v2220
    %v2356 = vadd.f32 %v2092, %v2222
    %v2357 = vadd.f32 %v2093, %v2225
    %v2358 = vadd.f32 %v2094, %v2227
    %v2359 = vadd.f32 %v2095, %v2230
    %v2360 = vadd.f32 %v2096, %v2232
    %v2361 = vadd.f32 %v2097, %v2235
    %v2362 = vadd.f32 %v2098, %v2237
    %v2363 = vadd.f32 %v2099, %v2240
    %v2364 = vadd.f32 %v2100, %v2242
    %v2365 = vadd.f32 %v2101, %v2245
    %v2366 = vadd.f32 %v2102, %v2247
    %v2367 = vadd.f32 %v2103, %v2250
    %v2368 = vadd.f32 %v2104, %v2252
    %v2369 = vadd.f32 %v2105, %v2255
    %v2370 = vadd.f32 %v2106, %v2257
    %v2371 = vadd.f32 %v2107, %v2260
    %v2372 = vadd.f32 %v2108, %v2262
    %v2373 = vadd.f32 %v2109, %v2265
    %v2374 = vadd.f32 %v2110, %v2267
    %v2375 = vadd.f32 %v2111, %v2270
    %v2376 = vadd.f32 %v2112, %v2272
    %v2377 = vadd.f32 %v2113, %v2275
    %v2378 = vadd.f32 %v2114, %v2277
    %v2379 = vadd.f32 %v2115, %v2280
    %v2380 = vadd.f32 %v2116, %v2282
    %v2381 = vadd.f32 %v2117, %v2285
    %v2382 = vadd.f32 %v2118, %v2287
    %v2383 = vadd.f32 %v2119, %v2290
    %v2384 = vadd.f32 %v2120, %v2292
    %v2385 = vadd.f32 %v2121, %v2295
    %v2386 = vadd.f32 %v2122, %v2297
    %v2387 = vadd.f32 %v2123, %v2300
    %v2388 = vadd.f32 %v2124, %v2302
    %v2389 = vadd.f32 %v2125, %v2305
    %v2390 = vadd.f32 %v2126, %v2307
    %v2391 = vadd.f32 %v2127, %v2310
    %v2392 = vadd.f32 %v2128, %v2312
    %v2393 = vadd.f32 %v2129, %v2315
    %v2394 = vadd.f32 %v2130, %v2317
    %v2395 = vadd.f32 %v2131, %v2320
    %v2396 = vadd.f32 %v2132, %v2322
    %v2397 = vadd.f32 %v2133, %v2325
    %v2398 = vadd.f32 %v2134, %v2327
    %v2399 = vadd.f32 %v2135, %v2330
    %v2400 = vadd.f32 %v2136, %v2332
    %v2401 = vadd.f32 %v2137, %v2335
    %v2402 = vadd.f32 %v2138, %v2337
    %v2403 = vrot.slane %v315, 2
    %v2404 = vrot.slane %v316, 2
    %v2405 = vsel %vm1306, %v2403, %v2404
    %v2406 = vrot.slane %v317, 2
    %v2407 = vsel %vm1306, %v2404, %v2406
    %v2408 = vrot.slane %v369, 2
    %v2409 = vrot.slane %v370, 2
    %v2410 = vsel %vm1306, %v2408, %v2409
    %v2411 = vrot.slane %v371, 2
    %v2412 = vsel %vm1306, %v2409, %v2411
    %v2417 = vpack.c.bf16 %v2407, %v2405
    %v2418 = vpack.c.bf16 %v2412, %v2410
    %v2420 = vsel %vm28, %v2417, 0
    %v2423 = vsel %vm28, %v2418, 0
    %v2426 = vsel %vm865, %v380, 0
    %2428 = vmatpush.bf16.msra.mxu0 0
    %2429 = vmatpush.bf16.msra.mxu0 0
    %2430 = vmatpush.bf16.msra.mxu0 0
    %2431 = vmatpush.bf16.msra.mxu0 0
    %2432 = vmatpush.bf16.msra.mxu0 0
    %2433 = vmatpush.bf16.msra.mxu0 0
    %2434 = vmatpush.bf16.msra.mxu0 0
    %2435 = vmatpush.bf16.msra.mxu0 %v2426
    %2436 = vmatmul.bf16.gmra.mxu0 %v1567
    %v2437 = vpop.f32.mrf.mxu0
    %v2438 = vadd.f32 0.0, %v2437
    %v2439 = vpop.f32.mrf.mxu0
    %v2440 = vadd.f32 0.0, %v2439
    %2441 = vmatmul.bf16.gmra.mxu0 %v1570
    %v2442 = vpop.f32.mrf.mxu0
    %v2443 = vadd.f32 0.0, %v2442
    %v2444 = vpop.f32.mrf.mxu0
    %v2445 = vadd.f32 0.0, %v2444
    %2446 = vmatmul.bf16.gmra.mxu0 %v1573
    %v2447 = vpop.f32.mrf.mxu0
    %v2448 = vadd.f32 0.0, %v2447
    %v2449 = vpop.f32.mrf.mxu0
    %v2450 = vadd.f32 0.0, %v2449
    %2451 = vmatmul.bf16.gmra.mxu0 %v1576
    %v2452 = vpop.f32.mrf.mxu0
    %v2453 = vadd.f32 0.0, %v2452
    %v2454 = vpop.f32.mrf.mxu0
    %v2455 = vadd.f32 0.0, %v2454
    %2456 = vmatmul.bf16.gmra.mxu0 %v1579
    %v2457 = vpop.f32.mrf.mxu0
    %v2458 = vadd.f32 0.0, %v2457
    %v2459 = vpop.f32.mrf.mxu0
    %v2460 = vadd.f32 0.0, %v2459
    %2461 = vmatmul.bf16.gmra.mxu0 %v1582
    %v2462 = vpop.f32.mrf.mxu0
    %v2463 = vadd.f32 0.0, %v2462
    %v2464 = vpop.f32.mrf.mxu0
    %v2465 = vadd.f32 0.0, %v2464
    %2466 = vmatmul.bf16.gmra.mxu0 %v1585
    %v2467 = vpop.f32.mrf.mxu0
    %v2468 = vadd.f32 0.0, %v2467
    %v2469 = vpop.f32.mrf.mxu0
    %v2470 = vadd.f32 0.0, %v2469
    %2471 = vmatmul.bf16.gmra.mxu0 %v1588
    %v2472 = vpop.f32.mrf.mxu0
    %v2473 = vadd.f32 0.0, %v2472
    %v2474 = vpop.f32.mrf.mxu0
    %v2475 = vadd.f32 0.0, %v2474
    %2476 = vmatmul.bf16.gmra.mxu0 %v1591
    %v2477 = vpop.f32.mrf.mxu0
    %v2478 = vadd.f32 0.0, %v2477
    %v2479 = vpop.f32.mrf.mxu0
    %v2480 = vadd.f32 0.0, %v2479
    %2481 = vmatmul.bf16.gmra.mxu0 %v1594
    %v2482 = vpop.f32.mrf.mxu0
    %v2483 = vadd.f32 0.0, %v2482
    %v2484 = vpop.f32.mrf.mxu0
    %v2485 = vadd.f32 0.0, %v2484
    %2486 = vmatmul.bf16.gmra.mxu0 %v1597
    %v2487 = vpop.f32.mrf.mxu0
    %v2488 = vadd.f32 0.0, %v2487
    %v2489 = vpop.f32.mrf.mxu0
    %v2490 = vadd.f32 0.0, %v2489
    %2491 = vmatmul.bf16.gmra.mxu0 %v1600
    %v2492 = vpop.f32.mrf.mxu0
    %v2493 = vadd.f32 0.0, %v2492
    %v2494 = vpop.f32.mrf.mxu0
    %v2495 = vadd.f32 0.0, %v2494
    %2496 = vmatmul.bf16.gmra.mxu0 %v1603
    %v2497 = vpop.f32.mrf.mxu0
    %v2498 = vadd.f32 0.0, %v2497
    %v2499 = vpop.f32.mrf.mxu0
    %v2500 = vadd.f32 0.0, %v2499
    %2501 = vmatmul.bf16.gmra.mxu0 %v1606
    %v2502 = vpop.f32.mrf.mxu0
    %v2503 = vadd.f32 0.0, %v2502
    %v2504 = vpop.f32.mrf.mxu0
    %v2505 = vadd.f32 0.0, %v2504
    %2506 = vmatmul.bf16.gmra.mxu0 %v1609
    %v2507 = vpop.f32.mrf.mxu0
    %v2508 = vadd.f32 0.0, %v2507
    %v2509 = vpop.f32.mrf.mxu0
    %v2510 = vadd.f32 0.0, %v2509
    %2511 = vmatmul.bf16.gmra.mxu0 %v2420
    %v2512 = vpop.f32.mrf.mxu0
    %v2513 = vadd.f32 0.0, %v2512
    %v2514 = vpop.f32.mrf.mxu0
    %v2515 = vadd.f32 0.0, %v2514
    %2516 = vmatmul.bf16.gmra.mxu0 %v1615
    %v2517 = vpop.f32.mrf.mxu0
    %v2518 = vadd.f32 0.0, %v2517
    %v2519 = vpop.f32.mrf.mxu0
    %v2520 = vadd.f32 0.0, %v2519
    %2521 = vmatmul.bf16.gmra.mxu0 %v1618
    %v2522 = vpop.f32.mrf.mxu0
    %v2523 = vadd.f32 0.0, %v2522
    %v2524 = vpop.f32.mrf.mxu0
    %v2525 = vadd.f32 0.0, %v2524
    %2526 = vmatmul.bf16.gmra.mxu0 %v1621
    %v2527 = vpop.f32.mrf.mxu0
    %v2528 = vadd.f32 0.0, %v2527
    %v2529 = vpop.f32.mrf.mxu0
    %v2530 = vadd.f32 0.0, %v2529
    %2531 = vmatmul.bf16.gmra.mxu0 %v1624
    %v2532 = vpop.f32.mrf.mxu0
    %v2533 = vadd.f32 0.0, %v2532
    %v2534 = vpop.f32.mrf.mxu0
    %v2535 = vadd.f32 0.0, %v2534
    %2536 = vmatmul.bf16.gmra.mxu0 %v1627
    %v2537 = vpop.f32.mrf.mxu0
    %v2538 = vadd.f32 0.0, %v2537
    %v2539 = vpop.f32.mrf.mxu0
    %v2540 = vadd.f32 0.0, %v2539
    %2541 = vmatmul.bf16.gmra.mxu0 %v1630
    %v2542 = vpop.f32.mrf.mxu0
    %v2543 = vadd.f32 0.0, %v2542
    %v2544 = vpop.f32.mrf.mxu0
    %v2545 = vadd.f32 0.0, %v2544
    %2546 = vmatmul.bf16.gmra.mxu0 %v1633
    %v2547 = vpop.f32.mrf.mxu0
    %v2548 = vadd.f32 0.0, %v2547
    %v2549 = vpop.f32.mrf.mxu0
    %v2550 = vadd.f32 0.0, %v2549
    %2551 = vmatmul.bf16.gmra.mxu0 %v1636
    %v2552 = vpop.f32.mrf.mxu0
    %v2553 = vadd.f32 0.0, %v2552
    %v2554 = vpop.f32.mrf.mxu0
    %v2555 = vadd.f32 0.0, %v2554
    %2556 = vmatmul.bf16.gmra.mxu0 %v1639
    %v2557 = vpop.f32.mrf.mxu0
    %v2558 = vadd.f32 0.0, %v2557
    %v2559 = vpop.f32.mrf.mxu0
    %v2560 = vadd.f32 0.0, %v2559
    %2561 = vmatmul.bf16.gmra.mxu0 %v1642
    %v2562 = vpop.f32.mrf.mxu0
    %v2563 = vadd.f32 0.0, %v2562
    %v2564 = vpop.f32.mrf.mxu0
    %v2565 = vadd.f32 0.0, %v2564
    %2566 = vmatmul.bf16.gmra.mxu0 %v1645
    %v2567 = vpop.f32.mrf.mxu0
    %v2568 = vadd.f32 0.0, %v2567
    %v2569 = vpop.f32.mrf.mxu0
    %v2570 = vadd.f32 0.0, %v2569
    %2571 = vmatmul.bf16.gmra.mxu0 %v1648
    %v2572 = vpop.f32.mrf.mxu0
    %v2573 = vadd.f32 0.0, %v2572
    %v2574 = vpop.f32.mrf.mxu0
    %v2575 = vadd.f32 0.0, %v2574
    %2576 = vmatmul.bf16.gmra.mxu0 %v1651
    %v2577 = vpop.f32.mrf.mxu0
    %v2578 = vadd.f32 0.0, %v2577
    %v2579 = vpop.f32.mrf.mxu0
    %v2580 = vadd.f32 0.0, %v2579
    %2581 = vmatmul.bf16.gmra.mxu0 %v1654
    %v2582 = vpop.f32.mrf.mxu0
    %v2583 = vadd.f32 0.0, %v2582
    %v2584 = vpop.f32.mrf.mxu0
    %v2585 = vadd.f32 0.0, %v2584
    %2586 = vmatmul.bf16.gmra.mxu0 %v1657
    %v2587 = vpop.f32.mrf.mxu0
    %v2588 = vadd.f32 0.0, %v2587
    %v2589 = vpop.f32.mrf.mxu0
    %v2590 = vadd.f32 0.0, %v2589
    %2591 = vmatmul.bf16.gmra.mxu0 %v2423
    %v2592 = vpop.f32.mrf.mxu0
    %v2593 = vadd.f32 0.0, %v2592
    %v2594 = vpop.f32.mrf.mxu0
    %v2595 = vadd.f32 0.0, %v2594
    %2596 = vdwg.mxu0
    %v2597 = vadd.f32 %v2339, %v2438
    %v2598 = vadd.f32 %v2340, %v2440
    %v2599 = vadd.f32 %v2341, %v2443
    %v2600 = vadd.f32 %v2342, %v2445
    %v2601 = vadd.f32 %v2343, %v2448
    %v2602 = vadd.f32 %v2344, %v2450
    %v2603 = vadd.f32 %v2345, %v2453
    %v2604 = vadd.f32 %v2346, %v2455
    %v2605 = vadd.f32 %v2347, %v2458
    %v2606 = vadd.f32 %v2348, %v2460
    %v2607 = vadd.f32 %v2349, %v2463
    %v2608 = vadd.f32 %v2350, %v2465
    %v2609 = vadd.f32 %v2351, %v2468
    %v2610 = vadd.f32 %v2352, %v2470
    %v2611 = vadd.f32 %v2353, %v2473
    %v2612 = vadd.f32 %v2354, %v2475
    %v2613 = vadd.f32 %v2355, %v2478
    %v2614 = vadd.f32 %v2356, %v2480
    %v2615 = vadd.f32 %v2357, %v2483
    %v2616 = vadd.f32 %v2358, %v2485
    %v2617 = vadd.f32 %v2359, %v2488
    %v2618 = vadd.f32 %v2360, %v2490
    %v2619 = vadd.f32 %v2361, %v2493
    %v2620 = vadd.f32 %v2362, %v2495
    %v2621 = vadd.f32 %v2363, %v2498
    %v2622 = vadd.f32 %v2364, %v2500
    %v2623 = vadd.f32 %v2365, %v2503
    %v2624 = vadd.f32 %v2366, %v2505
    %v2625 = vadd.f32 %v2367, %v2508
    %v2626 = vadd.f32 %v2368, %v2510
    %v2627 = vadd.f32 %v2369, %v2513
    %v2628 = vadd.f32 %v2370, %v2515
    %v2629 = vadd.f32 %v2371, %v2518
    %v2630 = vadd.f32 %v2372, %v2520
    %v2631 = vadd.f32 %v2373, %v2523
    %v2632 = vadd.f32 %v2374, %v2525
    %v2633 = vadd.f32 %v2375, %v2528
    %v2634 = vadd.f32 %v2376, %v2530
    %v2635 = vadd.f32 %v2377, %v2533
    %v2636 = vadd.f32 %v2378, %v2535
    %v2637 = vadd.f32 %v2379, %v2538
    %v2638 = vadd.f32 %v2380, %v2540
    %v2639 = vadd.f32 %v2381, %v2543
    %v2640 = vadd.f32 %v2382, %v2545
    %v2641 = vadd.f32 %v2383, %v2548
    %v2642 = vadd.f32 %v2384, %v2550
    %v2643 = vadd.f32 %v2385, %v2553
    %v2644 = vadd.f32 %v2386, %v2555
    %v2645 = vadd.f32 %v2387, %v2558
    %v2646 = vadd.f32 %v2388, %v2560
    %v2647 = vadd.f32 %v2389, %v2563
    %v2648 = vadd.f32 %v2390, %v2565
    %v2649 = vadd.f32 %v2391, %v2568
    %v2650 = vadd.f32 %v2392, %v2570
    %v2651 = vadd.f32 %v2393, %v2573
    %v2652 = vadd.f32 %v2394, %v2575
    %v2653 = vadd.f32 %v2395, %v2578
    %v2654 = vadd.f32 %v2396, %v2580
    %v2655 = vadd.f32 %v2397, %v2583
    %v2656 = vadd.f32 %v2398, %v2585
    %v2657 = vadd.f32 %v2399, %v2588
    %v2658 = vadd.f32 %v2400, %v2590
    %v2659 = vadd.f32 %v2401, %v2593
    %v2660 = vadd.f32 %v2402, %v2595
    %v2661 = vpack.c.bf16 %v319, %v318
    %v2662 = vpack.c.bf16 %v373, %v372
    %v2664 = vsel %vm28, %v2661, 0
    %v2667 = vsel %vm28, %v2662, 0
    %v2670 = vsel %vm865, %v381, 0
    %2672 = vmatpush.bf16.msra.mxu0 0
    %2673 = vmatpush.bf16.msra.mxu0 0
    %2674 = vmatpush.bf16.msra.mxu0 0
    %2675 = vmatpush.bf16.msra.mxu0 0
    %2676 = vmatpush.bf16.msra.mxu0 0
    %2677 = vmatpush.bf16.msra.mxu0 0
    %2678 = vmatpush.bf16.msra.mxu0 0
    %2679 = vmatpush.bf16.msra.mxu0 %v2670
    %2680 = vmatmul.bf16.gmra.mxu0 %v1045
    %v2681 = vpop.f32.mrf.mxu0
    %v2682 = vadd.f32 0.0, %v2681
    %v2683 = vpop.f32.mrf.mxu0
    %v2684 = vadd.f32 0.0, %v2683
    %2685 = vmatmul.bf16.gmra.mxu0 %v1048
    %v2686 = vpop.f32.mrf.mxu0
    %v2687 = vadd.f32 0.0, %v2686
    %v2688 = vpop.f32.mrf.mxu0
    %v2689 = vadd.f32 0.0, %v2688
    %2690 = vmatmul.bf16.gmra.mxu0 %v1051
    %v2691 = vpop.f32.mrf.mxu0
    %v2692 = vadd.f32 0.0, %v2691
    %v2693 = vpop.f32.mrf.mxu0
    %v2694 = vadd.f32 0.0, %v2693
    %2695 = vmatmul.bf16.gmra.mxu0 %v1054
    %v2696 = vpop.f32.mrf.mxu0
    %v2697 = vadd.f32 0.0, %v2696
    %v2698 = vpop.f32.mrf.mxu0
    %v2699 = vadd.f32 0.0, %v2698
    %2700 = vmatmul.bf16.gmra.mxu0 %v1057
    %v2701 = vpop.f32.mrf.mxu0
    %v2702 = vadd.f32 0.0, %v2701
    %v2703 = vpop.f32.mrf.mxu0
    %v2704 = vadd.f32 0.0, %v2703
    %2705 = vmatmul.bf16.gmra.mxu0 %v1060
    %v2706 = vpop.f32.mrf.mxu0
    %v2707 = vadd.f32 0.0, %v2706
    %v2708 = vpop.f32.mrf.mxu0
    %v2709 = vadd.f32 0.0, %v2708
    %2710 = vmatmul.bf16.gmra.mxu0 %v1063
    %v2711 = vpop.f32.mrf.mxu0
    %v2712 = vadd.f32 0.0, %v2711
    %v2713 = vpop.f32.mrf.mxu0
    %v2714 = vadd.f32 0.0, %v2713
    %2715 = vmatmul.bf16.gmra.mxu0 %v1066
    %v2716 = vpop.f32.mrf.mxu0
    %v2717 = vadd.f32 0.0, %v2716
    %v2718 = vpop.f32.mrf.mxu0
    %v2719 = vadd.f32 0.0, %v2718
    %2720 = vmatmul.bf16.gmra.mxu0 %v1069
    %v2721 = vpop.f32.mrf.mxu0
    %v2722 = vadd.f32 0.0, %v2721
    %v2723 = vpop.f32.mrf.mxu0
    %v2724 = vadd.f32 0.0, %v2723
    %2725 = vmatmul.bf16.gmra.mxu0 %v1072
    %v2726 = vpop.f32.mrf.mxu0
    %v2727 = vadd.f32 0.0, %v2726
    %v2728 = vpop.f32.mrf.mxu0
    %v2729 = vadd.f32 0.0, %v2728
    %2730 = vmatmul.bf16.gmra.mxu0 %v1075
    %v2731 = vpop.f32.mrf.mxu0
    %v2732 = vadd.f32 0.0, %v2731
    %v2733 = vpop.f32.mrf.mxu0
    %v2734 = vadd.f32 0.0, %v2733
    %2735 = vmatmul.bf16.gmra.mxu0 %v1078
    %v2736 = vpop.f32.mrf.mxu0
    %v2737 = vadd.f32 0.0, %v2736
    %v2738 = vpop.f32.mrf.mxu0
    %v2739 = vadd.f32 0.0, %v2738
    %2740 = vmatmul.bf16.gmra.mxu0 %v1081
    %v2741 = vpop.f32.mrf.mxu0
    %v2742 = vadd.f32 0.0, %v2741
    %v2743 = vpop.f32.mrf.mxu0
    %v2744 = vadd.f32 0.0, %v2743
    %2745 = vmatmul.bf16.gmra.mxu0 %v1084
    %v2746 = vpop.f32.mrf.mxu0
    %v2747 = vadd.f32 0.0, %v2746
    %v2748 = vpop.f32.mrf.mxu0
    %v2749 = vadd.f32 0.0, %v2748
    %2750 = vmatmul.bf16.gmra.mxu0 %v1898
    %v2751 = vpop.f32.mrf.mxu0
    %v2752 = vadd.f32 0.0, %v2751
    %v2753 = vpop.f32.mrf.mxu0
    %v2754 = vadd.f32 0.0, %v2753
    %2755 = vmatmul.bf16.gmra.mxu0 %v2664
    %v2756 = vpop.f32.mrf.mxu0
    %v2757 = vadd.f32 0.0, %v2756
    %v2758 = vpop.f32.mrf.mxu0
    %v2759 = vadd.f32 0.0, %v2758
    %2760 = vmatmul.bf16.gmra.mxu0 %v1093
    %v2761 = vpop.f32.mrf.mxu0
    %v2762 = vadd.f32 0.0, %v2761
    %v2763 = vpop.f32.mrf.mxu0
    %v2764 = vadd.f32 0.0, %v2763
    %2765 = vmatmul.bf16.gmra.mxu0 %v1096
    %v2766 = vpop.f32.mrf.mxu0
    %v2767 = vadd.f32 0.0, %v2766
    %v2768 = vpop.f32.mrf.mxu0
    %v2769 = vadd.f32 0.0, %v2768
    %2770 = vmatmul.bf16.gmra.mxu0 %v1099
    %v2771 = vpop.f32.mrf.mxu0
    %v2772 = vadd.f32 0.0, %v2771
    %v2773 = vpop.f32.mrf.mxu0
    %v2774 = vadd.f32 0.0, %v2773
    %2775 = vmatmul.bf16.gmra.mxu0 %v1102
    %v2776 = vpop.f32.mrf.mxu0
    %v2777 = vadd.f32 0.0, %v2776
    %v2778 = vpop.f32.mrf.mxu0
    %v2779 = vadd.f32 0.0, %v2778
    %2780 = vmatmul.bf16.gmra.mxu0 %v1105
    %v2781 = vpop.f32.mrf.mxu0
    %v2782 = vadd.f32 0.0, %v2781
    %v2783 = vpop.f32.mrf.mxu0
    %v2784 = vadd.f32 0.0, %v2783
    %2785 = vmatmul.bf16.gmra.mxu0 %v1108
    %v2786 = vpop.f32.mrf.mxu0
    %v2787 = vadd.f32 0.0, %v2786
    %v2788 = vpop.f32.mrf.mxu0
    %v2789 = vadd.f32 0.0, %v2788
    %2790 = vmatmul.bf16.gmra.mxu0 %v1111
    %v2791 = vpop.f32.mrf.mxu0
    %v2792 = vadd.f32 0.0, %v2791
    %v2793 = vpop.f32.mrf.mxu0
    %v2794 = vadd.f32 0.0, %v2793
    %2795 = vmatmul.bf16.gmra.mxu0 %v1114
    %v2796 = vpop.f32.mrf.mxu0
    %v2797 = vadd.f32 0.0, %v2796
    %v2798 = vpop.f32.mrf.mxu0
    %v2799 = vadd.f32 0.0, %v2798
    %2800 = vmatmul.bf16.gmra.mxu0 %v1117
    %v2801 = vpop.f32.mrf.mxu0
    %v2802 = vadd.f32 0.0, %v2801
    %v2803 = vpop.f32.mrf.mxu0
    %v2804 = vadd.f32 0.0, %v2803
    %2805 = vmatmul.bf16.gmra.mxu0 %v1120
    %v2806 = vpop.f32.mrf.mxu0
    %v2807 = vadd.f32 0.0, %v2806
    %v2808 = vpop.f32.mrf.mxu0
    %v2809 = vadd.f32 0.0, %v2808
    %2810 = vmatmul.bf16.gmra.mxu0 %v1123
    %v2811 = vpop.f32.mrf.mxu0
    %v2812 = vadd.f32 0.0, %v2811
    %v2813 = vpop.f32.mrf.mxu0
    %v2814 = vadd.f32 0.0, %v2813
    %2815 = vmatmul.bf16.gmra.mxu0 %v1126
    %v2816 = vpop.f32.mrf.mxu0
    %v2817 = vadd.f32 0.0, %v2816
    %v2818 = vpop.f32.mrf.mxu0
    %v2819 = vadd.f32 0.0, %v2818
    %2820 = vmatmul.bf16.gmra.mxu0 %v1129
    %v2821 = vpop.f32.mrf.mxu0
    %v2822 = vadd.f32 0.0, %v2821
    %v2823 = vpop.f32.mrf.mxu0
    %v2824 = vadd.f32 0.0, %v2823
    %2825 = vmatmul.bf16.gmra.mxu0 %v1132
    %v2826 = vpop.f32.mrf.mxu0
    %v2827 = vadd.f32 0.0, %v2826
    %v2828 = vpop.f32.mrf.mxu0
    %v2829 = vadd.f32 0.0, %v2828
    %2830 = vmatmul.bf16.gmra.mxu0 %v1901
    %v2831 = vpop.f32.mrf.mxu0
    %v2832 = vadd.f32 0.0, %v2831
    %v2833 = vpop.f32.mrf.mxu0
    %v2834 = vadd.f32 0.0, %v2833
    %2835 = vmatmul.bf16.gmra.mxu0 %v2667
    %v2836 = vpop.f32.mrf.mxu0
    %v2837 = vadd.f32 0.0, %v2836
    %v2838 = vpop.f32.mrf.mxu0
    %v2839 = vadd.f32 0.0, %v2838
    %2840 = vdwg.mxu0
    %v2841 = vadd.f32 %v2597, %v2682
    %v2842 = vadd.f32 %v2598, %v2684
    %v2843 = vadd.f32 %v2599, %v2687
    %v2844 = vadd.f32 %v2600, %v2689
    %v2845 = vadd.f32 %v2601, %v2692
    %v2846 = vadd.f32 %v2602, %v2694
    %v2847 = vadd.f32 %v2603, %v2697
    %v2848 = vadd.f32 %v2604, %v2699
    %v2849 = vadd.f32 %v2605, %v2702
    %v2850 = vadd.f32 %v2606, %v2704
    %v2851 = vadd.f32 %v2607, %v2707
    %v2852 = vadd.f32 %v2608, %v2709
    %v2853 = vadd.f32 %v2609, %v2712
    %v2854 = vadd.f32 %v2610, %v2714
    %v2855 = vadd.f32 %v2611, %v2717
    %v2856 = vadd.f32 %v2612, %v2719
    %v2857 = vadd.f32 %v2613, %v2722
    %v2858 = vadd.f32 %v2614, %v2724
    %v2859 = vadd.f32 %v2615, %v2727
    %v2860 = vadd.f32 %v2616, %v2729
    %v2861 = vadd.f32 %v2617, %v2732
    %v2862 = vadd.f32 %v2618, %v2734
    %v2863 = vadd.f32 %v2619, %v2737
    %v2864 = vadd.f32 %v2620, %v2739
    %v2865 = vadd.f32 %v2621, %v2742
    %v2866 = vadd.f32 %v2622, %v2744
    %v2867 = vadd.f32 %v2623, %v2747
    %v2868 = vadd.f32 %v2624, %v2749
    %v2869 = vadd.f32 %v2625, %v2752
    %v2870 = vadd.f32 %v2626, %v2754
    %v2871 = vadd.f32 %v2627, %v2757
    %v2872 = vadd.f32 %v2628, %v2759
    %v2873 = vadd.f32 %v2629, %v2762
    %v2874 = vadd.f32 %v2630, %v2764
    %v2875 = vadd.f32 %v2631, %v2767
    %v2876 = vadd.f32 %v2632, %v2769
    %v2877 = vadd.f32 %v2633, %v2772
    %v2878 = vadd.f32 %v2634, %v2774
    %v2879 = vadd.f32 %v2635, %v2777
    %v2880 = vadd.f32 %v2636, %v2779
    %v2881 = vadd.f32 %v2637, %v2782
    %v2882 = vadd.f32 %v2638, %v2784
    %v2883 = vadd.f32 %v2639, %v2787
    %v2884 = vadd.f32 %v2640, %v2789
    %v2885 = vadd.f32 %v2641, %v2792
    %v2886 = vadd.f32 %v2642, %v2794
    %v2887 = vadd.f32 %v2643, %v2797
    %v2888 = vadd.f32 %v2644, %v2799
    %v2889 = vadd.f32 %v2645, %v2802
    %v2890 = vadd.f32 %v2646, %v2804
    %v2891 = vadd.f32 %v2647, %v2807
    %v2892 = vadd.f32 %v2648, %v2809
    %v2893 = vadd.f32 %v2649, %v2812
    %v2894 = vadd.f32 %v2650, %v2814
    %v2895 = vadd.f32 %v2651, %v2817
    %v2896 = vadd.f32 %v2652, %v2819
    %v2897 = vadd.f32 %v2653, %v2822
    %v2898 = vadd.f32 %v2654, %v2824
    %v2899 = vadd.f32 %v2655, %v2827
    %v2900 = vadd.f32 %v2656, %v2829
    %v2901 = vadd.f32 %v2657, %v2832
    %v2902 = vadd.f32 %v2658, %v2834
    %v2903 = vadd.f32 %v2659, %v2837
    %v2904 = vadd.f32 %v2660, %v2839
    %v2911 = vrot.slane %v318, 1
    %v2912 = vrot.slane %v319, 1
    %v2913 = vsel %vm512, %v2911, %v2912
    %v2914 = vrot.slane %v320, 1
    %v2915 = vsel %vm512, %v2912, %v2914
    %v2916 = vrot.slane %v372, 1
    %v2917 = vrot.slane %v373, 1
    %v2918 = vsel %vm512, %v2916, %v2917
    %v2919 = vrot.slane %v374, 1
    %v2920 = vsel %vm512, %v2917, %v2919
    %v2925 = vpack.c.bf16 %v2915, %v2913
    %v2926 = vpack.c.bf16 %v2920, %v2918
    %v2928 = vsel %vm28, %v2925, 0
    %v2931 = vsel %vm28, %v2926, 0
    %v2934 = vsel %vm865, %v382, 0
    %2936 = vmatpush.bf16.msra.mxu0 0
    %2937 = vmatpush.bf16.msra.mxu0 0
    %2938 = vmatpush.bf16.msra.mxu0 0
    %2939 = vmatpush.bf16.msra.mxu0 0
    %2940 = vmatpush.bf16.msra.mxu0 0
    %2941 = vmatpush.bf16.msra.mxu0 0
    %2942 = vmatpush.bf16.msra.mxu0 0
    %2943 = vmatpush.bf16.msra.mxu0 %v2934
    %2944 = vmatmul.bf16.gmra.mxu0 %v776
    %v2945 = vpop.f32.mrf.mxu0
    %v2946 = vadd.f32 0.0, %v2945
    %v2947 = vpop.f32.mrf.mxu0
    %v2948 = vadd.f32 0.0, %v2947
    %2949 = vmatmul.bf16.gmra.mxu0 %v779
    %v2950 = vpop.f32.mrf.mxu0
    %v2951 = vadd.f32 0.0, %v2950
    %v2952 = vpop.f32.mrf.mxu0
    %v2953 = vadd.f32 0.0, %v2952
    %2954 = vmatmul.bf16.gmra.mxu0 %v782
    %v2955 = vpop.f32.mrf.mxu0
    %v2956 = vadd.f32 0.0, %v2955
    %v2957 = vpop.f32.mrf.mxu0
    %v2958 = vadd.f32 0.0, %v2957
    %2959 = vmatmul.bf16.gmra.mxu0 %v785
    %v2960 = vpop.f32.mrf.mxu0
    %v2961 = vadd.f32 0.0, %v2960
    %v2962 = vpop.f32.mrf.mxu0
    %v2963 = vadd.f32 0.0, %v2962
    %2964 = vmatmul.bf16.gmra.mxu0 %v788
    %v2965 = vpop.f32.mrf.mxu0
    %v2966 = vadd.f32 0.0, %v2965
    %v2967 = vpop.f32.mrf.mxu0
    %v2968 = vadd.f32 0.0, %v2967
    %2969 = vmatmul.bf16.gmra.mxu0 %v791
    %v2970 = vpop.f32.mrf.mxu0
    %v2971 = vadd.f32 0.0, %v2970
    %v2972 = vpop.f32.mrf.mxu0
    %v2973 = vadd.f32 0.0, %v2972
    %2974 = vmatmul.bf16.gmra.mxu0 %v794
    %v2975 = vpop.f32.mrf.mxu0
    %v2976 = vadd.f32 0.0, %v2975
    %v2977 = vpop.f32.mrf.mxu0
    %v2978 = vadd.f32 0.0, %v2977
    %2979 = vmatmul.bf16.gmra.mxu0 %v797
    %v2980 = vpop.f32.mrf.mxu0
    %v2981 = vadd.f32 0.0, %v2980
    %v2982 = vpop.f32.mrf.mxu0
    %v2983 = vadd.f32 0.0, %v2982
    %2984 = vmatmul.bf16.gmra.mxu0 %v800
    %v2985 = vpop.f32.mrf.mxu0
    %v2986 = vadd.f32 0.0, %v2985
    %v2987 = vpop.f32.mrf.mxu0
    %v2988 = vadd.f32 0.0, %v2987
    %2989 = vmatmul.bf16.gmra.mxu0 %v803
    %v2990 = vpop.f32.mrf.mxu0
    %v2991 = vadd.f32 0.0, %v2990
    %v2992 = vpop.f32.mrf.mxu0
    %v2993 = vadd.f32 0.0, %v2992
    %2994 = vmatmul.bf16.gmra.mxu0 %v806
    %v2995 = vpop.f32.mrf.mxu0
    %v2996 = vadd.f32 0.0, %v2995
    %v2997 = vpop.f32.mrf.mxu0
    %v2998 = vadd.f32 0.0, %v2997
    %2999 = vmatmul.bf16.gmra.mxu0 %v809
    %v3000 = vpop.f32.mrf.mxu0
    %v3001 = vadd.f32 0.0, %v3000
    %v3002 = vpop.f32.mrf.mxu0
    %v3003 = vadd.f32 0.0, %v3002
    %3004 = vmatmul.bf16.gmra.mxu0 %v812
    %v3005 = vpop.f32.mrf.mxu0
    %v3006 = vadd.f32 0.0, %v3005
    %v3007 = vpop.f32.mrf.mxu0
    %v3008 = vadd.f32 0.0, %v3007
    %3009 = vmatmul.bf16.gmra.mxu0 %v815
    %v3010 = vpop.f32.mrf.mxu0
    %v3011 = vadd.f32 0.0, %v3010
    %v3012 = vpop.f32.mrf.mxu0
    %v3013 = vadd.f32 0.0, %v3012
    %3014 = vmatmul.bf16.gmra.mxu0 %v2162
    %v3015 = vpop.f32.mrf.mxu0
    %v3016 = vadd.f32 0.0, %v3015
    %v3017 = vpop.f32.mrf.mxu0
    %v3018 = vadd.f32 0.0, %v3017
    %3019 = vmatmul.bf16.gmra.mxu0 %v2928
    %v3020 = vpop.f32.mrf.mxu0
    %v3021 = vadd.f32 0.0, %v3020
    %v3022 = vpop.f32.mrf.mxu0
    %v3023 = vadd.f32 0.0, %v3022
    %3024 = vmatmul.bf16.gmra.mxu0 %v824
    %v3025 = vpop.f32.mrf.mxu0
    %v3026 = vadd.f32 0.0, %v3025
    %v3027 = vpop.f32.mrf.mxu0
    %v3028 = vadd.f32 0.0, %v3027
    %3029 = vmatmul.bf16.gmra.mxu0 %v827
    %v3030 = vpop.f32.mrf.mxu0
    %v3031 = vadd.f32 0.0, %v3030
    %v3032 = vpop.f32.mrf.mxu0
    %v3033 = vadd.f32 0.0, %v3032
    %3034 = vmatmul.bf16.gmra.mxu0 %v830
    %v3035 = vpop.f32.mrf.mxu0
    %v3036 = vadd.f32 0.0, %v3035
    %v3037 = vpop.f32.mrf.mxu0
    %v3038 = vadd.f32 0.0, %v3037
    %3039 = vmatmul.bf16.gmra.mxu0 %v833
    %v3040 = vpop.f32.mrf.mxu0
    %v3041 = vadd.f32 0.0, %v3040
    %v3042 = vpop.f32.mrf.mxu0
    %v3043 = vadd.f32 0.0, %v3042
    %3044 = vmatmul.bf16.gmra.mxu0 %v836
    %v3045 = vpop.f32.mrf.mxu0
    %v3046 = vadd.f32 0.0, %v3045
    %v3047 = vpop.f32.mrf.mxu0
    %v3048 = vadd.f32 0.0, %v3047
    %3049 = vmatmul.bf16.gmra.mxu0 %v839
    %v3050 = vpop.f32.mrf.mxu0
    %v3051 = vadd.f32 0.0, %v3050
    %v3052 = vpop.f32.mrf.mxu0
    %v3053 = vadd.f32 0.0, %v3052
    %3054 = vmatmul.bf16.gmra.mxu0 %v842
    %v3055 = vpop.f32.mrf.mxu0
    %v3056 = vadd.f32 0.0, %v3055
    %v3057 = vpop.f32.mrf.mxu0
    %v3058 = vadd.f32 0.0, %v3057
    %3059 = vmatmul.bf16.gmra.mxu0 %v845
    %v3060 = vpop.f32.mrf.mxu0
    %v3061 = vadd.f32 0.0, %v3060
    %v3062 = vpop.f32.mrf.mxu0
    %v3063 = vadd.f32 0.0, %v3062
    %3064 = vmatmul.bf16.gmra.mxu0 %v848
    %v3065 = vpop.f32.mrf.mxu0
    %v3066 = vadd.f32 0.0, %v3065
    %v3067 = vpop.f32.mrf.mxu0
    %v3068 = vadd.f32 0.0, %v3067
    %3069 = vmatmul.bf16.gmra.mxu0 %v851
    %v3070 = vpop.f32.mrf.mxu0
    %v3071 = vadd.f32 0.0, %v3070
    %v3072 = vpop.f32.mrf.mxu0
    %v3073 = vadd.f32 0.0, %v3072
    %3074 = vmatmul.bf16.gmra.mxu0 %v854
    %v3075 = vpop.f32.mrf.mxu0
    %v3076 = vadd.f32 0.0, %v3075
    %v3077 = vpop.f32.mrf.mxu0
    %v3078 = vadd.f32 0.0, %v3077
    %3079 = vmatmul.bf16.gmra.mxu0 %v857
    %v3080 = vpop.f32.mrf.mxu0
    %v3081 = vadd.f32 0.0, %v3080
    %v3082 = vpop.f32.mrf.mxu0
    %v3083 = vadd.f32 0.0, %v3082
    %3084 = vmatmul.bf16.gmra.mxu0 %v860
    %v3085 = vpop.f32.mrf.mxu0
    %v3086 = vadd.f32 0.0, %v3085
    %v3087 = vpop.f32.mrf.mxu0
    %v3088 = vadd.f32 0.0, %v3087
    %3089 = vmatmul.bf16.gmra.mxu0 %v863
    %v3090 = vpop.f32.mrf.mxu0
    %v3091 = vadd.f32 0.0, %v3090
    %v3092 = vpop.f32.mrf.mxu0
    %v3093 = vadd.f32 0.0, %v3092
    %3094 = vmatmul.bf16.gmra.mxu0 %v2165
    %v3095 = vpop.f32.mrf.mxu0
    %v3096 = vadd.f32 0.0, %v3095
    %v3097 = vpop.f32.mrf.mxu0
    %v3098 = vadd.f32 0.0, %v3097
    %3099 = vmatmul.bf16.gmra.mxu0 %v2931
    %v3100 = vpop.f32.mrf.mxu0
    %v3101 = vadd.f32 0.0, %v3100
    %v3102 = vpop.f32.mrf.mxu0
    %v3103 = vadd.f32 0.0, %v3102
    %3104 = vdwg.mxu0
    %v3105 = vadd.f32 %v2841, %v2946
    %v3106 = vadd.f32 %v2842, %v2948
    %v3107 = vadd.f32 %v2843, %v2951
    %v3108 = vadd.f32 %v2844, %v2953
    %v3109 = vadd.f32 %v2845, %v2956
    %v3110 = vadd.f32 %v2846, %v2958
    %v3111 = vadd.f32 %v2847, %v2961
    %v3112 = vadd.f32 %v2848, %v2963
    %v3113 = vadd.f32 %v2849, %v2966
    %v3114 = vadd.f32 %v2850, %v2968
    %v3115 = vadd.f32 %v2851, %v2971
    %v3116 = vadd.f32 %v2852, %v2973
    %v3117 = vadd.f32 %v2853, %v2976
    %v3118 = vadd.f32 %v2854, %v2978
    %v3119 = vadd.f32 %v2855, %v2981
    %v3120 = vadd.f32 %v2856, %v2983
    %v3121 = vadd.f32 %v2857, %v2986
    %v3122 = vadd.f32 %v2858, %v2988
    %v3123 = vadd.f32 %v2859, %v2991
    %v3124 = vadd.f32 %v2860, %v2993
    %v3125 = vadd.f32 %v2861, %v2996
    %v3126 = vadd.f32 %v2862, %v2998
    %v3127 = vadd.f32 %v2863, %v3001
    %v3128 = vadd.f32 %v2864, %v3003
    %v3129 = vadd.f32 %v2865, %v3006
    %v3130 = vadd.f32 %v2866, %v3008
    %v3131 = vadd.f32 %v2867, %v3011
    %v3132 = vadd.f32 %v2868, %v3013
    %v3133 = vadd.f32 %v2869, %v3016
    %v3134 = vadd.f32 %v2870, %v3018
    %v3135 = vadd.f32 %v2871, %v3021
    %v3136 = vadd.f32 %v2872, %v3023
    %v3137 = vadd.f32 %v2873, %v3026
    %v3138 = vadd.f32 %v2874, %v3028
    %v3139 = vadd.f32 %v2875, %v3031
    %v3140 = vadd.f32 %v2876, %v3033
    %v3141 = vadd.f32 %v2877, %v3036
    %v3142 = vadd.f32 %v2878, %v3038
    %v3143 = vadd.f32 %v2879, %v3041
    %v3144 = vadd.f32 %v2880, %v3043
    %v3145 = vadd.f32 %v2881, %v3046
    %v3146 = vadd.f32 %v2882, %v3048
    %v3147 = vadd.f32 %v2883, %v3051
    %v3148 = vadd.f32 %v2884, %v3053
    %v3149 = vadd.f32 %v2885, %v3056
    %v3150 = vadd.f32 %v2886, %v3058
    %v3151 = vadd.f32 %v2887, %v3061
    %v3152 = vadd.f32 %v2888, %v3063
    %v3153 = vadd.f32 %v2889, %v3066
    %v3154 = vadd.f32 %v2890, %v3068
    %v3155 = vadd.f32 %v2891, %v3071
    %v3156 = vadd.f32 %v2892, %v3073
    %v3157 = vadd.f32 %v2893, %v3076
    %v3158 = vadd.f32 %v2894, %v3078
    %v3159 = vadd.f32 %v2895, %v3081
    %v3160 = vadd.f32 %v2896, %v3083
    %v3161 = vadd.f32 %v2897, %v3086
    %v3162 = vadd.f32 %v2898, %v3088
    %v3163 = vadd.f32 %v2899, %v3091
    %v3164 = vadd.f32 %v2900, %v3093
    %v3165 = vadd.f32 %v2901, %v3096
    %v3166 = vadd.f32 %v2902, %v3098
    %v3167 = vadd.f32 %v2903, %v3101
    %v3168 = vadd.f32 %v2904, %v3103
    %v3169 = vrot.slane %v318, 2
    %v3170 = vrot.slane %v319, 2
    %v3171 = vsel %vm1306, %v3169, %v3170
    %v3172 = vrot.slane %v320, 2
    %v3173 = vsel %vm1306, %v3170, %v3172
    %v3174 = vrot.slane %v372, 2
    %v3175 = vrot.slane %v373, 2
    %v3176 = vsel %vm1306, %v3174, %v3175
    %v3177 = vrot.slane %v374, 2
    %v3178 = vsel %vm1306, %v3175, %v3177
    %v3183 = vpack.c.bf16 %v3173, %v3171
    %v3184 = vpack.c.bf16 %v3178, %v3176
    %v3186 = vsel %vm28, %v3183, 0
    %v3189 = vsel %vm28, %v3184, 0
    %v3192 = vsel %vm865, %v383, 0
    %3194 = vmatpush.bf16.msra.mxu0 0
    %3195 = vmatpush.bf16.msra.mxu0 0
    %3196 = vmatpush.bf16.msra.mxu0 0
    %3197 = vmatpush.bf16.msra.mxu0 0
    %3198 = vmatpush.bf16.msra.mxu0 0
    %3199 = vmatpush.bf16.msra.mxu0 0
    %3200 = vmatpush.bf16.msra.mxu0 0
    %3201 = vmatpush.bf16.msra.mxu0 %v3192
    %3202 = vmatmul.bf16.gmra.mxu0 %v1570
    %v3203 = vpop.f32.mrf.mxu0
    %v3204 = vadd.f32 0.0, %v3203
    %v3205 = vpop.f32.mrf.mxu0
    %v3206 = vadd.f32 0.0, %v3205
    %3207 = vmatmul.bf16.gmra.mxu0 %v1573
    %v3208 = vpop.f32.mrf.mxu0
    %v3209 = vadd.f32 0.0, %v3208
    %v3210 = vpop.f32.mrf.mxu0
    %v3211 = vadd.f32 0.0, %v3210
    %3212 = vmatmul.bf16.gmra.mxu0 %v1576
    %v3213 = vpop.f32.mrf.mxu0
    %v3214 = vadd.f32 0.0, %v3213
    %v3215 = vpop.f32.mrf.mxu0
    %v3216 = vadd.f32 0.0, %v3215
    %3217 = vmatmul.bf16.gmra.mxu0 %v1579
    %v3218 = vpop.f32.mrf.mxu0
    %v3219 = vadd.f32 0.0, %v3218
    %v3220 = vpop.f32.mrf.mxu0
    %v3221 = vadd.f32 0.0, %v3220
    %3222 = vmatmul.bf16.gmra.mxu0 %v1582
    %v3223 = vpop.f32.mrf.mxu0
    %v3224 = vadd.f32 0.0, %v3223
    %v3225 = vpop.f32.mrf.mxu0
    %v3226 = vadd.f32 0.0, %v3225
    %3227 = vmatmul.bf16.gmra.mxu0 %v1585
    %v3228 = vpop.f32.mrf.mxu0
    %v3229 = vadd.f32 0.0, %v3228
    %v3230 = vpop.f32.mrf.mxu0
    %v3231 = vadd.f32 0.0, %v3230
    %3232 = vmatmul.bf16.gmra.mxu0 %v1588
    %v3233 = vpop.f32.mrf.mxu0
    %v3234 = vadd.f32 0.0, %v3233
    %v3235 = vpop.f32.mrf.mxu0
    %v3236 = vadd.f32 0.0, %v3235
    %3237 = vmatmul.bf16.gmra.mxu0 %v1591
    %v3238 = vpop.f32.mrf.mxu0
    %v3239 = vadd.f32 0.0, %v3238
    %v3240 = vpop.f32.mrf.mxu0
    %v3241 = vadd.f32 0.0, %v3240
    %3242 = vmatmul.bf16.gmra.mxu0 %v1594
    %v3243 = vpop.f32.mrf.mxu0
    %v3244 = vadd.f32 0.0, %v3243
    %v3245 = vpop.f32.mrf.mxu0
    %v3246 = vadd.f32 0.0, %v3245
    %3247 = vmatmul.bf16.gmra.mxu0 %v1597
    %v3248 = vpop.f32.mrf.mxu0
    %v3249 = vadd.f32 0.0, %v3248
    %v3250 = vpop.f32.mrf.mxu0
    %v3251 = vadd.f32 0.0, %v3250
    %3252 = vmatmul.bf16.gmra.mxu0 %v1600
    %v3253 = vpop.f32.mrf.mxu0
    %v3254 = vadd.f32 0.0, %v3253
    %v3255 = vpop.f32.mrf.mxu0
    %v3256 = vadd.f32 0.0, %v3255
    %3257 = vmatmul.bf16.gmra.mxu0 %v1603
    %v3258 = vpop.f32.mrf.mxu0
    %v3259 = vadd.f32 0.0, %v3258
    %v3260 = vpop.f32.mrf.mxu0
    %v3261 = vadd.f32 0.0, %v3260
    %3262 = vmatmul.bf16.gmra.mxu0 %v1606
    %v3263 = vpop.f32.mrf.mxu0
    %v3264 = vadd.f32 0.0, %v3263
    %v3265 = vpop.f32.mrf.mxu0
    %v3266 = vadd.f32 0.0, %v3265
    %3267 = vmatmul.bf16.gmra.mxu0 %v1609
    %v3268 = vpop.f32.mrf.mxu0
    %v3269 = vadd.f32 0.0, %v3268
    %v3270 = vpop.f32.mrf.mxu0
    %v3271 = vadd.f32 0.0, %v3270
    %3272 = vmatmul.bf16.gmra.mxu0 %v2420
    %v3273 = vpop.f32.mrf.mxu0
    %v3274 = vadd.f32 0.0, %v3273
    %v3275 = vpop.f32.mrf.mxu0
    %v3276 = vadd.f32 0.0, %v3275
    %3277 = vmatmul.bf16.gmra.mxu0 %v3186
    %v3278 = vpop.f32.mrf.mxu0
    %v3279 = vadd.f32 0.0, %v3278
    %v3280 = vpop.f32.mrf.mxu0
    %v3281 = vadd.f32 0.0, %v3280
    %3282 = vmatmul.bf16.gmra.mxu0 %v1618
    %v3283 = vpop.f32.mrf.mxu0
    %v3284 = vadd.f32 0.0, %v3283
    %v3285 = vpop.f32.mrf.mxu0
    %v3286 = vadd.f32 0.0, %v3285
    %3287 = vmatmul.bf16.gmra.mxu0 %v1621
    %v3288 = vpop.f32.mrf.mxu0
    %v3289 = vadd.f32 0.0, %v3288
    %v3290 = vpop.f32.mrf.mxu0
    %v3291 = vadd.f32 0.0, %v3290
    %3292 = vmatmul.bf16.gmra.mxu0 %v1624
    %v3293 = vpop.f32.mrf.mxu0
    %v3294 = vadd.f32 0.0, %v3293
    %v3295 = vpop.f32.mrf.mxu0
    %v3296 = vadd.f32 0.0, %v3295
    %3297 = vmatmul.bf16.gmra.mxu0 %v1627
    %v3298 = vpop.f32.mrf.mxu0
    %v3299 = vadd.f32 0.0, %v3298
    %v3300 = vpop.f32.mrf.mxu0
    %v3301 = vadd.f32 0.0, %v3300
    %3302 = vmatmul.bf16.gmra.mxu0 %v1630
    %v3303 = vpop.f32.mrf.mxu0
    %v3304 = vadd.f32 0.0, %v3303
    %v3305 = vpop.f32.mrf.mxu0
    %v3306 = vadd.f32 0.0, %v3305
    %3307 = vmatmul.bf16.gmra.mxu0 %v1633
    %v3308 = vpop.f32.mrf.mxu0
    %v3309 = vadd.f32 0.0, %v3308
    %v3310 = vpop.f32.mrf.mxu0
    %v3311 = vadd.f32 0.0, %v3310
    %3312 = vmatmul.bf16.gmra.mxu0 %v1636
    %v3313 = vpop.f32.mrf.mxu0
    %v3314 = vadd.f32 0.0, %v3313
    %v3315 = vpop.f32.mrf.mxu0
    %v3316 = vadd.f32 0.0, %v3315
    %3317 = vmatmul.bf16.gmra.mxu0 %v1639
    %v3318 = vpop.f32.mrf.mxu0
    %v3319 = vadd.f32 0.0, %v3318
    %v3320 = vpop.f32.mrf.mxu0
    %v3321 = vadd.f32 0.0, %v3320
    %3322 = vmatmul.bf16.gmra.mxu0 %v1642
    %v3323 = vpop.f32.mrf.mxu0
    %v3324 = vadd.f32 0.0, %v3323
    %v3325 = vpop.f32.mrf.mxu0
    %v3326 = vadd.f32 0.0, %v3325
    %3327 = vmatmul.bf16.gmra.mxu0 %v1645
    %v3328 = vpop.f32.mrf.mxu0
    %v3329 = vadd.f32 0.0, %v3328
    %v3330 = vpop.f32.mrf.mxu0
    %v3331 = vadd.f32 0.0, %v3330
    %3332 = vmatmul.bf16.gmra.mxu0 %v1648
    %v3333 = vpop.f32.mrf.mxu0
    %v3334 = vadd.f32 0.0, %v3333
    %v3335 = vpop.f32.mrf.mxu0
    %v3336 = vadd.f32 0.0, %v3335
    %3337 = vmatmul.bf16.gmra.mxu0 %v1651
    %v3338 = vpop.f32.mrf.mxu0
    %v3339 = vadd.f32 0.0, %v3338
    %v3340 = vpop.f32.mrf.mxu0
    %v3341 = vadd.f32 0.0, %v3340
    %3342 = vmatmul.bf16.gmra.mxu0 %v1654
    %v3343 = vpop.f32.mrf.mxu0
    %v3344 = vadd.f32 0.0, %v3343
    %v3345 = vpop.f32.mrf.mxu0
    %v3346 = vadd.f32 0.0, %v3345
    %3347 = vmatmul.bf16.gmra.mxu0 %v1657
    %v3348 = vpop.f32.mrf.mxu0
    %v3349 = vadd.f32 0.0, %v3348
    %v3350 = vpop.f32.mrf.mxu0
    %v3351 = vadd.f32 0.0, %v3350
    %3352 = vmatmul.bf16.gmra.mxu0 %v2423
    %v3353 = vpop.f32.mrf.mxu0
    %v3354 = vadd.f32 0.0, %v3353
    %v3355 = vpop.f32.mrf.mxu0
    %v3356 = vadd.f32 0.0, %v3355
    %3357 = vmatmul.bf16.gmra.mxu0 %v3189
    %v3358 = vpop.f32.mrf.mxu0
    %v3359 = vadd.f32 0.0, %v3358
    %v3360 = vpop.f32.mrf.mxu0
    %v3361 = vadd.f32 0.0, %v3360
    %3362 = vdwg.mxu0
    %v3363 = vadd.f32 %v3105, %v3204
    %v3364 = vadd.f32 %v3106, %v3206
    %v3365 = vadd.f32 %v3107, %v3209
    %v3366 = vadd.f32 %v3108, %v3211
    %v3367 = vadd.f32 %v3109, %v3214
    %v3368 = vadd.f32 %v3110, %v3216
    %v3369 = vadd.f32 %v3111, %v3219
    %v3370 = vadd.f32 %v3112, %v3221
    %v3371 = vadd.f32 %v3113, %v3224
    %v3372 = vadd.f32 %v3114, %v3226
    %v3373 = vadd.f32 %v3115, %v3229
    %v3374 = vadd.f32 %v3116, %v3231
    %v3375 = vadd.f32 %v3117, %v3234
    %v3376 = vadd.f32 %v3118, %v3236
    %v3377 = vadd.f32 %v3119, %v3239
    %v3378 = vadd.f32 %v3120, %v3241
    %v3379 = vadd.f32 %v3121, %v3244
    %v3380 = vadd.f32 %v3122, %v3246
    %v3381 = vadd.f32 %v3123, %v3249
    %v3382 = vadd.f32 %v3124, %v3251
    %v3383 = vadd.f32 %v3125, %v3254
    %v3384 = vadd.f32 %v3126, %v3256
    %v3385 = vadd.f32 %v3127, %v3259
    %v3386 = vadd.f32 %v3128, %v3261
    %v3387 = vadd.f32 %v3129, %v3264
    %v3388 = vadd.f32 %v3130, %v3266
    %v3389 = vadd.f32 %v3131, %v3269
    %v3390 = vadd.f32 %v3132, %v3271
    %v3391 = vadd.f32 %v3133, %v3274
    %v3392 = vadd.f32 %v3134, %v3276
    %v3393 = vadd.f32 %v3135, %v3279
    %v3394 = vadd.f32 %v3136, %v3281
    %v3395 = vadd.f32 %v3137, %v3284
    %v3396 = vadd.f32 %v3138, %v3286
    %v3397 = vadd.f32 %v3139, %v3289
    %v3398 = vadd.f32 %v3140, %v3291
    %v3399 = vadd.f32 %v3141, %v3294
    %v3400 = vadd.f32 %v3142, %v3296
    %v3401 = vadd.f32 %v3143, %v3299
    %v3402 = vadd.f32 %v3144, %v3301
    %v3403 = vadd.f32 %v3145, %v3304
    %v3404 = vadd.f32 %v3146, %v3306
    %v3405 = vadd.f32 %v3147, %v3309
    %v3406 = vadd.f32 %v3148, %v3311
    %v3407 = vadd.f32 %v3149, %v3314
    %v3408 = vadd.f32 %v3150, %v3316
    %v3409 = vadd.f32 %v3151, %v3319
    %v3410 = vadd.f32 %v3152, %v3321
    %v3411 = vadd.f32 %v3153, %v3324
    %v3412 = vadd.f32 %v3154, %v3326
    %v3413 = vadd.f32 %v3155, %v3329
    %v3414 = vadd.f32 %v3156, %v3331
    %v3415 = vadd.f32 %v3157, %v3334
    %v3416 = vadd.f32 %v3158, %v3336
    %v3417 = vadd.f32 %v3159, %v3339
    %v3418 = vadd.f32 %v3160, %v3341
    %v3419 = vadd.f32 %v3161, %v3344
    %v3420 = vadd.f32 %v3162, %v3346
    %v3421 = vadd.f32 %v3163, %v3349
    %v3422 = vadd.f32 %v3164, %v3351
    %v3423 = vadd.f32 %v3165, %v3354
    %v3424 = vadd.f32 %v3166, %v3356
    %v3425 = vadd.f32 %v3167, %v3359
    %v3426 = vadd.f32 %v3168, %v3361
    %v3427 = vld [vmem:[%s2] sm:$0x1]
    %v3428 = vld [vmem:[%s3] sm:$0x1]
    %v3429 = vadd.f32 %v3363, %v3364
    %v3430 = vadd.f32 %v3429, %v3365
    %v3431 = vadd.f32 %v3430, %v3366
    %v3432 = vadd.f32 %v3431, %v3367
    %v3433 = vadd.f32 %v3432, %v3368
    %v3434 = vadd.f32 %v3433, %v3369
    %v3435 = vadd.f32 %v3434, %v3370
    %v3436 = vadd.f32 %v3435, %v3371
    %v3437 = vadd.f32 %v3436, %v3372
    %v3438 = vadd.f32 %v3437, %v3373
    %v3439 = vadd.f32 %v3438, %v3374
    %v3440 = vadd.f32 %v3439, %v3375
    %v3441 = vadd.f32 %v3440, %v3376
    %v3442 = vadd.f32 %v3441, %v3377
    %v3443 = vadd.f32 %v3442, %v3378
    %v3444 = vadd.f32 %v3443, %v3379
    %v3445 = vadd.f32 %v3444, %v3380
    %v3446 = vadd.f32 %v3445, %v3381
    %v3447 = vadd.f32 %v3446, %v3382
    %v3448 = vadd.f32 %v3447, %v3383
    %v3449 = vadd.f32 %v3448, %v3384
    %v3450 = vadd.f32 %v3449, %v3385
    %v3451 = vadd.f32 %v3450, %v3386
    %v3452 = vadd.f32 %v3451, %v3387
    %v3453 = vadd.f32 %v3452, %v3388
    %v3454 = vadd.f32 %v3453, %v3389
    %v3455 = vadd.f32 %v3454, %v3390
    %v3456 = vadd.f32 %v3455, %v3391
    %v3457 = vadd.f32 %v3456, %v3392
    %v3458 = vadd.f32 %v3457, %v3393
    %v3459 = vadd.f32 %v3458, %v3394
    %v3460 = vadd.f32 %v3459, %v3395
    %v3461 = vadd.f32 %v3460, %v3396
    %v3462 = vadd.f32 %v3461, %v3397
    %v3463 = vadd.f32 %v3462, %v3398
    %v3464 = vadd.f32 %v3463, %v3399
    %v3465 = vadd.f32 %v3464, %v3400
    %v3466 = vadd.f32 %v3465, %v3401
    %v3467 = vadd.f32 %v3466, %v3402
    %v3468 = vadd.f32 %v3467, %v3403
    %v3469 = vadd.f32 %v3468, %v3404
    %v3470 = vadd.f32 %v3469, %v3405
    %v3471 = vadd.f32 %v3470, %v3406
    %v3472 = vadd.f32 %v3471, %v3407
    %v3473 = vadd.f32 %v3472, %v3408
    %v3474 = vadd.f32 %v3473, %v3409
    %v3475 = vadd.f32 %v3474, %v3410
    %v3476 = vadd.f32 %v3475, %v3411
    %v3477 = vadd.f32 %v3476, %v3412
    %v3478 = vadd.f32 %v3477, %v3413
    %v3479 = vadd.f32 %v3478, %v3414
    %v3480 = vadd.f32 %v3479, %v3415
    %v3481 = vadd.f32 %v3480, %v3416
    %v3482 = vadd.f32 %v3481, %v3417
    %v3483 = vadd.f32 %v3482, %v3418
    %v3484 = vadd.f32 %v3483, %v3419
    %v3485 = vadd.f32 %v3484, %v3420
    %v3486 = vadd.f32 %v3485, %v3421
    %v3487 = vadd.f32 %v3486, %v3422
    %v3488 = vadd.f32 %v3487, %v3423
    %v3489 = vadd.f32 %v3488, %v3424
    %v3490 = vadd.f32 %v3489, %v3425
    %v3491 = vadd.f32 %v3490, %v3426
    %v3492 = vrot.slane %v3491, 4
    %v3493 = vadd.f32 %v3491, %v3492
    %v3494 = vrot.slane %v3493, 2
    %v3495 = vadd.f32 %v3493, %v3494
    %v3496 = vrot.slane %v3495, 1
    %v3497 = vadd.f32 %v3495, %v3496
    %v3498 = vmul.f32 %v3497, 0.001953125
    %v3499 = vmul.f32 %v3363, %v3363
    %v3500 = vmul.f32 %v3364, %v3364
    %v3501 = vmul.f32 %v3365, %v3365
    %v3502 = vmul.f32 %v3366, %v3366
    %v3503 = vmul.f32 %v3367, %v3367
    %v3504 = vmul.f32 %v3368, %v3368
    %v3505 = vmul.f32 %v3369, %v3369
    %v3506 = vmul.f32 %v3370, %v3370
    %v3507 = vmul.f32 %v3371, %v3371
    %v3508 = vmul.f32 %v3372, %v3372
    %v3509 = vmul.f32 %v3373, %v3373
    %v3510 = vmul.f32 %v3374, %v3374
    %v3511 = vmul.f32 %v3375, %v3375
    %v3512 = vmul.f32 %v3376, %v3376
    %v3513 = vmul.f32 %v3377, %v3377
    %v3514 = vmul.f32 %v3378, %v3378
    %v3515 = vmul.f32 %v3379, %v3379
    %v3516 = vmul.f32 %v3380, %v3380
    %v3517 = vmul.f32 %v3381, %v3381
    %v3518 = vmul.f32 %v3382, %v3382
    %v3519 = vmul.f32 %v3383, %v3383
    %v3520 = vmul.f32 %v3384, %v3384
    %v3521 = vmul.f32 %v3385, %v3385
    %v3522 = vmul.f32 %v3386, %v3386
    %v3523 = vmul.f32 %v3387, %v3387
    %v3524 = vmul.f32 %v3388, %v3388
    %v3525 = vmul.f32 %v3389, %v3389
    %v3526 = vmul.f32 %v3390, %v3390
    %v3527 = vmul.f32 %v3391, %v3391
    %v3528 = vmul.f32 %v3392, %v3392
    %v3529 = vmul.f32 %v3393, %v3393
    %v3530 = vmul.f32 %v3394, %v3394
    %v3531 = vmul.f32 %v3395, %v3395
    %v3532 = vmul.f32 %v3396, %v3396
    %v3533 = vmul.f32 %v3397, %v3397
    %v3534 = vmul.f32 %v3398, %v3398
    %v3535 = vmul.f32 %v3399, %v3399
    %v3536 = vmul.f32 %v3400, %v3400
    %v3537 = vmul.f32 %v3401, %v3401
    %v3538 = vmul.f32 %v3402, %v3402
    %v3539 = vmul.f32 %v3403, %v3403
    %v3540 = vmul.f32 %v3404, %v3404
    %v3541 = vmul.f32 %v3405, %v3405
    %v3542 = vmul.f32 %v3406, %v3406
    %v3543 = vmul.f32 %v3407, %v3407
    %v3544 = vmul.f32 %v3408, %v3408
    %v3545 = vmul.f32 %v3409, %v3409
    %v3546 = vmul.f32 %v3410, %v3410
    %v3547 = vmul.f32 %v3411, %v3411
    %v3548 = vmul.f32 %v3412, %v3412
    %v3549 = vmul.f32 %v3413, %v3413
    %v3550 = vmul.f32 %v3414, %v3414
    %v3551 = vmul.f32 %v3415, %v3415
    %v3552 = vmul.f32 %v3416, %v3416
    %v3553 = vmul.f32 %v3417, %v3417
    %v3554 = vmul.f32 %v3418, %v3418
    %v3555 = vmul.f32 %v3419, %v3419
    %v3556 = vmul.f32 %v3420, %v3420
    %v3557 = vmul.f32 %v3421, %v3421
    %v3558 = vmul.f32 %v3422, %v3422
    %v3559 = vmul.f32 %v3423, %v3423
    %v3560 = vmul.f32 %v3424, %v3424
    %v3561 = vmul.f32 %v3425, %v3425
    %v3562 = vmul.f32 %v3426, %v3426
    %v3563 = vadd.f32 %v3499, %v3500
    %v3564 = vadd.f32 %v3563, %v3501
    %v3565 = vadd.f32 %v3564, %v3502
    %v3566 = vadd.f32 %v3565, %v3503
    %v3567 = vadd.f32 %v3566, %v3504
    %v3568 = vadd.f32 %v3567, %v3505
    %v3569 = vadd.f32 %v3568, %v3506
    %v3570 = vadd.f32 %v3569, %v3507
    %v3571 = vadd.f32 %v3570, %v3508
    %v3572 = vadd.f32 %v3571, %v3509
    %v3573 = vadd.f32 %v3572, %v3510
    %v3574 = vadd.f32 %v3573, %v3511
    %v3575 = vadd.f32 %v3574, %v3512
    %v3576 = vadd.f32 %v3575, %v3513
    %v3577 = vadd.f32 %v3576, %v3514
    %v3578 = vadd.f32 %v3577, %v3515
    %v3579 = vadd.f32 %v3578, %v3516
    %v3580 = vadd.f32 %v3579, %v3517
    %v3581 = vadd.f32 %v3580, %v3518
    %v3582 = vadd.f32 %v3581, %v3519
    %v3583 = vadd.f32 %v3582, %v3520
    %v3584 = vadd.f32 %v3583, %v3521
    %v3585 = vadd.f32 %v3584, %v3522
    %v3586 = vadd.f32 %v3585, %v3523
    %v3587 = vadd.f32 %v3586, %v3524
    %v3588 = vadd.f32 %v3587, %v3525
    %v3589 = vadd.f32 %v3588, %v3526
    %v3590 = vadd.f32 %v3589, %v3527
    %v3591 = vadd.f32 %v3590, %v3528
    %v3592 = vadd.f32 %v3591, %v3529
    %v3593 = vadd.f32 %v3592, %v3530
    %v3594 = vadd.f32 %v3593, %v3531
    %v3595 = vadd.f32 %v3594, %v3532
    %v3596 = vadd.f32 %v3595, %v3533
    %v3597 = vadd.f32 %v3596, %v3534
    %v3598 = vadd.f32 %v3597, %v3535
    %v3599 = vadd.f32 %v3598, %v3536
    %v3600 = vadd.f32 %v3599, %v3537
    %v3601 = vadd.f32 %v3600, %v3538
    %v3602 = vadd.f32 %v3601, %v3539
    %v3603 = vadd.f32 %v3602, %v3540
    %v3604 = vadd.f32 %v3603, %v3541
    %v3605 = vadd.f32 %v3604, %v3542
    %v3606 = vadd.f32 %v3605, %v3543
    %v3607 = vadd.f32 %v3606, %v3544
    %v3608 = vadd.f32 %v3607, %v3545
    %v3609 = vadd.f32 %v3608, %v3546
    %v3610 = vadd.f32 %v3609, %v3547
    %v3611 = vadd.f32 %v3610, %v3548
    %v3612 = vadd.f32 %v3611, %v3549
    %v3613 = vadd.f32 %v3612, %v3550
    %v3614 = vadd.f32 %v3613, %v3551
    %v3615 = vadd.f32 %v3614, %v3552
    %v3616 = vadd.f32 %v3615, %v3553
    %v3617 = vadd.f32 %v3616, %v3554
    %v3618 = vadd.f32 %v3617, %v3555
    %v3619 = vadd.f32 %v3618, %v3556
    %v3620 = vadd.f32 %v3619, %v3557
    %v3621 = vadd.f32 %v3620, %v3558
    %v3622 = vadd.f32 %v3621, %v3559
    %v3623 = vadd.f32 %v3622, %v3560
    %v3624 = vadd.f32 %v3623, %v3561
    %v3625 = vadd.f32 %v3624, %v3562
    %v3626 = vrot.slane %v3625, 4
    %v3627 = vadd.f32 %v3625, %v3626
    %v3628 = vrot.slane %v3627, 2
    %v3629 = vadd.f32 %v3627, %v3628
    %v3630 = vrot.slane %v3629, 1
    %v3631 = vadd.f32 %v3629, %v3630
    %v3632 = vmul.f32 %v3631, 0.001953125
    %v3633 = vmul.f32 %v3498, %v3498
    %v3634 = vsub.f32 %v3632, %v3633
    %v3635 = vmax.f32 %v3634, 0.0
    %v3636 = vadd.f32 %v3635, 1e-05
    %v3637 = vrsqrt.pop %v3636
    %v3638 = vmul.f32 %v3637, %v3636
    %v3639 = vmul.f32 %v3638, %v3637
    %v3640 = vmul.f32 0.5, %v3639
    %v3641 = vsub.f32 1.5, %v3640
    %v3642 = vmul.f32 %v3637, %v3641
    %vm3643 = vweird.f32 %v3636
    %vm3644 = vweird.f32 %v3637
    %vm3645 = vmor %vm3643, %vm3644
    %v3646 = vsel %vm3645, %v3637, %v3642
    %v3647 = vmul.f32 %v3427, %v3646
    %v3648 = vmul.f32 %v3498, %v3647
    %v3649 = vsub.f32 %v3428, %v3648
    %v3651 = vperm.slane %v3647, 0
    %v3653 = vmul.f32 %v3363, %v3651
    %v3654 = vmul.f32 %v3364, %v3651
    %v3655 = vmul.f32 %v3365, %v3651
    %v3656 = vmul.f32 %v3366, %v3651
    %v3657 = vmul.f32 %v3367, %v3651
    %v3658 = vmul.f32 %v3368, %v3651
    %v3659 = vmul.f32 %v3369, %v3651
    %v3660 = vmul.f32 %v3370, %v3651
    %v3661 = vmul.f32 %v3371, %v3651
    %v3662 = vmul.f32 %v3372, %v3651
    %v3663 = vmul.f32 %v3373, %v3651
    %v3664 = vmul.f32 %v3374, %v3651
    %v3665 = vmul.f32 %v3375, %v3651
    %v3666 = vmul.f32 %v3376, %v3651
    %v3667 = vmul.f32 %v3377, %v3651
    %v3668 = vmul.f32 %v3378, %v3651
    %v3669 = vmul.f32 %v3379, %v3651
    %v3670 = vmul.f32 %v3380, %v3651
    %v3671 = vmul.f32 %v3381, %v3651
    %v3672 = vmul.f32 %v3382, %v3651
    %v3673 = vmul.f32 %v3383, %v3651
    %v3674 = vmul.f32 %v3384, %v3651
    %v3675 = vmul.f32 %v3385, %v3651
    %v3676 = vmul.f32 %v3386, %v3651
    %v3677 = vmul.f32 %v3387, %v3651
    %v3678 = vmul.f32 %v3388, %v3651
    %v3679 = vmul.f32 %v3389, %v3651
    %v3680 = vmul.f32 %v3390, %v3651
    %v3681 = vmul.f32 %v3391, %v3651
    %v3682 = vmul.f32 %v3392, %v3651
    %v3683 = vmul.f32 %v3393, %v3651
    %v3684 = vmul.f32 %v3394, %v3651
    %v3685 = vmul.f32 %v3395, %v3651
    %v3686 = vmul.f32 %v3396, %v3651
    %v3687 = vmul.f32 %v3397, %v3651
    %v3688 = vmul.f32 %v3398, %v3651
    %v3689 = vmul.f32 %v3399, %v3651
    %v3690 = vmul.f32 %v3400, %v3651
    %v3691 = vmul.f32 %v3401, %v3651
    %v3692 = vmul.f32 %v3402, %v3651
    %v3693 = vmul.f32 %v3403, %v3651
    %v3694 = vmul.f32 %v3404, %v3651
    %v3695 = vmul.f32 %v3405, %v3651
    %v3696 = vmul.f32 %v3406, %v3651
    %v3697 = vmul.f32 %v3407, %v3651
    %v3698 = vmul.f32 %v3408, %v3651
    %v3699 = vmul.f32 %v3409, %v3651
    %v3700 = vmul.f32 %v3410, %v3651
    %v3701 = vmul.f32 %v3411, %v3651
    %v3702 = vmul.f32 %v3412, %v3651
    %v3703 = vmul.f32 %v3413, %v3651
    %v3704 = vmul.f32 %v3414, %v3651
    %v3705 = vmul.f32 %v3415, %v3651
    %v3706 = vmul.f32 %v3416, %v3651
    %v3707 = vmul.f32 %v3417, %v3651
    %v3708 = vmul.f32 %v3418, %v3651
    %v3709 = vmul.f32 %v3419, %v3651
    %v3710 = vmul.f32 %v3420, %v3651
    %v3711 = vmul.f32 %v3421, %v3651
    %v3712 = vmul.f32 %v3422, %v3651
    %v3713 = vmul.f32 %v3423, %v3651
    %v3714 = vmul.f32 %v3424, %v3651
    %v3715 = vmul.f32 %v3425, %v3651
    %v3716 = vmul.f32 %v3426, %v3651
    %v3718 = vperm.slane %v3649, 0
    %v3720 = vadd.f32 %v3653, %v3718
    %v3721 = vadd.f32 %v3654, %v3718
    %v3722 = vadd.f32 %v3655, %v3718
    %v3723 = vadd.f32 %v3656, %v3718
    %v3724 = vadd.f32 %v3657, %v3718
    %v3725 = vadd.f32 %v3658, %v3718
    %v3726 = vadd.f32 %v3659, %v3718
    %v3727 = vadd.f32 %v3660, %v3718
    %v3728 = vadd.f32 %v3661, %v3718
    %v3729 = vadd.f32 %v3662, %v3718
    %v3730 = vadd.f32 %v3663, %v3718
    %v3731 = vadd.f32 %v3664, %v3718
    %v3732 = vadd.f32 %v3665, %v3718
    %v3733 = vadd.f32 %v3666, %v3718
    %v3734 = vadd.f32 %v3667, %v3718
    %v3735 = vadd.f32 %v3668, %v3718
    %v3736 = vadd.f32 %v3669, %v3718
    %v3737 = vadd.f32 %v3670, %v3718
    %v3738 = vadd.f32 %v3671, %v3718
    %v3739 = vadd.f32 %v3672, %v3718
    %v3740 = vadd.f32 %v3673, %v3718
    %v3741 = vadd.f32 %v3674, %v3718
    %v3742 = vadd.f32 %v3675, %v3718
    %v3743 = vadd.f32 %v3676, %v3718
    %v3744 = vadd.f32 %v3677, %v3718
    %v3745 = vadd.f32 %v3678, %v3718
    %v3746 = vadd.f32 %v3679, %v3718
    %v3747 = vadd.f32 %v3680, %v3718
    %v3748 = vadd.f32 %v3681, %v3718
    %v3749 = vadd.f32 %v3682, %v3718
    %v3750 = vadd.f32 %v3683, %v3718
    %v3751 = vadd.f32 %v3684, %v3718
    %v3752 = vadd.f32 %v3685, %v3718
    %v3753 = vadd.f32 %v3686, %v3718
    %v3754 = vadd.f32 %v3687, %v3718
    %v3755 = vadd.f32 %v3688, %v3718
    %v3756 = vadd.f32 %v3689, %v3718
    %v3757 = vadd.f32 %v3690, %v3718
    %v3758 = vadd.f32 %v3691, %v3718
    %v3759 = vadd.f32 %v3692, %v3718
    %v3760 = vadd.f32 %v3693, %v3718
    %v3761 = vadd.f32 %v3694, %v3718
    %v3762 = vadd.f32 %v3695, %v3718
    %v3763 = vadd.f32 %v3696, %v3718
    %v3764 = vadd.f32 %v3697, %v3718
    %v3765 = vadd.f32 %v3698, %v3718
    %v3766 = vadd.f32 %v3699, %v3718
    %v3767 = vadd.f32 %v3700, %v3718
    %v3768 = vadd.f32 %v3701, %v3718
    %v3769 = vadd.f32 %v3702, %v3718
    %v3770 = vadd.f32 %v3703, %v3718
    %v3771 = vadd.f32 %v3704, %v3718
    %v3772 = vadd.f32 %v3705, %v3718
    %v3773 = vadd.f32 %v3706, %v3718
    %v3774 = vadd.f32 %v3707, %v3718
    %v3775 = vadd.f32 %v3708, %v3718
    %v3776 = vadd.f32 %v3709, %v3718
    %v3777 = vadd.f32 %v3710, %v3718
    %v3778 = vadd.f32 %v3711, %v3718
    %v3779 = vadd.f32 %v3712, %v3718
    %v3780 = vadd.f32 %v3713, %v3718
    %v3781 = vadd.f32 %v3714, %v3718
    %v3782 = vadd.f32 %v3715, %v3718
    %v3783 = vadd.f32 %v3716, %v3718
    %v3784 = vmax.f32 %v3720, 0.0
    %v3785 = vmax.f32 %v3721, 0.0
    %v3786 = vmax.f32 %v3722, 0.0
    %v3787 = vmax.f32 %v3723, 0.0
    %v3788 = vmax.f32 %v3724, 0.0
    %v3789 = vmax.f32 %v3725, 0.0
    %v3790 = vmax.f32 %v3726, 0.0
    %v3791 = vmax.f32 %v3727, 0.0
    %v3792 = vmax.f32 %v3728, 0.0
    %v3793 = vmax.f32 %v3729, 0.0
    %v3794 = vmax.f32 %v3730, 0.0
    %v3795 = vmax.f32 %v3731, 0.0
    %v3796 = vmax.f32 %v3732, 0.0
    %v3797 = vmax.f32 %v3733, 0.0
    %v3798 = vmax.f32 %v3734, 0.0
    %v3799 = vmax.f32 %v3735, 0.0
    %v3800 = vmax.f32 %v3736, 0.0
    %v3801 = vmax.f32 %v3737, 0.0
    %v3802 = vmax.f32 %v3738, 0.0
    %v3803 = vmax.f32 %v3739, 0.0
    %v3804 = vmax.f32 %v3740, 0.0
    %v3805 = vmax.f32 %v3741, 0.0
    %v3806 = vmax.f32 %v3742, 0.0
    %v3807 = vmax.f32 %v3743, 0.0
    %v3808 = vmax.f32 %v3744, 0.0
    %v3809 = vmax.f32 %v3745, 0.0
    %v3810 = vmax.f32 %v3746, 0.0
    %v3811 = vmax.f32 %v3747, 0.0
    %v3812 = vmax.f32 %v3748, 0.0
    %v3813 = vmax.f32 %v3749, 0.0
    %v3814 = vmax.f32 %v3750, 0.0
    %v3815 = vmax.f32 %v3751, 0.0
    %v3816 = vmax.f32 %v3752, 0.0
    %v3817 = vmax.f32 %v3753, 0.0
    %v3818 = vmax.f32 %v3754, 0.0
    %v3819 = vmax.f32 %v3755, 0.0
    %v3820 = vmax.f32 %v3756, 0.0
    %v3821 = vmax.f32 %v3757, 0.0
    %v3822 = vmax.f32 %v3758, 0.0
    %v3823 = vmax.f32 %v3759, 0.0
    %v3824 = vmax.f32 %v3760, 0.0
    %v3825 = vmax.f32 %v3761, 0.0
    %v3826 = vmax.f32 %v3762, 0.0
    %v3827 = vmax.f32 %v3763, 0.0
    %v3828 = vmax.f32 %v3764, 0.0
    %v3829 = vmax.f32 %v3765, 0.0
    %v3830 = vmax.f32 %v3766, 0.0
    %v3831 = vmax.f32 %v3767, 0.0
    %v3832 = vmax.f32 %v3768, 0.0
    %v3833 = vmax.f32 %v3769, 0.0
    %v3834 = vmax.f32 %v3770, 0.0
    %v3835 = vmax.f32 %v3771, 0.0
    %v3836 = vmax.f32 %v3772, 0.0
    %v3837 = vmax.f32 %v3773, 0.0
    %v3838 = vmax.f32 %v3774, 0.0
    %v3839 = vmax.f32 %v3775, 0.0
    %v3840 = vmax.f32 %v3776, 0.0
    %v3841 = vmax.f32 %v3777, 0.0
    %v3842 = vmax.f32 %v3778, 0.0
    %v3843 = vmax.f32 %v3779, 0.0
    %v3844 = vmax.f32 %v3780, 0.0
    %v3845 = vmax.f32 %v3781, 0.0
    %v3846 = vmax.f32 %v3782, 0.0
    %v3847 = vmax.f32 %v3783, 0.0
    %3848 = vst [vmem:[#allocation3] sm:$0xff] 0.0
    %3849 = vst [vmem:[#allocation3 + $0x8] sm:$0xff] 0.0
    %3850 = vst [vmem:[#allocation3 + $0x10] sm:$0x3] 0.0
    %3851 = vst [vmem:[#allocation3 + $0x18] sm:$0xff] 0.0
    %3852 = vst [vmem:[#allocation3 + $0x20] sm:$0xff] 0.0
    %3853 = vst [vmem:[#allocation3 + $0x28] sm:$0x3] 0.0
    %3854 = vst [vmem:[#allocation3 + $0x30] sm:$0xff] 0.0
    %3855 = vst [vmem:[#allocation3 + $0x38] sm:$0xff] 0.0
    %3856 = vst [vmem:[#allocation3 + $0x40] sm:$0x3] 0.0
    %3857 = vst [vmem:[#allocation3 + $0x48] sm:$0xff] 0.0
    %3858 = vst [vmem:[#allocation3 + $0x50] sm:$0xff] 0.0
    %3859 = vst [vmem:[#allocation3 + $0x58] sm:$0x3] 0.0
    %3860 = vst [vmem:[#allocation3 + $0x60] sm:$0xff] 0.0
    %3861 = vst [vmem:[#allocation3 + $0x68] sm:$0xff] 0.0
    %3862 = vst [vmem:[#allocation3 + $0x70] sm:$0x3] 0.0
    %3863 = vst [vmem:[#allocation3 + $0x78] sm:$0xff] 0.0
    %3864 = vst [vmem:[#allocation3 + $0x80] sm:$0xff] 0.0
    %3865 = vst [vmem:[#allocation3 + $0x88] sm:$0x3] 0.0
    %3866 = vst [vmem:[#allocation3 + $0x90] sm:$0xff] 0.0
    %3867 = vst [vmem:[#allocation3 + $0x98] sm:$0xff] 0.0
    %3868 = vst [vmem:[#allocation3 + $0xa0] sm:$0x3] 0.0
    %3869 = vst [vmem:[#allocation3 + $0xa8] sm:$0xff] 0.0
    %3870 = vst [vmem:[#allocation3 + $0xb0] sm:$0xff] 0.0
    %3871 = vst [vmem:[#allocation3 + $0xb8] sm:$0x3] 0.0
    %3872 = vst [vmem:[#allocation3 + $0xc0] sm:$0xff] 0.0
    %3873 = vst [vmem:[#allocation3 + $0xc8] sm:$0xff] 0.0
    %3874 = vst [vmem:[#allocation3 + $0xd0] sm:$0x3] 0.0
    %3875 = vst [vmem:[#allocation3 + $0xd8] sm:$0xff] 0.0
    %3876 = vst [vmem:[#allocation3 + $0xe0] sm:$0xff] 0.0
    %3877 = vst [vmem:[#allocation3 + $0xe8] sm:$0x3] 0.0
    %3878 = vst [vmem:[#allocation3 + $0xf0] sm:$0xff] 0.0
    %3879 = vst [vmem:[#allocation3 + $0xf8] sm:$0xff] 0.0
    %3880 = vst [vmem:[#allocation3 + $0x100] sm:$0x3] 0.0
    %3881 = vst [vmem:[#allocation3 + $0x108] sm:$0xff] 0.0
    %3882 = vst [vmem:[#allocation3 + $0x110] sm:$0xff] 0.0
    %3883 = vst [vmem:[#allocation3 + $0x118] sm:$0x3] 0.0
    %3884 = vst [vmem:[#allocation3 + $0x120] sm:$0xff] 0.0
    %3885 = vst [vmem:[#allocation3 + $0x128] sm:$0xff] 0.0
    %3886 = vst [vmem:[#allocation3 + $0x130] sm:$0x3] 0.0
    %3887 = vst [vmem:[#allocation3 + $0x138] sm:$0xff] 0.0
    %3888 = vst [vmem:[#allocation3 + $0x140] sm:$0xff] 0.0
    %3889 = vst [vmem:[#allocation3 + $0x148] sm:$0x3] 0.0
    %3890 = vst [vmem:[#allocation3 + $0x150] sm:$0xff] 0.0
    %3891 = vst [vmem:[#allocation3 + $0x158] sm:$0xff] 0.0
    %3892 = vst [vmem:[#allocation3 + $0x160] sm:$0x3] 0.0
    %3893 = vst [vmem:[#allocation3 + $0x168] sm:$0xff] 0.0
    %3894 = vst [vmem:[#allocation3 + $0x170] sm:$0xff] 0.0
    %3895 = vst [vmem:[#allocation3 + $0x178] sm:$0x3] 0.0
    %3896 = vst [vmem:[#allocation3 + $0x180] sm:$0xff] 0.0
    %3897 = vst [vmem:[#allocation3 + $0x188] sm:$0xff] 0.0
    %3898 = vst [vmem:[#allocation3 + $0x190] sm:$0x3] 0.0
    %3899 = vst [vmem:[#allocation3 + $0x198] sm:$0xff] 0.0
    %3900 = vst [vmem:[#allocation3 + $0x1a0] sm:$0xff] 0.0
    %3901 = vst [vmem:[#allocation3 + $0x1a8] sm:$0x3] 0.0
    %3902 = vst [vmem:[#allocation3 + $0x1b0] sm:$0xff] 0.0
    %3903 = vst [vmem:[#allocation3 + $0x1b8] sm:$0xff] 0.0
    %3904 = vst [vmem:[#allocation3 + $0x1c0] sm:$0x3] 0.0
    %3905 = vst [vmem:[#allocation3 + $0x1c8] sm:$0xff] 0.0
    %3906 = vst [vmem:[#allocation3 + $0x1d0] sm:$0xff] 0.0
    %3907 = vst [vmem:[#allocation3 + $0x1d8] sm:$0x3] 0.0
    %3908 = vst [vmem:[#allocation3 + $0x1e0] sm:$0xff] 0.0
    %3909 = vst [vmem:[#allocation3 + $0x1e8] sm:$0xff] 0.0
    %3910 = vst [vmem:[#allocation3 + $0x1f0] sm:$0x3] 0.0
    %3911 = vst [vmem:[#allocation3 + $0x1f8] sm:$0xff] 0.0
    %3912 = vst [vmem:[#allocation3 + $0x200] sm:$0xff] 0.0
    %3913 = vst [vmem:[#allocation3 + $0x208] sm:$0x3] 0.0
    %3914 = vst [vmem:[#allocation3 + $0x210] sm:$0xff] 0.0
    %3915 = vst [vmem:[#allocation3 + $0x218] sm:$0xff] 0.0
    %3916 = vst [vmem:[#allocation3 + $0x220] sm:$0x3] 0.0
    %3917 = vst [vmem:[#allocation3 + $0x228] sm:$0xff] 0.0
    %3918 = vst [vmem:[#allocation3 + $0x230] sm:$0xff] 0.0
    %3919 = vst [vmem:[#allocation3 + $0x238] sm:$0x3] 0.0
    %3920 = vst [vmem:[#allocation3 + $0x240] sm:$0xff] 0.0
    %3921 = vst [vmem:[#allocation3 + $0x248] sm:$0xff] 0.0
    %3922 = vst [vmem:[#allocation3 + $0x250] sm:$0x3] 0.0
    %3923 = vst [vmem:[#allocation3 + $0x258] sm:$0xff] 0.0
    %3924 = vst [vmem:[#allocation3 + $0x260] sm:$0xff] 0.0
    %3925 = vst [vmem:[#allocation3 + $0x268] sm:$0x3] 0.0
    %3926 = vst [vmem:[#allocation3 + $0x270] sm:$0xff] 0.0
    %3927 = vst [vmem:[#allocation3 + $0x278] sm:$0xff] 0.0
    %3928 = vst [vmem:[#allocation3 + $0x280] sm:$0x3] 0.0
    %3929 = vst [vmem:[#allocation3 + $0x288] sm:$0xff] 0.0
    %3930 = vst [vmem:[#allocation3 + $0x290] sm:$0xff] 0.0
    %3931 = vst [vmem:[#allocation3 + $0x298] sm:$0x3] 0.0
    %3932 = vst [vmem:[#allocation3 + $0x2a0] sm:$0xff] 0.0
    %3933 = vst [vmem:[#allocation3 + $0x2a8] sm:$0xff] 0.0
    %3934 = vst [vmem:[#allocation3 + $0x2b0] sm:$0x3] 0.0
    %3935 = vst [vmem:[#allocation3 + $0x2b8] sm:$0xff] 0.0
    %3936 = vst [vmem:[#allocation3 + $0x2c0] sm:$0xff] 0.0
    %3937 = vst [vmem:[#allocation3 + $0x2c8] sm:$0x3] 0.0
    %3938 = vst [vmem:[#allocation3 + $0x2d0] sm:$0xff] 0.0
    %3939 = vst [vmem:[#allocation3 + $0x2d8] sm:$0xff] 0.0
    %3940 = vst [vmem:[#allocation3 + $0x2e0] sm:$0x3] 0.0
    %3941 = vst [vmem:[#allocation3 + $0x2e8] sm:$0xff] 0.0
    %3942 = vst [vmem:[#allocation3 + $0x2f0] sm:$0xff] 0.0
    %3943 = vst [vmem:[#allocation3 + $0x2f8] sm:$0x3] 0.0
    %3944 = vst [vmem:[#allocation3 + $0x300] sm:$0xff] 0.0
    %3945 = vst [vmem:[#allocation3 + $0x308] sm:$0xff] 0.0
    %3946 = vst [vmem:[#allocation3 + $0x310] sm:$0x3] 0.0
    %3947 = vst [vmem:[#allocation3 + $0x318] sm:$0xff] 0.0
    %3948 = vst [vmem:[#allocation3 + $0x320] sm:$0xff] 0.0
    %3949 = vst [vmem:[#allocation3 + $0x328] sm:$0x3] 0.0
    %3950 = vst [vmem:[#allocation3 + $0x330] sm:$0xff] 0.0
    %3951 = vst [vmem:[#allocation3 + $0x338] sm:$0xff] 0.0
    %3952 = vst [vmem:[#allocation3 + $0x340] sm:$0x3] 0.0
    %3953 = vst [vmem:[#allocation3 + $0x348] sm:$0xff] 0.0
    %3954 = vst [vmem:[#allocation3 + $0x350] sm:$0xff] 0.0
    %3955 = vst [vmem:[#allocation3 + $0x358] sm:$0x3] 0.0
    %s3956 = scalar_lea.vmem [#allocation3], 24
    %3957 = vst [vmem:[%s3956 + $0x1] sm:$0xff] %v3784
    %3958 = vst [vmem:[%s3956 + $0x9] sm:$0xff] %v3785
    %3959 = vst [vmem:[%s3956 + $0x19] sm:$0xff] %v3786
    %3960 = vst [vmem:[%s3956 + $0x21] sm:$0xff] %v3787
    %3961 = vst [vmem:[%s3956 + $0x31] sm:$0xff] %v3788
    %3962 = vst [vmem:[%s3956 + $0x39] sm:$0xff] %v3789
    %3963 = vst [vmem:[%s3956 + $0x49] sm:$0xff] %v3790
    %3964 = vst [vmem:[%s3956 + $0x51] sm:$0xff] %v3791
    %3965 = vst [vmem:[%s3956 + $0x61] sm:$0xff] %v3792
    %3966 = vst [vmem:[%s3956 + $0x69] sm:$0xff] %v3793
    %3967 = vst [vmem:[%s3956 + $0x79] sm:$0xff] %v3794
    %3968 = vst [vmem:[%s3956 + $0x81] sm:$0xff] %v3795
    %3969 = vst [vmem:[%s3956 + $0x91] sm:$0xff] %v3796
    %3970 = vst [vmem:[%s3956 + $0x99] sm:$0xff] %v3797
    %3971 = vst [vmem:[%s3956 + $0xa9] sm:$0xff] %v3798
    %3972 = vst [vmem:[%s3956 + $0xb1] sm:$0xff] %v3799
    %3973 = vst [vmem:[%s3956 + $0xc1] sm:$0xff] %v3800
    %3974 = vst [vmem:[%s3956 + $0xc9] sm:$0xff] %v3801
    %3975 = vst [vmem:[%s3956 + $0xd9] sm:$0xff] %v3802
    %3976 = vst [vmem:[%s3956 + $0xe1] sm:$0xff] %v3803
    %3977 = vst [vmem:[%s3956 + $0xf1] sm:$0xff] %v3804
    %3978 = vst [vmem:[%s3956 + $0xf9] sm:$0xff] %v3805
    %3979 = vst [vmem:[%s3956 + $0x109] sm:$0xff] %v3806
    %3980 = vst [vmem:[%s3956 + $0x111] sm:$0xff] %v3807
    %3981 = vst [vmem:[%s3956 + $0x121] sm:$0xff] %v3808
    %3982 = vst [vmem:[%s3956 + $0x129] sm:$0xff] %v3809
    %3983 = vst [vmem:[%s3956 + $0x139] sm:$0xff] %v3810
    %3984 = vst [vmem:[%s3956 + $0x141] sm:$0xff] %v3811
    %3985 = vst [vmem:[%s3956 + $0x151] sm:$0xff] %v3812
    %3986 = vst [vmem:[%s3956 + $0x159] sm:$0xff] %v3813
    %3987 = vst [vmem:[%s3956 + $0x169] sm:$0xff] %v3814
    %3988 = vst [vmem:[%s3956 + $0x171] sm:$0xff] %v3815
    %3989 = vst [vmem:[%s3956 + $0x1b1] sm:$0xff] %v3816
    %3990 = vst [vmem:[%s3956 + $0x1b9] sm:$0xff] %v3817
    %3991 = vst [vmem:[%s3956 + $0x1c9] sm:$0xff] %v3818
    %3992 = vst [vmem:[%s3956 + $0x1d1] sm:$0xff] %v3819
    %3993 = vst [vmem:[%s3956 + $0x1e1] sm:$0xff] %v3820
    %3994 = vst [vmem:[%s3956 + $0x1e9] sm:$0xff] %v3821
    %3995 = vst [vmem:[%s3956 + $0x1f9] sm:$0xff] %v3822
    %3996 = vst [vmem:[%s3956 + $0x201] sm:$0xff] %v3823
    %3997 = vst [vmem:[%s3956 + $0x211] sm:$0xff] %v3824
    %3998 = vst [vmem:[%s3956 + $0x219] sm:$0xff] %v3825
    %3999 = vst [vmem:[%s3956 + $0x229] sm:$0xff] %v3826
    %4000 = vst [vmem:[%s3956 + $0x231] sm:$0xff] %v3827
    %4001 = vst [vmem:[%s3956 + $0x241] sm:$0xff] %v3828
    %4002 = vst [vmem:[%s3956 + $0x249] sm:$0xff] %v3829
    %4003 = vst [vmem:[%s3956 + $0x259] sm:$0xff] %v3830
    %4004 = vst [vmem:[%s3956 + $0x261] sm:$0xff] %v3831
    %4005 = vst [vmem:[%s3956 + $0x271] sm:$0xff] %v3832
    %4006 = vst [vmem:[%s3956 + $0x279] sm:$0xff] %v3833
    %4007 = vst [vmem:[%s3956 + $0x289] sm:$0xff] %v3834
    %4008 = vst [vmem:[%s3956 + $0x291] sm:$0xff] %v3835
    %4009 = vst [vmem:[%s3956 + $0x2a1] sm:$0xff] %v3836
    %4010 = vst [vmem:[%s3956 + $0x2a9] sm:$0xff] %v3837
    %4011 = vst [vmem:[%s3956 + $0x2b9] sm:$0xff] %v3838
    %4012 = vst [vmem:[%s3956 + $0x2c1] sm:$0xff] %v3839
    %4013 = vst [vmem:[%s3956 + $0x2d1] sm:$0xff] %v3840
    %4014 = vst [vmem:[%s3956 + $0x2d9] sm:$0xff] %v3841
    %4015 = vst [vmem:[%s3956 + $0x2e9] sm:$0xff] %v3842
    %4016 = vst [vmem:[%s3956 + $0x2f1] sm:$0xff] %v3843
    %4017 = vst [vmem:[%s3956 + $0x301] sm:$0xff] %v3844
    %4018 = vst [vmem:[%s3956 + $0x309] sm:$0xff] %v3845
    %4019 = vst [vmem:[%s3956 + $0x319] sm:$0xff] %v3846
    %4020 = vst [vmem:[%s3956 + $0x321] sm:$0xff] %v3847
    %v4021 = vld [vmem:[#allocation3] sm:$0xff]
    %v4022 = vld [vmem:[#allocation3 + $0x8] sm:$0xff]
    %v4023 = vld [vmem:[#allocation3 + $0x10] sm:$0x3]
    %v4024 = vld [vmem:[#allocation3 + $0x18] sm:$0xff]
    %v4025 = vld [vmem:[#allocation3 + $0x20] sm:$0xff]
    %v4026 = vld [vmem:[#allocation3 + $0x28] sm:$0x3]
    %v4027 = vld [vmem:[#allocation3 + $0x30] sm:$0xff]
    %v4028 = vld [vmem:[#allocation3 + $0x38] sm:$0xff]
    %v4029 = vld [vmem:[#allocation3 + $0x40] sm:$0x3]
    %v4030 = vld [vmem:[#allocation3 + $0x48] sm:$0xff]
    %v4031 = vld [vmem:[#allocation3 + $0x50] sm:$0xff]
    %v4032 = vld [vmem:[#allocation3 + $0x58] sm:$0x3]
    %v4033 = vld [vmem:[#allocation3 + $0x60] sm:$0xff]
    %v4034 = vld [vmem:[#allocation3 + $0x68] sm:$0xff]
    %v4035 = vld [vmem:[#allocation3 + $0x70] sm:$0x3]
    %v4036 = vld [vmem:[#allocation3 + $0x78] sm:$0xff]
    %v4037 = vld [vmem:[#allocation3 + $0x80] sm:$0xff]
    %v4038 = vld [vmem:[#allocation3 + $0x88] sm:$0x3]
    %v4039 = vld [vmem:[#allocation3 + $0x90] sm:$0xff]
    %v4040 = vld [vmem:[#allocation3 + $0x98] sm:$0xff]
    %v4041 = vld [vmem:[#allocation3 + $0xa0] sm:$0x3]
    %v4042 = vld [vmem:[#allocation3 + $0xa8] sm:$0xff]
    %v4043 = vld [vmem:[#allocation3 + $0xb0] sm:$0xff]
    %v4044 = vld [vmem:[#allocation3 + $0xb8] sm:$0x3]
    %v4045 = vld [vmem:[#allocation3 + $0xc0] sm:$0xff]
    %v4046 = vld [vmem:[#allocation3 + $0xc8] sm:$0xff]
    %v4047 = vld [vmem:[#allocation3 + $0xd0] sm:$0x3]
    %v4048 = vld [vmem:[#allocation3 + $0xd8] sm:$0xff]
    %v4049 = vld [vmem:[#allocation3 + $0xe0] sm:$0xff]
    %v4050 = vld [vmem:[#allocation3 + $0xe8] sm:$0x3]
    %v4051 = vld [vmem:[#allocation3 + $0xf0] sm:$0xff]
    %v4052 = vld [vmem:[#allocation3 + $0xf8] sm:$0xff]
    %v4053 = vld [vmem:[#allocation3 + $0x100] sm:$0x3]
    %v4054 = vld [vmem:[#allocation3 + $0x108] sm:$0xff]
    %v4055 = vld [vmem:[#allocation3 + $0x110] sm:$0xff]
    %v4056 = vld [vmem:[#allocation3 + $0x118] sm:$0x3]
    %v4057 = vld [vmem:[#allocation3 + $0x120] sm:$0xff]
    %v4058 = vld [vmem:[#allocation3 + $0x128] sm:$0xff]
    %v4059 = vld [vmem:[#allocation3 + $0x130] sm:$0x3]
    %v4060 = vld [vmem:[#allocation3 + $0x138] sm:$0xff]
    %v4061 = vld [vmem:[#allocation3 + $0x140] sm:$0xff]
    %v4062 = vld [vmem:[#allocation3 + $0x148] sm:$0x3]
    %v4063 = vld [vmem:[#allocation3 + $0x150] sm:$0xff]
    %v4064 = vld [vmem:[#allocation3 + $0x158] sm:$0xff]
    %v4065 = vld [vmem:[#allocation3 + $0x160] sm:$0x3]
    %v4066 = vld [vmem:[#allocation3 + $0x168] sm:$0xff]
    %v4067 = vld [vmem:[#allocation3 + $0x170] sm:$0xff]
    %v4068 = vld [vmem:[#allocation3 + $0x178] sm:$0x3]
    %v4069 = vld [vmem:[#allocation3 + $0x180] sm:$0xff]
    %v4070 = vld [vmem:[#allocation3 + $0x188] sm:$0xff]
    %v4071 = vld [vmem:[#allocation3 + $0x190] sm:$0x3]
    %v4072 = vld [vmem:[#allocation3 + $0x198] sm:$0xff]
    %v4073 = vld [vmem:[#allocation3 + $0x1a0] sm:$0xff]
    %v4074 = vld [vmem:[#allocation3 + $0x1a8] sm:$0x3]
    %v4075 = vld [vmem:[#allocation3 + $0x1b0] sm:$0xff]
    %v4076 = vld [vmem:[#allocation3 + $0x1b8] sm:$0xff]
    %v4077 = vld [vmem:[#allocation3 + $0x1c0] sm:$0x3]
    %v4078 = vld [vmem:[#allocation3 + $0x1c8] sm:$0xff]
    %v4079 = vld [vmem:[#allocation3 + $0x1d0] sm:$0xff]
    %v4080 = vld [vmem:[#allocation3 + $0x1d8] sm:$0x3]
    %v4081 = vld [vmem:[#allocation3 + $0x1e0] sm:$0xff]
    %v4082 = vld [vmem:[#allocation3 + $0x1e8] sm:$0xff]
    %v4083 = vld [vmem:[#allocation3 + $0x1f0] sm:$0x3]
    %v4084 = vld [vmem:[#allocation3 + $0x1f8] sm:$0xff]
    %v4085 = vld [vmem:[#allocation3 + $0x200] sm:$0xff]
    %v4086 = vld [vmem:[#allocation3 + $0x208] sm:$0x3]
    %v4087 = vld [vmem:[#allocation3 + $0x210] sm:$0xff]
    %v4088 = vld [vmem:[#allocation3 + $0x218] sm:$0xff]
    %v4089 = vld [vmem:[#allocation3 + $0x220] sm:$0x3]
    %v4090 = vld [vmem:[#allocation3 + $0x228] sm:$0xff]
    %v4091 = vld [vmem:[#allocation3 + $0x230] sm:$0xff]
    %v4092 = vld [vmem:[#allocation3 + $0x238] sm:$0x3]
    %v4093 = vld [vmem:[#allocation3 + $0x240] sm:$0xff]
    %v4094 = vld [vmem:[#allocation3 + $0x248] sm:$0xff]
    %v4095 = vld [vmem:[#allocation3 + $0x250] sm:$0x3]
    %v4096 = vld [vmem:[#allocation3 + $0x258] sm:$0xff]
    %v4097 = vld [vmem:[#allocation3 + $0x260] sm:$0xff]
    %v4098 = vld [vmem:[#allocation3 + $0x268] sm:$0x3]
    %v4099 = vld [vmem:[#allocation3 + $0x270] sm:$0xff]
    %v4100 = vld [vmem:[#allocation3 + $0x278] sm:$0xff]
    %v4101 = vld [vmem:[#allocation3 + $0x280] sm:$0x3]
    %v4102 = vld [vmem:[#allocation3 + $0x288] sm:$0xff]
    %v4103 = vld [vmem:[#allocation3 + $0x290] sm:$0xff]
    %v4104 = vld [vmem:[#allocation3 + $0x298] sm:$0x3]
    %v4105 = vld [vmem:[#allocation3 + $0x2a0] sm:$0xff]
    %v4106 = vld [vmem:[#allocation3 + $0x2a8] sm:$0xff]
    %v4107 = vld [vmem:[#allocation3 + $0x2b0] sm:$0x3]
    %v4108 = vld [vmem:[#allocation3 + $0x2b8] sm:$0xff]
    %v4109 = vld [vmem:[#allocation3 + $0x2c0] sm:$0xff]
    %v4110 = vld [vmem:[#allocation3 + $0x2c8] sm:$0x3]
    %v4111 = vld [vmem:[#allocation3 + $0x2d0] sm:$0xff]
    %v4112 = vld [vmem:[#allocation3 + $0x2d8] sm:$0xff]
    %v4113 = vld [vmem:[#allocation3 + $0x2e0] sm:$0x3]
    %v4114 = vld [vmem:[#allocation3 + $0x2e8] sm:$0xff]
    %v4115 = vld [vmem:[#allocation3 + $0x2f0] sm:$0xff]
    %v4116 = vld [vmem:[#allocation3 + $0x2f8] sm:$0x3]
    %v4117 = vld [vmem:[#allocation3 + $0x300] sm:$0xff]
    %v4118 = vld [vmem:[#allocation3 + $0x308] sm:$0xff]
    %v4119 = vld [vmem:[#allocation3 + $0x310] sm:$0x3]
    %v4120 = vld [vmem:[#allocation3 + $0x318] sm:$0xff]
    %v4121 = vld [vmem:[#allocation3 + $0x320] sm:$0xff]
    %v4122 = vld [vmem:[#allocation3 + $0x328] sm:$0x3]
    %v4123 = vld [vmem:[#allocation3 + $0x330] sm:$0xff]
    %v4124 = vld [vmem:[#allocation3 + $0x338] sm:$0xff]
    %v4125 = vld [vmem:[#allocation3 + $0x340] sm:$0x3]
    %v4126 = vld [vmem:[#allocation3 + $0x348] sm:$0xff]
    %v4127 = vld [vmem:[#allocation3 + $0x350] sm:$0xff]
    %v4128 = vld [vmem:[#allocation3 + $0x358] sm:$0x3]
    %v4129 = vld [vmem:[%s4] sm:$0xf]
    %v4130 = vld [vmem:[%s4 + $0x4] sm:$0xf]
    %v4131 = vld [vmem:[%s4 + $0x8] sm:$0xf]
    %v4132 = vld [vmem:[%s4 + $0xc] sm:$0xf]
    %v4133 = vld [vmem:[%s4 + $0x10] sm:$0xf]
    %v4134 = vld [vmem:[%s4 + $0x14] sm:$0xf]
    %v4135 = vld [vmem:[%s4 + $0x18] sm:$0xf]
    %v4136 = vld [vmem:[%s4 + $0x1c] sm:$0xf]
    %v4137 = vld [vmem:[%s4 + $0x20] sm:$0xf]
    %v4138 = vld [vmem:[%s4 + $0x24] sm:$0xf]
    %v4139 = vld [vmem:[%s4 + $0x28] sm:$0xf]
    %v4140 = vld [vmem:[%s4 + $0x2c] sm:$0xf]
    %v4141 = vld [vmem:[%s4 + $0x30] sm:$0xf]
    %v4142 = vld [vmem:[%s4 + $0x34] sm:$0xf]
    %v4143 = vld [vmem:[%s4 + $0x38] sm:$0xf]
    %v4144 = vld [vmem:[%s4 + $0x3c] sm:$0xf]
    %v4145 = vld [vmem:[%s4 + $0x40] sm:$0xf]
    %v4146 = vld [vmem:[%s4 + $0x44] sm:$0xf]
    %v4147 = vld [vmem:[%s4 + $0x48] sm:$0xf]
    %v4148 = vld [vmem:[%s4 + $0x4c] sm:$0xf]
    %v4149 = vld [vmem:[%s4 + $0x50] sm:$0xf]
    %v4150 = vld [vmem:[%s4 + $0x54] sm:$0xf]
    %v4151 = vld [vmem:[%s4 + $0x58] sm:$0xf]
    %v4152 = vld [vmem:[%s4 + $0x5c] sm:$0xf]
    %v4153 = vld [vmem:[%s4 + $0x60] sm:$0xf]
    %v4154 = vld [vmem:[%s4 + $0x64] sm:$0xf]
    %v4155 = vld [vmem:[%s4 + $0x68] sm:$0xf]
    %v4156 = vld [vmem:[%s4 + $0x6c] sm:$0xf]
    %v4157 = vld [vmem:[%s4 + $0x70] sm:$0xf]
    %v4158 = vld [vmem:[%s4 + $0x74] sm:$0xf]
    %v4159 = vld [vmem:[%s4 + $0x78] sm:$0xf]
    %v4160 = vld [vmem:[%s4 + $0x7c] sm:$0xf]
    %v4161 = vld [vmem:[%s4 + $0x80] sm:$0xf]
    %v4162 = vld [vmem:[%s4 + $0x84] sm:$0xf]
    %v4163 = vld [vmem:[%s4 + $0x88] sm:$0xf]
    %v4164 = vld [vmem:[%s4 + $0x8c] sm:$0xf]
    %v4165 = vld [vmem:[%s4 + $0x90] sm:$0xf]
    %v4166 = vld [vmem:[%s4 + $0x94] sm:$0xf]
    %v4167 = vld [vmem:[%s4 + $0x98] sm:$0xf]
    %v4168 = vld [vmem:[%s4 + $0x9c] sm:$0xf]
    %v4169 = vld [vmem:[%s4 + $0xa0] sm:$0xf]
    %v4170 = vld [vmem:[%s4 + $0xa4] sm:$0xf]
    %v4171 = vld [vmem:[%s4 + $0xa8] sm:$0xf]
    %v4172 = vld [vmem:[%s4 + $0xac] sm:$0xf]
    %v4173 = vld [vmem:[%s4 + $0xb0] sm:$0xf]
    %v4174 = vld [vmem:[%s4 + $0xb4] sm:$0xf]
    %v4175 = vld [vmem:[%s4 + $0xb8] sm:$0xf]
    %v4176 = vld [vmem:[%s4 + $0xbc] sm:$0xf]
    %v4177 = vld [vmem:[%s4 + $0xc0] sm:$0xf]
    %v4178 = vld [vmem:[%s4 + $0xc4] sm:$0xf]
    %v4179 = vld [vmem:[%s4 + $0xc8] sm:$0xf]
    %v4180 = vld [vmem:[%s4 + $0xcc] sm:$0xf]
    %v4181 = vld [vmem:[%s4 + $0xd0] sm:$0xf]
    %v4182 = vld [vmem:[%s4 + $0xd4] sm:$0xf]
    %v4183 = vld [vmem:[%s4 + $0xd8] sm:$0xf]
    %v4184 = vld [vmem:[%s4 + $0xdc] sm:$0xf]
    %v4185 = vld [vmem:[%s4 + $0xe0] sm:$0xf]
    %v4186 = vld [vmem:[%s4 + $0xe4] sm:$0xf]
    %v4187 = vld [vmem:[%s4 + $0xe8] sm:$0xf]
    %v4188 = vld [vmem:[%s4 + $0xec] sm:$0xf]
    %v4189 = vld [vmem:[%s4 + $0xf0] sm:$0xf]
    %v4190 = vld [vmem:[%s4 + $0xf4] sm:$0xf]
    %v4191 = vld [vmem:[%s4 + $0xf8] sm:$0xf]
    %v4192 = vld [vmem:[%s4 + $0xfc] sm:$0xf]
    %v4193 = vld [vmem:[%s4 + $0x100] sm:$0xf]
    %v4194 = vld [vmem:[%s4 + $0x104] sm:$0xf]
    %v4195 = vld [vmem:[%s4 + $0x108] sm:$0xf]
    %v4196 = vld [vmem:[%s4 + $0x10c] sm:$0xf]
    %v4197 = vld [vmem:[%s4 + $0x110] sm:$0xf]
    %v4198 = vld [vmem:[%s4 + $0x114] sm:$0xf]
    %v4199 = vld [vmem:[%s4 + $0x118] sm:$0xf]
    %v4200 = vld [vmem:[%s4 + $0x11c] sm:$0xf]
    %v4201 = vld [vmem:[%s4 + $0x120] sm:$0xf]
    %v4202 = vld [vmem:[%s4 + $0x124] sm:$0xf]
    %v4203 = vld [vmem:[%s4 + $0x128] sm:$0xf]
    %v4204 = vld [vmem:[%s4 + $0x12c] sm:$0xf]
    %v4205 = vld [vmem:[%s4 + $0x130] sm:$0xf]
    %v4206 = vld [vmem:[%s4 + $0x134] sm:$0xf]
    %v4207 = vld [vmem:[%s4 + $0x138] sm:$0xf]
    %v4208 = vld [vmem:[%s4 + $0x13c] sm:$0xf]
    %v4209 = vld [vmem:[%s4 + $0x140] sm:$0xf]
    %v4210 = vld [vmem:[%s4 + $0x144] sm:$0xf]
    %v4211 = vld [vmem:[%s4 + $0x148] sm:$0xf]
    %v4212 = vld [vmem:[%s4 + $0x14c] sm:$0xf]
    %v4213 = vld [vmem:[%s4 + $0x150] sm:$0xf]
    %v4214 = vld [vmem:[%s4 + $0x154] sm:$0xf]
    %v4215 = vld [vmem:[%s4 + $0x158] sm:$0xf]
    %v4216 = vld [vmem:[%s4 + $0x15c] sm:$0xf]
    %v4217 = vld [vmem:[%s4 + $0x160] sm:$0xf]
    %v4218 = vld [vmem:[%s4 + $0x164] sm:$0xf]
    %v4219 = vld [vmem:[%s4 + $0x168] sm:$0xf]
    %v4220 = vld [vmem:[%s4 + $0x16c] sm:$0xf]
    %v4221 = vld [vmem:[%s4 + $0x170] sm:$0xf]
    %v4222 = vld [vmem:[%s4 + $0x174] sm:$0xf]
    %v4223 = vld [vmem:[%s4 + $0x178] sm:$0xf]
    %v4224 = vld [vmem:[%s4 + $0x17c] sm:$0xf]
    %v4225 = vld [vmem:[%s4 + $0x180] sm:$0xf]
    %v4226 = vld [vmem:[%s4 + $0x184] sm:$0xf]
    %v4227 = vld [vmem:[%s4 + $0x188] sm:$0xf]
    %v4228 = vld [vmem:[%s4 + $0x18c] sm:$0xf]
    %v4229 = vld [vmem:[%s4 + $0x190] sm:$0xf]
    %v4230 = vld [vmem:[%s4 + $0x194] sm:$0xf]
    %v4231 = vld [vmem:[%s4 + $0x198] sm:$0xf]
    %v4232 = vld [vmem:[%s4 + $0x19c] sm:$0xf]
    %v4233 = vld [vmem:[%s4 + $0x1a0] sm:$0xf]
    %v4234 = vld [vmem:[%s4 + $0x1a4] sm:$0xf]
    %v4235 = vld [vmem:[%s4 + $0x1a8] sm:$0xf]
    %v4236 = vld [vmem:[%s4 + $0x1ac] sm:$0xf]
    %v4237 = vld [vmem:[%s4 + $0x1b0] sm:$0xf]
    %v4238 = vld [vmem:[%s4 + $0x1b4] sm:$0xf]
    %v4239 = vld [vmem:[%s4 + $0x1b8] sm:$0xf]
    %v4240 = vld [vmem:[%s4 + $0x1bc] sm:$0xf]
    %v4241 = vld [vmem:[%s4 + $0x1c0] sm:$0xf]
    %v4242 = vld [vmem:[%s4 + $0x1c4] sm:$0xf]
    %v4243 = vld [vmem:[%s4 + $0x1c8] sm:$0xf]
    %v4244 = vld [vmem:[%s4 + $0x1cc] sm:$0xf]
    %v4245 = vld [vmem:[%s4 + $0x1d0] sm:$0xf]
    %v4246 = vld [vmem:[%s4 + $0x1d4] sm:$0xf]
    %v4247 = vld [vmem:[%s4 + $0x1d8] sm:$0xf]
    %v4248 = vld [vmem:[%s4 + $0x1dc] sm:$0xf]
    %v4249 = vld [vmem:[%s4 + $0x1e0] sm:$0xf]
    %v4250 = vld [vmem:[%s4 + $0x1e4] sm:$0xf]
    %v4251 = vld [vmem:[%s4 + $0x1e8] sm:$0xf]
    %v4252 = vld [vmem:[%s4 + $0x1ec] sm:$0xf]
    %v4253 = vld [vmem:[%s4 + $0x1f0] sm:$0xf]
    %v4254 = vld [vmem:[%s4 + $0x1f4] sm:$0xf]
    %v4255 = vld [vmem:[%s4 + $0x1f8] sm:$0xf]
    %v4256 = vld [vmem:[%s4 + $0x1fc] sm:$0xf]
    %v4257 = vld [vmem:[%s4 + $0x200] sm:$0xf]
    %v4258 = vld [vmem:[%s4 + $0x204] sm:$0xf]
    %v4259 = vld [vmem:[%s4 + $0x208] sm:$0xf]
    %v4260 = vld [vmem:[%s4 + $0x20c] sm:$0xf]
    %v4261 = vld [vmem:[%s4 + $0x210] sm:$0xf]
    %v4262 = vld [vmem:[%s4 + $0x214] sm:$0xf]
    %v4263 = vld [vmem:[%s4 + $0x218] sm:$0xf]
    %v4264 = vld [vmem:[%s4 + $0x21c] sm:$0xf]
    %v4265 = vld [vmem:[%s4 + $0x220] sm:$0xf]
    %v4266 = vld [vmem:[%s4 + $0x224] sm:$0xf]
    %v4267 = vld [vmem:[%s4 + $0x228] sm:$0xf]
    %v4268 = vld [vmem:[%s4 + $0x22c] sm:$0xf]
    %v4269 = vld [vmem:[%s4 + $0x230] sm:$0xf]
    %v4270 = vld [vmem:[%s4 + $0x234] sm:$0xf]
    %v4271 = vld [vmem:[%s4 + $0x238] sm:$0xf]
    %v4272 = vld [vmem:[%s4 + $0x23c] sm:$0xf]
    %v4273 = vpack.c.bf16 %v4022, %v4021
    %v4274 = vpack.c.bf16 %v4025, %v4024
    %v4275 = vpack.c.bf16 %v4028, %v4027
    %v4276 = vpack.c.bf16 %v4031, %v4030
    %v4277 = vpack.c.bf16 %v4034, %v4033
    %v4278 = vpack.c.bf16 %v4037, %v4036
    %v4279 = vpack.c.bf16 %v4040, %v4039
    %v4280 = vpack.c.bf16 %v4043, %v4042
    %v4281 = vpack.c.bf16 %v4046, %v4045
    %v4282 = vpack.c.bf16 %v4049, %v4048
    %v4283 = vpack.c.bf16 %v4052, %v4051
    %v4284 = vpack.c.bf16 %v4055, %v4054
    %v4285 = vpack.c.bf16 %v4058, %v4057
    %v4286 = vpack.c.bf16 %v4061, %v4060
    %v4287 = vpack.c.bf16 %v4064, %v4063
    %v4288 = vpack.c.bf16 %v4067, %v4066
    %v4289 = vpack.c.bf16 %v4076, %v4075
    %v4290 = vpack.c.bf16 %v4079, %v4078
    %v4291 = vpack.c.bf16 %v4082, %v4081
    %v4292 = vpack.c.bf16 %v4085, %v4084
    %v4293 = vpack.c.bf16 %v4088, %v4087
    %v4294 = vpack.c.bf16 %v4091, %v4090
    %v4295 = vpack.c.bf16 %v4094, %v4093
    %v4296 = vpack.c.bf16 %v4097, %v4096
    %v4297 = vpack.c.bf16 %v4100, %v4099
    %v4298 = vpack.c.bf16 %v4103, %v4102
    %v4299 = vpack.c.bf16 %v4106, %v4105
    %v4300 = vpack.c.bf16 %v4109, %v4108
    %v4301 = vpack.c.bf16 %v4112, %v4111
    %v4302 = vpack.c.bf16 %v4115, %v4114
    %v4303 = vpack.c.bf16 %v4118, %v4117
    %v4304 = vpack.c.bf16 %v4121, %v4120
    %v4401 = vrot.slane %v4021, 1
    %v4402 = vrot.slane %v4022, 1
    %v4403 = vsel %vm512, %v4401, %v4402
    %v4404 = vrot.slane %v4023, 1
    %v4405 = vsel %vm512, %v4402, %v4404
    %v4406 = vrot.slane %v4024, 1
    %v4407 = vrot.slane %v4025, 1
    %v4408 = vsel %vm512, %v4406, %v4407
    %v4409 = vrot.slane %v4026, 1
    %v4410 = vsel %vm512, %v4407, %v4409
    %v4411 = vrot.slane %v4027, 1
    %v4412 = vrot.slane %v4028, 1
    %v4413 = vsel %vm512, %v4411, %v4412
    %v4414 = vrot.slane %v4029, 1
    %v4415 = vsel %vm512, %v4412, %v4414
    %v4416 = vrot.slane %v4030, 1
    %v4417 = vrot.slane %v4031, 1
    %v4418 = vsel %vm512, %v4416, %v4417
    %v4419 = vrot.slane %v4032, 1
    %v4420 = vsel %vm512, %v4417, %v4419
    %v4421 = vrot.slane %v4033, 1
    %v4422 = vrot.slane %v4034, 1
    %v4423 = vsel %vm512, %v4421, %v4422
    %v4424 = vrot.slane %v4035, 1
    %v4425 = vsel %vm512, %v4422, %v4424
    %v4426 = vrot.slane %v4036, 1
    %v4427 = vrot.slane %v4037, 1
    %v4428 = vsel %vm512, %v4426, %v4427
    %v4429 = vrot.slane %v4038, 1
    %v4430 = vsel %vm512, %v4427, %v4429
    %v4431 = vrot.slane %v4039, 1
    %v4432 = vrot.slane %v4040, 1
    %v4433 = vsel %vm512, %v4431, %v4432
    %v4434 = vrot.slane %v4041, 1
    %v4435 = vsel %vm512, %v4432, %v4434
    %v4436 = vrot.slane %v4042, 1
    %v4437 = vrot.slane %v4043, 1
    %v4438 = vsel %vm512, %v4436, %v4437
    %v4439 = vrot.slane %v4044, 1
    %v4440 = vsel %vm512, %v4437, %v4439
    %v4441 = vrot.slane %v4045, 1
    %v4442 = vrot.slane %v4046, 1
    %v4443 = vsel %vm512, %v4441, %v4442
    %v4444 = vrot.slane %v4047, 1
    %v4445 = vsel %vm512, %v4442, %v4444
    %v4446 = vrot.slane %v4048, 1
    %v4447 = vrot.slane %v4049, 1
    %v4448 = vsel %vm512, %v4446, %v4447
    %v4449 = vrot.slane %v4050, 1
    %v4450 = vsel %vm512, %v4447, %v4449
    %v4451 = vrot.slane %v4051, 1
    %v4452 = vrot.slane %v4052, 1
    %v4453 = vsel %vm512, %v4451, %v4452
    %v4454 = vrot.slane %v4053, 1
    %v4455 = vsel %vm512, %v4452, %v4454
    %v4456 = vrot.slane %v4054, 1
    %v4457 = vrot.slane %v4055, 1
    %v4458 = vsel %vm512, %v4456, %v4457
    %v4459 = vrot.slane %v4056, 1
    %v4460 = vsel %vm512, %v4457, %v4459
    %v4461 = vrot.slane %v4057, 1
    %v4462 = vrot.slane %v4058, 1
    %v4463 = vsel %vm512, %v4461, %v4462
    %v4464 = vrot.slane %v4059, 1
    %v4465 = vsel %vm512, %v4462, %v4464
    %v4466 = vrot.slane %v4060, 1
    %v4467 = vrot.slane %v4061, 1
    %v4468 = vsel %vm512, %v4466, %v4467
    %v4469 = vrot.slane %v4062, 1
    %v4470 = vsel %vm512, %v4467, %v4469
    %v4471 = vrot.slane %v4063, 1
    %v4472 = vrot.slane %v4064, 1
    %v4473 = vsel %vm512, %v4471, %v4472
    %v4474 = vrot.slane %v4065, 1
    %v4475 = vsel %vm512, %v4472, %v4474
    %v4476 = vrot.slane %v4066, 1
    %v4477 = vrot.slane %v4067, 1
    %v4478 = vsel %vm512, %v4476, %v4477
    %v4479 = vrot.slane %v4068, 1
    %v4480 = vsel %vm512, %v4477, %v4479
    %v4481 = vrot.slane %v4075, 1
    %v4482 = vrot.slane %v4076, 1
    %v4483 = vsel %vm512, %v4481, %v4482
    %v4484 = vrot.slane %v4077, 1
    %v4485 = vsel %vm512, %v4482, %v4484
    %v4486 = vrot.slane %v4078, 1
    %v4487 = vrot.slane %v4079, 1
    %v4488 = vsel %vm512, %v4486, %v4487
    %v4489 = vrot.slane %v4080, 1
    %v4490 = vsel %vm512, %v4487, %v4489
    %v4491 = vrot.slane %v4081, 1
    %v4492 = vrot.slane %v4082, 1
    %v4493 = vsel %vm512, %v4491, %v4492
    %v4494 = vrot.slane %v4083, 1
    %v4495 = vsel %vm512, %v4492, %v4494
    %v4496 = vrot.slane %v4084, 1
    %v4497 = vrot.slane %v4085, 1
    %v4498 = vsel %vm512, %v4496, %v4497
    %v4499 = vrot.slane %v4086, 1
    %v4500 = vsel %vm512, %v4497, %v4499
    %v4501 = vrot.slane %v4087, 1
    %v4502 = vrot.slane %v4088, 1
    %v4503 = vsel %vm512, %v4501, %v4502
    %v4504 = vrot.slane %v4089, 1
    %v4505 = vsel %vm512, %v4502, %v4504
    %v4506 = vrot.slane %v4090, 1
    %v4507 = vrot.slane %v4091, 1
    %v4508 = vsel %vm512, %v4506, %v4507
    %v4509 = vrot.slane %v4092, 1
    %v4510 = vsel %vm512, %v4507, %v4509
    %v4511 = vrot.slane %v4093, 1
    %v4512 = vrot.slane %v4094, 1
    %v4513 = vsel %vm512, %v4511, %v4512
    %v4514 = vrot.slane %v4095, 1
    %v4515 = vsel %vm512, %v4512, %v4514
    %v4516 = vrot.slane %v4096, 1
    %v4517 = vrot.slane %v4097, 1
    %v4518 = vsel %vm512, %v4516, %v4517
    %v4519 = vrot.slane %v4098, 1
    %v4520 = vsel %vm512, %v4517, %v4519
    %v4521 = vrot.slane %v4099, 1
    %v4522 = vrot.slane %v4100, 1
    %v4523 = vsel %vm512, %v4521, %v4522
    %v4524 = vrot.slane %v4101, 1
    %v4525 = vsel %vm512, %v4522, %v4524
    %v4526 = vrot.slane %v4102, 1
    %v4527 = vrot.slane %v4103, 1
    %v4528 = vsel %vm512, %v4526, %v4527
    %v4529 = vrot.slane %v4104, 1
    %v4530 = vsel %vm512, %v4527, %v4529
    %v4531 = vrot.slane %v4105, 1
    %v4532 = vrot.slane %v4106, 1
    %v4533 = vsel %vm512, %v4531, %v4532
    %v4534 = vrot.slane %v4107, 1
    %v4535 = vsel %vm512, %v4532, %v4534
    %v4536 = vrot.slane %v4108, 1
    %v4537 = vrot.slane %v4109, 1
    %v4538 = vsel %vm512, %v4536, %v4537
    %v4539 = vrot.slane %v4110, 1
    %v4540 = vsel %vm512, %v4537, %v4539
    %v4541 = vrot.slane %v4111, 1
    %v4542 = vrot.slane %v4112, 1
    %v4543 = vsel %vm512, %v4541, %v4542
    %v4544 = vrot.slane %v4113, 1
    %v4545 = vsel %vm512, %v4542, %v4544
    %v4546 = vrot.slane %v4114, 1
    %v4547 = vrot.slane %v4115, 1
    %v4548 = vsel %vm512, %v4546, %v4547
    %v4549 = vrot.slane %v4116, 1
    %v4550 = vsel %vm512, %v4547, %v4549
    %v4551 = vrot.slane %v4117, 1
    %v4552 = vrot.slane %v4118, 1
    %v4553 = vsel %vm512, %v4551, %v4552
    %v4554 = vrot.slane %v4119, 1
    %v4555 = vsel %vm512, %v4552, %v4554
    %v4556 = vrot.slane %v4120, 1
    %v4557 = vrot.slane %v4121, 1
    %v4558 = vsel %vm512, %v4556, %v4557
    %v4559 = vrot.slane %v4122, 1
    %v4560 = vsel %vm512, %v4557, %v4559
    %v4625 = vpack.c.bf16 %v4405, %v4403
    %v4626 = vpack.c.bf16 %v4410, %v4408
    %v4627 = vpack.c.bf16 %v4415, %v4413
    %v4628 = vpack.c.bf16 %v4420, %v4418
    %v4629 = vpack.c.bf16 %v4425, %v4423
    %v4630 = vpack.c.bf16 %v4430, %v4428
    %v4631 = vpack.c.bf16 %v4435, %v4433
    %v4632 = vpack.c.bf16 %v4440, %v4438
    %v4633 = vpack.c.bf16 %v4445, %v4443
    %v4634 = vpack.c.bf16 %v4450, %v4448
    %v4635 = vpack.c.bf16 %v4455, %v4453
    %v4636 = vpack.c.bf16 %v4460, %v4458
    %v4637 = vpack.c.bf16 %v4465, %v4463
    %v4638 = vpack.c.bf16 %v4470, %v4468
    %v4639 = vpack.c.bf16 %v4475, %v4473
    %v4640 = vpack.c.bf16 %v4480, %v4478
    %v4641 = vpack.c.bf16 %v4485, %v4483
    %v4642 = vpack.c.bf16 %v4490, %v4488
    %v4643 = vpack.c.bf16 %v4495, %v4493
    %v4644 = vpack.c.bf16 %v4500, %v4498
    %v4645 = vpack.c.bf16 %v4505, %v4503
    %v4646 = vpack.c.bf16 %v4510, %v4508
    %v4647 = vpack.c.bf16 %v4515, %v4513
    %v4648 = vpack.c.bf16 %v4520, %v4518
    %v4649 = vpack.c.bf16 %v4525, %v4523
    %v4650 = vpack.c.bf16 %v4530, %v4528
    %v4651 = vpack.c.bf16 %v4535, %v4533
    %v4652 = vpack.c.bf16 %v4540, %v4538
    %v4653 = vpack.c.bf16 %v4545, %v4543
    %v4654 = vpack.c.bf16 %v4550, %v4548
    %v4655 = vpack.c.bf16 %v4555, %v4553
    %v4656 = vpack.c.bf16 %v4560, %v4558
    %v4673 = vunpack.c.l.b16 %v4145
    %v4674 = vunpack.c.l.b16 %v4146
    %v4675 = vunpack.c.l.b16 %v4147
    %v4676 = vunpack.c.l.b16 %v4148
    %v4677 = vunpack.c.l.b16 %v4149
    %v4678 = vunpack.c.l.b16 %v4150
    %v4679 = vunpack.c.l.b16 %v4151
    %v4680 = vunpack.c.l.b16 %v4152
    %v4681 = vunpack.c.l.b16 %v4153
    %v4682 = vunpack.c.l.b16 %v4154
    %v4683 = vunpack.c.l.b16 %v4155
    %v4684 = vunpack.c.l.b16 %v4156
    %v4685 = vunpack.c.l.b16 %v4157
    %v4686 = vunpack.c.l.b16 %v4158
    %v4687 = vunpack.c.l.b16 %v4159
    %v4688 = vunpack.c.l.b16 %v4160
    %v4689 = vpack.c.b16 %v4674, %v4673
    %v4690 = vpack.c.b16 %v4676, %v4675
    %v4691 = vpack.c.b16 %v4678, %v4677
    %v4692 = vpack.c.b16 %v4680, %v4679
    %v4693 = vpack.c.b16 %v4682, %v4681
    %v4694 = vpack.c.b16 %v4684, %v4683
    %v4695 = vpack.c.b16 %v4686, %v4685
    %v4696 = vpack.c.b16 %v4688, %v4687
    %4705 = vmatpush.bf16.msra.mxu0 %v4696
    %4706 = vmatpush.bf16.msra.mxu0 %v4695
    %4707 = vmatpush.bf16.msra.mxu0 %v4694
    %4708 = vmatpush.bf16.msra.mxu0 %v4693
    %4709 = vmatpush.bf16.msra.mxu0 %v4692
    %4710 = vmatpush.bf16.msra.mxu0 %v4691
    %4711 = vmatpush.bf16.msra.mxu0 %v4690
    %4712 = vmatpush.bf16.msra.mxu0 %v4689
    %4713 = vmatmul.bf16.gmra.mxu0 %v4625
    %v4714 = vpop.f32.mrf.mxu0
    %v4715 = vadd.f32 0.0, %v4714
    %v4716 = vpop.f32.mrf.mxu0
    %v4717 = vadd.f32 0.0, %v4716
    %4718 = vmatmul.bf16.gmra.mxu0 %v4626
    %v4719 = vpop.f32.mrf.mxu0
    %v4720 = vadd.f32 0.0, %v4719
    %v4721 = vpop.f32.mrf.mxu0
    %v4722 = vadd.f32 0.0, %v4721
    %4723 = vmatmul.bf16.gmra.mxu0 %v4627
    %v4724 = vpop.f32.mrf.mxu0
    %v4725 = vadd.f32 0.0, %v4724
    %v4726 = vpop.f32.mrf.mxu0
    %v4727 = vadd.f32 0.0, %v4726
    %4728 = vmatmul.bf16.gmra.mxu0 %v4628
    %v4729 = vpop.f32.mrf.mxu0
    %v4730 = vadd.f32 0.0, %v4729
    %v4731 = vpop.f32.mrf.mxu0
    %v4732 = vadd.f32 0.0, %v4731
    %4733 = vmatmul.bf16.gmra.mxu0 %v4629
    %v4734 = vpop.f32.mrf.mxu0
    %v4735 = vadd.f32 0.0, %v4734
    %v4736 = vpop.f32.mrf.mxu0
    %v4737 = vadd.f32 0.0, %v4736
    %4738 = vmatmul.bf16.gmra.mxu0 %v4630
    %v4739 = vpop.f32.mrf.mxu0
    %v4740 = vadd.f32 0.0, %v4739
    %v4741 = vpop.f32.mrf.mxu0
    %v4742 = vadd.f32 0.0, %v4741
    %4743 = vmatmul.bf16.gmra.mxu0 %v4631
    %v4744 = vpop.f32.mrf.mxu0
    %v4745 = vadd.f32 0.0, %v4744
    %v4746 = vpop.f32.mrf.mxu0
    %v4747 = vadd.f32 0.0, %v4746
    %4748 = vmatmul.bf16.gmra.mxu0 %v4632
    %v4749 = vpop.f32.mrf.mxu0
    %v4750 = vadd.f32 0.0, %v4749
    %v4751 = vpop.f32.mrf.mxu0
    %v4752 = vadd.f32 0.0, %v4751
    %4753 = vmatmul.bf16.gmra.mxu0 %v4633
    %v4754 = vpop.f32.mrf.mxu0
    %v4755 = vadd.f32 0.0, %v4754
    %v4756 = vpop.f32.mrf.mxu0
    %v4757 = vadd.f32 0.0, %v4756
    %4758 = vmatmul.bf16.gmra.mxu0 %v4634
    %v4759 = vpop.f32.mrf.mxu0
    %v4760 = vadd.f32 0.0, %v4759
    %v4761 = vpop.f32.mrf.mxu0
    %v4762 = vadd.f32 0.0, %v4761
    %4763 = vmatmul.bf16.gmra.mxu0 %v4635
    %v4764 = vpop.f32.mrf.mxu0
    %v4765 = vadd.f32 0.0, %v4764
    %v4766 = vpop.f32.mrf.mxu0
    %v4767 = vadd.f32 0.0, %v4766
    %4768 = vmatmul.bf16.gmra.mxu0 %v4636
    %v4769 = vpop.f32.mrf.mxu0
    %v4770 = vadd.f32 0.0, %v4769
    %v4771 = vpop.f32.mrf.mxu0
    %v4772 = vadd.f32 0.0, %v4771
    %4773 = vmatmul.bf16.gmra.mxu0 %v4637
    %v4774 = vpop.f32.mrf.mxu0
    %v4775 = vadd.f32 0.0, %v4774
    %v4776 = vpop.f32.mrf.mxu0
    %v4777 = vadd.f32 0.0, %v4776
    %4778 = vmatmul.bf16.gmra.mxu0 %v4638
    %v4779 = vpop.f32.mrf.mxu0
    %v4780 = vadd.f32 0.0, %v4779
    %v4781 = vpop.f32.mrf.mxu0
    %v4782 = vadd.f32 0.0, %v4781
    %4783 = vmatmul.bf16.gmra.mxu0 %v4639
    %v4784 = vpop.f32.mrf.mxu0
    %v4785 = vadd.f32 0.0, %v4784
    %v4786 = vpop.f32.mrf.mxu0
    %v4787 = vadd.f32 0.0, %v4786
    %4788 = vmatmul.bf16.gmra.mxu0 %v4640
    %v4789 = vpop.f32.mrf.mxu0
    %v4790 = vadd.f32 0.0, %v4789
    %v4791 = vpop.f32.mrf.mxu0
    %v4792 = vadd.f32 0.0, %v4791
    %4793 = vmatmul.bf16.gmra.mxu0 %v4641
    %v4794 = vpop.f32.mrf.mxu0
    %v4795 = vadd.f32 0.0, %v4794
    %v4796 = vpop.f32.mrf.mxu0
    %v4797 = vadd.f32 0.0, %v4796
    %4798 = vmatmul.bf16.gmra.mxu0 %v4642
    %v4799 = vpop.f32.mrf.mxu0
    %v4800 = vadd.f32 0.0, %v4799
    %v4801 = vpop.f32.mrf.mxu0
    %v4802 = vadd.f32 0.0, %v4801
    %4803 = vmatmul.bf16.gmra.mxu0 %v4643
    %v4804 = vpop.f32.mrf.mxu0
    %v4805 = vadd.f32 0.0, %v4804
    %v4806 = vpop.f32.mrf.mxu0
    %v4807 = vadd.f32 0.0, %v4806
    %4808 = vmatmul.bf16.gmra.mxu0 %v4644
    %v4809 = vpop.f32.mrf.mxu0
    %v4810 = vadd.f32 0.0, %v4809
    %v4811 = vpop.f32.mrf.mxu0
    %v4812 = vadd.f32 0.0, %v4811
    %4813 = vmatmul.bf16.gmra.mxu0 %v4645
    %v4814 = vpop.f32.mrf.mxu0
    %v4815 = vadd.f32 0.0, %v4814
    %v4816 = vpop.f32.mrf.mxu0
    %v4817 = vadd.f32 0.0, %v4816
    %4818 = vmatmul.bf16.gmra.mxu0 %v4646
    %v4819 = vpop.f32.mrf.mxu0
    %v4820 = vadd.f32 0.0, %v4819
    %v4821 = vpop.f32.mrf.mxu0
    %v4822 = vadd.f32 0.0, %v4821
    %4823 = vmatmul.bf16.gmra.mxu0 %v4647
    %v4824 = vpop.f32.mrf.mxu0
    %v4825 = vadd.f32 0.0, %v4824
    %v4826 = vpop.f32.mrf.mxu0
    %v4827 = vadd.f32 0.0, %v4826
    %4828 = vmatmul.bf16.gmra.mxu0 %v4648
    %v4829 = vpop.f32.mrf.mxu0
    %v4830 = vadd.f32 0.0, %v4829
    %v4831 = vpop.f32.mrf.mxu0
    %v4832 = vadd.f32 0.0, %v4831
    %4833 = vmatmul.bf16.gmra.mxu0 %v4649
    %v4834 = vpop.f32.mrf.mxu0
    %v4835 = vadd.f32 0.0, %v4834
    %v4836 = vpop.f32.mrf.mxu0
    %v4837 = vadd.f32 0.0, %v4836
    %4838 = vmatmul.bf16.gmra.mxu0 %v4650
    %v4839 = vpop.f32.mrf.mxu0
    %v4840 = vadd.f32 0.0, %v4839
    %v4841 = vpop.f32.mrf.mxu0
    %v4842 = vadd.f32 0.0, %v4841
    %4843 = vmatmul.bf16.gmra.mxu0 %v4651
    %v4844 = vpop.f32.mrf.mxu0
    %v4845 = vadd.f32 0.0, %v4844
    %v4846 = vpop.f32.mrf.mxu0
    %v4847 = vadd.f32 0.0, %v4846
    %4848 = vmatmul.bf16.gmra.mxu0 %v4652
    %v4849 = vpop.f32.mrf.mxu0
    %v4850 = vadd.f32 0.0, %v4849
    %v4851 = vpop.f32.mrf.mxu0
    %v4852 = vadd.f32 0.0, %v4851
    %4853 = vmatmul.bf16.gmra.mxu0 %v4653
    %v4854 = vpop.f32.mrf.mxu0
    %v4855 = vadd.f32 0.0, %v4854
    %v4856 = vpop.f32.mrf.mxu0
    %v4857 = vadd.f32 0.0, %v4856
    %4858 = vmatmul.bf16.gmra.mxu0 %v4654
    %v4859 = vpop.f32.mrf.mxu0
    %v4860 = vadd.f32 0.0, %v4859
    %v4861 = vpop.f32.mrf.mxu0
    %v4862 = vadd.f32 0.0, %v4861
    %4863 = vmatmul.bf16.gmra.mxu0 %v4655
    %v4864 = vpop.f32.mrf.mxu0
    %v4865 = vadd.f32 0.0, %v4864
    %v4866 = vpop.f32.mrf.mxu0
    %v4867 = vadd.f32 0.0, %v4866
    %4868 = vmatmul.bf16.gmra.mxu0 %v4656
    %v4869 = vpop.f32.mrf.mxu0
    %v4870 = vadd.f32 0.0, %v4869
    %v4871 = vpop.f32.mrf.mxu0
    %v4872 = vadd.f32 0.0, %v4871
    %4873 = vdwg.mxu0
    %v4890 = vunpack.c.l.b16 %v4129
    %v4891 = vunpack.c.l.b16 %v4130
    %v4892 = vunpack.c.l.b16 %v4131
    %v4893 = vunpack.c.l.b16 %v4132
    %v4894 = vunpack.c.l.b16 %v4133
    %v4895 = vunpack.c.l.b16 %v4134
    %v4896 = vunpack.c.l.b16 %v4135
    %v4897 = vunpack.c.l.b16 %v4136
    %v4898 = vunpack.c.l.b16 %v4137
    %v4899 = vunpack.c.l.b16 %v4138
    %v4900 = vunpack.c.l.b16 %v4139
    %v4901 = vunpack.c.l.b16 %v4140
    %v4902 = vunpack.c.l.b16 %v4141
    %v4903 = vunpack.c.l.b16 %v4142
    %v4904 = vunpack.c.l.b16 %v4143
    %v4905 = vunpack.c.l.b16 %v4144
    %v4906 = vpack.c.b16 %v4891, %v4890
    %v4907 = vpack.c.b16 %v4893, %v4892
    %v4908 = vpack.c.b16 %v4895, %v4894
    %v4909 = vpack.c.b16 %v4897, %v4896
    %v4910 = vpack.c.b16 %v4899, %v4898
    %v4911 = vpack.c.b16 %v4901, %v4900
    %v4912 = vpack.c.b16 %v4903, %v4902
    %v4913 = vpack.c.b16 %v4905, %v4904
    %4922 = vmatpush.bf16.msra.mxu0 %v4913
    %4923 = vmatpush.bf16.msra.mxu0 %v4912
    %4924 = vmatpush.bf16.msra.mxu0 %v4911
    %4925 = vmatpush.bf16.msra.mxu0 %v4910
    %4926 = vmatpush.bf16.msra.mxu0 %v4909
    %4927 = vmatpush.bf16.msra.mxu0 %v4908
    %4928 = vmatpush.bf16.msra.mxu0 %v4907
    %4929 = vmatpush.bf16.msra.mxu0 %v4906
    %4930 = vmatmul.bf16.gmra.mxu0 %v4273
    %v4931 = vpop.f32.mrf.mxu0
    %v4932 = vadd.f32 %v4715, %v4931
    %v4933 = vpop.f32.mrf.mxu0
    %v4934 = vadd.f32 %v4717, %v4933
    %4935 = vmatmul.bf16.gmra.mxu0 %v4274
    %v4936 = vpop.f32.mrf.mxu0
    %v4937 = vadd.f32 %v4720, %v4936
    %v4938 = vpop.f32.mrf.mxu0
    %v4939 = vadd.f32 %v4722, %v4938
    %4940 = vmatmul.bf16.gmra.mxu0 %v4275
    %v4941 = vpop.f32.mrf.mxu0
    %v4942 = vadd.f32 %v4725, %v4941
    %v4943 = vpop.f32.mrf.mxu0
    %v4944 = vadd.f32 %v4727, %v4943
    %4945 = vmatmul.bf16.gmra.mxu0 %v4276
    %v4946 = vpop.f32.mrf.mxu0
    %v4947 = vadd.f32 %v4730, %v4946
    %v4948 = vpop.f32.mrf.mxu0
    %v4949 = vadd.f32 %v4732, %v4948
    %4950 = vmatmul.bf16.gmra.mxu0 %v4277
    %v4951 = vpop.f32.mrf.mxu0
    %v4952 = vadd.f32 %v4735, %v4951
    %v4953 = vpop.f32.mrf.mxu0
    %v4954 = vadd.f32 %v4737, %v4953
    %4955 = vmatmul.bf16.gmra.mxu0 %v4278
    %v4956 = vpop.f32.mrf.mxu0
    %v4957 = vadd.f32 %v4740, %v4956
    %v4958 = vpop.f32.mrf.mxu0
    %v4959 = vadd.f32 %v4742, %v4958
    %4960 = vmatmul.bf16.gmra.mxu0 %v4279
    %v4961 = vpop.f32.mrf.mxu0
    %v4962 = vadd.f32 %v4745, %v4961
    %v4963 = vpop.f32.mrf.mxu0
    %v4964 = vadd.f32 %v4747, %v4963
    %4965 = vmatmul.bf16.gmra.mxu0 %v4280
    %v4966 = vpop.f32.mrf.mxu0
    %v4967 = vadd.f32 %v4750, %v4966
    %v4968 = vpop.f32.mrf.mxu0
    %v4969 = vadd.f32 %v4752, %v4968
    %4970 = vmatmul.bf16.gmra.mxu0 %v4281
    %v4971 = vpop.f32.mrf.mxu0
    %v4972 = vadd.f32 %v4755, %v4971
    %v4973 = vpop.f32.mrf.mxu0
    %v4974 = vadd.f32 %v4757, %v4973
    %4975 = vmatmul.bf16.gmra.mxu0 %v4282
    %v4976 = vpop.f32.mrf.mxu0
    %v4977 = vadd.f32 %v4760, %v4976
    %v4978 = vpop.f32.mrf.mxu0
    %v4979 = vadd.f32 %v4762, %v4978
    %4980 = vmatmul.bf16.gmra.mxu0 %v4283
    %v4981 = vpop.f32.mrf.mxu0
    %v4982 = vadd.f32 %v4765, %v4981
    %v4983 = vpop.f32.mrf.mxu0
    %v4984 = vadd.f32 %v4767, %v4983
    %4985 = vmatmul.bf16.gmra.mxu0 %v4284
    %v4986 = vpop.f32.mrf.mxu0
    %v4987 = vadd.f32 %v4770, %v4986
    %v4988 = vpop.f32.mrf.mxu0
    %v4989 = vadd.f32 %v4772, %v4988
    %4990 = vmatmul.bf16.gmra.mxu0 %v4285
    %v4991 = vpop.f32.mrf.mxu0
    %v4992 = vadd.f32 %v4775, %v4991
    %v4993 = vpop.f32.mrf.mxu0
    %v4994 = vadd.f32 %v4777, %v4993
    %4995 = vmatmul.bf16.gmra.mxu0 %v4286
    %v4996 = vpop.f32.mrf.mxu0
    %v4997 = vadd.f32 %v4780, %v4996
    %v4998 = vpop.f32.mrf.mxu0
    %v4999 = vadd.f32 %v4782, %v4998
    %5000 = vmatmul.bf16.gmra.mxu0 %v4287
    %v5001 = vpop.f32.mrf.mxu0
    %v5002 = vadd.f32 %v4785, %v5001
    %v5003 = vpop.f32.mrf.mxu0
    %v5004 = vadd.f32 %v4787, %v5003
    %5005 = vmatmul.bf16.gmra.mxu0 %v4288
    %v5006 = vpop.f32.mrf.mxu0
    %v5007 = vadd.f32 %v4790, %v5006
    %v5008 = vpop.f32.mrf.mxu0
    %v5009 = vadd.f32 %v4792, %v5008
    %5010 = vmatmul.bf16.gmra.mxu0 %v4289
    %v5011 = vpop.f32.mrf.mxu0
    %v5012 = vadd.f32 %v4795, %v5011
    %v5013 = vpop.f32.mrf.mxu0
    %v5014 = vadd.f32 %v4797, %v5013
    %5015 = vmatmul.bf16.gmra.mxu0 %v4290
    %v5016 = vpop.f32.mrf.mxu0
    %v5017 = vadd.f32 %v4800, %v5016
    %v5018 = vpop.f32.mrf.mxu0
    %v5019 = vadd.f32 %v4802, %v5018
    %5020 = vmatmul.bf16.gmra.mxu0 %v4291
    %v5021 = vpop.f32.mrf.mxu0
    %v5022 = vadd.f32 %v4805, %v5021
    %v5023 = vpop.f32.mrf.mxu0
    %v5024 = vadd.f32 %v4807, %v5023
    %5025 = vmatmul.bf16.gmra.mxu0 %v4292
    %v5026 = vpop.f32.mrf.mxu0
    %v5027 = vadd.f32 %v4810, %v5026
    %v5028 = vpop.f32.mrf.mxu0
    %v5029 = vadd.f32 %v4812, %v5028
    %5030 = vmatmul.bf16.gmra.mxu0 %v4293
    %v5031 = vpop.f32.mrf.mxu0
    %v5032 = vadd.f32 %v4815, %v5031
    %v5033 = vpop.f32.mrf.mxu0
    %v5034 = vadd.f32 %v4817, %v5033
    %5035 = vmatmul.bf16.gmra.mxu0 %v4294
    %v5036 = vpop.f32.mrf.mxu0
    %v5037 = vadd.f32 %v4820, %v5036
    %v5038 = vpop.f32.mrf.mxu0
    %v5039 = vadd.f32 %v4822, %v5038
    %5040 = vmatmul.bf16.gmra.mxu0 %v4295
    %v5041 = vpop.f32.mrf.mxu0
    %v5042 = vadd.f32 %v4825, %v5041
    %v5043 = vpop.f32.mrf.mxu0
    %v5044 = vadd.f32 %v4827, %v5043
    %5045 = vmatmul.bf16.gmra.mxu0 %v4296
    %v5046 = vpop.f32.mrf.mxu0
    %v5047 = vadd.f32 %v4830, %v5046
    %v5048 = vpop.f32.mrf.mxu0
    %v5049 = vadd.f32 %v4832, %v5048
    %5050 = vmatmul.bf16.gmra.mxu0 %v4297
    %v5051 = vpop.f32.mrf.mxu0
    %v5052 = vadd.f32 %v4835, %v5051
    %v5053 = vpop.f32.mrf.mxu0
    %v5054 = vadd.f32 %v4837, %v5053
    %5055 = vmatmul.bf16.gmra.mxu0 %v4298
    %v5056 = vpop.f32.mrf.mxu0
    %v5057 = vadd.f32 %v4840, %v5056
    %v5058 = vpop.f32.mrf.mxu0
    %v5059 = vadd.f32 %v4842, %v5058
    %5060 = vmatmul.bf16.gmra.mxu0 %v4299
    %v5061 = vpop.f32.mrf.mxu0
    %v5062 = vadd.f32 %v4845, %v5061
    %v5063 = vpop.f32.mrf.mxu0
    %v5064 = vadd.f32 %v4847, %v5063
    %5065 = vmatmul.bf16.gmra.mxu0 %v4300
    %v5066 = vpop.f32.mrf.mxu0
    %v5067 = vadd.f32 %v4850, %v5066
    %v5068 = vpop.f32.mrf.mxu0
    %v5069 = vadd.f32 %v4852, %v5068
    %5070 = vmatmul.bf16.gmra.mxu0 %v4301
    %v5071 = vpop.f32.mrf.mxu0
    %v5072 = vadd.f32 %v4855, %v5071
    %v5073 = vpop.f32.mrf.mxu0
    %v5074 = vadd.f32 %v4857, %v5073
    %5075 = vmatmul.bf16.gmra.mxu0 %v4302
    %v5076 = vpop.f32.mrf.mxu0
    %v5077 = vadd.f32 %v4860, %v5076
    %v5078 = vpop.f32.mrf.mxu0
    %v5079 = vadd.f32 %v4862, %v5078
    %5080 = vmatmul.bf16.gmra.mxu0 %v4303
    %v5081 = vpop.f32.mrf.mxu0
    %v5082 = vadd.f32 %v4865, %v5081
    %v5083 = vpop.f32.mrf.mxu0
    %v5084 = vadd.f32 %v4867, %v5083
    %5085 = vmatmul.bf16.gmra.mxu0 %v4304
    %v5086 = vpop.f32.mrf.mxu0
    %v5087 = vadd.f32 %v4870, %v5086
    %v5088 = vpop.f32.mrf.mxu0
    %v5089 = vadd.f32 %v4872, %v5088
    %5090 = vdwg.mxu0
    %v5091 = vrot.slane %v4021, 2
    %v5092 = vrot.slane %v4022, 2
    %v5093 = vsel %vm1306, %v5091, %v5092
    %v5094 = vrot.slane %v4023, 2
    %v5095 = vsel %vm1306, %v5092, %v5094
    %v5096 = vrot.slane %v4024, 2
    %v5097 = vrot.slane %v4025, 2
    %v5098 = vsel %vm1306, %v5096, %v5097
    %v5099 = vrot.slane %v4026, 2
    %v5100 = vsel %vm1306, %v5097, %v5099
    %v5101 = vrot.slane %v4027, 2
    %v5102 = vrot.slane %v4028, 2
    %v5103 = vsel %vm1306, %v5101, %v5102
    %v5104 = vrot.slane %v4029, 2
    %v5105 = vsel %vm1306, %v5102, %v5104
    %v5106 = vrot.slane %v4030, 2
    %v5107 = vrot.slane %v4031, 2
    %v5108 = vsel %vm1306, %v5106, %v5107
    %v5109 = vrot.slane %v4032, 2
    %v5110 = vsel %vm1306, %v5107, %v5109
    %v5111 = vrot.slane %v4033, 2
    %v5112 = vrot.slane %v4034, 2
    %v5113 = vsel %vm1306, %v5111, %v5112
    %v5114 = vrot.slane %v4035, 2
    %v5115 = vsel %vm1306, %v5112, %v5114
    %v5116 = vrot.slane %v4036, 2
    %v5117 = vrot.slane %v4037, 2
    %v5118 = vsel %vm1306, %v5116, %v5117
    %v5119 = vrot.slane %v4038, 2
    %v5120 = vsel %vm1306, %v5117, %v5119
    %v5121 = vrot.slane %v4039, 2
    %v5122 = vrot.slane %v4040, 2
    %v5123 = vsel %vm1306, %v5121, %v5122
    %v5124 = vrot.slane %v4041, 2
    %v5125 = vsel %vm1306, %v5122, %v5124
    %v5126 = vrot.slane %v4042, 2
    %v5127 = vrot.slane %v4043, 2
    %v5128 = vsel %vm1306, %v5126, %v5127
    %v5129 = vrot.slane %v4044, 2
    %v5130 = vsel %vm1306, %v5127, %v5129
    %v5131 = vrot.slane %v4045, 2
    %v5132 = vrot.slane %v4046, 2
    %v5133 = vsel %vm1306, %v5131, %v5132
    %v5134 = vrot.slane %v4047, 2
    %v5135 = vsel %vm1306, %v5132, %v5134
    %v5136 = vrot.slane %v4048, 2
    %v5137 = vrot.slane %v4049, 2
    %v5138 = vsel %vm1306, %v5136, %v5137
    %v5139 = vrot.slane %v4050, 2
    %v5140 = vsel %vm1306, %v5137, %v5139
    %v5141 = vrot.slane %v4051, 2
    %v5142 = vrot.slane %v4052, 2
    %v5143 = vsel %vm1306, %v5141, %v5142
    %v5144 = vrot.slane %v4053, 2
    %v5145 = vsel %vm1306, %v5142, %v5144
    %v5146 = vrot.slane %v4054, 2
    %v5147 = vrot.slane %v4055, 2
    %v5148 = vsel %vm1306, %v5146, %v5147
    %v5149 = vrot.slane %v4056, 2
    %v5150 = vsel %vm1306, %v5147, %v5149
    %v5151 = vrot.slane %v4057, 2
    %v5152 = vrot.slane %v4058, 2
    %v5153 = vsel %vm1306, %v5151, %v5152
    %v5154 = vrot.slane %v4059, 2
    %v5155 = vsel %vm1306, %v5152, %v5154
    %v5156 = vrot.slane %v4060, 2
    %v5157 = vrot.slane %v4061, 2
    %v5158 = vsel %vm1306, %v5156, %v5157
    %v5159 = vrot.slane %v4062, 2
    %v5160 = vsel %vm1306, %v5157, %v5159
    %v5161 = vrot.slane %v4063, 2
    %v5162 = vrot.slane %v4064, 2
    %v5163 = vsel %vm1306, %v5161, %v5162
    %v5164 = vrot.slane %v4065, 2
    %v5165 = vsel %vm1306, %v5162, %v5164
    %v5166 = vrot.slane %v4066, 2
    %v5167 = vrot.slane %v4067, 2
    %v5168 = vsel %vm1306, %v5166, %v5167
    %v5169 = vrot.slane %v4068, 2
    %v5170 = vsel %vm1306, %v5167, %v5169
    %v5171 = vrot.slane %v4075, 2
    %v5172 = vrot.slane %v4076, 2
    %v5173 = vsel %vm1306, %v5171, %v5172
    %v5174 = vrot.slane %v4077, 2
    %v5175 = vsel %vm1306, %v5172, %v5174
    %v5176 = vrot.slane %v4078, 2
    %v5177 = vrot.slane %v4079, 2
    %v5178 = vsel %vm1306, %v5176, %v5177
    %v5179 = vrot.slane %v4080, 2
    %v5180 = vsel %vm1306, %v5177, %v5179
    %v5181 = vrot.slane %v4081, 2
    %v5182 = vrot.slane %v4082, 2
    %v5183 = vsel %vm1306, %v5181, %v5182
    %v5184 = vrot.slane %v4083, 2
    %v5185 = vsel %vm1306, %v5182, %v5184
    %v5186 = vrot.slane %v4084, 2
    %v5187 = vrot.slane %v4085, 2
    %v5188 = vsel %vm1306, %v5186, %v5187
    %v5189 = vrot.slane %v4086, 2
    %v5190 = vsel %vm1306, %v5187, %v5189
    %v5191 = vrot.slane %v4087, 2
    %v5192 = vrot.slane %v4088, 2
    %v5193 = vsel %vm1306, %v5191, %v5192
    %v5194 = vrot.slane %v4089, 2
    %v5195 = vsel %vm1306, %v5192, %v5194
    %v5196 = vrot.slane %v4090, 2
    %v5197 = vrot.slane %v4091, 2
    %v5198 = vsel %vm1306, %v5196, %v5197
    %v5199 = vrot.slane %v4092, 2
    %v5200 = vsel %vm1306, %v5197, %v5199
    %v5201 = vrot.slane %v4093, 2
    %v5202 = vrot.slane %v4094, 2
    %v5203 = vsel %vm1306, %v5201, %v5202
    %v5204 = vrot.slane %v4095, 2
    %v5205 = vsel %vm1306, %v5202, %v5204
    %v5206 = vrot.slane %v4096, 2
    %v5207 = vrot.slane %v4097, 2
    %v5208 = vsel %vm1306, %v5206, %v5207
    %v5209 = vrot.slane %v4098, 2
    %v5210 = vsel %vm1306, %v5207, %v5209
    %v5211 = vrot.slane %v4099, 2
    %v5212 = vrot.slane %v4100, 2
    %v5213 = vsel %vm1306, %v5211, %v5212
    %v5214 = vrot.slane %v4101, 2
    %v5215 = vsel %vm1306, %v5212, %v5214
    %v5216 = vrot.slane %v4102, 2
    %v5217 = vrot.slane %v4103, 2
    %v5218 = vsel %vm1306, %v5216, %v5217
    %v5219 = vrot.slane %v4104, 2
    %v5220 = vsel %vm1306, %v5217, %v5219
    %v5221 = vrot.slane %v4105, 2
    %v5222 = vrot.slane %v4106, 2
    %v5223 = vsel %vm1306, %v5221, %v5222
    %v5224 = vrot.slane %v4107, 2
    %v5225 = vsel %vm1306, %v5222, %v5224
    %v5226 = vrot.slane %v4108, 2
    %v5227 = vrot.slane %v4109, 2
    %v5228 = vsel %vm1306, %v5226, %v5227
    %v5229 = vrot.slane %v4110, 2
    %v5230 = vsel %vm1306, %v5227, %v5229
    %v5231 = vrot.slane %v4111, 2
    %v5232 = vrot.slane %v4112, 2
    %v5233 = vsel %vm1306, %v5231, %v5232
    %v5234 = vrot.slane %v4113, 2
    %v5235 = vsel %vm1306, %v5232, %v5234
    %v5236 = vrot.slane %v4114, 2
    %v5237 = vrot.slane %v4115, 2
    %v5238 = vsel %vm1306, %v5236, %v5237
    %v5239 = vrot.slane %v4116, 2
    %v5240 = vsel %vm1306, %v5237, %v5239
    %v5241 = vrot.slane %v4117, 2
    %v5242 = vrot.slane %v4118, 2
    %v5243 = vsel %vm1306, %v5241, %v5242
    %v5244 = vrot.slane %v4119, 2
    %v5245 = vsel %vm1306, %v5242, %v5244
    %v5246 = vrot.slane %v4120, 2
    %v5247 = vrot.slane %v4121, 2
    %v5248 = vsel %vm1306, %v5246, %v5247
    %v5249 = vrot.slane %v4122, 2
    %v5250 = vsel %vm1306, %v5247, %v5249
    %v5315 = vpack.c.bf16 %v5095, %v5093
    %v5316 = vpack.c.bf16 %v5100, %v5098
    %v5317 = vpack.c.bf16 %v5105, %v5103
    %v5318 = vpack.c.bf16 %v5110, %v5108
    %v5319 = vpack.c.bf16 %v5115, %v5113
    %v5320 = vpack.c.bf16 %v5120, %v5118
    %v5321 = vpack.c.bf16 %v5125, %v5123
    %v5322 = vpack.c.bf16 %v5130, %v5128
    %v5323 = vpack.c.bf16 %v5135, %v5133
    %v5324 = vpack.c.bf16 %v5140, %v5138
    %v5325 = vpack.c.bf16 %v5145, %v5143
    %v5326 = vpack.c.bf16 %v5150, %v5148
    %v5327 = vpack.c.bf16 %v5155, %v5153
    %v5328 = vpack.c.bf16 %v5160, %v5158
    %v5329 = vpack.c.bf16 %v5165, %v5163
    %v5330 = vpack.c.bf16 %v5170, %v5168
    %v5331 = vpack.c.bf16 %v5175, %v5173
    %v5332 = vpack.c.bf16 %v5180, %v5178
    %v5333 = vpack.c.bf16 %v5185, %v5183
    %v5334 = vpack.c.bf16 %v5190, %v5188
    %v5335 = vpack.c.bf16 %v5195, %v5193
    %v5336 = vpack.c.bf16 %v5200, %v5198
    %v5337 = vpack.c.bf16 %v5205, %v5203
    %v5338 = vpack.c.bf16 %v5210, %v5208
    %v5339 = vpack.c.bf16 %v5215, %v5213
    %v5340 = vpack.c.bf16 %v5220, %v5218
    %v5341 = vpack.c.bf16 %v5225, %v5223
    %v5342 = vpack.c.bf16 %v5230, %v5228
    %v5343 = vpack.c.bf16 %v5235, %v5233
    %v5344 = vpack.c.bf16 %v5240, %v5238
    %v5345 = vpack.c.bf16 %v5245, %v5243
    %v5346 = vpack.c.bf16 %v5250, %v5248
    %v5363 = vunpack.c.l.b16 %v4161
    %v5364 = vunpack.c.l.b16 %v4162
    %v5365 = vunpack.c.l.b16 %v4163
    %v5366 = vunpack.c.l.b16 %v4164
    %v5367 = vunpack.c.l.b16 %v4165
    %v5368 = vunpack.c.l.b16 %v4166
    %v5369 = vunpack.c.l.b16 %v4167
    %v5370 = vunpack.c.l.b16 %v4168
    %v5371 = vunpack.c.l.b16 %v4169
    %v5372 = vunpack.c.l.b16 %v4170
    %v5373 = vunpack.c.l.b16 %v4171
    %v5374 = vunpack.c.l.b16 %v4172
    %v5375 = vunpack.c.l.b16 %v4173
    %v5376 = vunpack.c.l.b16 %v4174
    %v5377 = vunpack.c.l.b16 %v4175
    %v5378 = vunpack.c.l.b16 %v4176
    %v5379 = vpack.c.b16 %v5364, %v5363
    %v5380 = vpack.c.b16 %v5366, %v5365
    %v5381 = vpack.c.b16 %v5368, %v5367
    %v5382 = vpack.c.b16 %v5370, %v5369
    %v5383 = vpack.c.b16 %v5372, %v5371
    %v5384 = vpack.c.b16 %v5374, %v5373
    %v5385 = vpack.c.b16 %v5376, %v5375
    %v5386 = vpack.c.b16 %v5378, %v5377
    %5395 = vmatpush.bf16.msra.mxu0 %v5386
    %5396 = vmatpush.bf16.msra.mxu0 %v5385
    %5397 = vmatpush.bf16.msra.mxu0 %v5384
    %5398 = vmatpush.bf16.msra.mxu0 %v5383
    %5399 = vmatpush.bf16.msra.mxu0 %v5382
    %5400 = vmatpush.bf16.msra.mxu0 %v5381
    %5401 = vmatpush.bf16.msra.mxu0 %v5380
    %5402 = vmatpush.bf16.msra.mxu0 %v5379
    %5403 = vmatmul.bf16.gmra.mxu0 %v5315
    %v5404 = vpop.f32.mrf.mxu0
    %v5405 = vadd.f32 0.0, %v5404
    %v5406 = vpop.f32.mrf.mxu0
    %v5407 = vadd.f32 0.0, %v5406
    %5408 = vmatmul.bf16.gmra.mxu0 %v5316
    %v5409 = vpop.f32.mrf.mxu0
    %v5410 = vadd.f32 0.0, %v5409
    %v5411 = vpop.f32.mrf.mxu0
    %v5412 = vadd.f32 0.0, %v5411
    %5413 = vmatmul.bf16.gmra.mxu0 %v5317
    %v5414 = vpop.f32.mrf.mxu0
    %v5415 = vadd.f32 0.0, %v5414
    %v5416 = vpop.f32.mrf.mxu0
    %v5417 = vadd.f32 0.0, %v5416
    %5418 = vmatmul.bf16.gmra.mxu0 %v5318
    %v5419 = vpop.f32.mrf.mxu0
    %v5420 = vadd.f32 0.0, %v5419
    %v5421 = vpop.f32.mrf.mxu0
    %v5422 = vadd.f32 0.0, %v5421
    %5423 = vmatmul.bf16.gmra.mxu0 %v5319
    %v5424 = vpop.f32.mrf.mxu0
    %v5425 = vadd.f32 0.0, %v5424
    %v5426 = vpop.f32.mrf.mxu0
    %v5427 = vadd.f32 0.0, %v5426
    %5428 = vmatmul.bf16.gmra.mxu0 %v5320
    %v5429 = vpop.f32.mrf.mxu0
    %v5430 = vadd.f32 0.0, %v5429
    %v5431 = vpop.f32.mrf.mxu0
    %v5432 = vadd.f32 0.0, %v5431
    %5433 = vmatmul.bf16.gmra.mxu0 %v5321
    %v5434 = vpop.f32.mrf.mxu0
    %v5435 = vadd.f32 0.0, %v5434
    %v5436 = vpop.f32.mrf.mxu0
    %v5437 = vadd.f32 0.0, %v5436
    %5438 = vmatmul.bf16.gmra.mxu0 %v5322
    %v5439 = vpop.f32.mrf.mxu0
    %v5440 = vadd.f32 0.0, %v5439
    %v5441 = vpop.f32.mrf.mxu0
    %v5442 = vadd.f32 0.0, %v5441
    %5443 = vmatmul.bf16.gmra.mxu0 %v5323
    %v5444 = vpop.f32.mrf.mxu0
    %v5445 = vadd.f32 0.0, %v5444
    %v5446 = vpop.f32.mrf.mxu0
    %v5447 = vadd.f32 0.0, %v5446
    %5448 = vmatmul.bf16.gmra.mxu0 %v5324
    %v5449 = vpop.f32.mrf.mxu0
    %v5450 = vadd.f32 0.0, %v5449
    %v5451 = vpop.f32.mrf.mxu0
    %v5452 = vadd.f32 0.0, %v5451
    %5453 = vmatmul.bf16.gmra.mxu0 %v5325
    %v5454 = vpop.f32.mrf.mxu0
    %v5455 = vadd.f32 0.0, %v5454
    %v5456 = vpop.f32.mrf.mxu0
    %v5457 = vadd.f32 0.0, %v5456
    %5458 = vmatmul.bf16.gmra.mxu0 %v5326
    %v5459 = vpop.f32.mrf.mxu0
    %v5460 = vadd.f32 0.0, %v5459
    %v5461 = vpop.f32.mrf.mxu0
    %v5462 = vadd.f32 0.0, %v5461
    %5463 = vmatmul.bf16.gmra.mxu0 %v5327
    %v5464 = vpop.f32.mrf.mxu0
    %v5465 = vadd.f32 0.0, %v5464
    %v5466 = vpop.f32.mrf.mxu0
    %v5467 = vadd.f32 0.0, %v5466
    %5468 = vmatmul.bf16.gmra.mxu0 %v5328
    %v5469 = vpop.f32.mrf.mxu0
    %v5470 = vadd.f32 0.0, %v5469
    %v5471 = vpop.f32.mrf.mxu0
    %v5472 = vadd.f32 0.0, %v5471
    %5473 = vmatmul.bf16.gmra.mxu0 %v5329
    %v5474 = vpop.f32.mrf.mxu0
    %v5475 = vadd.f32 0.0, %v5474
    %v5476 = vpop.f32.mrf.mxu0
    %v5477 = vadd.f32 0.0, %v5476
    %5478 = vmatmul.bf16.gmra.mxu0 %v5330
    %v5479 = vpop.f32.mrf.mxu0
    %v5480 = vadd.f32 0.0, %v5479
    %v5481 = vpop.f32.mrf.mxu0
    %v5482 = vadd.f32 0.0, %v5481
    %5483 = vmatmul.bf16.gmra.mxu0 %v5331
    %v5484 = vpop.f32.mrf.mxu0
    %v5485 = vadd.f32 0.0, %v5484
    %v5486 = vpop.f32.mrf.mxu0
    %v5487 = vadd.f32 0.0, %v5486
    %5488 = vmatmul.bf16.gmra.mxu0 %v5332
    %v5489 = vpop.f32.mrf.mxu0
    %v5490 = vadd.f32 0.0, %v5489
    %v5491 = vpop.f32.mrf.mxu0
    %v5492 = vadd.f32 0.0, %v5491
    %5493 = vmatmul.bf16.gmra.mxu0 %v5333
    %v5494 = vpop.f32.mrf.mxu0
    %v5495 = vadd.f32 0.0, %v5494
    %v5496 = vpop.f32.mrf.mxu0
    %v5497 = vadd.f32 0.0, %v5496
    %5498 = vmatmul.bf16.gmra.mxu0 %v5334
    %v5499 = vpop.f32.mrf.mxu0
    %v5500 = vadd.f32 0.0, %v5499
    %v5501 = vpop.f32.mrf.mxu0
    %v5502 = vadd.f32 0.0, %v5501
    %5503 = vmatmul.bf16.gmra.mxu0 %v5335
    %v5504 = vpop.f32.mrf.mxu0
    %v5505 = vadd.f32 0.0, %v5504
    %v5506 = vpop.f32.mrf.mxu0
    %v5507 = vadd.f32 0.0, %v5506
    %5508 = vmatmul.bf16.gmra.mxu0 %v5336
    %v5509 = vpop.f32.mrf.mxu0
    %v5510 = vadd.f32 0.0, %v5509
    %v5511 = vpop.f32.mrf.mxu0
    %v5512 = vadd.f32 0.0, %v5511
    %5513 = vmatmul.bf16.gmra.mxu0 %v5337
    %v5514 = vpop.f32.mrf.mxu0
    %v5515 = vadd.f32 0.0, %v5514
    %v5516 = vpop.f32.mrf.mxu0
    %v5517 = vadd.f32 0.0, %v5516
    %5518 = vmatmul.bf16.gmra.mxu0 %v5338
    %v5519 = vpop.f32.mrf.mxu0
    %v5520 = vadd.f32 0.0, %v5519
    %v5521 = vpop.f32.mrf.mxu0
    %v5522 = vadd.f32 0.0, %v5521
    %5523 = vmatmul.bf16.gmra.mxu0 %v5339
    %v5524 = vpop.f32.mrf.mxu0
    %v5525 = vadd.f32 0.0, %v5524
    %v5526 = vpop.f32.mrf.mxu0
    %v5527 = vadd.f32 0.0, %v5526
    %5528 = vmatmul.bf16.gmra.mxu0 %v5340
    %v5529 = vpop.f32.mrf.mxu0
    %v5530 = vadd.f32 0.0, %v5529
    %v5531 = vpop.f32.mrf.mxu0
    %v5532 = vadd.f32 0.0, %v5531
    %5533 = vmatmul.bf16.gmra.mxu0 %v5341
    %v5534 = vpop.f32.mrf.mxu0
    %v5535 = vadd.f32 0.0, %v5534
    %v5536 = vpop.f32.mrf.mxu0
    %v5537 = vadd.f32 0.0, %v5536
    %5538 = vmatmul.bf16.gmra.mxu0 %v5342
    %v5539 = vpop.f32.mrf.mxu0
    %v5540 = vadd.f32 0.0, %v5539
    %v5541 = vpop.f32.mrf.mxu0
    %v5542 = vadd.f32 0.0, %v5541
    %5543 = vmatmul.bf16.gmra.mxu0 %v5343
    %v5544 = vpop.f32.mrf.mxu0
    %v5545 = vadd.f32 0.0, %v5544
    %v5546 = vpop.f32.mrf.mxu0
    %v5547 = vadd.f32 0.0, %v5546
    %5548 = vmatmul.bf16.gmra.mxu0 %v5344
    %v5549 = vpop.f32.mrf.mxu0
    %v5550 = vadd.f32 0.0, %v5549
    %v5551 = vpop.f32.mrf.mxu0
    %v5552 = vadd.f32 0.0, %v5551
    %5553 = vmatmul.bf16.gmra.mxu0 %v5345
    %v5554 = vpop.f32.mrf.mxu0
    %v5555 = vadd.f32 0.0, %v5554
    %v5556 = vpop.f32.mrf.mxu0
    %v5557 = vadd.f32 0.0, %v5556
    %5558 = vmatmul.bf16.gmra.mxu0 %v5346
    %v5559 = vpop.f32.mrf.mxu0
    %v5560 = vadd.f32 0.0, %v5559
    %v5561 = vpop.f32.mrf.mxu0
    %v5562 = vadd.f32 0.0, %v5561
    %5563 = vdwg.mxu0
    %v5564 = vadd.f32 %v4932, %v5405
    %v5565 = vadd.f32 %v4934, %v5407
    %v5566 = vadd.f32 %v4937, %v5410
    %v5567 = vadd.f32 %v4939, %v5412
    %v5568 = vadd.f32 %v4942, %v5415
    %v5569 = vadd.f32 %v4944, %v5417
    %v5570 = vadd.f32 %v4947, %v5420
    %v5571 = vadd.f32 %v4949, %v5422
    %v5572 = vadd.f32 %v4952, %v5425
    %v5573 = vadd.f32 %v4954, %v5427
    %v5574 = vadd.f32 %v4957, %v5430
    %v5575 = vadd.f32 %v4959, %v5432
    %v5576 = vadd.f32 %v4962, %v5435
    %v5577 = vadd.f32 %v4964, %v5437
    %v5578 = vadd.f32 %v4967, %v5440
    %v5579 = vadd.f32 %v4969, %v5442
    %v5580 = vadd.f32 %v4972, %v5445
    %v5581 = vadd.f32 %v4974, %v5447
    %v5582 = vadd.f32 %v4977, %v5450
    %v5583 = vadd.f32 %v4979, %v5452
    %v5584 = vadd.f32 %v4982, %v5455
    %v5585 = vadd.f32 %v4984, %v5457
    %v5586 = vadd.f32 %v4987, %v5460
    %v5587 = vadd.f32 %v4989, %v5462
    %v5588 = vadd.f32 %v4992, %v5465
    %v5589 = vadd.f32 %v4994, %v5467
    %v5590 = vadd.f32 %v4997, %v5470
    %v5591 = vadd.f32 %v4999, %v5472
    %v5592 = vadd.f32 %v5002, %v5475
    %v5593 = vadd.f32 %v5004, %v5477
    %v5594 = vadd.f32 %v5007, %v5480
    %v5595 = vadd.f32 %v5009, %v5482
    %v5596 = vadd.f32 %v5012, %v5485
    %v5597 = vadd.f32 %v5014, %v5487
    %v5598 = vadd.f32 %v5017, %v5490
    %v5599 = vadd.f32 %v5019, %v5492
    %v5600 = vadd.f32 %v5022, %v5495
    %v5601 = vadd.f32 %v5024, %v5497
    %v5602 = vadd.f32 %v5027, %v5500
    %v5603 = vadd.f32 %v5029, %v5502
    %v5604 = vadd.f32 %v5032, %v5505
    %v5605 = vadd.f32 %v5034, %v5507
    %v5606 = vadd.f32 %v5037, %v5510
    %v5607 = vadd.f32 %v5039, %v5512
    %v5608 = vadd.f32 %v5042, %v5515
    %v5609 = vadd.f32 %v5044, %v5517
    %v5610 = vadd.f32 %v5047, %v5520
    %v5611 = vadd.f32 %v5049, %v5522
    %v5612 = vadd.f32 %v5052, %v5525
    %v5613 = vadd.f32 %v5054, %v5527
    %v5614 = vadd.f32 %v5057, %v5530
    %v5615 = vadd.f32 %v5059, %v5532
    %v5616 = vadd.f32 %v5062, %v5535
    %v5617 = vadd.f32 %v5064, %v5537
    %v5618 = vadd.f32 %v5067, %v5540
    %v5619 = vadd.f32 %v5069, %v5542
    %v5620 = vadd.f32 %v5072, %v5545
    %v5621 = vadd.f32 %v5074, %v5547
    %v5622 = vadd.f32 %v5077, %v5550
    %v5623 = vadd.f32 %v5079, %v5552
    %v5624 = vadd.f32 %v5082, %v5555
    %v5625 = vadd.f32 %v5084, %v5557
    %v5626 = vadd.f32 %v5087, %v5560
    %v5627 = vadd.f32 %v5089, %v5562
    %v5628 = vpack.c.bf16 %v4070, %v4069
    %v5629 = vpack.c.bf16 %v4124, %v4123
    %v5646 = vunpack.c.l.b16 %v4177
    %v5647 = vunpack.c.l.b16 %v4178
    %v5648 = vunpack.c.l.b16 %v4179
    %v5649 = vunpack.c.l.b16 %v4180
    %v5650 = vunpack.c.l.b16 %v4181
    %v5651 = vunpack.c.l.b16 %v4182
    %v5652 = vunpack.c.l.b16 %v4183
    %v5653 = vunpack.c.l.b16 %v4184
    %v5654 = vunpack.c.l.b16 %v4185
    %v5655 = vunpack.c.l.b16 %v4186
    %v5656 = vunpack.c.l.b16 %v4187
    %v5657 = vunpack.c.l.b16 %v4188
    %v5658 = vunpack.c.l.b16 %v4189
    %v5659 = vunpack.c.l.b16 %v4190
    %v5660 = vunpack.c.l.b16 %v4191
    %v5661 = vunpack.c.l.b16 %v4192
    %v5662 = vpack.c.b16 %v5647, %v5646
    %v5663 = vpack.c.b16 %v5649, %v5648
    %v5664 = vpack.c.b16 %v5651, %v5650
    %v5665 = vpack.c.b16 %v5653, %v5652
    %v5666 = vpack.c.b16 %v5655, %v5654
    %v5667 = vpack.c.b16 %v5657, %v5656
    %v5668 = vpack.c.b16 %v5659, %v5658
    %v5669 = vpack.c.b16 %v5661, %v5660
    %5678 = vmatpush.bf16.msra.mxu0 %v5669
    %5679 = vmatpush.bf16.msra.mxu0 %v5668
    %5680 = vmatpush.bf16.msra.mxu0 %v5667
    %5681 = vmatpush.bf16.msra.mxu0 %v5666
    %5682 = vmatpush.bf16.msra.mxu0 %v5665
    %5683 = vmatpush.bf16.msra.mxu0 %v5664
    %5684 = vmatpush.bf16.msra.mxu0 %v5663
    %5685 = vmatpush.bf16.msra.mxu0 %v5662
    %5686 = vmatmul.bf16.gmra.mxu0 %v4274
    %v5687 = vpop.f32.mrf.mxu0
    %v5688 = vadd.f32 0.0, %v5687
    %v5689 = vpop.f32.mrf.mxu0
    %v5690 = vadd.f32 0.0, %v5689
    %5691 = vmatmul.bf16.gmra.mxu0 %v4275
    %v5692 = vpop.f32.mrf.mxu0
    %v5693 = vadd.f32 0.0, %v5692
    %v5694 = vpop.f32.mrf.mxu0
    %v5695 = vadd.f32 0.0, %v5694
    %5696 = vmatmul.bf16.gmra.mxu0 %v4276
    %v5697 = vpop.f32.mrf.mxu0
    %v5698 = vadd.f32 0.0, %v5697
    %v5699 = vpop.f32.mrf.mxu0
    %v5700 = vadd.f32 0.0, %v5699
    %5701 = vmatmul.bf16.gmra.mxu0 %v4277
    %v5702 = vpop.f32.mrf.mxu0
    %v5703 = vadd.f32 0.0, %v5702
    %v5704 = vpop.f32.mrf.mxu0
    %v5705 = vadd.f32 0.0, %v5704
    %5706 = vmatmul.bf16.gmra.mxu0 %v4278
    %v5707 = vpop.f32.mrf.mxu0
    %v5708 = vadd.f32 0.0, %v5707
    %v5709 = vpop.f32.mrf.mxu0
    %v5710 = vadd.f32 0.0, %v5709
    %5711 = vmatmul.bf16.gmra.mxu0 %v4279
    %v5712 = vpop.f32.mrf.mxu0
    %v5713 = vadd.f32 0.0, %v5712
    %v5714 = vpop.f32.mrf.mxu0
    %v5715 = vadd.f32 0.0, %v5714
    %5716 = vmatmul.bf16.gmra.mxu0 %v4280
    %v5717 = vpop.f32.mrf.mxu0
    %v5718 = vadd.f32 0.0, %v5717
    %v5719 = vpop.f32.mrf.mxu0
    %v5720 = vadd.f32 0.0, %v5719
    %5721 = vmatmul.bf16.gmra.mxu0 %v4281
    %v5722 = vpop.f32.mrf.mxu0
    %v5723 = vadd.f32 0.0, %v5722
    %v5724 = vpop.f32.mrf.mxu0
    %v5725 = vadd.f32 0.0, %v5724
    %5726 = vmatmul.bf16.gmra.mxu0 %v4282
    %v5727 = vpop.f32.mrf.mxu0
    %v5728 = vadd.f32 0.0, %v5727
    %v5729 = vpop.f32.mrf.mxu0
    %v5730 = vadd.f32 0.0, %v5729
    %5731 = vmatmul.bf16.gmra.mxu0 %v4283
    %v5732 = vpop.f32.mrf.mxu0
    %v5733 = vadd.f32 0.0, %v5732
    %v5734 = vpop.f32.mrf.mxu0
    %v5735 = vadd.f32 0.0, %v5734
    %5736 = vmatmul.bf16.gmra.mxu0 %v4284
    %v5737 = vpop.f32.mrf.mxu0
    %v5738 = vadd.f32 0.0, %v5737
    %v5739 = vpop.f32.mrf.mxu0
    %v5740 = vadd.f32 0.0, %v5739
    %5741 = vmatmul.bf16.gmra.mxu0 %v4285
    %v5742 = vpop.f32.mrf.mxu0
    %v5743 = vadd.f32 0.0, %v5742
    %v5744 = vpop.f32.mrf.mxu0
    %v5745 = vadd.f32 0.0, %v5744
    %5746 = vmatmul.bf16.gmra.mxu0 %v4286
    %v5747 = vpop.f32.mrf.mxu0
    %v5748 = vadd.f32 0.0, %v5747
    %v5749 = vpop.f32.mrf.mxu0
    %v5750 = vadd.f32 0.0, %v5749
    %5751 = vmatmul.bf16.gmra.mxu0 %v4287
    %v5752 = vpop.f32.mrf.mxu0
    %v5753 = vadd.f32 0.0, %v5752
    %v5754 = vpop.f32.mrf.mxu0
    %v5755 = vadd.f32 0.0, %v5754
    %5756 = vmatmul.bf16.gmra.mxu0 %v4288
    %v5757 = vpop.f32.mrf.mxu0
    %v5758 = vadd.f32 0.0, %v5757
    %v5759 = vpop.f32.mrf.mxu0
    %v5760 = vadd.f32 0.0, %v5759
    %5761 = vmatmul.bf16.gmra.mxu0 %v5628
    %v5762 = vpop.f32.mrf.mxu0
    %v5763 = vadd.f32 0.0, %v5762
    %v5764 = vpop.f32.mrf.mxu0
    %v5765 = vadd.f32 0.0, %v5764
    %5766 = vmatmul.bf16.gmra.mxu0 %v4290
    %v5767 = vpop.f32.mrf.mxu0
    %v5768 = vadd.f32 0.0, %v5767
    %v5769 = vpop.f32.mrf.mxu0
    %v5770 = vadd.f32 0.0, %v5769
    %5771 = vmatmul.bf16.gmra.mxu0 %v4291
    %v5772 = vpop.f32.mrf.mxu0
    %v5773 = vadd.f32 0.0, %v5772
    %v5774 = vpop.f32.mrf.mxu0
    %v5775 = vadd.f32 0.0, %v5774
    %5776 = vmatmul.bf16.gmra.mxu0 %v4292
    %v5777 = vpop.f32.mrf.mxu0
    %v5778 = vadd.f32 0.0, %v5777
    %v5779 = vpop.f32.mrf.mxu0
    %v5780 = vadd.f32 0.0, %v5779
    %5781 = vmatmul.bf16.gmra.mxu0 %v4293
    %v5782 = vpop.f32.mrf.mxu0
    %v5783 = vadd.f32 0.0, %v5782
    %v5784 = vpop.f32.mrf.mxu0
    %v5785 = vadd.f32 0.0, %v5784
    %5786 = vmatmul.bf16.gmra.mxu0 %v4294
    %v5787 = vpop.f32.mrf.mxu0
    %v5788 = vadd.f32 0.0, %v5787
    %v5789 = vpop.f32.mrf.mxu0
    %v5790 = vadd.f32 0.0, %v5789
    %5791 = vmatmul.bf16.gmra.mxu0 %v4295
    %v5792 = vpop.f32.mrf.mxu0
    %v5793 = vadd.f32 0.0, %v5792
    %v5794 = vpop.f32.mrf.mxu0
    %v5795 = vadd.f32 0.0, %v5794
    %5796 = vmatmul.bf16.gmra.mxu0 %v4296
    %v5797 = vpop.f32.mrf.mxu0
    %v5798 = vadd.f32 0.0, %v5797
    %v5799 = vpop.f32.mrf.mxu0
    %v5800 = vadd.f32 0.0, %v5799
    %5801 = vmatmul.bf16.gmra.mxu0 %v4297
    %v5802 = vpop.f32.mrf.mxu0
    %v5803 = vadd.f32 0.0, %v5802
    %v5804 = vpop.f32.mrf.mxu0
    %v5805 = vadd.f32 0.0, %v5804
    %5806 = vmatmul.bf16.gmra.mxu0 %v4298
    %v5807 = vpop.f32.mrf.mxu0
    %v5808 = vadd.f32 0.0, %v5807
    %v5809 = vpop.f32.mrf.mxu0
    %v5810 = vadd.f32 0.0, %v5809
    %5811 = vmatmul.bf16.gmra.mxu0 %v4299
    %v5812 = vpop.f32.mrf.mxu0
    %v5813 = vadd.f32 0.0, %v5812
    %v5814 = vpop.f32.mrf.mxu0
    %v5815 = vadd.f32 0.0, %v5814
    %5816 = vmatmul.bf16.gmra.mxu0 %v4300
    %v5817 = vpop.f32.mrf.mxu0
    %v5818 = vadd.f32 0.0, %v5817
    %v5819 = vpop.f32.mrf.mxu0
    %v5820 = vadd.f32 0.0, %v5819
    %5821 = vmatmul.bf16.gmra.mxu0 %v4301
    %v5822 = vpop.f32.mrf.mxu0
    %v5823 = vadd.f32 0.0, %v5822
    %v5824 = vpop.f32.mrf.mxu0
    %v5825 = vadd.f32 0.0, %v5824
    %5826 = vmatmul.bf16.gmra.mxu0 %v4302
    %v5827 = vpop.f32.mrf.mxu0
    %v5828 = vadd.f32 0.0, %v5827
    %v5829 = vpop.f32.mrf.mxu0
    %v5830 = vadd.f32 0.0, %v5829
    %5831 = vmatmul.bf16.gmra.mxu0 %v4303
    %v5832 = vpop.f32.mrf.mxu0
    %v5833 = vadd.f32 0.0, %v5832
    %v5834 = vpop.f32.mrf.mxu0
    %v5835 = vadd.f32 0.0, %v5834
    %5836 = vmatmul.bf16.gmra.mxu0 %v4304
    %v5837 = vpop.f32.mrf.mxu0
    %v5838 = vadd.f32 0.0, %v5837
    %v5839 = vpop.f32.mrf.mxu0
    %v5840 = vadd.f32 0.0, %v5839
    %5841 = vmatmul.bf16.gmra.mxu0 %v5629
    %v5842 = vpop.f32.mrf.mxu0
    %v5843 = vadd.f32 0.0, %v5842
    %v5844 = vpop.f32.mrf.mxu0
    %v5845 = vadd.f32 0.0, %v5844
    %5846 = vdwg.mxu0
    %v5847 = vadd.f32 %v5564, %v5688
    %v5848 = vadd.f32 %v5565, %v5690
    %v5849 = vadd.f32 %v5566, %v5693
    %v5850 = vadd.f32 %v5567, %v5695
    %v5851 = vadd.f32 %v5568, %v5698
    %v5852 = vadd.f32 %v5569, %v5700
    %v5853 = vadd.f32 %v5570, %v5703
    %v5854 = vadd.f32 %v5571, %v5705
    %v5855 = vadd.f32 %v5572, %v5708
    %v5856 = vadd.f32 %v5573, %v5710
    %v5857 = vadd.f32 %v5574, %v5713
    %v5858 = vadd.f32 %v5575, %v5715
    %v5859 = vadd.f32 %v5576, %v5718
    %v5860 = vadd.f32 %v5577, %v5720
    %v5861 = vadd.f32 %v5578, %v5723
    %v5862 = vadd.f32 %v5579, %v5725
    %v5863 = vadd.f32 %v5580, %v5728
    %v5864 = vadd.f32 %v5581, %v5730
    %v5865 = vadd.f32 %v5582, %v5733
    %v5866 = vadd.f32 %v5583, %v5735
    %v5867 = vadd.f32 %v5584, %v5738
    %v5868 = vadd.f32 %v5585, %v5740
    %v5869 = vadd.f32 %v5586, %v5743
    %v5870 = vadd.f32 %v5587, %v5745
    %v5871 = vadd.f32 %v5588, %v5748
    %v5872 = vadd.f32 %v5589, %v5750
    %v5873 = vadd.f32 %v5590, %v5753
    %v5874 = vadd.f32 %v5591, %v5755
    %v5875 = vadd.f32 %v5592, %v5758
    %v5876 = vadd.f32 %v5593, %v5760
    %v5877 = vadd.f32 %v5594, %v5763
    %v5878 = vadd.f32 %v5595, %v5765
    %v5879 = vadd.f32 %v5596, %v5768
    %v5880 = vadd.f32 %v5597, %v5770
    %v5881 = vadd.f32 %v5598, %v5773
    %v5882 = vadd.f32 %v5599, %v5775
    %v5883 = vadd.f32 %v5600, %v5778
    %v5884 = vadd.f32 %v5601, %v5780
    %v5885 = vadd.f32 %v5602, %v5783
    %v5886 = vadd.f32 %v5603, %v5785
    %v5887 = vadd.f32 %v5604, %v5788
    %v5888 = vadd.f32 %v5605, %v5790
    %v5889 = vadd.f32 %v5606, %v5793
    %v5890 = vadd.f32 %v5607, %v5795
    %v5891 = vadd.f32 %v5608, %v5798
    %v5892 = vadd.f32 %v5609, %v5800
    %v5893 = vadd.f32 %v5610, %v5803
    %v5894 = vadd.f32 %v5611, %v5805
    %v5895 = vadd.f32 %v5612, %v5808
    %v5896 = vadd.f32 %v5613, %v5810
    %v5897 = vadd.f32 %v5614, %v5813
    %v5898 = vadd.f32 %v5615, %v5815
    %v5899 = vadd.f32 %v5616, %v5818
    %v5900 = vadd.f32 %v5617, %v5820
    %v5901 = vadd.f32 %v5618, %v5823
    %v5902 = vadd.f32 %v5619, %v5825
    %v5903 = vadd.f32 %v5620, %v5828
    %v5904 = vadd.f32 %v5621, %v5830
    %v5905 = vadd.f32 %v5622, %v5833
    %v5906 = vadd.f32 %v5623, %v5835
    %v5907 = vadd.f32 %v5624, %v5838
    %v5908 = vadd.f32 %v5625, %v5840
    %v5909 = vadd.f32 %v5626, %v5843
    %v5910 = vadd.f32 %v5627, %v5845
    %v5917 = vrot.slane %v4069, 1
    %v5918 = vrot.slane %v4070, 1
    %v5919 = vsel %vm512, %v5917, %v5918
    %v5920 = vrot.slane %v4071, 1
    %v5921 = vsel %vm512, %v5918, %v5920
    %v5922 = vrot.slane %v4123, 1
    %v5923 = vrot.slane %v4124, 1
    %v5924 = vsel %vm512, %v5922, %v5923
    %v5925 = vrot.slane %v4125, 1
    %v5926 = vsel %vm512, %v5923, %v5925
    %v5931 = vpack.c.bf16 %v5921, %v5919
    %v5932 = vpack.c.bf16 %v5926, %v5924
    %v5949 = vunpack.c.l.b16 %v4193
    %v5950 = vunpack.c.l.b16 %v4194
    %v5951 = vunpack.c.l.b16 %v4195
    %v5952 = vunpack.c.l.b16 %v4196
    %v5953 = vunpack.c.l.b16 %v4197
    %v5954 = vunpack.c.l.b16 %v4198
    %v5955 = vunpack.c.l.b16 %v4199
    %v5956 = vunpack.c.l.b16 %v4200
    %v5957 = vunpack.c.l.b16 %v4201
    %v5958 = vunpack.c.l.b16 %v4202
    %v5959 = vunpack.c.l.b16 %v4203
    %v5960 = vunpack.c.l.b16 %v4204
    %v5961 = vunpack.c.l.b16 %v4205
    %v5962 = vunpack.c.l.b16 %v4206
    %v5963 = vunpack.c.l.b16 %v4207
    %v5964 = vunpack.c.l.b16 %v4208
    %v5965 = vpack.c.b16 %v5950, %v5949
    %v5966 = vpack.c.b16 %v5952, %v5951
    %v5967 = vpack.c.b16 %v5954, %v5953
    %v5968 = vpack.c.b16 %v5956, %v5955
    %v5969 = vpack.c.b16 %v5958, %v5957
    %v5970 = vpack.c.b16 %v5960, %v5959
    %v5971 = vpack.c.b16 %v5962, %v5961
    %v5972 = vpack.c.b16 %v5964, %v5963
    %5981 = vmatpush.bf16.msra.mxu0 %v5972
    %5982 = vmatpush.bf16.msra.mxu0 %v5971
    %5983 = vmatpush.bf16.msra.mxu0 %v5970
    %5984 = vmatpush.bf16.msra.mxu0 %v5969
    %5985 = vmatpush.bf16.msra.mxu0 %v5968
    %5986 = vmatpush.bf16.msra.mxu0 %v5967
    %5987 = vmatpush.bf16.msra.mxu0 %v5966
    %5988 = vmatpush.bf16.msra.mxu0 %v5965
    %5989 = vmatmul.bf16.gmra.mxu0 %v4626
    %v5990 = vpop.f32.mrf.mxu0
    %v5991 = vadd.f32 0.0, %v5990
    %v5992 = vpop.f32.mrf.mxu0
    %v5993 = vadd.f32 0.0, %v5992
    %5994 = vmatmul.bf16.gmra.mxu0 %v4627
    %v5995 = vpop.f32.mrf.mxu0
    %v5996 = vadd.f32 0.0, %v5995
    %v5997 = vpop.f32.mrf.mxu0
    %v5998 = vadd.f32 0.0, %v5997
    %5999 = vmatmul.bf16.gmra.mxu0 %v4628
    %v6000 = vpop.f32.mrf.mxu0
    %v6001 = vadd.f32 0.0, %v6000
    %v6002 = vpop.f32.mrf.mxu0
    %v6003 = vadd.f32 0.0, %v6002
    %6004 = vmatmul.bf16.gmra.mxu0 %v4629
    %v6005 = vpop.f32.mrf.mxu0
    %v6006 = vadd.f32 0.0, %v6005
    %v6007 = vpop.f32.mrf.mxu0
    %v6008 = vadd.f32 0.0, %v6007
    %6009 = vmatmul.bf16.gmra.mxu0 %v4630
    %v6010 = vpop.f32.mrf.mxu0
    %v6011 = vadd.f32 0.0, %v6010
    %v6012 = vpop.f32.mrf.mxu0
    %v6013 = vadd.f32 0.0, %v6012
    %6014 = vmatmul.bf16.gmra.mxu0 %v4631
    %v6015 = vpop.f32.mrf.mxu0
    %v6016 = vadd.f32 0.0, %v6015
    %v6017 = vpop.f32.mrf.mxu0
    %v6018 = vadd.f32 0.0, %v6017
    %6019 = vmatmul.bf16.gmra.mxu0 %v4632
    %v6020 = vpop.f32.mrf.mxu0
    %v6021 = vadd.f32 0.0, %v6020
    %v6022 = vpop.f32.mrf.mxu0
    %v6023 = vadd.f32 0.0, %v6022
    %6024 = vmatmul.bf16.gmra.mxu0 %v4633
    %v6025 = vpop.f32.mrf.mxu0
    %v6026 = vadd.f32 0.0, %v6025
    %v6027 = vpop.f32.mrf.mxu0
    %v6028 = vadd.f32 0.0, %v6027
    %6029 = vmatmul.bf16.gmra.mxu0 %v4634
    %v6030 = vpop.f32.mrf.mxu0
    %v6031 = vadd.f32 0.0, %v6030
    %v6032 = vpop.f32.mrf.mxu0
    %v6033 = vadd.f32 0.0, %v6032
    %6034 = vmatmul.bf16.gmra.mxu0 %v4635
    %v6035 = vpop.f32.mrf.mxu0
    %v6036 = vadd.f32 0.0, %v6035
    %v6037 = vpop.f32.mrf.mxu0
    %v6038 = vadd.f32 0.0, %v6037
    %6039 = vmatmul.bf16.gmra.mxu0 %v4636
    %v6040 = vpop.f32.mrf.mxu0
    %v6041 = vadd.f32 0.0, %v6040
    %v6042 = vpop.f32.mrf.mxu0
    %v6043 = vadd.f32 0.0, %v6042
    %6044 = vmatmul.bf16.gmra.mxu0 %v4637
    %v6045 = vpop.f32.mrf.mxu0
    %v6046 = vadd.f32 0.0, %v6045
    %v6047 = vpop.f32.mrf.mxu0
    %v6048 = vadd.f32 0.0, %v6047
    %6049 = vmatmul.bf16.gmra.mxu0 %v4638
    %v6050 = vpop.f32.mrf.mxu0
    %v6051 = vadd.f32 0.0, %v6050
    %v6052 = vpop.f32.mrf.mxu0
    %v6053 = vadd.f32 0.0, %v6052
    %6054 = vmatmul.bf16.gmra.mxu0 %v4639
    %v6055 = vpop.f32.mrf.mxu0
    %v6056 = vadd.f32 0.0, %v6055
    %v6057 = vpop.f32.mrf.mxu0
    %v6058 = vadd.f32 0.0, %v6057
    %6059 = vmatmul.bf16.gmra.mxu0 %v4640
    %v6060 = vpop.f32.mrf.mxu0
    %v6061 = vadd.f32 0.0, %v6060
    %v6062 = vpop.f32.mrf.mxu0
    %v6063 = vadd.f32 0.0, %v6062
    %6064 = vmatmul.bf16.gmra.mxu0 %v5931
    %v6065 = vpop.f32.mrf.mxu0
    %v6066 = vadd.f32 0.0, %v6065
    %v6067 = vpop.f32.mrf.mxu0
    %v6068 = vadd.f32 0.0, %v6067
    %6069 = vmatmul.bf16.gmra.mxu0 %v4642
    %v6070 = vpop.f32.mrf.mxu0
    %v6071 = vadd.f32 0.0, %v6070
    %v6072 = vpop.f32.mrf.mxu0
    %v6073 = vadd.f32 0.0, %v6072
    %6074 = vmatmul.bf16.gmra.mxu0 %v4643
    %v6075 = vpop.f32.mrf.mxu0
    %v6076 = vadd.f32 0.0, %v6075
    %v6077 = vpop.f32.mrf.mxu0
    %v6078 = vadd.f32 0.0, %v6077
    %6079 = vmatmul.bf16.gmra.mxu0 %v4644
    %v6080 = vpop.f32.mrf.mxu0
    %v6081 = vadd.f32 0.0, %v6080
    %v6082 = vpop.f32.mrf.mxu0
    %v6083 = vadd.f32 0.0, %v6082
    %6084 = vmatmul.bf16.gmra.mxu0 %v4645
    %v6085 = vpop.f32.mrf.mxu0
    %v6086 = vadd.f32 0.0, %v6085
    %v6087 = vpop.f32.mrf.mxu0
    %v6088 = vadd.f32 0.0, %v6087
    %6089 = vmatmul.bf16.gmra.mxu0 %v4646
    %v6090 = vpop.f32.mrf.mxu0
    %v6091 = vadd.f32 0.0, %v6090
    %v6092 = vpop.f32.mrf.mxu0
    %v6093 = vadd.f32 0.0, %v6092
    %6094 = vmatmul.bf16.gmra.mxu0 %v4647
    %v6095 = vpop.f32.mrf.mxu0
    %v6096 = vadd.f32 0.0, %v6095
    %v6097 = vpop.f32.mrf.mxu0
    %v6098 = vadd.f32 0.0, %v6097
    %6099 = vmatmul.bf16.gmra.mxu0 %v4648
    %v6100 = vpop.f32.mrf.mxu0
    %v6101 = vadd.f32 0.0, %v6100
    %v6102 = vpop.f32.mrf.mxu0
    %v6103 = vadd.f32 0.0, %v6102
    %6104 = vmatmul.bf16.gmra.mxu0 %v4649
    %v6105 = vpop.f32.mrf.mxu0
    %v6106 = vadd.f32 0.0, %v6105
    %v6107 = vpop.f32.mrf.mxu0
    %v6108 = vadd.f32 0.0, %v6107
    %6109 = vmatmul.bf16.gmra.mxu0 %v4650
    %v6110 = vpop.f32.mrf.mxu0
    %v6111 = vadd.f32 0.0, %v6110
    %v6112 = vpop.f32.mrf.mxu0
    %v6113 = vadd.f32 0.0, %v6112
    %6114 = vmatmul.bf16.gmra.mxu0 %v4651
    %v6115 = vpop.f32.mrf.mxu0
    %v6116 = vadd.f32 0.0, %v6115
    %v6117 = vpop.f32.mrf.mxu0
    %v6118 = vadd.f32 0.0, %v6117
    %6119 = vmatmul.bf16.gmra.mxu0 %v4652
    %v6120 = vpop.f32.mrf.mxu0
    %v6121 = vadd.f32 0.0, %v6120
    %v6122 = vpop.f32.mrf.mxu0
    %v6123 = vadd.f32 0.0, %v6122
    %6124 = vmatmul.bf16.gmra.mxu0 %v4653
    %v6125 = vpop.f32.mrf.mxu0
    %v6126 = vadd.f32 0.0, %v6125
    %v6127 = vpop.f32.mrf.mxu0
    %v6128 = vadd.f32 0.0, %v6127
    %6129 = vmatmul.bf16.gmra.mxu0 %v4654
    %v6130 = vpop.f32.mrf.mxu0
    %v6131 = vadd.f32 0.0, %v6130
    %v6132 = vpop.f32.mrf.mxu0
    %v6133 = vadd.f32 0.0, %v6132
    %6134 = vmatmul.bf16.gmra.mxu0 %v4655
    %v6135 = vpop.f32.mrf.mxu0
    %v6136 = vadd.f32 0.0, %v6135
    %v6137 = vpop.f32.mrf.mxu0
    %v6138 = vadd.f32 0.0, %v6137
    %6139 = vmatmul.bf16.gmra.mxu0 %v4656
    %v6140 = vpop.f32.mrf.mxu0
    %v6141 = vadd.f32 0.0, %v6140
    %v6142 = vpop.f32.mrf.mxu0
    %v6143 = vadd.f32 0.0, %v6142
    %6144 = vmatmul.bf16.gmra.mxu0 %v5932
    %v6145 = vpop.f32.mrf.mxu0
    %v6146 = vadd.f32 0.0, %v6145
    %v6147 = vpop.f32.mrf.mxu0
    %v6148 = vadd.f32 0.0, %v6147
    %6149 = vdwg.mxu0
    %v6150 = vadd.f32 %v5847, %v5991
    %v6151 = vadd.f32 %v5848, %v5993
    %v6152 = vadd.f32 %v5849, %v5996
    %v6153 = vadd.f32 %v5850, %v5998
    %v6154 = vadd.f32 %v5851, %v6001
    %v6155 = vadd.f32 %v5852, %v6003
    %v6156 = vadd.f32 %v5853, %v6006
    %v6157 = vadd.f32 %v5854, %v6008
    %v6158 = vadd.f32 %v5855, %v6011
    %v6159 = vadd.f32 %v5856, %v6013
    %v6160 = vadd.f32 %v5857, %v6016
    %v6161 = vadd.f32 %v5858, %v6018
    %v6162 = vadd.f32 %v5859, %v6021
    %v6163 = vadd.f32 %v5860, %v6023
    %v6164 = vadd.f32 %v5861, %v6026
    %v6165 = vadd.f32 %v5862, %v6028
    %v6166 = vadd.f32 %v5863, %v6031
    %v6167 = vadd.f32 %v5864, %v6033
    %v6168 = vadd.f32 %v5865, %v6036
    %v6169 = vadd.f32 %v5866, %v6038
    %v6170 = vadd.f32 %v5867, %v6041
    %v6171 = vadd.f32 %v5868, %v6043
    %v6172 = vadd.f32 %v5869, %v6046
    %v6173 = vadd.f32 %v5870, %v6048
    %v6174 = vadd.f32 %v5871, %v6051
    %v6175 = vadd.f32 %v5872, %v6053
    %v6176 = vadd.f32 %v5873, %v6056
    %v6177 = vadd.f32 %v5874, %v6058
    %v6178 = vadd.f32 %v5875, %v6061
    %v6179 = vadd.f32 %v5876, %v6063
    %v6180 = vadd.f32 %v5877, %v6066
    %v6181 = vadd.f32 %v5878, %v6068
    %v6182 = vadd.f32 %v5879, %v6071
    %v6183 = vadd.f32 %v5880, %v6073
    %v6184 = vadd.f32 %v5881, %v6076
    %v6185 = vadd.f32 %v5882, %v6078
    %v6186 = vadd.f32 %v5883, %v6081
    %v6187 = vadd.f32 %v5884, %v6083
    %v6188 = vadd.f32 %v5885, %v6086
    %v6189 = vadd.f32 %v5886, %v6088
    %v6190 = vadd.f32 %v5887, %v6091
    %v6191 = vadd.f32 %v5888, %v6093
    %v6192 = vadd.f32 %v5889, %v6096
    %v6193 = vadd.f32 %v5890, %v6098
    %v6194 = vadd.f32 %v5891, %v6101
    %v6195 = vadd.f32 %v5892, %v6103
    %v6196 = vadd.f32 %v5893, %v6106
    %v6197 = vadd.f32 %v5894, %v6108
    %v6198 = vadd.f32 %v5895, %v6111
    %v6199 = vadd.f32 %v5896, %v6113
    %v6200 = vadd.f32 %v5897, %v6116
    %v6201 = vadd.f32 %v5898, %v6118
    %v6202 = vadd.f32 %v5899, %v6121
    %v6203 = vadd.f32 %v5900, %v6123
    %v6204 = vadd.f32 %v5901, %v6126
    %v6205 = vadd.f32 %v5902, %v6128
    %v6206 = vadd.f32 %v5903, %v6131
    %v6207 = vadd.f32 %v5904, %v6133
    %v6208 = vadd.f32 %v5905, %v6136
    %v6209 = vadd.f32 %v5906, %v6138
    %v6210 = vadd.f32 %v5907, %v6141
    %v6211 = vadd.f32 %v5908, %v6143
    %v6212 = vadd.f32 %v5909, %v6146
    %v6213 = vadd.f32 %v5910, %v6148
    %v6214 = vrot.slane %v4069, 2
    %v6215 = vrot.slane %v4070, 2
    %v6216 = vsel %vm1306, %v6214, %v6215
    %v6217 = vrot.slane %v4071, 2
    %v6218 = vsel %vm1306, %v6215, %v6217
    %v6219 = vrot.slane %v4123, 2
    %v6220 = vrot.slane %v4124, 2
    %v6221 = vsel %vm1306, %v6219, %v6220
    %v6222 = vrot.slane %v4125, 2
    %v6223 = vsel %vm1306, %v6220, %v6222
    %v6228 = vpack.c.bf16 %v6218, %v6216
    %v6229 = vpack.c.bf16 %v6223, %v6221
    %v6246 = vunpack.c.l.b16 %v4209
    %v6247 = vunpack.c.l.b16 %v4210
    %v6248 = vunpack.c.l.b16 %v4211
    %v6249 = vunpack.c.l.b16 %v4212
    %v6250 = vunpack.c.l.b16 %v4213
    %v6251 = vunpack.c.l.b16 %v4214
    %v6252 = vunpack.c.l.b16 %v4215
    %v6253 = vunpack.c.l.b16 %v4216
    %v6254 = vunpack.c.l.b16 %v4217
    %v6255 = vunpack.c.l.b16 %v4218
    %v6256 = vunpack.c.l.b16 %v4219
    %v6257 = vunpack.c.l.b16 %v4220
    %v6258 = vunpack.c.l.b16 %v4221
    %v6259 = vunpack.c.l.b16 %v4222
    %v6260 = vunpack.c.l.b16 %v4223
    %v6261 = vunpack.c.l.b16 %v4224
    %v6262 = vpack.c.b16 %v6247, %v6246
    %v6263 = vpack.c.b16 %v6249, %v6248
    %v6264 = vpack.c.b16 %v6251, %v6250
    %v6265 = vpack.c.b16 %v6253, %v6252
    %v6266 = vpack.c.b16 %v6255, %v6254
    %v6267 = vpack.c.b16 %v6257, %v6256
    %v6268 = vpack.c.b16 %v6259, %v6258
    %v6269 = vpack.c.b16 %v6261, %v6260
    %6278 = vmatpush.bf16.msra.mxu0 %v6269
    %6279 = vmatpush.bf16.msra.mxu0 %v6268
    %6280 = vmatpush.bf16.msra.mxu0 %v6267
    %6281 = vmatpush.bf16.msra.mxu0 %v6266
    %6282 = vmatpush.bf16.msra.mxu0 %v6265
    %6283 = vmatpush.bf16.msra.mxu0 %v6264
    %6284 = vmatpush.bf16.msra.mxu0 %v6263
    %6285 = vmatpush.bf16.msra.mxu0 %v6262
    %6286 = vmatmul.bf16.gmra.mxu0 %v5316
    %v6287 = vpop.f32.mrf.mxu0
    %v6288 = vadd.f32 0.0, %v6287
    %v6289 = vpop.f32.mrf.mxu0
    %v6290 = vadd.f32 0.0, %v6289
    %6291 = vmatmul.bf16.gmra.mxu0 %v5317
    %v6292 = vpop.f32.mrf.mxu0
    %v6293 = vadd.f32 0.0, %v6292
    %v6294 = vpop.f32.mrf.mxu0
    %v6295 = vadd.f32 0.0, %v6294
    %6296 = vmatmul.bf16.gmra.mxu0 %v5318
    %v6297 = vpop.f32.mrf.mxu0
    %v6298 = vadd.f32 0.0, %v6297
    %v6299 = vpop.f32.mrf.mxu0
    %v6300 = vadd.f32 0.0, %v6299
    %6301 = vmatmul.bf16.gmra.mxu0 %v5319
    %v6302 = vpop.f32.mrf.mxu0
    %v6303 = vadd.f32 0.0, %v6302
    %v6304 = vpop.f32.mrf.mxu0
    %v6305 = vadd.f32 0.0, %v6304
    %6306 = vmatmul.bf16.gmra.mxu0 %v5320
    %v6307 = vpop.f32.mrf.mxu0
    %v6308 = vadd.f32 0.0, %v6307
    %v6309 = vpop.f32.mrf.mxu0
    %v6310 = vadd.f32 0.0, %v6309
    %6311 = vmatmul.bf16.gmra.mxu0 %v5321
    %v6312 = vpop.f32.mrf.mxu0
    %v6313 = vadd.f32 0.0, %v6312
    %v6314 = vpop.f32.mrf.mxu0
    %v6315 = vadd.f32 0.0, %v6314
    %6316 = vmatmul.bf16.gmra.mxu0 %v5322
    %v6317 = vpop.f32.mrf.mxu0
    %v6318 = vadd.f32 0.0, %v6317
    %v6319 = vpop.f32.mrf.mxu0
    %v6320 = vadd.f32 0.0, %v6319
    %6321 = vmatmul.bf16.gmra.mxu0 %v5323
    %v6322 = vpop.f32.mrf.mxu0
    %v6323 = vadd.f32 0.0, %v6322
    %v6324 = vpop.f32.mrf.mxu0
    %v6325 = vadd.f32 0.0, %v6324
    %6326 = vmatmul.bf16.gmra.mxu0 %v5324
    %v6327 = vpop.f32.mrf.mxu0
    %v6328 = vadd.f32 0.0, %v6327
    %v6329 = vpop.f32.mrf.mxu0
    %v6330 = vadd.f32 0.0, %v6329
    %6331 = vmatmul.bf16.gmra.mxu0 %v5325
    %v6332 = vpop.f32.mrf.mxu0
    %v6333 = vadd.f32 0.0, %v6332
    %v6334 = vpop.f32.mrf.mxu0
    %v6335 = vadd.f32 0.0, %v6334
    %6336 = vmatmul.bf16.gmra.mxu0 %v5326
    %v6337 = vpop.f32.mrf.mxu0
    %v6338 = vadd.f32 0.0, %v6337
    %v6339 = vpop.f32.mrf.mxu0
    %v6340 = vadd.f32 0.0, %v6339
    %6341 = vmatmul.bf16.gmra.mxu0 %v5327
    %v6342 = vpop.f32.mrf.mxu0
    %v6343 = vadd.f32 0.0, %v6342
    %v6344 = vpop.f32.mrf.mxu0
    %v6345 = vadd.f32 0.0, %v6344
    %6346 = vmatmul.bf16.gmra.mxu0 %v5328
    %v6347 = vpop.f32.mrf.mxu0
    %v6348 = vadd.f32 0.0, %v6347
    %v6349 = vpop.f32.mrf.mxu0
    %v6350 = vadd.f32 0.0, %v6349
    %6351 = vmatmul.bf16.gmra.mxu0 %v5329
    %v6352 = vpop.f32.mrf.mxu0
    %v6353 = vadd.f32 0.0, %v6352
    %v6354 = vpop.f32.mrf.mxu0
    %v6355 = vadd.f32 0.0, %v6354
    %6356 = vmatmul.bf16.gmra.mxu0 %v5330
    %v6357 = vpop.f32.mrf.mxu0
    %v6358 = vadd.f32 0.0, %v6357
    %v6359 = vpop.f32.mrf.mxu0
    %v6360 = vadd.f32 0.0, %v6359
    %6361 = vmatmul.bf16.gmra.mxu0 %v6228
    %v6362 = vpop.f32.mrf.mxu0
    %v6363 = vadd.f32 0.0, %v6362
    %v6364 = vpop.f32.mrf.mxu0
    %v6365 = vadd.f32 0.0, %v6364
    %6366 = vmatmul.bf16.gmra.mxu0 %v5332
    %v6367 = vpop.f32.mrf.mxu0
    %v6368 = vadd.f32 0.0, %v6367
    %v6369 = vpop.f32.mrf.mxu0
    %v6370 = vadd.f32 0.0, %v6369
    %6371 = vmatmul.bf16.gmra.mxu0 %v5333
    %v6372 = vpop.f32.mrf.mxu0
    %v6373 = vadd.f32 0.0, %v6372
    %v6374 = vpop.f32.mrf.mxu0
    %v6375 = vadd.f32 0.0, %v6374
    %6376 = vmatmul.bf16.gmra.mxu0 %v5334
    %v6377 = vpop.f32.mrf.mxu0
    %v6378 = vadd.f32 0.0, %v6377
    %v6379 = vpop.f32.mrf.mxu0
    %v6380 = vadd.f32 0.0, %v6379
    %6381 = vmatmul.bf16.gmra.mxu0 %v5335
    %v6382 = vpop.f32.mrf.mxu0
    %v6383 = vadd.f32 0.0, %v6382
    %v6384 = vpop.f32.mrf.mxu0
    %v6385 = vadd.f32 0.0, %v6384
    %6386 = vmatmul.bf16.gmra.mxu0 %v5336
    %v6387 = vpop.f32.mrf.mxu0
    %v6388 = vadd.f32 0.0, %v6387
    %v6389 = vpop.f32.mrf.mxu0
    %v6390 = vadd.f32 0.0, %v6389
    %6391 = vmatmul.bf16.gmra.mxu0 %v5337
    %v6392 = vpop.f32.mrf.mxu0
    %v6393 = vadd.f32 0.0, %v6392
    %v6394 = vpop.f32.mrf.mxu0
    %v6395 = vadd.f32 0.0, %v6394
    %6396 = vmatmul.bf16.gmra.mxu0 %v5338
    %v6397 = vpop.f32.mrf.mxu0
    %v6398 = vadd.f32 0.0, %v6397
    %v6399 = vpop.f32.mrf.mxu0
    %v6400 = vadd.f32 0.0, %v6399
    %6401 = vmatmul.bf16.gmra.mxu0 %v5339
    %v6402 = vpop.f32.mrf.mxu0
    %v6403 = vadd.f32 0.0, %v6402
    %v6404 = vpop.f32.mrf.mxu0
    %v6405 = vadd.f32 0.0, %v6404
    %6406 = vmatmul.bf16.gmra.mxu0 %v5340
    %v6407 = vpop.f32.mrf.mxu0
    %v6408 = vadd.f32 0.0, %v6407
    %v6409 = vpop.f32.mrf.mxu0
    %v6410 = vadd.f32 0.0, %v6409
    %6411 = vmatmul.bf16.gmra.mxu0 %v5341
    %v6412 = vpop.f32.mrf.mxu0
    %v6413 = vadd.f32 0.0, %v6412
    %v6414 = vpop.f32.mrf.mxu0
    %v6415 = vadd.f32 0.0, %v6414
    %6416 = vmatmul.bf16.gmra.mxu0 %v5342
    %v6417 = vpop.f32.mrf.mxu0
    %v6418 = vadd.f32 0.0, %v6417
    %v6419 = vpop.f32.mrf.mxu0
    %v6420 = vadd.f32 0.0, %v6419
    %6421 = vmatmul.bf16.gmra.mxu0 %v5343
    %v6422 = vpop.f32.mrf.mxu0
    %v6423 = vadd.f32 0.0, %v6422
    %v6424 = vpop.f32.mrf.mxu0
    %v6425 = vadd.f32 0.0, %v6424
    %6426 = vmatmul.bf16.gmra.mxu0 %v5344
    %v6427 = vpop.f32.mrf.mxu0
    %v6428 = vadd.f32 0.0, %v6427
    %v6429 = vpop.f32.mrf.mxu0
    %v6430 = vadd.f32 0.0, %v6429
    %6431 = vmatmul.bf16.gmra.mxu0 %v5345
    %v6432 = vpop.f32.mrf.mxu0
    %v6433 = vadd.f32 0.0, %v6432
    %v6434 = vpop.f32.mrf.mxu0
    %v6435 = vadd.f32 0.0, %v6434
    %6436 = vmatmul.bf16.gmra.mxu0 %v5346
    %v6437 = vpop.f32.mrf.mxu0
    %v6438 = vadd.f32 0.0, %v6437
    %v6439 = vpop.f32.mrf.mxu0
    %v6440 = vadd.f32 0.0, %v6439
    %6441 = vmatmul.bf16.gmra.mxu0 %v6229
    %v6442 = vpop.f32.mrf.mxu0
    %v6443 = vadd.f32 0.0, %v6442
    %v6444 = vpop.f32.mrf.mxu0
    %v6445 = vadd.f32 0.0, %v6444
    %6446 = vdwg.mxu0
    %v6447 = vadd.f32 %v6150, %v6288
    %v6448 = vadd.f32 %v6151, %v6290
    %v6449 = vadd.f32 %v6152, %v6293
    %v6450 = vadd.f32 %v6153, %v6295
    %v6451 = vadd.f32 %v6154, %v6298
    %v6452 = vadd.f32 %v6155, %v6300
    %v6453 = vadd.f32 %v6156, %v6303
    %v6454 = vadd.f32 %v6157, %v6305
    %v6455 = vadd.f32 %v6158, %v6308
    %v6456 = vadd.f32 %v6159, %v6310
    %v6457 = vadd.f32 %v6160, %v6313
    %v6458 = vadd.f32 %v6161, %v6315
    %v6459 = vadd.f32 %v6162, %v6318
    %v6460 = vadd.f32 %v6163, %v6320
    %v6461 = vadd.f32 %v6164, %v6323
    %v6462 = vadd.f32 %v6165, %v6325
    %v6463 = vadd.f32 %v6166, %v6328
    %v6464 = vadd.f32 %v6167, %v6330
    %v6465 = vadd.f32 %v6168, %v6333
    %v6466 = vadd.f32 %v6169, %v6335
    %v6467 = vadd.f32 %v6170, %v6338
    %v6468 = vadd.f32 %v6171, %v6340
    %v6469 = vadd.f32 %v6172, %v6343
    %v6470 = vadd.f32 %v6173, %v6345
    %v6471 = vadd.f32 %v6174, %v6348
    %v6472 = vadd.f32 %v6175, %v6350
    %v6473 = vadd.f32 %v6176, %v6353
    %v6474 = vadd.f32 %v6177, %v6355
    %v6475 = vadd.f32 %v6178, %v6358
    %v6476 = vadd.f32 %v6179, %v6360
    %v6477 = vadd.f32 %v6180, %v6363
    %v6478 = vadd.f32 %v6181, %v6365
    %v6479 = vadd.f32 %v6182, %v6368
    %v6480 = vadd.f32 %v6183, %v6370
    %v6481 = vadd.f32 %v6184, %v6373
    %v6482 = vadd.f32 %v6185, %v6375
    %v6483 = vadd.f32 %v6186, %v6378
    %v6484 = vadd.f32 %v6187, %v6380
    %v6485 = vadd.f32 %v6188, %v6383
    %v6486 = vadd.f32 %v6189, %v6385
    %v6487 = vadd.f32 %v6190, %v6388
    %v6488 = vadd.f32 %v6191, %v6390
    %v6489 = vadd.f32 %v6192, %v6393
    %v6490 = vadd.f32 %v6193, %v6395
    %v6491 = vadd.f32 %v6194, %v6398
    %v6492 = vadd.f32 %v6195, %v6400
    %v6493 = vadd.f32 %v6196, %v6403
    %v6494 = vadd.f32 %v6197, %v6405
    %v6495 = vadd.f32 %v6198, %v6408
    %v6496 = vadd.f32 %v6199, %v6410
    %v6497 = vadd.f32 %v6200, %v6413
    %v6498 = vadd.f32 %v6201, %v6415
    %v6499 = vadd.f32 %v6202, %v6418
    %v6500 = vadd.f32 %v6203, %v6420
    %v6501 = vadd.f32 %v6204, %v6423
    %v6502 = vadd.f32 %v6205, %v6425
    %v6503 = vadd.f32 %v6206, %v6428
    %v6504 = vadd.f32 %v6207, %v6430
    %v6505 = vadd.f32 %v6208, %v6433
    %v6506 = vadd.f32 %v6209, %v6435
    %v6507 = vadd.f32 %v6210, %v6438
    %v6508 = vadd.f32 %v6211, %v6440
    %v6509 = vadd.f32 %v6212, %v6443
    %v6510 = vadd.f32 %v6213, %v6445
    %v6511 = vpack.c.bf16 %v4073, %v4072
    %v6512 = vpack.c.bf16 %v4127, %v4126
    %v6529 = vunpack.c.l.b16 %v4225
    %v6530 = vunpack.c.l.b16 %v4226
    %v6531 = vunpack.c.l.b16 %v4227
    %v6532 = vunpack.c.l.b16 %v4228
    %v6533 = vunpack.c.l.b16 %v4229
    %v6534 = vunpack.c.l.b16 %v4230
    %v6535 = vunpack.c.l.b16 %v4231
    %v6536 = vunpack.c.l.b16 %v4232
    %v6537 = vunpack.c.l.b16 %v4233
    %v6538 = vunpack.c.l.b16 %v4234
    %v6539 = vunpack.c.l.b16 %v4235
    %v6540 = vunpack.c.l.b16 %v4236
    %v6541 = vunpack.c.l.b16 %v4237
    %v6542 = vunpack.c.l.b16 %v4238
    %v6543 = vunpack.c.l.b16 %v4239
    %v6544 = vunpack.c.l.b16 %v4240
    %v6545 = vpack.c.b16 %v6530, %v6529
    %v6546 = vpack.c.b16 %v6532, %v6531
    %v6547 = vpack.c.b16 %v6534, %v6533
    %v6548 = vpack.c.b16 %v6536, %v6535
    %v6549 = vpack.c.b16 %v6538, %v6537
    %v6550 = vpack.c.b16 %v6540, %v6539
    %v6551 = vpack.c.b16 %v6542, %v6541
    %v6552 = vpack.c.b16 %v6544, %v6543
    %6561 = vmatpush.bf16.msra.mxu0 %v6552
    %6562 = vmatpush.bf16.msra.mxu0 %v6551
    %6563 = vmatpush.bf16.msra.mxu0 %v6550
    %6564 = vmatpush.bf16.msra.mxu0 %v6549
    %6565 = vmatpush.bf16.msra.mxu0 %v6548
    %6566 = vmatpush.bf16.msra.mxu0 %v6547
    %6567 = vmatpush.bf16.msra.mxu0 %v6546
    %6568 = vmatpush.bf16.msra.mxu0 %v6545
    %6569 = vmatmul.bf16.gmra.mxu0 %v4275
    %v6570 = vpop.f32.mrf.mxu0
    %v6571 = vadd.f32 0.0, %v6570
    %v6572 = vpop.f32.mrf.mxu0
    %v6573 = vadd.f32 0.0, %v6572
    %6574 = vmatmul.bf16.gmra.mxu0 %v4276
    %v6575 = vpop.f32.mrf.mxu0
    %v6576 = vadd.f32 0.0, %v6575
    %v6577 = vpop.f32.mrf.mxu0
    %v6578 = vadd.f32 0.0, %v6577
    %6579 = vmatmul.bf16.gmra.mxu0 %v4277
    %v6580 = vpop.f32.mrf.mxu0
    %v6581 = vadd.f32 0.0, %v6580
    %v6582 = vpop.f32.mrf.mxu0
    %v6583 = vadd.f32 0.0, %v6582
    %6584 = vmatmul.bf16.gmra.mxu0 %v4278
    %v6585 = vpop.f32.mrf.mxu0
    %v6586 = vadd.f32 0.0, %v6585
    %v6587 = vpop.f32.mrf.mxu0
    %v6588 = vadd.f32 0.0, %v6587
    %6589 = vmatmul.bf16.gmra.mxu0 %v4279
    %v6590 = vpop.f32.mrf.mxu0
    %v6591 = vadd.f32 0.0, %v6590
    %v6592 = vpop.f32.mrf.mxu0
    %v6593 = vadd.f32 0.0, %v6592
    %6594 = vmatmul.bf16.gmra.mxu0 %v4280
    %v6595 = vpop.f32.mrf.mxu0
    %v6596 = vadd.f32 0.0, %v6595
    %v6597 = vpop.f32.mrf.mxu0
    %v6598 = vadd.f32 0.0, %v6597
    %6599 = vmatmul.bf16.gmra.mxu0 %v4281
    %v6600 = vpop.f32.mrf.mxu0
    %v6601 = vadd.f32 0.0, %v6600
    %v6602 = vpop.f32.mrf.mxu0
    %v6603 = vadd.f32 0.0, %v6602
    %6604 = vmatmul.bf16.gmra.mxu0 %v4282
    %v6605 = vpop.f32.mrf.mxu0
    %v6606 = vadd.f32 0.0, %v6605
    %v6607 = vpop.f32.mrf.mxu0
    %v6608 = vadd.f32 0.0, %v6607
    %6609 = vmatmul.bf16.gmra.mxu0 %v4283
    %v6610 = vpop.f32.mrf.mxu0
    %v6611 = vadd.f32 0.0, %v6610
    %v6612 = vpop.f32.mrf.mxu0
    %v6613 = vadd.f32 0.0, %v6612
    %6614 = vmatmul.bf16.gmra.mxu0 %v4284
    %v6615 = vpop.f32.mrf.mxu0
    %v6616 = vadd.f32 0.0, %v6615
    %v6617 = vpop.f32.mrf.mxu0
    %v6618 = vadd.f32 0.0, %v6617
    %6619 = vmatmul.bf16.gmra.mxu0 %v4285
    %v6620 = vpop.f32.mrf.mxu0
    %v6621 = vadd.f32 0.0, %v6620
    %v6622 = vpop.f32.mrf.mxu0
    %v6623 = vadd.f32 0.0, %v6622
    %6624 = vmatmul.bf16.gmra.mxu0 %v4286
    %v6625 = vpop.f32.mrf.mxu0
    %v6626 = vadd.f32 0.0, %v6625
    %v6627 = vpop.f32.mrf.mxu0
    %v6628 = vadd.f32 0.0, %v6627
    %6629 = vmatmul.bf16.gmra.mxu0 %v4287
    %v6630 = vpop.f32.mrf.mxu0
    %v6631 = vadd.f32 0.0, %v6630
    %v6632 = vpop.f32.mrf.mxu0
    %v6633 = vadd.f32 0.0, %v6632
    %6634 = vmatmul.bf16.gmra.mxu0 %v4288
    %v6635 = vpop.f32.mrf.mxu0
    %v6636 = vadd.f32 0.0, %v6635
    %v6637 = vpop.f32.mrf.mxu0
    %v6638 = vadd.f32 0.0, %v6637
    %6639 = vmatmul.bf16.gmra.mxu0 %v5628
    %v6640 = vpop.f32.mrf.mxu0
    %v6641 = vadd.f32 0.0, %v6640
    %v6642 = vpop.f32.mrf.mxu0
    %v6643 = vadd.f32 0.0, %v6642
    %6644 = vmatmul.bf16.gmra.mxu0 %v6511
    %v6645 = vpop.f32.mrf.mxu0
    %v6646 = vadd.f32 0.0, %v6645
    %v6647 = vpop.f32.mrf.mxu0
    %v6648 = vadd.f32 0.0, %v6647
    %6649 = vmatmul.bf16.gmra.mxu0 %v4291
    %v6650 = vpop.f32.mrf.mxu0
    %v6651 = vadd.f32 0.0, %v6650
    %v6652 = vpop.f32.mrf.mxu0
    %v6653 = vadd.f32 0.0, %v6652
    %6654 = vmatmul.bf16.gmra.mxu0 %v4292
    %v6655 = vpop.f32.mrf.mxu0
    %v6656 = vadd.f32 0.0, %v6655
    %v6657 = vpop.f32.mrf.mxu0
    %v6658 = vadd.f32 0.0, %v6657
    %6659 = vmatmul.bf16.gmra.mxu0 %v4293
    %v6660 = vpop.f32.mrf.mxu0
    %v6661 = vadd.f32 0.0, %v6660
    %v6662 = vpop.f32.mrf.mxu0
    %v6663 = vadd.f32 0.0, %v6662
    %6664 = vmatmul.bf16.gmra.mxu0 %v4294
    %v6665 = vpop.f32.mrf.mxu0
    %v6666 = vadd.f32 0.0, %v6665
    %v6667 = vpop.f32.mrf.mxu0
    %v6668 = vadd.f32 0.0, %v6667
    %6669 = vmatmul.bf16.gmra.mxu0 %v4295
    %v6670 = vpop.f32.mrf.mxu0
    %v6671 = vadd.f32 0.0, %v6670
    %v6672 = vpop.f32.mrf.mxu0
    %v6673 = vadd.f32 0.0, %v6672
    %6674 = vmatmul.bf16.gmra.mxu0 %v4296
    %v6675 = vpop.f32.mrf.mxu0
    %v6676 = vadd.f32 0.0, %v6675
    %v6677 = vpop.f32.mrf.mxu0
    %v6678 = vadd.f32 0.0, %v6677
    %6679 = vmatmul.bf16.gmra.mxu0 %v4297
    %v6680 = vpop.f32.mrf.mxu0
    %v6681 = vadd.f32 0.0, %v6680
    %v6682 = vpop.f32.mrf.mxu0
    %v6683 = vadd.f32 0.0, %v6682
    %6684 = vmatmul.bf16.gmra.mxu0 %v4298
    %v6685 = vpop.f32.mrf.mxu0
    %v6686 = vadd.f32 0.0, %v6685
    %v6687 = vpop.f32.mrf.mxu0
    %v6688 = vadd.f32 0.0, %v6687
    %6689 = vmatmul.bf16.gmra.mxu0 %v4299
    %v6690 = vpop.f32.mrf.mxu0
    %v6691 = vadd.f32 0.0, %v6690
    %v6692 = vpop.f32.mrf.mxu0
    %v6693 = vadd.f32 0.0, %v6692
    %6694 = vmatmul.bf16.gmra.mxu0 %v4300
    %v6695 = vpop.f32.mrf.mxu0
    %v6696 = vadd.f32 0.0, %v6695
    %v6697 = vpop.f32.mrf.mxu0
    %v6698 = vadd.f32 0.0, %v6697
    %6699 = vmatmul.bf16.gmra.mxu0 %v4301
    %v6700 = vpop.f32.mrf.mxu0
    %v6701 = vadd.f32 0.0, %v6700
    %v6702 = vpop.f32.mrf.mxu0
    %v6703 = vadd.f32 0.0, %v6702
    %6704 = vmatmul.bf16.gmra.mxu0 %v4302
    %v6705 = vpop.f32.mrf.mxu0
    %v6706 = vadd.f32 0.0, %v6705
    %v6707 = vpop.f32.mrf.mxu0
    %v6708 = vadd.f32 0.0, %v6707
    %6709 = vmatmul.bf16.gmra.mxu0 %v4303
    %v6710 = vpop.f32.mrf.mxu0
    %v6711 = vadd.f32 0.0, %v6710
    %v6712 = vpop.f32.mrf.mxu0
    %v6713 = vadd.f32 0.0, %v6712
    %6714 = vmatmul.bf16.gmra.mxu0 %v4304
    %v6715 = vpop.f32.mrf.mxu0
    %v6716 = vadd.f32 0.0, %v6715
    %v6717 = vpop.f32.mrf.mxu0
    %v6718 = vadd.f32 0.0, %v6717
    %6719 = vmatmul.bf16.gmra.mxu0 %v5629
    %v6720 = vpop.f32.mrf.mxu0
    %v6721 = vadd.f32 0.0, %v6720
    %v6722 = vpop.f32.mrf.mxu0
    %v6723 = vadd.f32 0.0, %v6722
    %6724 = vmatmul.bf16.gmra.mxu0 %v6512
    %v6725 = vpop.f32.mrf.mxu0
    %v6726 = vadd.f32 0.0, %v6725
    %v6727 = vpop.f32.mrf.mxu0
    %v6728 = vadd.f32 0.0, %v6727
    %6729 = vdwg.mxu0
    %v6730 = vadd.f32 %v6447, %v6571
    %v6731 = vadd.f32 %v6448, %v6573
    %v6732 = vadd.f32 %v6449, %v6576
    %v6733 = vadd.f32 %v6450, %v6578
    %v6734 = vadd.f32 %v6451, %v6581
    %v6735 = vadd.f32 %v6452, %v6583
    %v6736 = vadd.f32 %v6453, %v6586
    %v6737 = vadd.f32 %v6454, %v6588
    %v6738 = vadd.f32 %v6455, %v6591
    %v6739 = vadd.f32 %v6456, %v6593
    %v6740 = vadd.f32 %v6457, %v6596
    %v6741 = vadd.f32 %v6458, %v6598
    %v6742 = vadd.f32 %v6459, %v6601
    %v6743 = vadd.f32 %v6460, %v6603
    %v6744 = vadd.f32 %v6461, %v6606
    %v6745 = vadd.f32 %v6462, %v6608
    %v6746 = vadd.f32 %v6463, %v6611
    %v6747 = vadd.f32 %v6464, %v6613
    %v6748 = vadd.f32 %v6465, %v6616
    %v6749 = vadd.f32 %v6466, %v6618
    %v6750 = vadd.f32 %v6467, %v6621
    %v6751 = vadd.f32 %v6468, %v6623
    %v6752 = vadd.f32 %v6469, %v6626
    %v6753 = vadd.f32 %v6470, %v6628
    %v6754 = vadd.f32 %v6471, %v6631
    %v6755 = vadd.f32 %v6472, %v6633
    %v6756 = vadd.f32 %v6473, %v6636
    %v6757 = vadd.f32 %v6474, %v6638
    %v6758 = vadd.f32 %v6475, %v6641
    %v6759 = vadd.f32 %v6476, %v6643
    %v6760 = vadd.f32 %v6477, %v6646
    %v6761 = vadd.f32 %v6478, %v6648
    %v6762 = vadd.f32 %v6479, %v6651
    %v6763 = vadd.f32 %v6480, %v6653
    %v6764 = vadd.f32 %v6481, %v6656
    %v6765 = vadd.f32 %v6482, %v6658
    %v6766 = vadd.f32 %v6483, %v6661
    %v6767 = vadd.f32 %v6484, %v6663
    %v6768 = vadd.f32 %v6485, %v6666
    %v6769 = vadd.f32 %v6486, %v6668
    %v6770 = vadd.f32 %v6487, %v6671
    %v6771 = vadd.f32 %v6488, %v6673
    %v6772 = vadd.f32 %v6489, %v6676
    %v6773 = vadd.f32 %v6490, %v6678
    %v6774 = vadd.f32 %v6491, %v6681
    %v6775 = vadd.f32 %v6492, %v6683
    %v6776 = vadd.f32 %v6493, %v6686
    %v6777 = vadd.f32 %v6494, %v6688
    %v6778 = vadd.f32 %v6495, %v6691
    %v6779 = vadd.f32 %v6496, %v6693
    %v6780 = vadd.f32 %v6497, %v6696
    %v6781 = vadd.f32 %v6498, %v6698
    %v6782 = vadd.f32 %v6499, %v6701
    %v6783 = vadd.f32 %v6500, %v6703
    %v6784 = vadd.f32 %v6501, %v6706
    %v6785 = vadd.f32 %v6502, %v6708
    %v6786 = vadd.f32 %v6503, %v6711
    %v6787 = vadd.f32 %v6504, %v6713
    %v6788 = vadd.f32 %v6505, %v6716
    %v6789 = vadd.f32 %v6506, %v6718
    %v6790 = vadd.f32 %v6507, %v6721
    %v6791 = vadd.f32 %v6508, %v6723
    %v6792 = vadd.f32 %v6509, %v6726
    %v6793 = vadd.f32 %v6510, %v6728
    %v6800 = vrot.slane %v4072, 1
    %v6801 = vrot.slane %v4073, 1
    %v6802 = vsel %vm512, %v6800, %v6801
    %v6803 = vrot.slane %v4074, 1
    %v6804 = vsel %vm512, %v6801, %v6803
    %v6805 = vrot.slane %v4126, 1
    %v6806 = vrot.slane %v4127, 1
    %v6807 = vsel %vm512, %v6805, %v6806
    %v6808 = vrot.slane %v4128, 1
    %v6809 = vsel %vm512, %v6806, %v6808
    %v6814 = vpack.c.bf16 %v6804, %v6802
    %v6815 = vpack.c.bf16 %v6809, %v6807
    %v6832 = vunpack.c.l.b16 %v4241
    %v6833 = vunpack.c.l.b16 %v4242
    %v6834 = vunpack.c.l.b16 %v4243
    %v6835 = vunpack.c.l.b16 %v4244
    %v6836 = vunpack.c.l.b16 %v4245
    %v6837 = vunpack.c.l.b16 %v4246
    %v6838 = vunpack.c.l.b16 %v4247
    %v6839 = vunpack.c.l.b16 %v4248
    %v6840 = vunpack.c.l.b16 %v4249
    %v6841 = vunpack.c.l.b16 %v4250
    %v6842 = vunpack.c.l.b16 %v4251
    %v6843 = vunpack.c.l.b16 %v4252
    %v6844 = vunpack.c.l.b16 %v4253
    %v6845 = vunpack.c.l.b16 %v4254
    %v6846 = vunpack.c.l.b16 %v4255
    %v6847 = vunpack.c.l.b16 %v4256
    %v6848 = vpack.c.b16 %v6833, %v6832
    %v6849 = vpack.c.b16 %v6835, %v6834
    %v6850 = vpack.c.b16 %v6837, %v6836
    %v6851 = vpack.c.b16 %v6839, %v6838
    %v6852 = vpack.c.b16 %v6841, %v6840
    %v6853 = vpack.c.b16 %v6843, %v6842
    %v6854 = vpack.c.b16 %v6845, %v6844
    %v6855 = vpack.c.b16 %v6847, %v6846
    %6864 = vmatpush.bf16.msra.mxu0 %v6855
    %6865 = vmatpush.bf16.msra.mxu0 %v6854
    %6866 = vmatpush.bf16.msra.mxu0 %v6853
    %6867 = vmatpush.bf16.msra.mxu0 %v6852
    %6868 = vmatpush.bf16.msra.mxu0 %v6851
    %6869 = vmatpush.bf16.msra.mxu0 %v6850
    %6870 = vmatpush.bf16.msra.mxu0 %v6849
    %6871 = vmatpush.bf16.msra.mxu0 %v6848
    %6872 = vmatmul.bf16.gmra.mxu0 %v4627
    %v6873 = vpop.f32.mrf.mxu0
    %v6874 = vadd.f32 0.0, %v6873
    %v6875 = vpop.f32.mrf.mxu0
    %v6876 = vadd.f32 0.0, %v6875
    %6877 = vmatmul.bf16.gmra.mxu0 %v4628
    %v6878 = vpop.f32.mrf.mxu0
    %v6879 = vadd.f32 0.0, %v6878
    %v6880 = vpop.f32.mrf.mxu0
    %v6881 = vadd.f32 0.0, %v6880
    %6882 = vmatmul.bf16.gmra.mxu0 %v4629
    %v6883 = vpop.f32.mrf.mxu0
    %v6884 = vadd.f32 0.0, %v6883
    %v6885 = vpop.f32.mrf.mxu0
    %v6886 = vadd.f32 0.0, %v6885
    %6887 = vmatmul.bf16.gmra.mxu0 %v4630
    %v6888 = vpop.f32.mrf.mxu0
    %v6889 = vadd.f32 0.0, %v6888
    %v6890 = vpop.f32.mrf.mxu0
    %v6891 = vadd.f32 0.0, %v6890
    %6892 = vmatmul.bf16.gmra.mxu0 %v4631
    %v6893 = vpop.f32.mrf.mxu0
    %v6894 = vadd.f32 0.0, %v6893
    %v6895 = vpop.f32.mrf.mxu0
    %v6896 = vadd.f32 0.0, %v6895
    %6897 = vmatmul.bf16.gmra.mxu0 %v4632
    %v6898 = vpop.f32.mrf.mxu0
    %v6899 = vadd.f32 0.0, %v6898
    %v6900 = vpop.f32.mrf.mxu0
    %v6901 = vadd.f32 0.0, %v6900
    %6902 = vmatmul.bf16.gmra.mxu0 %v4633
    %v6903 = vpop.f32.mrf.mxu0
    %v6904 = vadd.f32 0.0, %v6903
    %v6905 = vpop.f32.mrf.mxu0
    %v6906 = vadd.f32 0.0, %v6905
    %6907 = vmatmul.bf16.gmra.mxu0 %v4634
    %v6908 = vpop.f32.mrf.mxu0
    %v6909 = vadd.f32 0.0, %v6908
    %v6910 = vpop.f32.mrf.mxu0
    %v6911 = vadd.f32 0.0, %v6910
    %6912 = vmatmul.bf16.gmra.mxu0 %v4635
    %v6913 = vpop.f32.mrf.mxu0
    %v6914 = vadd.f32 0.0, %v6913
    %v6915 = vpop.f32.mrf.mxu0
    %v6916 = vadd.f32 0.0, %v6915
    %6917 = vmatmul.bf16.gmra.mxu0 %v4636
    %v6918 = vpop.f32.mrf.mxu0
    %v6919 = vadd.f32 0.0, %v6918
    %v6920 = vpop.f32.mrf.mxu0
    %v6921 = vadd.f32 0.0, %v6920
    %6922 = vmatmul.bf16.gmra.mxu0 %v4637
    %v6923 = vpop.f32.mrf.mxu0
    %v6924 = vadd.f32 0.0, %v6923
    %v6925 = vpop.f32.mrf.mxu0
    %v6926 = vadd.f32 0.0, %v6925
    %6927 = vmatmul.bf16.gmra.mxu0 %v4638
    %v6928 = vpop.f32.mrf.mxu0
    %v6929 = vadd.f32 0.0, %v6928
    %v6930 = vpop.f32.mrf.mxu0
    %v6931 = vadd.f32 0.0, %v6930
    %6932 = vmatmul.bf16.gmra.mxu0 %v4639
    %v6933 = vpop.f32.mrf.mxu0
    %v6934 = vadd.f32 0.0, %v6933
    %v6935 = vpop.f32.mrf.mxu0
    %v6936 = vadd.f32 0.0, %v6935
    %6937 = vmatmul.bf16.gmra.mxu0 %v4640
    %v6938 = vpop.f32.mrf.mxu0
    %v6939 = vadd.f32 0.0, %v6938
    %v6940 = vpop.f32.mrf.mxu0
    %v6941 = vadd.f32 0.0, %v6940
    %6942 = vmatmul.bf16.gmra.mxu0 %v5931
    %v6943 = vpop.f32.mrf.mxu0
    %v6944 = vadd.f32 0.0, %v6943
    %v6945 = vpop.f32.mrf.mxu0
    %v6946 = vadd.f32 0.0, %v6945
    %6947 = vmatmul.bf16.gmra.mxu0 %v6814
    %v6948 = vpop.f32.mrf.mxu0
    %v6949 = vadd.f32 0.0, %v6948
    %v6950 = vpop.f32.mrf.mxu0
    %v6951 = vadd.f32 0.0, %v6950
    %6952 = vmatmul.bf16.gmra.mxu0 %v4643
    %v6953 = vpop.f32.mrf.mxu0
    %v6954 = vadd.f32 0.0, %v6953
    %v6955 = vpop.f32.mrf.mxu0
    %v6956 = vadd.f32 0.0, %v6955
    %6957 = vmatmul.bf16.gmra.mxu0 %v4644
    %v6958 = vpop.f32.mrf.mxu0
    %v6959 = vadd.f32 0.0, %v6958
    %v6960 = vpop.f32.mrf.mxu0
    %v6961 = vadd.f32 0.0, %v6960
    %6962 = vmatmul.bf16.gmra.mxu0 %v4645
    %v6963 = vpop.f32.mrf.mxu0
    %v6964 = vadd.f32 0.0, %v6963
    %v6965 = vpop.f32.mrf.mxu0
    %v6966 = vadd.f32 0.0, %v6965
    %6967 = vmatmul.bf16.gmra.mxu0 %v4646
    %v6968 = vpop.f32.mrf.mxu0
    %v6969 = vadd.f32 0.0, %v6968
    %v6970 = vpop.f32.mrf.mxu0
    %v6971 = vadd.f32 0.0, %v6970
    %6972 = vmatmul.bf16.gmra.mxu0 %v4647
    %v6973 = vpop.f32.mrf.mxu0
    %v6974 = vadd.f32 0.0, %v6973
    %v6975 = vpop.f32.mrf.mxu0
    %v6976 = vadd.f32 0.0, %v6975
    %6977 = vmatmul.bf16.gmra.mxu0 %v4648
    %v6978 = vpop.f32.mrf.mxu0
    %v6979 = vadd.f32 0.0, %v6978
    %v6980 = vpop.f32.mrf.mxu0
    %v6981 = vadd.f32 0.0, %v6980
    %6982 = vmatmul.bf16.gmra.mxu0 %v4649
    %v6983 = vpop.f32.mrf.mxu0
    %v6984 = vadd.f32 0.0, %v6983
    %v6985 = vpop.f32.mrf.mxu0
    %v6986 = vadd.f32 0.0, %v6985
    %6987 = vmatmul.bf16.gmra.mxu0 %v4650
    %v6988 = vpop.f32.mrf.mxu0
    %v6989 = vadd.f32 0.0, %v6988
    %v6990 = vpop.f32.mrf.mxu0
    %v6991 = vadd.f32 0.0, %v6990
    %6992 = vmatmul.bf16.gmra.mxu0 %v4651
    %v6993 = vpop.f32.mrf.mxu0
    %v6994 = vadd.f32 0.0, %v6993
    %v6995 = vpop.f32.mrf.mxu0
    %v6996 = vadd.f32 0.0, %v6995
    %6997 = vmatmul.bf16.gmra.mxu0 %v4652
    %v6998 = vpop.f32.mrf.mxu0
    %v6999 = vadd.f32 0.0, %v6998
    %v7000 = vpop.f32.mrf.mxu0
    %v7001 = vadd.f32 0.0, %v7000
    %7002 = vmatmul.bf16.gmra.mxu0 %v4653
    %v7003 = vpop.f32.mrf.mxu0
    %v7004 = vadd.f32 0.0, %v7003
    %v7005 = vpop.f32.mrf.mxu0
    %v7006 = vadd.f32 0.0, %v7005
    %7007 = vmatmul.bf16.gmra.mxu0 %v4654
    %v7008 = vpop.f32.mrf.mxu0
    %v7009 = vadd.f32 0.0, %v7008
    %v7010 = vpop.f32.mrf.mxu0
    %v7011 = vadd.f32 0.0, %v7010
    %7012 = vmatmul.bf16.gmra.mxu0 %v4655
    %v7013 = vpop.f32.mrf.mxu0
    %v7014 = vadd.f32 0.0, %v7013
    %v7015 = vpop.f32.mrf.mxu0
    %v7016 = vadd.f32 0.0, %v7015
    %7017 = vmatmul.bf16.gmra.mxu0 %v4656
    %v7018 = vpop.f32.mrf.mxu0
    %v7019 = vadd.f32 0.0, %v7018
    %v7020 = vpop.f32.mrf.mxu0
    %v7021 = vadd.f32 0.0, %v7020
    %7022 = vmatmul.bf16.gmra.mxu0 %v5932
    %v7023 = vpop.f32.mrf.mxu0
    %v7024 = vadd.f32 0.0, %v7023
    %v7025 = vpop.f32.mrf.mxu0
    %v7026 = vadd.f32 0.0, %v7025
    %7027 = vmatmul.bf16.gmra.mxu0 %v6815
    %v7028 = vpop.f32.mrf.mxu0
    %v7029 = vadd.f32 0.0, %v7028
    %v7030 = vpop.f32.mrf.mxu0
    %v7031 = vadd.f32 0.0, %v7030
    %7032 = vdwg.mxu0
    %v7033 = vadd.f32 %v6730, %v6874
    %v7034 = vadd.f32 %v6731, %v6876
    %v7035 = vadd.f32 %v6732, %v6879
    %v7036 = vadd.f32 %v6733, %v6881
    %v7037 = vadd.f32 %v6734, %v6884
    %v7038 = vadd.f32 %v6735, %v6886
    %v7039 = vadd.f32 %v6736, %v6889
    %v7040 = vadd.f32 %v6737, %v6891
    %v7041 = vadd.f32 %v6738, %v6894
    %v7042 = vadd.f32 %v6739, %v6896
    %v7043 = vadd.f32 %v6740, %v6899
    %v7044 = vadd.f32 %v6741, %v6901
    %v7045 = vadd.f32 %v6742, %v6904
    %v7046 = vadd.f32 %v6743, %v6906
    %v7047 = vadd.f32 %v6744, %v6909
    %v7048 = vadd.f32 %v6745, %v6911
    %v7049 = vadd.f32 %v6746, %v6914
    %v7050 = vadd.f32 %v6747, %v6916
    %v7051 = vadd.f32 %v6748, %v6919
    %v7052 = vadd.f32 %v6749, %v6921
    %v7053 = vadd.f32 %v6750, %v6924
    %v7054 = vadd.f32 %v6751, %v6926
    %v7055 = vadd.f32 %v6752, %v6929
    %v7056 = vadd.f32 %v6753, %v6931
    %v7057 = vadd.f32 %v6754, %v6934
    %v7058 = vadd.f32 %v6755, %v6936
    %v7059 = vadd.f32 %v6756, %v6939
    %v7060 = vadd.f32 %v6757, %v6941
    %v7061 = vadd.f32 %v6758, %v6944
    %v7062 = vadd.f32 %v6759, %v6946
    %v7063 = vadd.f32 %v6760, %v6949
    %v7064 = vadd.f32 %v6761, %v6951
    %v7065 = vadd.f32 %v6762, %v6954
    %v7066 = vadd.f32 %v6763, %v6956
    %v7067 = vadd.f32 %v6764, %v6959
    %v7068 = vadd.f32 %v6765, %v6961
    %v7069 = vadd.f32 %v6766, %v6964
    %v7070 = vadd.f32 %v6767, %v6966
    %v7071 = vadd.f32 %v6768, %v6969
    %v7072 = vadd.f32 %v6769, %v6971
    %v7073 = vadd.f32 %v6770, %v6974
    %v7074 = vadd.f32 %v6771, %v6976
    %v7075 = vadd.f32 %v6772, %v6979
    %v7076 = vadd.f32 %v6773, %v6981
    %v7077 = vadd.f32 %v6774, %v6984
    %v7078 = vadd.f32 %v6775, %v6986
    %v7079 = vadd.f32 %v6776, %v6989
    %v7080 = vadd.f32 %v6777, %v6991
    %v7081 = vadd.f32 %v6778, %v6994
    %v7082 = vadd.f32 %v6779, %v6996
    %v7083 = vadd.f32 %v6780, %v6999
    %v7084 = vadd.f32 %v6781, %v7001
    %v7085 = vadd.f32 %v6782, %v7004
    %v7086 = vadd.f32 %v6783, %v7006
    %v7087 = vadd.f32 %v6784, %v7009
    %v7088 = vadd.f32 %v6785, %v7011
    %v7089 = vadd.f32 %v6786, %v7014
    %v7090 = vadd.f32 %v6787, %v7016
    %v7091 = vadd.f32 %v6788, %v7019
    %v7092 = vadd.f32 %v6789, %v7021
    %v7093 = vadd.f32 %v6790, %v7024
    %v7094 = vadd.f32 %v6791, %v7026
    %v7095 = vadd.f32 %v6792, %v7029
    %v7096 = vadd.f32 %v6793, %v7031
    %v7097 = vrot.slane %v4072, 2
    %v7098 = vrot.slane %v4073, 2
    %v7099 = vsel %vm1306, %v7097, %v7098
    %v7100 = vrot.slane %v4074, 2
    %v7101 = vsel %vm1306, %v7098, %v7100
    %v7102 = vrot.slane %v4126, 2
    %v7103 = vrot.slane %v4127, 2
    %v7104 = vsel %vm1306, %v7102, %v7103
    %v7105 = vrot.slane %v4128, 2
    %v7106 = vsel %vm1306, %v7103, %v7105
    %v7111 = vpack.c.bf16 %v7101, %v7099
    %v7112 = vpack.c.bf16 %v7106, %v7104
    %v7129 = vunpack.c.l.b16 %v4257
    %v7130 = vunpack.c.l.b16 %v4258
    %v7131 = vunpack.c.l.b16 %v4259
    %v7132 = vunpack.c.l.b16 %v4260
    %v7133 = vunpack.c.l.b16 %v4261
    %v7134 = vunpack.c.l.b16 %v4262
    %v7135 = vunpack.c.l.b16 %v4263
    %v7136 = vunpack.c.l.b16 %v4264
    %v7137 = vunpack.c.l.b16 %v4265
    %v7138 = vunpack.c.l.b16 %v4266
    %v7139 = vunpack.c.l.b16 %v4267
    %v7140 = vunpack.c.l.b16 %v4268
    %v7141 = vunpack.c.l.b16 %v4269
    %v7142 = vunpack.c.l.b16 %v4270
    %v7143 = vunpack.c.l.b16 %v4271
    %v7144 = vunpack.c.l.b16 %v4272
    %v7145 = vpack.c.b16 %v7130, %v7129
    %v7146 = vpack.c.b16 %v7132, %v7131
    %v7147 = vpack.c.b16 %v7134, %v7133
    %v7148 = vpack.c.b16 %v7136, %v7135
    %v7149 = vpack.c.b16 %v7138, %v7137
    %v7150 = vpack.c.b16 %v7140, %v7139
    %v7151 = vpack.c.b16 %v7142, %v7141
    %v7152 = vpack.c.b16 %v7144, %v7143
    %7161 = vmatpush.bf16.msra.mxu0 %v7152
    %7162 = vmatpush.bf16.msra.mxu0 %v7151
    %7163 = vmatpush.bf16.msra.mxu0 %v7150
    %7164 = vmatpush.bf16.msra.mxu0 %v7149
    %7165 = vmatpush.bf16.msra.mxu0 %v7148
    %7166 = vmatpush.bf16.msra.mxu0 %v7147
    %7167 = vmatpush.bf16.msra.mxu0 %v7146
    %7168 = vmatpush.bf16.msra.mxu0 %v7145
    %7169 = vmatmul.bf16.gmra.mxu0 %v5317
    %v7170 = vpop.f32.mrf.mxu0
    %v7171 = vadd.f32 0.0, %v7170
    %v7172 = vpop.f32.mrf.mxu0
    %v7173 = vadd.f32 0.0, %v7172
    %7174 = vmatmul.bf16.gmra.mxu0 %v5318
    %v7175 = vpop.f32.mrf.mxu0
    %v7176 = vadd.f32 0.0, %v7175
    %v7177 = vpop.f32.mrf.mxu0
    %v7178 = vadd.f32 0.0, %v7177
    %7179 = vmatmul.bf16.gmra.mxu0 %v5319
    %v7180 = vpop.f32.mrf.mxu0
    %v7181 = vadd.f32 0.0, %v7180
    %v7182 = vpop.f32.mrf.mxu0
    %v7183 = vadd.f32 0.0, %v7182
    %7184 = vmatmul.bf16.gmra.mxu0 %v5320
    %v7185 = vpop.f32.mrf.mxu0
    %v7186 = vadd.f32 0.0, %v7185
    %v7187 = vpop.f32.mrf.mxu0
    %v7188 = vadd.f32 0.0, %v7187
    %7189 = vmatmul.bf16.gmra.mxu0 %v5321
    %v7190 = vpop.f32.mrf.mxu0
    %v7191 = vadd.f32 0.0, %v7190
    %v7192 = vpop.f32.mrf.mxu0
    %v7193 = vadd.f32 0.0, %v7192
    %7194 = vmatmul.bf16.gmra.mxu0 %v5322
    %v7195 = vpop.f32.mrf.mxu0
    %v7196 = vadd.f32 0.0, %v7195
    %v7197 = vpop.f32.mrf.mxu0
    %v7198 = vadd.f32 0.0, %v7197
    %7199 = vmatmul.bf16.gmra.mxu0 %v5323
    %v7200 = vpop.f32.mrf.mxu0
    %v7201 = vadd.f32 0.0, %v7200
    %v7202 = vpop.f32.mrf.mxu0
    %v7203 = vadd.f32 0.0, %v7202
    %7204 = vmatmul.bf16.gmra.mxu0 %v5324
    %v7205 = vpop.f32.mrf.mxu0
    %v7206 = vadd.f32 0.0, %v7205
    %v7207 = vpop.f32.mrf.mxu0
    %v7208 = vadd.f32 0.0, %v7207
    %7209 = vmatmul.bf16.gmra.mxu0 %v5325
    %v7210 = vpop.f32.mrf.mxu0
    %v7211 = vadd.f32 0.0, %v7210
    %v7212 = vpop.f32.mrf.mxu0
    %v7213 = vadd.f32 0.0, %v7212
    %7214 = vmatmul.bf16.gmra.mxu0 %v5326
    %v7215 = vpop.f32.mrf.mxu0
    %v7216 = vadd.f32 0.0, %v7215
    %v7217 = vpop.f32.mrf.mxu0
    %v7218 = vadd.f32 0.0, %v7217
    %7219 = vmatmul.bf16.gmra.mxu0 %v5327
    %v7220 = vpop.f32.mrf.mxu0
    %v7221 = vadd.f32 0.0, %v7220
    %v7222 = vpop.f32.mrf.mxu0
    %v7223 = vadd.f32 0.0, %v7222
    %7224 = vmatmul.bf16.gmra.mxu0 %v5328
    %v7225 = vpop.f32.mrf.mxu0
    %v7226 = vadd.f32 0.0, %v7225
    %v7227 = vpop.f32.mrf.mxu0
    %v7228 = vadd.f32 0.0, %v7227
    %7229 = vmatmul.bf16.gmra.mxu0 %v5329
    %v7230 = vpop.f32.mrf.mxu0
    %v7231 = vadd.f32 0.0, %v7230
    %v7232 = vpop.f32.mrf.mxu0
    %v7233 = vadd.f32 0.0, %v7232
    %7234 = vmatmul.bf16.gmra.mxu0 %v5330
    %v7235 = vpop.f32.mrf.mxu0
    %v7236 = vadd.f32 0.0, %v7235
    %v7237 = vpop.f32.mrf.mxu0
    %v7238 = vadd.f32 0.0, %v7237
    %7239 = vmatmul.bf16.gmra.mxu0 %v6228
    %v7240 = vpop.f32.mrf.mxu0
    %v7241 = vadd.f32 0.0, %v7240
    %v7242 = vpop.f32.mrf.mxu0
    %v7243 = vadd.f32 0.0, %v7242
    %7244 = vmatmul.bf16.gmra.mxu0 %v7111
    %v7245 = vpop.f32.mrf.mxu0
    %v7246 = vadd.f32 0.0, %v7245
    %v7247 = vpop.f32.mrf.mxu0
    %v7248 = vadd.f32 0.0, %v7247
    %7249 = vmatmul.bf16.gmra.mxu0 %v5333
    %v7250 = vpop.f32.mrf.mxu0
    %v7251 = vadd.f32 0.0, %v7250
    %v7252 = vpop.f32.mrf.mxu0
    %v7253 = vadd.f32 0.0, %v7252
    %7254 = vmatmul.bf16.gmra.mxu0 %v5334
    %v7255 = vpop.f32.mrf.mxu0
    %v7256 = vadd.f32 0.0, %v7255
    %v7257 = vpop.f32.mrf.mxu0
    %v7258 = vadd.f32 0.0, %v7257
    %7259 = vmatmul.bf16.gmra.mxu0 %v5335
    %v7260 = vpop.f32.mrf.mxu0
    %v7261 = vadd.f32 0.0, %v7260
    %v7262 = vpop.f32.mrf.mxu0
    %v7263 = vadd.f32 0.0, %v7262
    %7264 = vmatmul.bf16.gmra.mxu0 %v5336
    %v7265 = vpop.f32.mrf.mxu0
    %v7266 = vadd.f32 0.0, %v7265
    %v7267 = vpop.f32.mrf.mxu0
    %v7268 = vadd.f32 0.0, %v7267
    %7269 = vmatmul.bf16.gmra.mxu0 %v5337
    %v7270 = vpop.f32.mrf.mxu0
    %v7271 = vadd.f32 0.0, %v7270
    %v7272 = vpop.f32.mrf.mxu0
    %v7273 = vadd.f32 0.0, %v7272
    %7274 = vmatmul.bf16.gmra.mxu0 %v5338
    %v7275 = vpop.f32.mrf.mxu0
    %v7276 = vadd.f32 0.0, %v7275
    %v7277 = vpop.f32.mrf.mxu0
    %v7278 = vadd.f32 0.0, %v7277
    %7279 = vmatmul.bf16.gmra.mxu0 %v5339
    %v7280 = vpop.f32.mrf.mxu0
    %v7281 = vadd.f32 0.0, %v7280
    %v7282 = vpop.f32.mrf.mxu0
    %v7283 = vadd.f32 0.0, %v7282
    %7284 = vmatmul.bf16.gmra.mxu0 %v5340
    %v7285 = vpop.f32.mrf.mxu0
    %v7286 = vadd.f32 0.0, %v7285
    %v7287 = vpop.f32.mrf.mxu0
    %v7288 = vadd.f32 0.0, %v7287
    %7289 = vmatmul.bf16.gmra.mxu0 %v5341
    %v7290 = vpop.f32.mrf.mxu0
    %v7291 = vadd.f32 0.0, %v7290
    %v7292 = vpop.f32.mrf.mxu0
    %v7293 = vadd.f32 0.0, %v7292
    %7294 = vmatmul.bf16.gmra.mxu0 %v5342
    %v7295 = vpop.f32.mrf.mxu0
    %v7296 = vadd.f32 0.0, %v7295
    %v7297 = vpop.f32.mrf.mxu0
    %v7298 = vadd.f32 0.0, %v7297
    %7299 = vmatmul.bf16.gmra.mxu0 %v5343
    %v7300 = vpop.f32.mrf.mxu0
    %v7301 = vadd.f32 0.0, %v7300
    %v7302 = vpop.f32.mrf.mxu0
    %v7303 = vadd.f32 0.0, %v7302
    %7304 = vmatmul.bf16.gmra.mxu0 %v5344
    %v7305 = vpop.f32.mrf.mxu0
    %v7306 = vadd.f32 0.0, %v7305
    %v7307 = vpop.f32.mrf.mxu0
    %v7308 = vadd.f32 0.0, %v7307
    %7309 = vmatmul.bf16.gmra.mxu0 %v5345
    %v7310 = vpop.f32.mrf.mxu0
    %v7311 = vadd.f32 0.0, %v7310
    %v7312 = vpop.f32.mrf.mxu0
    %v7313 = vadd.f32 0.0, %v7312
    %7314 = vmatmul.bf16.gmra.mxu0 %v5346
    %v7315 = vpop.f32.mrf.mxu0
    %v7316 = vadd.f32 0.0, %v7315
    %v7317 = vpop.f32.mrf.mxu0
    %v7318 = vadd.f32 0.0, %v7317
    %7319 = vmatmul.bf16.gmra.mxu0 %v6229
    %v7320 = vpop.f32.mrf.mxu0
    %v7321 = vadd.f32 0.0, %v7320
    %v7322 = vpop.f32.mrf.mxu0
    %v7323 = vadd.f32 0.0, %v7322
    %7324 = vmatmul.bf16.gmra.mxu0 %v7112
    %v7325 = vpop.f32.mrf.mxu0
    %v7326 = vadd.f32 0.0, %v7325
    %v7327 = vpop.f32.mrf.mxu0
    %v7328 = vadd.f32 0.0, %v7327
    %7329 = vdwg.mxu0
    %v7330 = vadd.f32 %v7033, %v7171
    %v7331 = vadd.f32 %v7034, %v7173
    %v7332 = vadd.f32 %v7035, %v7176
    %v7333 = vadd.f32 %v7036, %v7178
    %v7334 = vadd.f32 %v7037, %v7181
    %v7335 = vadd.f32 %v7038, %v7183
    %v7336 = vadd.f32 %v7039, %v7186
    %v7337 = vadd.f32 %v7040, %v7188
    %v7338 = vadd.f32 %v7041, %v7191
    %v7339 = vadd.f32 %v7042, %v7193
    %v7340 = vadd.f32 %v7043, %v7196
    %v7341 = vadd.f32 %v7044, %v7198
    %v7342 = vadd.f32 %v7045, %v7201
    %v7343 = vadd.f32 %v7046, %v7203
    %v7344 = vadd.f32 %v7047, %v7206
    %v7345 = vadd.f32 %v7048, %v7208
    %v7346 = vadd.f32 %v7049, %v7211
    %v7347 = vadd.f32 %v7050, %v7213
    %v7348 = vadd.f32 %v7051, %v7216
    %v7349 = vadd.f32 %v7052, %v7218
    %v7350 = vadd.f32 %v7053, %v7221
    %v7351 = vadd.f32 %v7054, %v7223
    %v7352 = vadd.f32 %v7055, %v7226
    %v7353 = vadd.f32 %v7056, %v7228
    %v7354 = vadd.f32 %v7057, %v7231
    %v7355 = vadd.f32 %v7058, %v7233
    %v7356 = vadd.f32 %v7059, %v7236
    %v7357 = vadd.f32 %v7060, %v7238
    %v7358 = vadd.f32 %v7061, %v7241
    %v7359 = vadd.f32 %v7062, %v7243
    %v7360 = vadd.f32 %v7063, %v7246
    %v7361 = vadd.f32 %v7064, %v7248
    %v7362 = vadd.f32 %v7065, %v7251
    %v7363 = vadd.f32 %v7066, %v7253
    %v7364 = vadd.f32 %v7067, %v7256
    %v7365 = vadd.f32 %v7068, %v7258
    %v7366 = vadd.f32 %v7069, %v7261
    %v7367 = vadd.f32 %v7070, %v7263
    %v7368 = vadd.f32 %v7071, %v7266
    %v7369 = vadd.f32 %v7072, %v7268
    %v7370 = vadd.f32 %v7073, %v7271
    %v7371 = vadd.f32 %v7074, %v7273
    %v7372 = vadd.f32 %v7075, %v7276
    %v7373 = vadd.f32 %v7076, %v7278
    %v7374 = vadd.f32 %v7077, %v7281
    %v7375 = vadd.f32 %v7078, %v7283
    %v7376 = vadd.f32 %v7079, %v7286
    %v7377 = vadd.f32 %v7080, %v7288
    %v7378 = vadd.f32 %v7081, %v7291
    %v7379 = vadd.f32 %v7082, %v7293
    %v7380 = vadd.f32 %v7083, %v7296
    %v7381 = vadd.f32 %v7084, %v7298
    %v7382 = vadd.f32 %v7085, %v7301
    %v7383 = vadd.f32 %v7086, %v7303
    %v7384 = vadd.f32 %v7087, %v7306
    %v7385 = vadd.f32 %v7088, %v7308
    %v7386 = vadd.f32 %v7089, %v7311
    %v7387 = vadd.f32 %v7090, %v7313
    %v7388 = vadd.f32 %v7091, %v7316
    %v7389 = vadd.f32 %v7092, %v7318
    %v7390 = vadd.f32 %v7093, %v7321
    %v7391 = vadd.f32 %v7094, %v7323
    %v7392 = vadd.f32 %v7095, %v7326
    %v7393 = vadd.f32 %v7096, %v7328
    %v7394 = vld [vmem:[%s5] sm:$0x1]
    %v7395 = vld [vmem:[%s6] sm:$0x1]
    %v7396 = vadd.f32 %v7330, %v7331
    %v7397 = vadd.f32 %v7396, %v7332
    %v7398 = vadd.f32 %v7397, %v7333
    %v7399 = vadd.f32 %v7398, %v7334
    %v7400 = vadd.f32 %v7399, %v7335
    %v7401 = vadd.f32 %v7400, %v7336
    %v7402 = vadd.f32 %v7401, %v7337
    %v7403 = vadd.f32 %v7402, %v7338
    %v7404 = vadd.f32 %v7403, %v7339
    %v7405 = vadd.f32 %v7404, %v7340
    %v7406 = vadd.f32 %v7405, %v7341
    %v7407 = vadd.f32 %v7406, %v7342
    %v7408 = vadd.f32 %v7407, %v7343
    %v7409 = vadd.f32 %v7408, %v7344
    %v7410 = vadd.f32 %v7409, %v7345
    %v7411 = vadd.f32 %v7410, %v7346
    %v7412 = vadd.f32 %v7411, %v7347
    %v7413 = vadd.f32 %v7412, %v7348
    %v7414 = vadd.f32 %v7413, %v7349
    %v7415 = vadd.f32 %v7414, %v7350
    %v7416 = vadd.f32 %v7415, %v7351
    %v7417 = vadd.f32 %v7416, %v7352
    %v7418 = vadd.f32 %v7417, %v7353
    %v7419 = vadd.f32 %v7418, %v7354
    %v7420 = vadd.f32 %v7419, %v7355
    %v7421 = vadd.f32 %v7420, %v7356
    %v7422 = vadd.f32 %v7421, %v7357
    %v7423 = vadd.f32 %v7422, %v7358
    %v7424 = vadd.f32 %v7423, %v7359
    %v7425 = vadd.f32 %v7424, %v7360
    %v7426 = vadd.f32 %v7425, %v7361
    %v7427 = vadd.f32 %v7426, %v7362
    %v7428 = vadd.f32 %v7427, %v7363
    %v7429 = vadd.f32 %v7428, %v7364
    %v7430 = vadd.f32 %v7429, %v7365
    %v7431 = vadd.f32 %v7430, %v7366
    %v7432 = vadd.f32 %v7431, %v7367
    %v7433 = vadd.f32 %v7432, %v7368
    %v7434 = vadd.f32 %v7433, %v7369
    %v7435 = vadd.f32 %v7434, %v7370
    %v7436 = vadd.f32 %v7435, %v7371
    %v7437 = vadd.f32 %v7436, %v7372
    %v7438 = vadd.f32 %v7437, %v7373
    %v7439 = vadd.f32 %v7438, %v7374
    %v7440 = vadd.f32 %v7439, %v7375
    %v7441 = vadd.f32 %v7440, %v7376
    %v7442 = vadd.f32 %v7441, %v7377
    %v7443 = vadd.f32 %v7442, %v7378
    %v7444 = vadd.f32 %v7443, %v7379
    %v7445 = vadd.f32 %v7444, %v7380
    %v7446 = vadd.f32 %v7445, %v7381
    %v7447 = vadd.f32 %v7446, %v7382
    %v7448 = vadd.f32 %v7447, %v7383
    %v7449 = vadd.f32 %v7448, %v7384
    %v7450 = vadd.f32 %v7449, %v7385
    %v7451 = vadd.f32 %v7450, %v7386
    %v7452 = vadd.f32 %v7451, %v7387
    %v7453 = vadd.f32 %v7452, %v7388
    %v7454 = vadd.f32 %v7453, %v7389
    %v7455 = vadd.f32 %v7454, %v7390
    %v7456 = vadd.f32 %v7455, %v7391
    %v7457 = vadd.f32 %v7456, %v7392
    %v7458 = vadd.f32 %v7457, %v7393
    %v7459 = vrot.slane %v7458, 4
    %v7460 = vadd.f32 %v7458, %v7459
    %v7461 = vrot.slane %v7460, 2
    %v7462 = vadd.f32 %v7460, %v7461
    %v7463 = vrot.slane %v7462, 1
    %v7464 = vadd.f32 %v7462, %v7463
    %v7465 = vmul.f32 %v7464, 0.001953125
    %v7466 = vmul.f32 %v7330, %v7330
    %v7467 = vmul.f32 %v7331, %v7331
    %v7468 = vmul.f32 %v7332, %v7332
    %v7469 = vmul.f32 %v7333, %v7333
    %v7470 = vmul.f32 %v7334, %v7334
    %v7471 = vmul.f32 %v7335, %v7335
    %v7472 = vmul.f32 %v7336, %v7336
    %v7473 = vmul.f32 %v7337, %v7337
    %v7474 = vmul.f32 %v7338, %v7338
    %v7475 = vmul.f32 %v7339, %v7339
    %v7476 = vmul.f32 %v7340, %v7340
    %v7477 = vmul.f32 %v7341, %v7341
    %v7478 = vmul.f32 %v7342, %v7342
    %v7479 = vmul.f32 %v7343, %v7343
    %v7480 = vmul.f32 %v7344, %v7344
    %v7481 = vmul.f32 %v7345, %v7345
    %v7482 = vmul.f32 %v7346, %v7346
    %v7483 = vmul.f32 %v7347, %v7347
    %v7484 = vmul.f32 %v7348, %v7348
    %v7485 = vmul.f32 %v7349, %v7349
    %v7486 = vmul.f32 %v7350, %v7350
    %v7487 = vmul.f32 %v7351, %v7351
    %v7488 = vmul.f32 %v7352, %v7352
    %v7489 = vmul.f32 %v7353, %v7353
    %v7490 = vmul.f32 %v7354, %v7354
    %v7491 = vmul.f32 %v7355, %v7355
    %v7492 = vmul.f32 %v7356, %v7356
    %v7493 = vmul.f32 %v7357, %v7357
    %v7494 = vmul.f32 %v7358, %v7358
    %v7495 = vmul.f32 %v7359, %v7359
    %v7496 = vmul.f32 %v7360, %v7360
    %v7497 = vmul.f32 %v7361, %v7361
    %v7498 = vmul.f32 %v7362, %v7362
    %v7499 = vmul.f32 %v7363, %v7363
    %v7500 = vmul.f32 %v7364, %v7364
    %v7501 = vmul.f32 %v7365, %v7365
    %v7502 = vmul.f32 %v7366, %v7366
    %v7503 = vmul.f32 %v7367, %v7367
    %v7504 = vmul.f32 %v7368, %v7368
    %v7505 = vmul.f32 %v7369, %v7369
    %v7506 = vmul.f32 %v7370, %v7370
    %v7507 = vmul.f32 %v7371, %v7371
    %v7508 = vmul.f32 %v7372, %v7372
    %v7509 = vmul.f32 %v7373, %v7373
    %v7510 = vmul.f32 %v7374, %v7374
    %v7511 = vmul.f32 %v7375, %v7375
    %v7512 = vmul.f32 %v7376, %v7376
    %v7513 = vmul.f32 %v7377, %v7377
    %v7514 = vmul.f32 %v7378, %v7378
    %v7515 = vmul.f32 %v7379, %v7379
    %v7516 = vmul.f32 %v7380, %v7380
    %v7517 = vmul.f32 %v7381, %v7381
    %v7518 = vmul.f32 %v7382, %v7382
    %v7519 = vmul.f32 %v7383, %v7383
    %v7520 = vmul.f32 %v7384, %v7384
    %v7521 = vmul.f32 %v7385, %v7385
    %v7522 = vmul.f32 %v7386, %v7386
    %v7523 = vmul.f32 %v7387, %v7387
    %v7524 = vmul.f32 %v7388, %v7388
    %v7525 = vmul.f32 %v7389, %v7389
    %v7526 = vmul.f32 %v7390, %v7390
    %v7527 = vmul.f32 %v7391, %v7391
    %v7528 = vmul.f32 %v7392, %v7392
    %v7529 = vmul.f32 %v7393, %v7393
    %v7530 = vadd.f32 %v7466, %v7467
    %v7531 = vadd.f32 %v7530, %v7468
    %v7532 = vadd.f32 %v7531, %v7469
    %v7533 = vadd.f32 %v7532, %v7470
    %v7534 = vadd.f32 %v7533, %v7471
    %v7535 = vadd.f32 %v7534, %v7472
    %v7536 = vadd.f32 %v7535, %v7473
    %v7537 = vadd.f32 %v7536, %v7474
    %v7538 = vadd.f32 %v7537, %v7475
    %v7539 = vadd.f32 %v7538, %v7476
    %v7540 = vadd.f32 %v7539, %v7477
    %v7541 = vadd.f32 %v7540, %v7478
    %v7542 = vadd.f32 %v7541, %v7479
    %v7543 = vadd.f32 %v7542, %v7480
    %v7544 = vadd.f32 %v7543, %v7481
    %v7545 = vadd.f32 %v7544, %v7482
    %v7546 = vadd.f32 %v7545, %v7483
    %v7547 = vadd.f32 %v7546, %v7484
    %v7548 = vadd.f32 %v7547, %v7485
    %v7549 = vadd.f32 %v7548, %v7486
    %v7550 = vadd.f32 %v7549, %v7487
    %v7551 = vadd.f32 %v7550, %v7488
    %v7552 = vadd.f32 %v7551, %v7489
    %v7553 = vadd.f32 %v7552, %v7490
    %v7554 = vadd.f32 %v7553, %v7491
    %v7555 = vadd.f32 %v7554, %v7492
    %v7556 = vadd.f32 %v7555, %v7493
    %v7557 = vadd.f32 %v7556, %v7494
    %v7558 = vadd.f32 %v7557, %v7495
    %v7559 = vadd.f32 %v7558, %v7496
    %v7560 = vadd.f32 %v7559, %v7497
    %v7561 = vadd.f32 %v7560, %v7498
    %v7562 = vadd.f32 %v7561, %v7499
    %v7563 = vadd.f32 %v7562, %v7500
    %v7564 = vadd.f32 %v7563, %v7501
    %v7565 = vadd.f32 %v7564, %v7502
    %v7566 = vadd.f32 %v7565, %v7503
    %v7567 = vadd.f32 %v7566, %v7504
    %v7568 = vadd.f32 %v7567, %v7505
    %v7569 = vadd.f32 %v7568, %v7506
    %v7570 = vadd.f32 %v7569, %v7507
    %v7571 = vadd.f32 %v7570, %v7508
    %v7572 = vadd.f32 %v7571, %v7509
    %v7573 = vadd.f32 %v7572, %v7510
    %v7574 = vadd.f32 %v7573, %v7511
    %v7575 = vadd.f32 %v7574, %v7512
    %v7576 = vadd.f32 %v7575, %v7513
    %v7577 = vadd.f32 %v7576, %v7514
    %v7578 = vadd.f32 %v7577, %v7515
    %v7579 = vadd.f32 %v7578, %v7516
    %v7580 = vadd.f32 %v7579, %v7517
    %v7581 = vadd.f32 %v7580, %v7518
    %v7582 = vadd.f32 %v7581, %v7519
    %v7583 = vadd.f32 %v7582, %v7520
    %v7584 = vadd.f32 %v7583, %v7521
    %v7585 = vadd.f32 %v7584, %v7522
    %v7586 = vadd.f32 %v7585, %v7523
    %v7587 = vadd.f32 %v7586, %v7524
    %v7588 = vadd.f32 %v7587, %v7525
    %v7589 = vadd.f32 %v7588, %v7526
    %v7590 = vadd.f32 %v7589, %v7527
    %v7591 = vadd.f32 %v7590, %v7528
    %v7592 = vadd.f32 %v7591, %v7529
    %v7593 = vrot.slane %v7592, 4
    %v7594 = vadd.f32 %v7592, %v7593
    %v7595 = vrot.slane %v7594, 2
    %v7596 = vadd.f32 %v7594, %v7595
    %v7597 = vrot.slane %v7596, 1
    %v7598 = vadd.f32 %v7596, %v7597
    %v7599 = vmul.f32 %v7598, 0.001953125
    %v7600 = vmul.f32 %v7465, %v7465
    %v7601 = vsub.f32 %v7599, %v7600
    %v7602 = vmax.f32 %v7601, 0.0
    %v7603 = vadd.f32 %v7602, 1e-05
    %v7604 = vrsqrt.pop %v7603
    %v7605 = vmul.f32 %v7604, %v7603
    %v7606 = vmul.f32 %v7605, %v7604
    %v7607 = vmul.f32 0.5, %v7606
    %v7608 = vsub.f32 1.5, %v7607
    %v7609 = vmul.f32 %v7604, %v7608
    %vm7610 = vweird.f32 %v7603
    %vm7611 = vweird.f32 %v7604
    %vm7612 = vmor %vm7610, %vm7611
    %v7613 = vsel %vm7612, %v7604, %v7609
    %v7614 = vmul.f32 %v7394, %v7613
    %v7615 = vmul.f32 %v7465, %v7614
    %v7616 = vsub.f32 %v7395, %v7615
    %v7618 = vperm.slane %v7614, 0
    %v7620 = vmul.f32 %v7330, %v7618
    %v7621 = vmul.f32 %v7331, %v7618
    %v7622 = vmul.f32 %v7332, %v7618
    %v7623 = vmul.f32 %v7333, %v7618
    %v7624 = vmul.f32 %v7334, %v7618
    %v7625 = vmul.f32 %v7335, %v7618
    %v7626 = vmul.f32 %v7336, %v7618
    %v7627 = vmul.f32 %v7337, %v7618
    %v7628 = vmul.f32 %v7338, %v7618
    %v7629 = vmul.f32 %v7339, %v7618
    %v7630 = vmul.f32 %v7340, %v7618
    %v7631 = vmul.f32 %v7341, %v7618
    %v7632 = vmul.f32 %v7342, %v7618
    %v7633 = vmul.f32 %v7343, %v7618
    %v7634 = vmul.f32 %v7344, %v7618
    %v7635 = vmul.f32 %v7345, %v7618
    %v7636 = vmul.f32 %v7346, %v7618
    %v7637 = vmul.f32 %v7347, %v7618
    %v7638 = vmul.f32 %v7348, %v7618
    %v7639 = vmul.f32 %v7349, %v7618
    %v7640 = vmul.f32 %v7350, %v7618
    %v7641 = vmul.f32 %v7351, %v7618
    %v7642 = vmul.f32 %v7352, %v7618
    %v7643 = vmul.f32 %v7353, %v7618
    %v7644 = vmul.f32 %v7354, %v7618
    %v7645 = vmul.f32 %v7355, %v7618
    %v7646 = vmul.f32 %v7356, %v7618
    %v7647 = vmul.f32 %v7357, %v7618
    %v7648 = vmul.f32 %v7358, %v7618
    %v7649 = vmul.f32 %v7359, %v7618
    %v7650 = vmul.f32 %v7360, %v7618
    %v7651 = vmul.f32 %v7361, %v7618
    %v7652 = vmul.f32 %v7362, %v7618
    %v7653 = vmul.f32 %v7363, %v7618
    %v7654 = vmul.f32 %v7364, %v7618
    %v7655 = vmul.f32 %v7365, %v7618
    %v7656 = vmul.f32 %v7366, %v7618
    %v7657 = vmul.f32 %v7367, %v7618
    %v7658 = vmul.f32 %v7368, %v7618
    %v7659 = vmul.f32 %v7369, %v7618
    %v7660 = vmul.f32 %v7370, %v7618
    %v7661 = vmul.f32 %v7371, %v7618
    %v7662 = vmul.f32 %v7372, %v7618
    %v7663 = vmul.f32 %v7373, %v7618
    %v7664 = vmul.f32 %v7374, %v7618
    %v7665 = vmul.f32 %v7375, %v7618
    %v7666 = vmul.f32 %v7376, %v7618
    %v7667 = vmul.f32 %v7377, %v7618
    %v7668 = vmul.f32 %v7378, %v7618
    %v7669 = vmul.f32 %v7379, %v7618
    %v7670 = vmul.f32 %v7380, %v7618
    %v7671 = vmul.f32 %v7381, %v7618
    %v7672 = vmul.f32 %v7382, %v7618
    %v7673 = vmul.f32 %v7383, %v7618
    %v7674 = vmul.f32 %v7384, %v7618
    %v7675 = vmul.f32 %v7385, %v7618
    %v7676 = vmul.f32 %v7386, %v7618
    %v7677 = vmul.f32 %v7387, %v7618
    %v7678 = vmul.f32 %v7388, %v7618
    %v7679 = vmul.f32 %v7389, %v7618
    %v7680 = vmul.f32 %v7390, %v7618
    %v7681 = vmul.f32 %v7391, %v7618
    %v7682 = vmul.f32 %v7392, %v7618
    %v7683 = vmul.f32 %v7393, %v7618
    %v7685 = vperm.slane %v7616, 0
    %v7687 = vadd.f32 %v7620, %v7685
    %v7688 = vadd.f32 %v7621, %v7685
    %v7689 = vadd.f32 %v7622, %v7685
    %v7690 = vadd.f32 %v7623, %v7685
    %v7691 = vadd.f32 %v7624, %v7685
    %v7692 = vadd.f32 %v7625, %v7685
    %v7693 = vadd.f32 %v7626, %v7685
    %v7694 = vadd.f32 %v7627, %v7685
    %v7695 = vadd.f32 %v7628, %v7685
    %v7696 = vadd.f32 %v7629, %v7685
    %v7697 = vadd.f32 %v7630, %v7685
    %v7698 = vadd.f32 %v7631, %v7685
    %v7699 = vadd.f32 %v7632, %v7685
    %v7700 = vadd.f32 %v7633, %v7685
    %v7701 = vadd.f32 %v7634, %v7685
    %v7702 = vadd.f32 %v7635, %v7685
    %v7703 = vadd.f32 %v7636, %v7685
    %v7704 = vadd.f32 %v7637, %v7685
    %v7705 = vadd.f32 %v7638, %v7685
    %v7706 = vadd.f32 %v7639, %v7685
    %v7707 = vadd.f32 %v7640, %v7685
    %v7708 = vadd.f32 %v7641, %v7685
    %v7709 = vadd.f32 %v7642, %v7685
    %v7710 = vadd.f32 %v7643, %v7685
    %v7711 = vadd.f32 %v7644, %v7685
    %v7712 = vadd.f32 %v7645, %v7685
    %v7713 = vadd.f32 %v7646, %v7685
    %v7714 = vadd.f32 %v7647, %v7685
    %v7715 = vadd.f32 %v7648, %v7685
    %v7716 = vadd.f32 %v7649, %v7685
    %v7717 = vadd.f32 %v7650, %v7685
    %v7718 = vadd.f32 %v7651, %v7685
    %v7719 = vadd.f32 %v7652, %v7685
    %v7720 = vadd.f32 %v7653, %v7685
    %v7721 = vadd.f32 %v7654, %v7685
    %v7722 = vadd.f32 %v7655, %v7685
    %v7723 = vadd.f32 %v7656, %v7685
    %v7724 = vadd.f32 %v7657, %v7685
    %v7725 = vadd.f32 %v7658, %v7685
    %v7726 = vadd.f32 %v7659, %v7685
    %v7727 = vadd.f32 %v7660, %v7685
    %v7728 = vadd.f32 %v7661, %v7685
    %v7729 = vadd.f32 %v7662, %v7685
    %v7730 = vadd.f32 %v7663, %v7685
    %v7731 = vadd.f32 %v7664, %v7685
    %v7732 = vadd.f32 %v7665, %v7685
    %v7733 = vadd.f32 %v7666, %v7685
    %v7734 = vadd.f32 %v7667, %v7685
    %v7735 = vadd.f32 %v7668, %v7685
    %v7736 = vadd.f32 %v7669, %v7685
    %v7737 = vadd.f32 %v7670, %v7685
    %v7738 = vadd.f32 %v7671, %v7685
    %v7739 = vadd.f32 %v7672, %v7685
    %v7740 = vadd.f32 %v7673, %v7685
    %v7741 = vadd.f32 %v7674, %v7685
    %v7742 = vadd.f32 %v7675, %v7685
    %v7743 = vadd.f32 %v7676, %v7685
    %v7744 = vadd.f32 %v7677, %v7685
    %v7745 = vadd.f32 %v7678, %v7685
    %v7746 = vadd.f32 %v7679, %v7685
    %v7747 = vadd.f32 %v7680, %v7685
    %v7748 = vadd.f32 %v7681, %v7685
    %v7749 = vadd.f32 %v7682, %v7685
    %v7750 = vadd.f32 %v7683, %v7685
    %v7751 = vmax.f32 %v7687, 0.0
    %v7752 = vmax.f32 %v7688, 0.0
    %v7753 = vmax.f32 %v7689, 0.0
    %v7754 = vmax.f32 %v7690, 0.0
    %v7755 = vmax.f32 %v7691, 0.0
    %v7756 = vmax.f32 %v7692, 0.0
    %v7757 = vmax.f32 %v7693, 0.0
    %v7758 = vmax.f32 %v7694, 0.0
    %v7759 = vmax.f32 %v7695, 0.0
    %v7760 = vmax.f32 %v7696, 0.0
    %v7761 = vmax.f32 %v7697, 0.0
    %v7762 = vmax.f32 %v7698, 0.0
    %v7763 = vmax.f32 %v7699, 0.0
    %v7764 = vmax.f32 %v7700, 0.0
    %v7765 = vmax.f32 %v7701, 0.0
    %v7766 = vmax.f32 %v7702, 0.0
    %v7767 = vmax.f32 %v7703, 0.0
    %v7768 = vmax.f32 %v7704, 0.0
    %v7769 = vmax.f32 %v7705, 0.0
    %v7770 = vmax.f32 %v7706, 0.0
    %v7771 = vmax.f32 %v7707, 0.0
    %v7772 = vmax.f32 %v7708, 0.0
    %v7773 = vmax.f32 %v7709, 0.0
    %v7774 = vmax.f32 %v7710, 0.0
    %v7775 = vmax.f32 %v7711, 0.0
    %v7776 = vmax.f32 %v7712, 0.0
    %v7777 = vmax.f32 %v7713, 0.0
    %v7778 = vmax.f32 %v7714, 0.0
    %v7779 = vmax.f32 %v7715, 0.0
    %v7780 = vmax.f32 %v7716, 0.0
    %v7781 = vmax.f32 %v7717, 0.0
    %v7782 = vmax.f32 %v7718, 0.0
    %v7783 = vmax.f32 %v7719, 0.0
    %v7784 = vmax.f32 %v7720, 0.0
    %v7785 = vmax.f32 %v7721, 0.0
    %v7786 = vmax.f32 %v7722, 0.0
    %v7787 = vmax.f32 %v7723, 0.0
    %v7788 = vmax.f32 %v7724, 0.0
    %v7789 = vmax.f32 %v7725, 0.0
    %v7790 = vmax.f32 %v7726, 0.0
    %v7791 = vmax.f32 %v7727, 0.0
    %v7792 = vmax.f32 %v7728, 0.0
    %v7793 = vmax.f32 %v7729, 0.0
    %v7794 = vmax.f32 %v7730, 0.0
    %v7795 = vmax.f32 %v7731, 0.0
    %v7796 = vmax.f32 %v7732, 0.0
    %v7797 = vmax.f32 %v7733, 0.0
    %v7798 = vmax.f32 %v7734, 0.0
    %v7799 = vmax.f32 %v7735, 0.0
    %v7800 = vmax.f32 %v7736, 0.0
    %v7801 = vmax.f32 %v7737, 0.0
    %v7802 = vmax.f32 %v7738, 0.0
    %v7803 = vmax.f32 %v7739, 0.0
    %v7804 = vmax.f32 %v7740, 0.0
    %v7805 = vmax.f32 %v7741, 0.0
    %v7806 = vmax.f32 %v7742, 0.0
    %v7807 = vmax.f32 %v7743, 0.0
    %v7808 = vmax.f32 %v7744, 0.0
    %v7809 = vmax.f32 %v7745, 0.0
    %v7810 = vmax.f32 %v7746, 0.0
    %v7811 = vmax.f32 %v7747, 0.0
    %v7812 = vmax.f32 %v7748, 0.0
    %v7813 = vmax.f32 %v7749, 0.0
    %v7814 = vmax.f32 %v7750, 0.0
    %7815 = vst [vmem:[#allocation4] sm:$0xff] %v7751
    %7816 = vst [vmem:[#allocation4 + $0x8] sm:$0xff] %v7752
    %7817 = vst [vmem:[#allocation4 + $0x10] sm:$0xff] %v7753
    %7818 = vst [vmem:[#allocation4 + $0x18] sm:$0xff] %v7754
    %7819 = vst [vmem:[#allocation4 + $0x20] sm:$0xff] %v7755
    %7820 = vst [vmem:[#allocation4 + $0x28] sm:$0xff] %v7756
    %7821 = vst [vmem:[#allocation4 + $0x30] sm:$0xff] %v7757
    %7822 = vst [vmem:[#allocation4 + $0x38] sm:$0xff] %v7758
    %7823 = vst [vmem:[#allocation4 + $0x40] sm:$0xff] %v7759
    %7824 = vst [vmem:[#allocation4 + $0x48] sm:$0xff] %v7760
    %7825 = vst [vmem:[#allocation4 + $0x50] sm:$0xff] %v7761
    %7826 = vst [vmem:[#allocation4 + $0x58] sm:$0xff] %v7762
    %7827 = vst [vmem:[#allocation4 + $0x60] sm:$0xff] %v7763
    %7828 = vst [vmem:[#allocation4 + $0x68] sm:$0xff] %v7764
    %7829 = vst [vmem:[#allocation4 + $0x70] sm:$0xff] %v7765
    %7830 = vst [vmem:[#allocation4 + $0x78] sm:$0xff] %v7766
    %7831 = vst [vmem:[#allocation4 + $0x80] sm:$0xff] %v7767
    %7832 = vst [vmem:[#allocation4 + $0x88] sm:$0xff] %v7768
    %7833 = vst [vmem:[#allocation4 + $0x90] sm:$0xff] %v7769
    %7834 = vst [vmem:[#allocation4 + $0x98] sm:$0xff] %v7770
    %7835 = vst [vmem:[#allocation4 + $0xa0] sm:$0xff] %v7771
    %7836 = vst [vmem:[#allocation4 + $0xa8] sm:$0xff] %v7772
    %7837 = vst [vmem:[#allocation4 + $0xb0] sm:$0xff] %v7773
    %7838 = vst [vmem:[#allocation4 + $0xb8] sm:$0xff] %v7774
    %7839 = vst [vmem:[#allocation4 + $0xc0] sm:$0xff] %v7775
    %7840 = vst [vmem:[#allocation4 + $0xc8] sm:$0xff] %v7776
    %7841 = vst [vmem:[#allocation4 + $0xd0] sm:$0xff] %v7777
    %7842 = vst [vmem:[#allocation4 + $0xd8] sm:$0xff] %v7778
    %7843 = vst [vmem:[#allocation4 + $0xe0] sm:$0xff] %v7779
    %7844 = vst [vmem:[#allocation4 + $0xe8] sm:$0xff] %v7780
    %7845 = vst [vmem:[#allocation4 + $0xf0] sm:$0xff] %v7781
    %7846 = vst [vmem:[#allocation4 + $0xf8] sm:$0xff] %v7782
    %7847 = vst [vmem:[#allocation4 + $0x100] sm:$0xff] %v7783
    %7848 = vst [vmem:[#allocation4 + $0x108] sm:$0xff] %v7784
    %7849 = vst [vmem:[#allocation4 + $0x110] sm:$0xff] %v7785
    %7850 = vst [vmem:[#allocation4 + $0x118] sm:$0xff] %v7786
    %7851 = vst [vmem:[#allocation4 + $0x120] sm:$0xff] %v7787
    %7852 = vst [vmem:[#allocation4 + $0x128] sm:$0xff] %v7788
    %7853 = vst [vmem:[#allocation4 + $0x130] sm:$0xff] %v7789
    %7854 = vst [vmem:[#allocation4 + $0x138] sm:$0xff] %v7790
    %7855 = vst [vmem:[#allocation4 + $0x140] sm:$0xff] %v7791
    %7856 = vst [vmem:[#allocation4 + $0x148] sm:$0xff] %v7792
    %7857 = vst [vmem:[#allocation4 + $0x150] sm:$0xff] %v7793
    %7858 = vst [vmem:[#allocation4 + $0x158] sm:$0xff] %v7794
    %7859 = vst [vmem:[#allocation4 + $0x160] sm:$0xff] %v7795
    %7860 = vst [vmem:[#allocation4 + $0x168] sm:$0xff] %v7796
    %7861 = vst [vmem:[#allocation4 + $0x170] sm:$0xff] %v7797
    %7862 = vst [vmem:[#allocation4 + $0x178] sm:$0xff] %v7798
    %7863 = vst [vmem:[#allocation4 + $0x180] sm:$0xff] %v7799
    %7864 = vst [vmem:[#allocation4 + $0x188] sm:$0xff] %v7800
    %7865 = vst [vmem:[#allocation4 + $0x190] sm:$0xff] %v7801
    %7866 = vst [vmem:[#allocation4 + $0x198] sm:$0xff] %v7802
    %7867 = vst [vmem:[#allocation4 + $0x1a0] sm:$0xff] %v7803
    %7868 = vst [vmem:[#allocation4 + $0x1a8] sm:$0xff] %v7804
    %7869 = vst [vmem:[#allocation4 + $0x1b0] sm:$0xff] %v7805
    %7870 = vst [vmem:[#allocation4 + $0x1b8] sm:$0xff] %v7806
    %7871 = vst [vmem:[#allocation4 + $0x1c0] sm:$0xff] %v7807
    %7872 = vst [vmem:[#allocation4 + $0x1c8] sm:$0xff] %v7808
    %7873 = vst [vmem:[#allocation4 + $0x1d0] sm:$0xff] %v7809
    %7874 = vst [vmem:[#allocation4 + $0x1d8] sm:$0xff] %v7810
    %7875 = vst [vmem:[#allocation4 + $0x1e0] sm:$0xff] %v7811
    %7876 = vst [vmem:[#allocation4 + $0x1e8] sm:$0xff] %v7812
    %7877 = vst [vmem:[#allocation4 + $0x1f0] sm:$0xff] %v7813
    %7878 = vst [vmem:[#allocation4 + $0x1f8] sm:$0xff] %v7814
    // Predicated region
    $region30: #{tpu_custom_call.1} parent=1 // pred_check
      _
    $region31: #{tpu_custom_call.1} parent=1 // pred_check_branch
      %7880 = sbr.rel (0) target = $region33
    $region32: #{tpu_custom_call.1} parent=1 // pred_region
      %7882 = vsyncadd [#allocation5], 0
      %s7883 = sshll.u32 [#allocation4], 4
      %s7884 = int_to_ptr.vmem [resolvable:$true] %s7883
      %s7885 = sshll.u32 %s7, 4
      %s7886 = int_to_ptr.hbm [resolvable:$true] %s7885
      %7891 = dma.vmem_to_hbm [thread:$0]  %s7884, 8192, %s7886, [#allocation5], 128, 128, 8
    $region33: #{tpu_custom_call.1} parent=1 // pred_fallthru
      _
    // Predicated region
    $region34: #{tpu_custom_call.1} parent=1 // pred_check
      _
    $region35: #{tpu_custom_call.1} parent=1 // pred_check_branch
      %7893 = sbr.rel (0) target = $region37
    $region36: #{tpu_custom_call.1} parent=1 // pred_region
      %7895 = dma.done [#allocation5], 8192
    $region37: #{tpu_custom_call.1} parent=1 // pred_fallthru
      _
    %7896 = vsyncpa [#allocation5], 1

</llo_original>
